<compile_context>
chip_gen: v7x
topology: tpu7x:2x2x1
jax: 0.10.0
libtpu: 0.0.40
codegen_flags: <defaults>
</compile_context>

<pallas_src>
import functools

import jax
import jax.numpy as jnp
from jax.experimental import pallas as pl
from jax.experimental.pallas import tpu as pltpu

_TAPS = ((0, 0), (0, 1), (1, 0), (1, 1))  # (dy, dx), row-major == HWIO flatten order


def _whole(shape):
    n = len(shape)
    return pl.BlockSpec(shape, lambda i, _n=n: (0,) * _n)


# ----------------------------------------------------------------------------
# Fused forward kernel
# ----------------------------------------------------------------------------
def _fused_kernel(p1_ref, w1_ref, b1_ref, w2_ref, b2_ref, w3_ref, b3_ref,
                  wh1_ref, bh1_ref, w2h_ref, b2h_ref, w3h_ref, b3h_ref,
                  o_ref, h1_scr, h2_scr, feat_scr,
                  *, B, W, H1, H2, H3, BP):
    f32, bf16 = jnp.float32, jnp.bfloat16
    C = b1_ref.shape[1]                         # 256
    R1, R2, R3 = H1 * W, H2 * W, H3 * W         # flat rows per batch per layer

    # Zero scratch tails / feature rows (only ever read by discarded positions).
    h1_scr[pl.ds(B * R1, 8), :] = jnp.zeros((8, C), f32)
    h2_scr[pl.ds(B * R2, 8), :] = jnp.zeros((8, C), f32)
    feat_scr[...] = jnp.zeros((BP, C), f32)

    # ---- conv1 (Cin=1): one small matmul per batch over pre-built patches ----
    for b in range(B):
        lhs = p1_ref[pl.ds(b * R1, R1), :]                                   # (R1, 8)
        acc = jnp.dot(lhs, w1_ref[...], preferred_element_type=f32)          # (R1, C)
        h1_scr[pl.ds(b * R1, R1), :] = jnp.maximum(acc + b1_ref[...], 0.0)

    # ---- conv2: 4 shifted K=256 bf16 matmuls, f32 accumulation ----
    for b in range(B):
        acc = jnp.zeros((R2, C), f32)
        for t, (dy, dx) in enumerate(_TAPS):
            lhs = h1_scr[pl.ds(b * R1 + dy * W + dx, R2), :].astype(bf16)
            acc = acc + jnp.dot(lhs, w2_ref[t], preferred_element_type=f32)
        h2_scr[pl.ds(b * R2, R2), :] = jnp.maximum(acc + b2_ref[...], 0.0)

    # ---- conv3 + fused global average pool over the valid (H-3)x(W-3) region ----
    n_valid = H3 * (W - 3)
    for b in range(B):
        acc = jnp.zeros((R3, C), f32)
        for t, (dy, dx) in enumerate(_TAPS):
            lhs = h2_scr[pl.ds(b * R2 + dy * W + dx, R3), :].astype(bf16)
            acc = acc + jnp.dot(lhs, w3_ref[t], preferred_element_type=f32)
        h3 = jnp.maximum(acc + b3_ref[...], 0.0)                             # (R3, C)
        m = jax.lax.broadcasted_iota(jnp.int32, (R3, C), 0)
        col = (m & (W - 1)) if (W & (W - 1)) == 0 else (m % W)
        h3v = jnp.where(col < W - 3, h3, 0.0)
        feat_scr[pl.ds(b, 1), :] = (jnp.sum(h3v, axis=0, keepdims=True)
                                    * (1.0 / float(n_valid)))

    # ---- dueling head: 3 lane-dense matmuls on pooled features ----
    featb = feat_scr[...].astype(bf16)                                        # (BP, 256)
    h = jnp.maximum(jnp.dot(featb, wh1_ref[...], preferred_element_type=f32)
                    + bh1_ref[...], 0.0)          # lanes [0:128] action, [128:192] state
    t2 = (jnp.dot(h.astype(bf16), w2h_ref[...], preferred_element_type=f32)
          + b2h_ref[...])                         # lanes [0:32] action2, lane 32 = state
    lane = jax.lax.broadcasted_iota(jnp.int32, t2.shape, 1)
    lhs3 = jnp.where(lane < 32, jnp.maximum(t2, 0.0), t2)   # ReLU on action lanes only
    o_ref[...] = (jnp.dot(lhs3.astype(bf16), w3h_ref[...],
                          preferred_element_type=f32) + b3h_ref[...])


# ----------------------------------------------------------------------------
# Wrapper: layout/packing glue (tiny XLA ops) + the fused pallas_call
# ----------------------------------------------------------------------------
def convd3qn_forward(x, params, num_actions=4):
    """x: (B, H, W) or (B, 1, H, W) in PyTorch NCHW convention."""
    if x.ndim == 3:
        x = x[:, None, :, :]
    x = x.astype(jnp.float32)
    B, Cin, H, W = x.shape
    assert Cin == 1
    H1, H2, H3 = H - 1, H - 2, H - 3
    R1, R2, R3 = H1 * W, H2 * W, H3 * W
    BP = max(8, ((B + 7) // 8) * 8)
    C = 256
    bf16 = jnp.bfloat16

    # conv1 patches (Cin=1): flat (B*R1, 8), column k = tap dy*2+dx, k>=4 zero.
    x2 = x[:, 0]
    xp = jnp.pad(x2, ((0, 0), (0, 1), (0, 1)))
    shifts = [xp[:, dy:dy + H1, dx:dx + W] for dy, dx in _TAPS]
    p1 = jnp.stack(shifts, axis=-1).reshape(B * R1, 4)
    p1 = jnp.pad(p1, ((0, 0), (0, 4)))

    # Conv weights: taps flattened, bf16 for the MXU (f32 bias / accumulation).
    w1 = jnp.pad(params["cw1"].reshape(4, C), ((0, 4), (0, 0))).astype(jnp.float32)
    b1 = params["cb1"].reshape(1, C).astype(jnp.float32)
    w2 = params["cw2"].reshape(4, C, C).astype(bf16)
    b2 = params["cb2"].reshape(1, C).astype(jnp.float32)
    w3 = params["cw3"].reshape(4, C, C).astype(bf16)
    b3 = params["cb3"].reshape(1, C).astype(jnp.float32)

    # Head layer 1: action(256->128) || state(256->64), lane-padded to 256.
    wh1 = (jnp.zeros((C, C), jnp.float32)
           .at[:, :128].set(params["wa1"])
           .at[:, 128:192].set(params["ws1"])).astype(bf16)
    bh1 = (jnp.zeros((1, C), jnp.float32)
           .at[:, :128].set(params["ba1"])
           .at[:, 128:192].set(params["bs1"]))
    # Head layer 2 (block diagonal): cols [0:32]=action hidden2, col 32=state value.
    w2h = (jnp.zeros((C, 128), jnp.float32)
           .at[:128, :32].set(params["wa2"])
           .at[128:192, 32:33].set(params["ws2"])).astype(bf16)
    b2h = (jnp.zeros((1, 128), jnp.float32)
           .at[:, :32].set(params["ba2"])
           .at[:, 32:33].set(params["bs2"]))
    # Head layer 3: wa3 in rows 0..31, row 32 of ones broadcast-adds the state value.
    w3h = (jnp.zeros((128, 128), jnp.float32)
           .at[:32, :num_actions].set(params["wa3"])
           .at[32, :].set(1.0)).astype(bf16)
    b3h = jnp.zeros((1, 128), jnp.float32).at[:, :num_actions].set(params["ba3"])

    args = (p1, w1, b1, w2, b2, w3, b3, wh1, bh1, w2h, b2h, w3h, b3h)
    kernel = functools.partial(_fused_kernel, B=B, W=W, H1=H1, H2=H2, H3=H3, BP=BP)

    out = pl.pallas_call(
        kernel,
        grid=(1,),
        in_specs=[_whole(a.shape) for a in args],
        out_specs=_whole((BP, 128)),
        out_shape=jax.ShapeDtypeStruct((BP, 128), jnp.float32),
        scratch_shapes=[
            pltpu.VMEM((B * R1 + 8, C), jnp.float32),   # conv1 output
            pltpu.VMEM((B * R2 + 8, C), jnp.float32),   # conv2 output
            pltpu.VMEM((BP, C), jnp.float32),           # pooled features
        ],
        compiler_params=pltpu.CompilerParams(
            dimension_semantics=("arbitrary",)),
    )(*args)
    return out[:B, :num_actions]


# ----------------------------------------------------------------------------
# Deterministic parameter init (synthetic; not a checkpoint load)
# ----------------------------------------------------------------------------
def init_params(key, num_actions=4):
    ks = jax.random.split(key, 16)
    nrm = lambda k, s, sc: (jax.random.normal(k, s, jnp.float32) * sc)
    p = {}
    # conv weights in HWIO layout (kh, kw, Cin, Cout)
    p["cw1"] = nrm(ks[0], (2, 2, 1, 256), 0.20);   p["cb1"] = nrm(ks[1], (256,), 0.02)
    p["cw2"] = nrm(ks[2], (2, 2, 256, 256), 0.03); p["cb2"] = nrm(ks[3], (256,), 0.02)
    p["cw3"] = nrm(ks[4], (2, 2, 256, 256), 0.03); p["cb3"] = nrm(ks[5], (256,), 0.02)
    # linear weights in (in, out) layout; biases as (1, out)
    p["wa1"] = nrm(ks[6], (256, 128), 0.05);  p["ba1"] = nrm(ks[7], (1, 128), 0.02)
    p["wa2"] = nrm(ks[8], (128, 32), 0.08);   p["ba2"] = nrm(ks[9], (1, 32), 0.02)
    p["wa3"] = nrm(ks[10], (32, num_actions), 0.15); p["ba3"] = nrm(ks[11], (1, num_actions), 0.02)
    p["ws1"] = nrm(ks[12], (256, 64), 0.05);  p["bs1"] = nrm(ks[13], (1, 64), 0.02)
    p["ws2"] = nrm(ks[14], (64, 1), 0.10);    p["bs2"] = nrm(ks[15], (1, 1), 0.02)
    return p


# ----------------------------------------------------------------------------
# Pure-JAX reference (f32) for the sanity check
# ----------------------------------------------------------------------------
def reference_forward(x, params, num_actions=4):
    if x.ndim == 3:
        x = x[:, None, :, :]
    h = jnp.transpose(x, (0, 2, 3, 1)).astype(jnp.float32)

    def conv(h, w, b):
        y = jax.lax.conv_general_dilated(
            h, w, (1, 1), "VALID", dimension_numbers=("NHWC", "HWIO", "NHWC"))
        return jax.nn.relu(y + b)

    h = conv(h, params["cw1"], params["cb1"])
    h = conv(h, params["cw2"], params["cb2"])
    h = conv(h, params["cw3"], params["cb3"])
    feat = jnp.mean(h, axis=(1, 2))
    a = jax.nn.relu(feat @ params["wa1"] + params["ba1"][0])
    a = jax.nn.relu(a @ params["wa2"] + params["ba2"][0])
    a = a @ params["wa3"] + params["ba3"][0]
    s = jax.nn.relu(feat @ params["ws1"] + params["bs1"][0])
    s = s @ params["ws2"] + params["bs2"][0]
    return a + s  # broadcast == repeat(1, num_actions) then add


# TODO(synk): greedy()/act() epsilon-greedy sampling uses host-side Python
# `random`; it is not part of forward() and is left out of the kernel.

if __name__ == "__main__":
    num_actions = 4
    key = jax.random.PRNGKey(0)
    pkey, xkey = jax.random.split(key)
    params = init_params(pkey, num_actions)

    # PyTorch-style NCHW input: (batch=2, channels=1, 16, 16)
    x = jax.random.normal(xkey, (2, 1, 16, 16), jnp.float32)

    fwd = jax.jit(functools.partial(convd3qn_forward, num_actions=num_actions))
    out = jax.block_until_ready(fwd(x, params))

    ref = jax.block_until_ready(reference_forward(x, params, num_actions))
    assert out.shape == (2, num_actions), out.shape
    assert jnp.allclose(out, ref, rtol=2e-2, atol=2e-2), (out, ref)

    print("KERNEL_OK")
</pallas_src>

<mosaic_0001>
module attributes {stable_mosaic.version = 11 : i64} {
  func.func @_fused_kernel(%arg0: i32, %arg1: memref<480x8xf32, #tpu.memory_space<vmem>>, %arg2: memref<8x256xf32, #tpu.memory_space<vmem>>, %arg3: memref<1x256xf32, #tpu.memory_space<vmem>>, %arg4: memref<4x256x256xbf16, #tpu.memory_space<vmem>>, %arg5: memref<1x256xf32, #tpu.memory_space<vmem>>, %arg6: memref<4x256x256xbf16, #tpu.memory_space<vmem>>, %arg7: memref<1x256xf32, #tpu.memory_space<vmem>>, %arg8: memref<256x256xbf16, #tpu.memory_space<vmem>>, %arg9: memref<1x256xf32, #tpu.memory_space<vmem>>, %arg10: memref<256x128xbf16, #tpu.memory_space<vmem>>, %arg11: memref<1x128xf32, #tpu.memory_space<vmem>>, %arg12: memref<128x128xbf16, #tpu.memory_space<vmem>>, %arg13: memref<1x128xf32, #tpu.memory_space<vmem>>, %arg14: memref<8x128xf32, #tpu.memory_space<vmem>>, %arg15: memref<488x256xf32, #tpu.memory_space<vmem>>, %arg16: memref<456x256xf32, #tpu.memory_space<vmem>>, %arg17: memref<8x256xf32, #tpu.memory_space<vmem>>) attributes {dimension_semantics = [#tpu.dimension_semantics<arbitrary>], iteration_bounds = array<i64: 1>, scalar_prefetch = 0 : i64, scratch_operands = 3 : i64, tpu.core_type = #tpu.core_type<tc>, window_params = [{pipeline_mode = #tpu.pipeline_mode<synchronous>, transform_indices = @transform_0, window_bounds = array<i64: 480, 8>}, {pipeline_mode = #tpu.pipeline_mode<synchronous>, transform_indices = @transform_1, window_bounds = array<i64: 8, 256>}, {pipeline_mode = #tpu.pipeline_mode<synchronous>, transform_indices = @transform_2, window_bounds = array<i64: 1, 256>}, {pipeline_mode = #tpu.pipeline_mode<synchronous>, transform_indices = @transform_3, window_bounds = array<i64: 4, 256, 256>}, {pipeline_mode = #tpu.pipeline_mode<synchronous>, transform_indices = @transform_4, window_bounds = array<i64: 1, 256>}, {pipeline_mode = #tpu.pipeline_mode<synchronous>, transform_indices = @transform_5, window_bounds = array<i64: 4, 256, 256>}, {pipeline_mode = #tpu.pipeline_mode<synchronous>, transform_indices = @transform_6, window_bounds = array<i64: 1, 256>}, {pipeline_mode = #tpu.pipeline_mode<synchronous>, transform_indices = @transform_7, window_bounds = array<i64: 256, 256>}, {pipeline_mode = #tpu.pipeline_mode<synchronous>, transform_indices = @transform_8, window_bounds = array<i64: 1, 256>}, {pipeline_mode = #tpu.pipeline_mode<synchronous>, transform_indices = @transform_9, window_bounds = array<i64: 256, 128>}, {pipeline_mode = #tpu.pipeline_mode<synchronous>, transform_indices = @transform_10, window_bounds = array<i64: 1, 128>}, {pipeline_mode = #tpu.pipeline_mode<synchronous>, transform_indices = @transform_11, window_bounds = array<i64: 128, 128>}, {pipeline_mode = #tpu.pipeline_mode<synchronous>, transform_indices = @transform_12, window_bounds = array<i64: 1, 128>}, {pipeline_mode = #tpu.pipeline_mode<synchronous>, transform_indices = @transform_13, window_bounds = array<i64: 8, 128>}]} {
    %cst = arith.constant 0.000000e+00 : f32
    %0 = vector.broadcast %cst : f32 to vector<8x256xf32>
    %c480 = arith.constant 480 : index
    %c0 = arith.constant 0 : index
    %1 = vector.load %arg15[%c480, %c0] : memref<488x256xf32, #tpu.memory_space<vmem>>, vector<8x256xf32>
    tpu.vector_store %arg15[%c480, %c0], %0 {strides = array<i32>} : memref<488x256xf32, #tpu.memory_space<vmem>>, vector<8x256xf32>,
    %cst_0 = arith.constant 0.000000e+00 : f32
    %2 = vector.broadcast %cst_0 : f32 to vector<8x256xf32>
    %c448 = arith.constant 448 : index
    %c0_1 = arith.constant 0 : index
    %3 = vector.load %arg16[%c448, %c0_1] : memref<456x256xf32, #tpu.memory_space<vmem>>, vector<8x256xf32>
    tpu.vector_store %arg16[%c448, %c0_1], %2 {strides = array<i32>} : memref<456x256xf32, #tpu.memory_space<vmem>>, vector<8x256xf32>,
    %cst_2 = arith.constant 0.000000e+00 : f32
    %4 = vector.broadcast %cst_2 : f32 to vector<8x256xf32>
    %c0_3 = arith.constant 0 : index
    %c0_4 = arith.constant 0 : index
    %5 = vector.load %arg17[%c0_3, %c0_4] : memref<8x256xf32, #tpu.memory_space<vmem>>, vector<8x256xf32>
    tpu.vector_store %arg17[%c0_3, %c0_4], %4 {strides = array<i32>} : memref<8x256xf32, #tpu.memory_space<vmem>>, vector<8x256xf32>,
    %c0_5 = arith.constant 0 : index
    %c0_6 = arith.constant 0 : index
    %6 = vector.load %arg1[%c0_5, %c0_6] : memref<480x8xf32, #tpu.memory_space<vmem>>, vector<240x8xf32>
    %c0_7 = arith.constant 0 : index
    %c0_8 = arith.constant 0 : index
    %7 = vector.load %arg2[%c0_7, %c0_8] : memref<8x256xf32, #tpu.memory_space<vmem>>, vector<8x256xf32>
    %cst_9 = arith.constant dense<0.000000e+00> : vector<240x256xf32>
    %8 = tpu.matmul %6, %7, %cst_9 {dimension_numbers = #tpu.dot_dimension_numbers<[1], [0], [0], [1], [0, 0, 1, 1], [], []>} : vector<240x8xf32>, vector<8x256xf32>, vector<240x256xf32> -> vector<240x256xf32>
    %c0_10 = arith.constant 0 : index
    %c0_11 = arith.constant 0 : index
    %9 = vector.load %arg3[%c0_10, %c0_11] : memref<1x256xf32, #tpu.memory_space<vmem>>, vector<1x256xf32>
    %10 = vector.broadcast %9 : vector<1x256xf32> to vector<240x256xf32>
    %11 = arith.addf %8, %10 : vector<240x256xf32>
    %cst_12 = arith.constant 0.000000e+00 : f32
    %12 = vector.broadcast %cst_12 : f32 to vector<240x256xf32>
    %13 = arith.maximumf %11, %12 : vector<240x256xf32>
    %c0_13 = arith.constant 0 : index
    %c0_14 = arith.constant 0 : index
    %14 = vector.load %arg15[%c0_13, %c0_14] : memref<488x256xf32, #tpu.memory_space<vmem>>, vector<240x256xf32>
    tpu.vector_store %arg15[%c0_13, %c0_14], %13 {strides = array<i32>} : memref<488x256xf32, #tpu.memory_space<vmem>>, vector<240x256xf32>,
    %c240 = arith.constant 240 : index
    %c0_15 = arith.constant 0 : index
    %15 = vector.load %arg1[%c240, %c0_15] : memref<480x8xf32, #tpu.memory_space<vmem>>, vector<240x8xf32>
    %c0_16 = arith.constant 0 : index
    %c0_17 = arith.constant 0 : index
    %16 = vector.load %arg2[%c0_16, %c0_17] : memref<8x256xf32, #tpu.memory_space<vmem>>, vector<8x256xf32>
    %cst_18 = arith.constant dense<0.000000e+00> : vector<240x256xf32>
    %17 = tpu.matmul %15, %16, %cst_18 {dimension_numbers = #tpu.dot_dimension_numbers<[1], [0], [0], [1], [0, 0, 1, 1], [], []>} : vector<240x8xf32>, vector<8x256xf32>, vector<240x256xf32> -> vector<240x256xf32>
    %c0_19 = arith.constant 0 : index
    %c0_20 = arith.constant 0 : index
    %18 = vector.load %arg3[%c0_19, %c0_20] : memref<1x256xf32, #tpu.memory_space<vmem>>, vector<1x256xf32>
    %19 = vector.broadcast %18 : vector<1x256xf32> to vector<240x256xf32>
    %20 = arith.addf %17, %19 : vector<240x256xf32>
    %cst_21 = arith.constant 0.000000e+00 : f32
    %21 = vector.broadcast %cst_21 : f32 to vector<240x256xf32>
    %22 = arith.maximumf %20, %21 : vector<240x256xf32>
    %c240_22 = arith.constant 240 : index
    %c0_23 = arith.constant 0 : index
    %23 = vector.load %arg15[%c240_22, %c0_23] : memref<488x256xf32, #tpu.memory_space<vmem>>, vector<240x256xf32>
    tpu.vector_store %arg15[%c240_22, %c0_23], %22 {strides = array<i32>} : memref<488x256xf32, #tpu.memory_space<vmem>>, vector<240x256xf32>,
    %cst_24 = arith.constant 0.000000e+00 : f32
    %24 = vector.broadcast %cst_24 : f32 to vector<224x256xf32>
    %c0_25 = arith.constant 0 : index
    %c0_26 = arith.constant 0 : index
    %25 = vector.load %arg15[%c0_25, %c0_26] : memref<488x256xf32, #tpu.memory_space<vmem>>, vector<224x256xf32>
    %26 = arith.truncf %25 : vector<224x256xf32> to vector<224x256xbf16>
    %c0_27 = arith.constant 0 : index
    %c0_28 = arith.constant 0 : index
    %c0_29 = arith.constant 0 : index
    %27 = vector.load %arg4[%c0_27, %c0_28, %c0_29] : memref<4x256x256xbf16, #tpu.memory_space<vmem>>, vector<1x256x256xbf16>
    %28 = vector.shape_cast %27 : vector<1x256x256xbf16> to vector<256x256xbf16>
    %cst_30 = arith.constant dense<0.000000e+00> : vector<224x256xf32>
    %29 = tpu.matmul %26, %28, %cst_30 {dimension_numbers = #tpu.dot_dimension_numbers<[1], [0], [0], [1], [0, 0, 1, 1], [], []>} : vector<224x256xbf16>, vector<256x256xbf16>, vector<224x256xf32> -> vector<224x256xf32>
    %30 = arith.addf %24, %29 : vector<224x256xf32>
    %c1 = arith.constant 1 : index
    %c0_31 = arith.constant 0 : index
    %31 = vector.load %arg15[%c1, %c0_31] : memref<488x256xf32, #tpu.memory_space<vmem>>, vector<224x256xf32>
    %32 = arith.truncf %31 : vector<224x256xf32> to vector<224x256xbf16>
    %c1_32 = arith.constant 1 : index
    %c0_33 = arith.constant 0 : index
    %c0_34 = arith.constant 0 : index
    %33 = vector.load %arg4[%c1_32, %c0_33, %c0_34] : memref<4x256x256xbf16, #tpu.memory_space<vmem>>, vector<1x256x256xbf16>
    %34 = vector.shape_cast %33 : vector<1x256x256xbf16> to vector<256x256xbf16>
    %cst_35 = arith.constant dense<0.000000e+00> : vector<224x256xf32>
    %35 = tpu.matmul %32, %34, %cst_35 {dimension_numbers = #tpu.dot_dimension_numbers<[1], [0], [0], [1], [0, 0, 1, 1], [], []>} : vector<224x256xbf16>, vector<256x256xbf16>, vector<224x256xf32> -> vector<224x256xf32>
    %36 = arith.addf %30, %35 : vector<224x256xf32>
    %c16 = arith.constant 16 : index
    %c0_36 = arith.constant 0 : index
    %37 = vector.load %arg15[%c16, %c0_36] : memref<488x256xf32, #tpu.memory_space<vmem>>, vector<224x256xf32>
    %38 = arith.truncf %37 : vector<224x256xf32> to vector<224x256xbf16>
    %c2 = arith.constant 2 : index
    %c0_37 = arith.constant 0 : index
    %c0_38 = arith.constant 0 : index
    %39 = vector.load %arg4[%c2, %c0_37, %c0_38] : memref<4x256x256xbf16, #tpu.memory_space<vmem>>, vector<1x256x256xbf16>
    %40 = vector.shape_cast %39 : vector<1x256x256xbf16> to vector<256x256xbf16>
    %cst_39 = arith.constant dense<0.000000e+00> : vector<224x256xf32>
    %41 = tpu.matmul %38, %40, %cst_39 {dimension_numbers = #tpu.dot_dimension_numbers<[1], [0], [0], [1], [0, 0, 1, 1], [], []>} : vector<224x256xbf16>, vector<256x256xbf16>, vector<224x256xf32> -> vector<224x256xf32>
    %42 = arith.addf %36, %41 : vector<224x256xf32>
    %c17 = arith.constant 17 : index
    %c0_40 = arith.constant 0 : index
    %43 = vector.load %arg15[%c17, %c0_40] : memref<488x256xf32, #tpu.memory_space<vmem>>, vector<224x256xf32>
    %44 = arith.truncf %43 : vector<224x256xf32> to vector<224x256xbf16>
    %c3 = arith.constant 3 : index
    %c0_41 = arith.constant 0 : index
    %c0_42 = arith.constant 0 : index
    %45 = vector.load %arg4[%c3, %c0_41, %c0_42] : memref<4x256x256xbf16, #tpu.memory_space<vmem>>, vector<1x256x256xbf16>
    %46 = vector.shape_cast %45 : vector<1x256x256xbf16> to vector<256x256xbf16>
    %cst_43 = arith.constant dense<0.000000e+00> : vector<224x256xf32>
    %47 = tpu.matmul %44, %46, %cst_43 {dimension_numbers = #tpu.dot_dimension_numbers<[1], [0], [0], [1], [0, 0, 1, 1], [], []>} : vector<224x256xbf16>, vector<256x256xbf16>, vector<224x256xf32> -> vector<224x256xf32>
    %48 = arith.addf %42, %47 : vector<224x256xf32>
    %c0_44 = arith.constant 0 : index
    %c0_45 = arith.constant 0 : index
    %49 = vector.load %arg5[%c0_44, %c0_45] : memref<1x256xf32, #tpu.memory_space<vmem>>, vector<1x256xf32>
    %50 = vector.broadcast %49 : vector<1x256xf32> to vector<224x256xf32>
    %51 = arith.addf %48, %50 : vector<224x256xf32>
    %cst_46 = arith.constant 0.000000e+00 : f32
    %52 = vector.broadcast %cst_46 : f32 to vector<224x256xf32>
    %53 = arith.maximumf %51, %52 : vector<224x256xf32>
    %c0_47 = arith.constant 0 : index
    %c0_48 = arith.constant 0 : index
    %54 = vector.load %arg16[%c0_47, %c0_48] : memref<456x256xf32, #tpu.memory_space<vmem>>, vector<224x256xf32>
    tpu.vector_store %arg16[%c0_47, %c0_48], %53 {strides = array<i32>} : memref<456x256xf32, #tpu.memory_space<vmem>>, vector<224x256xf32>,
    %cst_49 = arith.constant 0.000000e+00 : f32
    %55 = vector.broadcast %cst_49 : f32 to vector<224x256xf32>
    %c240_50 = arith.constant 240 : index
    %c0_51 = arith.constant 0 : index
    %56 = vector.load %arg15[%c240_50, %c0_51] : memref<488x256xf32, #tpu.memory_space<vmem>>, vector<224x256xf32>
    %57 = arith.truncf %56 : vector<224x256xf32> to vector<224x256xbf16>
    %c0_52 = arith.constant 0 : index
    %c0_53 = arith.constant 0 : index
    %c0_54 = arith.constant 0 : index
    %58 = vector.load %arg4[%c0_52, %c0_53, %c0_54] : memref<4x256x256xbf16, #tpu.memory_space<vmem>>, vector<1x256x256xbf16>
    %59 = vector.shape_cast %58 : vector<1x256x256xbf16> to vector<256x256xbf16>
    %cst_55 = arith.constant dense<0.000000e+00> : vector<224x256xf32>
    %60 = tpu.matmul %57, %59, %cst_55 {dimension_numbers = #tpu.dot_dimension_numbers<[1], [0], [0], [1], [0, 0, 1, 1], [], []>} : vector<224x256xbf16>, vector<256x256xbf16>, vector<224x256xf32> -> vector<224x256xf32>
    %61 = arith.addf %55, %60 : vector<224x256xf32>
    %c241 = arith.constant 241 : index
    %c0_56 = arith.constant 0 : index
    %62 = vector.load %arg15[%c241, %c0_56] : memref<488x256xf32, #tpu.memory_space<vmem>>, vector<224x256xf32>
    %63 = arith.truncf %62 : vector<224x256xf32> to vector<224x256xbf16>
    %c1_57 = arith.constant 1 : index
    %c0_58 = arith.constant 0 : index
    %c0_59 = arith.constant 0 : index
    %64 = vector.load %arg4[%c1_57, %c0_58, %c0_59] : memref<4x256x256xbf16, #tpu.memory_space<vmem>>, vector<1x256x256xbf16>
    %65 = vector.shape_cast %64 : vector<1x256x256xbf16> to vector<256x256xbf16>
    %cst_60 = arith.constant dense<0.000000e+00> : vector<224x256xf32>
    %66 = tpu.matmul %63, %65, %cst_60 {dimension_numbers = #tpu.dot_dimension_numbers<[1], [0], [0], [1], [0, 0, 1, 1], [], []>} : vector<224x256xbf16>, vector<256x256xbf16>, vector<224x256xf32> -> vector<224x256xf32>
    %67 = arith.addf %61, %66 : vector<224x256xf32>
    %c256 = arith.constant 256 : index
    %c0_61 = arith.constant 0 : index
    %68 = vector.load %arg15[%c256, %c0_61] : memref<488x256xf32, #tpu.memory_space<vmem>>, vector<224x256xf32>
    %69 = arith.truncf %68 : vector<224x256xf32> to vector<224x256xbf16>
    %c2_62 = arith.constant 2 : index
    %c0_63 = arith.constant 0 : index
    %c0_64 = arith.constant 0 : index
    %70 = vector.load %arg4[%c2_62, %c0_63, %c0_64] : memref<4x256x256xbf16, #tpu.memory_space<vmem>>, vector<1x256x256xbf16>
    %71 = vector.shape_cast %70 : vector<1x256x256xbf16> to vector<256x256xbf16>
    %cst_65 = arith.constant dense<0.000000e+00> : vector<224x256xf32>
    %72 = tpu.matmul %69, %71, %cst_65 {dimension_numbers = #tpu.dot_dimension_numbers<[1], [0], [0], [1], [0, 0, 1, 1], [], []>} : vector<224x256xbf16>, vector<256x256xbf16>, vector<224x256xf32> -> vector<224x256xf32>
    %73 = arith.addf %67, %72 : vector<224x256xf32>
    %c257 = arith.constant 257 : index
    %c0_66 = arith.constant 0 : index
    %74 = vector.load %arg15[%c257, %c0_66] : memref<488x256xf32, #tpu.memory_space<vmem>>, vector<224x256xf32>
    %75 = arith.truncf %74 : vector<224x256xf32> to vector<224x256xbf16>
    %c3_67 = arith.constant 3 : index
    %c0_68 = arith.constant 0 : index
    %c0_69 = arith.constant 0 : index
    %76 = vector.load %arg4[%c3_67, %c0_68, %c0_69] : memref<4x256x256xbf16, #tpu.memory_space<vmem>>, vector<1x256x256xbf16>
    %77 = vector.shape_cast %76 : vector<1x256x256xbf16> to vector<256x256xbf16>
    %cst_70 = arith.constant dense<0.000000e+00> : vector<224x256xf32>
    %78 = tpu.matmul %75, %77, %cst_70 {dimension_numbers = #tpu.dot_dimension_numbers<[1], [0], [0], [1], [0, 0, 1, 1], [], []>} : vector<224x256xbf16>, vector<256x256xbf16>, vector<224x256xf32> -> vector<224x256xf32>
    %79 = arith.addf %73, %78 : vector<224x256xf32>
    %c0_71 = arith.constant 0 : index
    %c0_72 = arith.constant 0 : index
    %80 = vector.load %arg5[%c0_71, %c0_72] : memref<1x256xf32, #tpu.memory_space<vmem>>, vector<1x256xf32>
    %81 = vector.broadcast %80 : vector<1x256xf32> to vector<224x256xf32>
    %82 = arith.addf %79, %81 : vector<224x256xf32>
    %cst_73 = arith.constant 0.000000e+00 : f32
    %83 = vector.broadcast %cst_73 : f32 to vector<224x256xf32>
    %84 = arith.maximumf %82, %83 : vector<224x256xf32>
    %c224 = arith.constant 224 : index
    %c0_74 = arith.constant 0 : index
    %85 = vector.load %arg16[%c224, %c0_74] : memref<456x256xf32, #tpu.memory_space<vmem>>, vector<224x256xf32>
    tpu.vector_store %arg16[%c224, %c0_74], %84 {strides = array<i32>} : memref<456x256xf32, #tpu.memory_space<vmem>>, vector<224x256xf32>,
    %cst_75 = arith.constant 0.000000e+00 : f32
    %86 = vector.broadcast %cst_75 : f32 to vector<208x256xf32>
    %c0_76 = arith.constant 0 : index
    %c0_77 = arith.constant 0 : index
    %87 = vector.load %arg16[%c0_76, %c0_77] : memref<456x256xf32, #tpu.memory_space<vmem>>, vector<208x256xf32>
    %88 = arith.truncf %87 : vector<208x256xf32> to vector<208x256xbf16>
    %c0_78 = arith.constant 0 : index
    %c0_79 = arith.constant 0 : index
    %c0_80 = arith.constant 0 : index
    %89 = vector.load %arg6[%c0_78, %c0_79, %c0_80] : memref<4x256x256xbf16, #tpu.memory_space<vmem>>, vector<1x256x256xbf16>
    %90 = vector.shape_cast %89 : vector<1x256x256xbf16> to vector<256x256xbf16>
    %cst_81 = arith.constant dense<0.000000e+00> : vector<208x256xf32>
    %91 = tpu.matmul %88, %90, %cst_81 {dimension_numbers = #tpu.dot_dimension_numbers<[1], [0], [0], [1], [0, 0, 1, 1], [], []>} : vector<208x256xbf16>, vector<256x256xbf16>, vector<208x256xf32> -> vector<208x256xf32>
    %92 = arith.addf %86, %91 : vector<208x256xf32>
    %c1_82 = arith.constant 1 : index
    %c0_83 = arith.constant 0 : index
    %93 = vector.load %arg16[%c1_82, %c0_83] : memref<456x256xf32, #tpu.memory_space<vmem>>, vector<208x256xf32>
    %94 = arith.truncf %93 : vector<208x256xf32> to vector<208x256xbf16>
    %c1_84 = arith.constant 1 : index
    %c0_85 = arith.constant 0 : index
    %c0_86 = arith.constant 0 : index
    %95 = vector.load %arg6[%c1_84, %c0_85, %c0_86] : memref<4x256x256xbf16, #tpu.memory_space<vmem>>, vector<1x256x256xbf16>
    %96 = vector.shape_cast %95 : vector<1x256x256xbf16> to vector<256x256xbf16>
    %cst_87 = arith.constant dense<0.000000e+00> : vector<208x256xf32>
    %97 = tpu.matmul %94, %96, %cst_87 {dimension_numbers = #tpu.dot_dimension_numbers<[1], [0], [0], [1], [0, 0, 1, 1], [], []>} : vector<208x256xbf16>, vector<256x256xbf16>, vector<208x256xf32> -> vector<208x256xf32>
    %98 = arith.addf %92, %97 : vector<208x256xf32>
    %c16_88 = arith.constant 16 : index
    %c0_89 = arith.constant 0 : index
    %99 = vector.load %arg16[%c16_88, %c0_89] : memref<456x256xf32, #tpu.memory_space<vmem>>, vector<208x256xf32>
    %100 = arith.truncf %99 : vector<208x256xf32> to vector<208x256xbf16>
    %c2_90 = arith.constant 2 : index
    %c0_91 = arith.constant 0 : index
    %c0_92 = arith.constant 0 : index
    %101 = vector.load %arg6[%c2_90, %c0_91, %c0_92] : memref<4x256x256xbf16, #tpu.memory_space<vmem>>, vector<1x256x256xbf16>
    %102 = vector.shape_cast %101 : vector<1x256x256xbf16> to vector<256x256xbf16>
    %cst_93 = arith.constant dense<0.000000e+00> : vector<208x256xf32>
    %103 = tpu.matmul %100, %102, %cst_93 {dimension_numbers = #tpu.dot_dimension_numbers<[1], [0], [0], [1], [0, 0, 1, 1], [], []>} : vector<208x256xbf16>, vector<256x256xbf16>, vector<208x256xf32> -> vector<208x256xf32>
    %104 = arith.addf %98, %103 : vector<208x256xf32>
    %c17_94 = arith.constant 17 : index
    %c0_95 = arith.constant 0 : index
    %105 = vector.load %arg16[%c17_94, %c0_95] : memref<456x256xf32, #tpu.memory_space<vmem>>, vector<208x256xf32>
    %106 = arith.truncf %105 : vector<208x256xf32> to vector<208x256xbf16>
    %c3_96 = arith.constant 3 : index
    %c0_97 = arith.constant 0 : index
    %c0_98 = arith.constant 0 : index
    %107 = vector.load %arg6[%c3_96, %c0_97, %c0_98] : memref<4x256x256xbf16, #tpu.memory_space<vmem>>, vector<1x256x256xbf16>
    %108 = vector.shape_cast %107 : vector<1x256x256xbf16> to vector<256x256xbf16>
    %cst_99 = arith.constant dense<0.000000e+00> : vector<208x256xf32>
    %109 = tpu.matmul %106, %108, %cst_99 {dimension_numbers = #tpu.dot_dimension_numbers<[1], [0], [0], [1], [0, 0, 1, 1], [], []>} : vector<208x256xbf16>, vector<256x256xbf16>, vector<208x256xf32> -> vector<208x256xf32>
    %110 = arith.addf %104, %109 : vector<208x256xf32>
    %c0_100 = arith.constant 0 : index
    %c0_101 = arith.constant 0 : index
    %111 = vector.load %arg7[%c0_100, %c0_101] : memref<1x256xf32, #tpu.memory_space<vmem>>, vector<1x256xf32>
    %112 = vector.broadcast %111 : vector<1x256xf32> to vector<208x256xf32>
    %113 = arith.addf %110, %112 : vector<208x256xf32>
    %cst_102 = arith.constant 0.000000e+00 : f32
    %114 = vector.broadcast %cst_102 : f32 to vector<208x256xf32>
    %115 = arith.maximumf %113, %114 : vector<208x256xf32>
    %116 = tpu.iota {dimensions = array<i32: 0>} : vector<208x256xi32>
    %c15_i32 = arith.constant 15 : i32
    %117 = vector.broadcast %c15_i32 : i32 to vector<208x256xi32>
    %118 = arith.andi %116, %117 : vector<208x256xi32>
    %c13_i32 = arith.constant 13 : i32
    %119 = vector.broadcast %c13_i32 : i32 to vector<208x256xi32>
    %120 = arith.cmpi slt, %118, %119 : vector<208x256xi32>
    %cst_103 = arith.constant 0.000000e+00 : f32
    %121 = vector.broadcast %cst_103 : f32 to vector<208x256xf32>
    %122 = arith.select %120, %115, %121 : vector<208x256xi1>, vector<208x256xf32>
    %cst_104 = arith.constant dense<0.000000e+00> : vector<256xf32>
    %123 = vector.multi_reduction <add>, %122, %cst_104 [0] : vector<208x256xf32> to vector<256xf32>
    %124 = vector.shape_cast %123 : vector<256xf32> to vector<1x256xf32>
    %cst_105 = arith.constant 5.917160e-03 : f32
    %125 = vector.broadcast %cst_105 : f32 to vector<1x256xf32>
    %126 = arith.mulf %124, %125 : vector<1x256xf32>
    %c0_106 = arith.constant 0 : index
    %c0_107 = arith.constant 0 : index
    %127 = vector.load %arg17[%c0_106, %c0_107] : memref<8x256xf32, #tpu.memory_space<vmem>>, vector<1x256xf32>
    tpu.vector_store %arg17[%c0_106, %c0_107], %126 {strides = array<i32>} : memref<8x256xf32, #tpu.memory_space<vmem>>, vector<1x256xf32>,
    %cst_108 = arith.constant 0.000000e+00 : f32
    %128 = vector.broadcast %cst_108 : f32 to vector<208x256xf32>
    %c224_109 = arith.constant 224 : index
    %c0_110 = arith.constant 0 : index
    %129 = vector.load %arg16[%c224_109, %c0_110] : memref<456x256xf32, #tpu.memory_space<vmem>>, vector<208x256xf32>
    %130 = arith.truncf %129 : vector<208x256xf32> to vector<208x256xbf16>
    %c0_111 = arith.constant 0 : index
    %c0_112 = arith.constant 0 : index
    %c0_113 = arith.constant 0 : index
    %131 = vector.load %arg6[%c0_111, %c0_112, %c0_113] : memref<4x256x256xbf16, #tpu.memory_space<vmem>>, vector<1x256x256xbf16>
    %132 = vector.shape_cast %131 : vector<1x256x256xbf16> to vector<256x256xbf16>
    %cst_114 = arith.constant dense<0.000000e+00> : vector<208x256xf32>
    %133 = tpu.matmul %130, %132, %cst_114 {dimension_numbers = #tpu.dot_dimension_numbers<[1], [0], [0], [1], [0, 0, 1, 1], [], []>} : vector<208x256xbf16>, vector<256x256xbf16>, vector<208x256xf32> -> vector<208x256xf32>
    %134 = arith.addf %128, %133 : vector<208x256xf32>
    %c225 = arith.constant 225 : index
    %c0_115 = arith.constant 0 : index
    %135 = vector.load %arg16[%c225, %c0_115] : memref<456x256xf32, #tpu.memory_space<vmem>>, vector<208x256xf32>
    %136 = arith.truncf %135 : vector<208x256xf32> to vector<208x256xbf16>
    %c1_116 = arith.constant 1 : index
    %c0_117 = arith.constant 0 : index
    %c0_118 = arith.constant 0 : index
    %137 = vector.load %arg6[%c1_116, %c0_117, %c0_118] : memref<4x256x256xbf16, #tpu.memory_space<vmem>>, vector<1x256x256xbf16>
    %138 = vector.shape_cast %137 : vector<1x256x256xbf16> to vector<256x256xbf16>
    %cst_119 = arith.constant dense<0.000000e+00> : vector<208x256xf32>
    %139 = tpu.matmul %136, %138, %cst_119 {dimension_numbers = #tpu.dot_dimension_numbers<[1], [0], [0], [1], [0, 0, 1, 1], [], []>} : vector<208x256xbf16>, vector<256x256xbf16>, vector<208x256xf32> -> vector<208x256xf32>
    %140 = arith.addf %134, %139 : vector<208x256xf32>
    %c240_120 = arith.constant 240 : index
    %c0_121 = arith.constant 0 : index
    %141 = vector.load %arg16[%c240_120, %c0_121] : memref<456x256xf32, #tpu.memory_space<vmem>>, vector<208x256xf32>
    %142 = arith.truncf %141 : vector<208x256xf32> to vector<208x256xbf16>
    %c2_122 = arith.constant 2 : index
    %c0_123 = arith.constant 0 : index
    %c0_124 = arith.constant 0 : index
    %143 = vector.load %arg6[%c2_122, %c0_123, %c0_124] : memref<4x256x256xbf16, #tpu.memory_space<vmem>>, vector<1x256x256xbf16>
    %144 = vector.shape_cast %143 : vector<1x256x256xbf16> to vector<256x256xbf16>
    %cst_125 = arith.constant dense<0.000000e+00> : vector<208x256xf32>
    %145 = tpu.matmul %142, %144, %cst_125 {dimension_numbers = #tpu.dot_dimension_numbers<[1], [0], [0], [1], [0, 0, 1, 1], [], []>} : vector<208x256xbf16>, vector<256x256xbf16>, vector<208x256xf32> -> vector<208x256xf32>
    %146 = arith.addf %140, %145 : vector<208x256xf32>
    %c241_126 = arith.constant 241 : index
    %c0_127 = arith.constant 0 : index
    %147 = vector.load %arg16[%c241_126, %c0_127] : memref<456x256xf32, #tpu.memory_space<vmem>>, vector<208x256xf32>
    %148 = arith.truncf %147 : vector<208x256xf32> to vector<208x256xbf16>
    %c3_128 = arith.constant 3 : index
    %c0_129 = arith.constant 0 : index
    %c0_130 = arith.constant 0 : index
    %149 = vector.load %arg6[%c3_128, %c0_129, %c0_130] : memref<4x256x256xbf16, #tpu.memory_space<vmem>>, vector<1x256x256xbf16>
    %150 = vector.shape_cast %149 : vector<1x256x256xbf16> to vector<256x256xbf16>
    %cst_131 = arith.constant dense<0.000000e+00> : vector<208x256xf32>
    %151 = tpu.matmul %148, %150, %cst_131 {dimension_numbers = #tpu.dot_dimension_numbers<[1], [0], [0], [1], [0, 0, 1, 1], [], []>} : vector<208x256xbf16>, vector<256x256xbf16>, vector<208x256xf32> -> vector<208x256xf32>
    %152 = arith.addf %146, %151 : vector<208x256xf32>
    %c0_132 = arith.constant 0 : index
    %c0_133 = arith.constant 0 : index
    %153 = vector.load %arg7[%c0_132, %c0_133] : memref<1x256xf32, #tpu.memory_space<vmem>>, vector<1x256xf32>
    %154 = vector.broadcast %153 : vector<1x256xf32> to vector<208x256xf32>
    %155 = arith.addf %152, %154 : vector<208x256xf32>
    %cst_134 = arith.constant 0.000000e+00 : f32
    %156 = vector.broadcast %cst_134 : f32 to vector<208x256xf32>
    %157 = arith.maximumf %155, %156 : vector<208x256xf32>
    %158 = tpu.iota {dimensions = array<i32: 0>} : vector<208x256xi32>
    %c15_i32_135 = arith.constant 15 : i32
    %159 = vector.broadcast %c15_i32_135 : i32 to vector<208x256xi32>
    %160 = arith.andi %158, %159 : vector<208x256xi32>
    %c13_i32_136 = arith.constant 13 : i32
    %161 = vector.broadcast %c13_i32_136 : i32 to vector<208x256xi32>
    %162 = arith.cmpi slt, %160, %161 : vector<208x256xi32>
    %cst_137 = arith.constant 0.000000e+00 : f32
    %163 = vector.broadcast %cst_137 : f32 to vector<208x256xf32>
    %164 = arith.select %162, %157, %163 : vector<208x256xi1>, vector<208x256xf32>
    %cst_138 = arith.constant dense<0.000000e+00> : vector<256xf32>
    %165 = vector.multi_reduction <add>, %164, %cst_138 [0] : vector<208x256xf32> to vector<256xf32>
    %166 = vector.shape_cast %165 : vector<256xf32> to vector<1x256xf32>
    %cst_139 = arith.constant 5.917160e-03 : f32
    %167 = vector.broadcast %cst_139 : f32 to vector<1x256xf32>
    %168 = arith.mulf %166, %167 : vector<1x256xf32>
    %c1_140 = arith.constant 1 : index
    %c0_141 = arith.constant 0 : index
    %169 = vector.load %arg17[%c1_140, %c0_141] : memref<8x256xf32, #tpu.memory_space<vmem>>, vector<1x256xf32>
    tpu.vector_store %arg17[%c1_140, %c0_141], %168 {strides = array<i32>} : memref<8x256xf32, #tpu.memory_space<vmem>>, vector<1x256xf32>,
    %c0_142 = arith.constant 0 : index
    %c0_143 = arith.constant 0 : index
    %170 = vector.load %arg17[%c0_142, %c0_143] : memref<8x256xf32, #tpu.memory_space<vmem>>, vector<8x256xf32>
    %171 = arith.truncf %170 : vector<8x256xf32> to vector<8x256xbf16>
    %c0_144 = arith.constant 0 : index
    %c0_145 = arith.constant 0 : index
    %172 = vector.load %arg8[%c0_144, %c0_145] : memref<256x256xbf16, #tpu.memory_space<vmem>>, vector<256x256xbf16>
    %cst_146 = arith.constant dense<0.000000e+00> : vector<8x256xf32>
    %173 = tpu.matmul %171, %172, %cst_146 {dimension_numbers = #tpu.dot_dimension_numbers<[1], [0], [0], [1], [0, 0, 1, 1], [], []>} : vector<8x256xbf16>, vector<256x256xbf16>, vector<8x256xf32> -> vector<8x256xf32>
    %c0_147 = arith.constant 0 : index
    %c0_148 = arith.constant 0 : index
    %174 = vector.load %arg9[%c0_147, %c0_148] : memref<1x256xf32, #tpu.memory_space<vmem>>, vector<1x256xf32>
    %175 = vector.broadcast %174 : vector<1x256xf32> to vector<8x256xf32>
    %176 = arith.addf %173, %175 : vector<8x256xf32>
    %cst_149 = arith.constant 0.000000e+00 : f32
    %177 = vector.broadcast %cst_149 : f32 to vector<8x256xf32>
    %178 = arith.maximumf %176, %177 : vector<8x256xf32>
    %179 = arith.truncf %178 : vector<8x256xf32> to vector<8x256xbf16>
    %c0_150 = arith.constant 0 : index
    %c0_151 = arith.constant 0 : index
    %180 = vector.load %arg10[%c0_150, %c0_151] : memref<256x128xbf16, #tpu.memory_space<vmem>>, vector<256x128xbf16>
    %cst_152 = arith.constant dense<0.000000e+00> : vector<8x128xf32>
    %181 = tpu.matmul %179, %180, %cst_152 {dimension_numbers = #tpu.dot_dimension_numbers<[1], [0], [0], [1], [0, 0, 1, 1], [], []>} : vector<8x256xbf16>, vector<256x128xbf16>, vector<8x128xf32> -> vector<8x128xf32>
    %c0_153 = arith.constant 0 : index
    %c0_154 = arith.constant 0 : index
    %182 = vector.load %arg11[%c0_153, %c0_154] : memref<1x128xf32, #tpu.memory_space<vmem>>, vector<1x128xf32>
    %183 = vector.broadcast %182 : vector<1x128xf32> to vector<8x128xf32>
    %184 = arith.addf %181, %183 : vector<8x128xf32>
    %185 = tpu.iota {dimensions = array<i32: 1>} : vector<8x128xi32>
    %c32_i32 = arith.constant 32 : i32
    %186 = vector.broadcast %c32_i32 : i32 to vector<8x128xi32>
    %187 = arith.cmpi slt, %185, %186 : vector<8x128xi32>
    %cst_155 = arith.constant 0.000000e+00 : f32
    %188 = vector.broadcast %cst_155 : f32 to vector<8x128xf32>
    %189 = arith.maximumf %184, %188 : vector<8x128xf32>
    %190 = arith.select %187, %189, %184 : vector<8x128xi1>, vector<8x128xf32>
    %191 = arith.truncf %190 : vector<8x128xf32> to vector<8x128xbf16>
    %c0_156 = arith.constant 0 : index
    %c0_157 = arith.constant 0 : index
    %192 = vector.load %arg12[%c0_156, %c0_157] : memref<128x128xbf16, #tpu.memory_space<vmem>>, vector<128x128xbf16>
    %cst_158 = arith.constant dense<0.000000e+00> : vector<8x128xf32>
    %193 = tpu.matmul %191, %192, %cst_158 {dimension_numbers = #tpu.dot_dimension_numbers<[1], [0], [0], [1], [0, 0, 1, 1], [], []>} : vector<8x128xbf16>, vector<128x128xbf16>, vector<8x128xf32> -> vector<8x128xf32>
    %c0_159 = arith.constant 0 : index
    %c0_160 = arith.constant 0 : index
    %194 = vector.load %arg13[%c0_159, %c0_160] : memref<1x128xf32, #tpu.memory_space<vmem>>, vector<1x128xf32>
    %195 = vector.broadcast %194 : vector<1x128xf32> to vector<8x128xf32>
    %196 = arith.addf %193, %195 : vector<8x128xf32>
    %c0_161 = arith.constant 0 : index
    %c0_162 = arith.constant 0 : index
    %197 = vector.load %arg14[%c0_161, %c0_162] : memref<8x128xf32, #tpu.memory_space<vmem>>, vector<8x128xf32>
    tpu.vector_store %arg14[%c0_161, %c0_162], %196 {strides = array<i32>} : memref<8x128xf32, #tpu.memory_space<vmem>>, vector<8x128xf32>,
    return
  }
  func.func @transform_0(%arg0: i32) -> (i32, i32) {
    %c0_i32 = arith.constant 0 : i32
    %c0_i32_0 = arith.constant 0 : i32
    %c0_i32_1 = arith.constant 0 : i32
    return %c0_i32, %c0_i32_0 : i32, i32
  }
  func.func @transform_1(%arg0: i32) -> (i32, i32) {
    %c0_i32 = arith.constant 0 : i32
    %c0_i32_0 = arith.constant 0 : i32
    %c0_i32_1 = arith.constant 0 : i32
    return %c0_i32, %c0_i32_0 : i32, i32
  }
  func.func @transform_2(%arg0: i32) -> (i32, i32) {
    %c0_i32 = arith.constant 0 : i32
    %c0_i32_0 = arith.constant 0 : i32
    %c0_i32_1 = arith.constant 0 : i32
    return %c0_i32, %c0_i32_0 : i32, i32
  }
  func.func @transform_3(%arg0: i32) -> (i32, i32, i32) {
    %c0_i32 = arith.constant 0 : i32
    %c0_i32_0 = arith.constant 0 : i32
    %c0_i32_1 = arith.constant 0 : i32
    %c0_i32_2 = arith.constant 0 : i32
    return %c0_i32, %c0_i32_0, %c0_i32_1 : i32, i32, i32
  }
  func.func @transform_4(%arg0: i32) -> (i32, i32) {
    %c0_i32 = arith.constant 0 : i32
    %c0_i32_0 = arith.constant 0 : i32
    %c0_i32_1 = arith.constant 0 : i32
    return %c0_i32, %c0_i32_0 : i32, i32
  }
  func.func @transform_5(%arg0: i32) -> (i32, i32, i32) {
    %c0_i32 = arith.constant 0 : i32
    %c0_i32_0 = arith.constant 0 : i32
    %c0_i32_1 = arith.constant 0 : i32
    %c0_i32_2 = arith.constant 0 : i32
    return %c0_i32, %c0_i32_0, %c0_i32_1 : i32, i32, i32
  }
  func.func @transform_6(%arg0: i32) -> (i32, i32) {
    %c0_i32 = arith.constant 0 : i32
    %c0_i32_0 = arith.constant 0 : i32
    %c0_i32_1 = arith.constant 0 : i32
    return %c0_i32, %c0_i32_0 : i32, i32
  }
  func.func @transform_7(%arg0: i32) -> (i32, i32) {
    %c0_i32 = arith.constant 0 : i32
    %c0_i32_0 = arith.constant 0 : i32
    %c0_i32_1 = arith.constant 0 : i32
    return %c0_i32, %c0_i32_0 : i32, i32
  }
  func.func @transform_8(%arg0: i32) -> (i32, i32) {
    %c0_i32 = arith.constant 0 : i32
    %c0_i32_0 = arith.constant 0 : i32
    %c0_i32_1 = arith.constant 0 : i32
    return %c0_i32, %c0_i32_0 : i32, i32
  }
  func.func @transform_9(%arg0: i32) -> (i32, i32) {
    %c0_i32 = arith.constant 0 : i32
    %c0_i32_0 = arith.constant 0 : i32
    %c0_i32_1 = arith.constant 0 : i32
    return %c0_i32, %c0_i32_0 : i32, i32
  }
  func.func @transform_10(%arg0: i32) -> (i32, i32) {
    %c0_i32 = arith.constant 0 : i32
    %c0_i32_0 = arith.constant 0 : i32
    %c0_i32_1 = arith.constant 0 : i32
    return %c0_i32, %c0_i32_0 : i32, i32
  }
  func.func @transform_11(%arg0: i32) -> (i32, i32) {
    %c0_i32 = arith.constant 0 : i32
    %c0_i32_0 = arith.constant 0 : i32
    %c0_i32_1 = arith.constant 0 : i32
    return %c0_i32, %c0_i32_0 : i32, i32
  }
  func.func @transform_12(%arg0: i32) -> (i32, i32) {
    %c0_i32 = arith.constant 0 : i32
    %c0_i32_0 = arith.constant 0 : i32
    %c0_i32_1 = arith.constant 0 : i32
    return %c0_i32, %c0_i32_0 : i32, i32
  }
  func.func @transform_13(%arg0: i32) -> (i32, i32) {
    %c0_i32 = arith.constant 0 : i32
    %c0_i32_0 = arith.constant 0 : i32
    %c0_i32_1 = arith.constant 0 : i32
    return %c0_i32, %c0_i32_0 : i32, i32
  }
}

</mosaic_0001>

<llo_original>
// kernel: convd3qn_forward.1
$region0: #{convd3qn_forward.1}
  #allocation0 [shape = 'u32[]', space=smem, size = 0x4, offset = 0x4, fixed_abs, tag = 'smem constant byte address 0x4 - core index']
  #allocation1 [shape = 'u32[144,128]{1,0:T(1,128)}', space=vmem, size = 0x12000, scoped, tag = 'internal scratch']
  #allocation2 [shape = 'f32[488,256]{1,0:T(8,128)}', space=vmem, size = 0x7a000, scoped, tag = 'scratch operand']
  #allocation3 [shape = 'f32[456,256]{1,0:T(8,128)}', space=vmem, size = 0x72000, scoped, tag = 'scratch operand']
  #allocation4 [shape = 'f32[8,256]{1,0:T(8,128)}', space=vmem, size = 0x2000, scoped, tag = 'scratch operand']
  %s0 = inlined_call_operand.vmem [shape: f32[480,8], index: 0, kind: input, shape index: {}]
  %s1 = inlined_call_operand.vmem [shape: f32[8,256], index: 1, kind: input, shape index: {}]
  %s2 = inlined_call_operand.vmem [shape: f32[1,256], index: 2, kind: input, shape index: {}]
  %s3 = inlined_call_operand.vmem [shape: bf16[4,256,256], index: 3, kind: input, shape index: {}]
  %s4 = inlined_call_operand.vmem [shape: f32[1,256], index: 4, kind: input, shape index: {}]
  %s5 = inlined_call_operand.vmem [shape: bf16[4,256,256], index: 5, kind: input, shape index: {}]
  %s6 = inlined_call_operand.vmem [shape: f32[1,256], index: 6, kind: input, shape index: {}]
  %s7 = inlined_call_operand.vmem [shape: bf16[256,256], index: 7, kind: input, shape index: {}]
  %s8 = inlined_call_operand.vmem [shape: f32[1,256], index: 8, kind: input, shape index: {}]
  %s9 = inlined_call_operand.vmem [shape: bf16[256,128], index: 9, kind: input, shape index: {}]
  %s10 = inlined_call_operand.vmem [shape: f32[1,128], index: 10, kind: input, shape index: {}]
  %s11 = inlined_call_operand.vmem [shape: bf16[128,128], index: 11, kind: input, shape index: {}]
  %s12 = inlined_call_operand.vmem [shape: f32[1,128], index: 12, kind: input, shape index: {}]
  %s13 = inlined_call_operand.vmem [shape: f32[8,128], index: 13, kind: output, shape index: {}]
  %s14 = sld [smem:[#allocation0]]
  $region62: #{convd3qn_forward.1} parent=0
    _
  %s16 = ssub.s32 1, %s14
  %s17 = scalar_select 0, %s16, %s14
  // Predicated region
  $region2: #{convd3qn_forward.1} parent=0 // pred_check
    _
  $region3: #{convd3qn_forward.1} parent=0 // pred_check_branch
    %19 = sbr.rel (0) target = $region5
  $region4: #{convd3qn_forward.1} parent=0 // pred_region
    _
  $region5: #{convd3qn_forward.1} parent=0 // pred_fallthru
    _
  // Predicated region
  $region6: #{convd3qn_forward.1} parent=0 // pred_check
    _
  $region7: #{convd3qn_forward.1} parent=0 // pred_check_branch
    %21 = sbr.rel (0) target = $region9
  $region8: #{convd3qn_forward.1} parent=0 // pred_region
    _
  $region9: #{convd3qn_forward.1} parent=0 // pred_fallthru
    _
  // Predicated region
  $region10: #{convd3qn_forward.1} parent=0 // pred_check
    _
  $region11: #{convd3qn_forward.1} parent=0 // pred_check_branch
    %23 = sbr.rel (0) target = $region13
  $region12: #{convd3qn_forward.1} parent=0 // pred_region
    _
  $region13: #{convd3qn_forward.1} parent=0 // pred_fallthru
    _
  // Predicated region
  $region14: #{convd3qn_forward.1} parent=0 // pred_check
    _
  $region15: #{convd3qn_forward.1} parent=0 // pred_check_branch
    %25 = sbr.rel (0) target = $region17
  $region16: #{convd3qn_forward.1} parent=0 // pred_region
    _
  $region17: #{convd3qn_forward.1} parent=0 // pred_fallthru
    _
  // Predicated region
  $region18: #{convd3qn_forward.1} parent=0 // pred_check
    _
  $region19: #{convd3qn_forward.1} parent=0 // pred_check_branch
    %27 = sbr.rel (0) target = $region21
  $region20: #{convd3qn_forward.1} parent=0 // pred_region
    _
  $region21: #{convd3qn_forward.1} parent=0 // pred_fallthru
    _
  // Predicated region
  $region22: #{convd3qn_forward.1} parent=0 // pred_check
    _
  $region23: #{convd3qn_forward.1} parent=0 // pred_check_branch
    %29 = sbr.rel (0) target = $region25
  $region24: #{convd3qn_forward.1} parent=0 // pred_region
    _
  $region25: #{convd3qn_forward.1} parent=0 // pred_fallthru
    _
  // Predicated region
  $region26: #{convd3qn_forward.1} parent=0 // pred_check
    _
  $region27: #{convd3qn_forward.1} parent=0 // pred_check_branch
    %31 = sbr.rel (0) target = $region29
  $region28: #{convd3qn_forward.1} parent=0 // pred_region
    _
  $region29: #{convd3qn_forward.1} parent=0 // pred_fallthru
    _
  // Predicated region
  $region30: #{convd3qn_forward.1} parent=0 // pred_check
    _
  $region31: #{convd3qn_forward.1} parent=0 // pred_check_branch
    %33 = sbr.rel (0) target = $region33
  $region32: #{convd3qn_forward.1} parent=0 // pred_region
    _
  $region33: #{convd3qn_forward.1} parent=0 // pred_fallthru
    _
  // Predicated region
  $region34: #{convd3qn_forward.1} parent=0 // pred_check
    _
  $region35: #{convd3qn_forward.1} parent=0 // pred_check_branch
    %35 = sbr.rel (0) target = $region37
  $region36: #{convd3qn_forward.1} parent=0 // pred_region
    _
  $region37: #{convd3qn_forward.1} parent=0 // pred_fallthru
    _
  // Predicated region
  $region38: #{convd3qn_forward.1} parent=0 // pred_check
    _
  $region39: #{convd3qn_forward.1} parent=0 // pred_check_branch
    %37 = sbr.rel (0) target = $region41
  $region40: #{convd3qn_forward.1} parent=0 // pred_region
    _
  $region41: #{convd3qn_forward.1} parent=0 // pred_fallthru
    _
  // Predicated region
  $region42: #{convd3qn_forward.1} parent=0 // pred_check
    _
  $region43: #{convd3qn_forward.1} parent=0 // pred_check_branch
    %39 = sbr.rel (0) target = $region45
  $region44: #{convd3qn_forward.1} parent=0 // pred_region
    _
  $region45: #{convd3qn_forward.1} parent=0 // pred_fallthru
    _
  // Predicated region
  $region46: #{convd3qn_forward.1} parent=0 // pred_check
    _
  $region47: #{convd3qn_forward.1} parent=0 // pred_check_branch
    %41 = sbr.rel (0) target = $region49
  $region48: #{convd3qn_forward.1} parent=0 // pred_region
    _
  $region49: #{convd3qn_forward.1} parent=0 // pred_fallthru
    _
  // Predicated region
  $region50: #{convd3qn_forward.1} parent=0 // pred_check
    _
  $region51: #{convd3qn_forward.1} parent=0 // pred_check_branch
    %43 = sbr.rel (0) target = $region53
  $region52: #{convd3qn_forward.1} parent=0 // pred_region
    _
  $region53: #{convd3qn_forward.1} parent=0 // pred_fallthru
    _
  %45 = vst [vmem:[#allocation2 + $0x3c0] sm:$0xff] 0.0
  %46 = vst [vmem:[#allocation2 + $0x3c8] sm:$0xff] 0.0
  %47 = vst [vmem:[#allocation3 + $0x380] sm:$0xff] 0.0
  %48 = vst [vmem:[#allocation3 + $0x388] sm:$0xff] 0.0
  %49 = vst [vmem:[#allocation4] sm:$0xff] 0.0
  %50 = vst [vmem:[#allocation4 + $0x8] sm:$0xff] 0.0
  %v51 = vld [vmem:[%s0] sm:$0xff]
  %v52 = vld [vmem:[%s0 + $0x8] sm:$0xff]
  %v53 = vld [vmem:[%s0 + $0x10] sm:$0xff]
  %v54 = vld [vmem:[%s0 + $0x18] sm:$0xff]
  %v55 = vld [vmem:[%s0 + $0x20] sm:$0xff]
  %v56 = vld [vmem:[%s0 + $0x28] sm:$0xff]
  %v57 = vld [vmem:[%s0 + $0x30] sm:$0xff]
  %v58 = vld [vmem:[%s0 + $0x38] sm:$0xff]
  %v59 = vld [vmem:[%s0 + $0x40] sm:$0xff]
  %v60 = vld [vmem:[%s0 + $0x48] sm:$0xff]
  %v61 = vld [vmem:[%s0 + $0x50] sm:$0xff]
  %v62 = vld [vmem:[%s0 + $0x58] sm:$0xff]
  %v63 = vld [vmem:[%s0 + $0x60] sm:$0xff]
  %v64 = vld [vmem:[%s0 + $0x68] sm:$0xff]
  %v65 = vld [vmem:[%s0 + $0x70] sm:$0xff]
  %v66 = vld [vmem:[%s0 + $0x78] sm:$0xff]
  %v67 = vld [vmem:[%s0 + $0x80] sm:$0xff]
  %v68 = vld [vmem:[%s0 + $0x88] sm:$0xff]
  %v69 = vld [vmem:[%s0 + $0x90] sm:$0xff]
  %v70 = vld [vmem:[%s0 + $0x98] sm:$0xff]
  %v71 = vld [vmem:[%s0 + $0xa0] sm:$0xff]
  %v72 = vld [vmem:[%s0 + $0xa8] sm:$0xff]
  %v73 = vld [vmem:[%s0 + $0xb0] sm:$0xff]
  %v74 = vld [vmem:[%s0 + $0xb8] sm:$0xff]
  %v75 = vld [vmem:[%s0 + $0xc0] sm:$0xff]
  %v76 = vld [vmem:[%s0 + $0xc8] sm:$0xff]
  %v77 = vld [vmem:[%s0 + $0xd0] sm:$0xff]
  %v78 = vld [vmem:[%s0 + $0xd8] sm:$0xff]
  %v79 = vld [vmem:[%s0 + $0xe0] sm:$0xff]
  %v80 = vld [vmem:[%s0 + $0xe8] sm:$0xff]
  %v81 = vld [vmem:[%s1] sm:$0xff]
  %v82 = vld [vmem:[%s1 + $0x8] sm:$0xff]
  %v83 = vld [vmem:[%s2] sm:$0x3]
  %v85 = vlaneseq
  %v86 = vshrl.u32 %v85, 7
  %v87 = vsub.s32 0, %v86
  %v88 = vrot.slane %v83, %v87
  %v89 = vlaneseq
  %v90 = vshrl.u32 %v89, 7
  %v91 = vsub.s32 1, %v90
  %v92 = vrot.slane %v83, %v91
  %vm95 = vcmask 64512
  %v97 = vsel %vm95, %v51, 0
  %v100 = vsel %vm95, %v52, 0
  %v103 = vsel %vm95, %v53, 0
  %v106 = vsel %vm95, %v54, 0
  %v109 = vsel %vm95, %v55, 0
  %v112 = vsel %vm95, %v56, 0
  %v115 = vsel %vm95, %v57, 0
  %v118 = vsel %vm95, %v58, 0
  %v121 = vsel %vm95, %v59, 0
  %v124 = vsel %vm95, %v60, 0
  %v127 = vsel %vm95, %v61, 0
  %v130 = vsel %vm95, %v62, 0
  %v133 = vsel %vm95, %v63, 0
  %v136 = vsel %vm95, %v64, 0
  %v139 = vsel %vm95, %v65, 0
  %v142 = vsel %vm95, %v66, 0
  %v145 = vsel %vm95, %v67, 0
  %v148 = vsel %vm95, %v68, 0
  %v151 = vsel %vm95, %v69, 0
  %v154 = vsel %vm95, %v70, 0
  %v157 = vsel %vm95, %v71, 0
  %v160 = vsel %vm95, %v72, 0
  %v163 = vsel %vm95, %v73, 0
  %v166 = vsel %vm95, %v74, 0
  %v169 = vsel %vm95, %v75, 0
  %v172 = vsel %vm95, %v76, 0
  %v175 = vsel %vm95, %v77, 0
  %v178 = vsel %vm95, %v78, 0
  %v181 = vsel %vm95, %v79, 0
  %v184 = vsel %vm95, %v80, 0
  %186 = vmatprep.subr.mxu0 %v82
  %187 = vmatpush1.msra.mxu0 %v81
  %188 = vmatprep.subr.mxu0 0.0
  %189 = vmatpush1.msra.mxu0 0.0
  %190 = vmatprep.subr.mxu0 0.0
  %191 = vmatpush1.msra.mxu0 0.0
  %192 = vmatprep.subr.mxu0 0.0
  %193 = vmatpush1.msra.mxu0 0.0
  %194 = vmatprep.subr.mxu0 0.0
  %195 = vmatpush1.msra.mxu0 0.0
  %196 = vmatprep.subr.mxu0 0.0
  %197 = vmatpush1.msra.mxu0 0.0
  %198 = vmatprep.subr.mxu0 0.0
  %199 = vmatpush1.msra.mxu0 0.0
  %200 = vmatprep.subr.mxu0 0.0
  %201 = vmatpush1.msra.mxu0 0.0
  %202 = vmatprep.subr.mxu0 0.0
  %203 = vmatpush1.msra.mxu0 0.0
  %204 = vmatprep.subr.mxu0 0.0
  %205 = vmatpush1.msra.mxu0 0.0
  %206 = vmatprep.subr.mxu0 0.0
  %207 = vmatpush1.msra.mxu0 0.0
  %208 = vmatprep.subr.mxu0 0.0
  %209 = vmatpush1.msra.mxu0 0.0
  %210 = vmatprep.subr.mxu0 0.0
  %211 = vmatpush1.msra.mxu0 0.0
  %212 = vmatprep.subr.mxu0 0.0
  %213 = vmatpush1.msra.mxu0 0.0
  %214 = vmatprep.subr.mxu0 0.0
  %215 = vmatpush1.msra.mxu0 0.0
  %216 = vmatprep.subr.mxu0 0.0
  %217 = vmatpush1.msra.mxu0 0.0
  %218 = vmatprep.subr.mxu0 0.0
  %219 = vmatpush1.msra.mxu0 0.0
  %220 = vmatprep.subr.mxu0 0.0
  %221 = vmatpush1.msra.mxu0 0.0
  %222 = vmatprep.subr.mxu0 0.0
  %223 = vmatpush1.msra.mxu0 0.0
  %224 = vmatprep.subr.mxu0 0.0
  %225 = vmatpush1.msra.mxu0 0.0
  %226 = vmatprep.subr.mxu0 0.0
  %227 = vmatpush1.msra.mxu0 0.0
  %228 = vmatprep.subr.mxu0 0.0
  %229 = vmatpush1.msra.mxu0 0.0
  %230 = vmatprep.subr.mxu0 0.0
  %231 = vmatpush1.msra.mxu0 0.0
  %232 = vmatprep.subr.mxu0 0.0
  %233 = vmatpush1.msra.mxu0 0.0
  %234 = vmatprep.subr.mxu0 0.0
  %235 = vmatpush1.msra.mxu0 0.0
  %236 = vmatprep.subr.mxu0 0.0
  %237 = vmatpush1.msra.mxu0 0.0
  %238 = vmatprep.subr.mxu0 0.0
  %239 = vmatpush1.msra.mxu0 0.0
  %240 = vmatprep.subr.mxu0 0.0
  %241 = vmatpush1.msra.mxu0 0.0
  %242 = vmatprep.subr.mxu0 0.0
  %243 = vmatpush1.msra.mxu0 0.0
  %244 = vmatprep.subr.mxu0 0.0
  %245 = vmatpush1.msra.mxu0 0.0
  %246 = vmatprep.subr.mxu0 0.0
  %247 = vmatpush1.msra.mxu0 0.0
  %248 = vmatprep.subr.mxu0 0.0
  %249 = vmatpush1.msra.mxu0 0.0
  %250 = vmatprep.mubr.f32.mxu0 0.0
  %251 = vmatmul.mubr.f32.gmra.mrb[0].mxu0 %v97
  %v252 = vpop.f32.mrb[0].mxu0
  %v253 = vadd.f32 %v88, %v252
  %v254 = vpop.f32.mrb[0].mxu0
  %v255 = vadd.f32 %v92, %v254
  %256 = vmatprep.mubr.f32.mxu0 0.0
  %257 = vmatmul.mubr.f32.gmra.mrb[0].mxu0 %v100
  %v258 = vpop.f32.mrb[0].mxu0
  %v259 = vadd.f32 %v88, %v258
  %v260 = vpop.f32.mrb[0].mxu0
  %v261 = vadd.f32 %v92, %v260
  %262 = vmatprep.mubr.f32.mxu0 0.0
  %263 = vmatmul.mubr.f32.gmra.mrb[0].mxu0 %v103
  %v264 = vpop.f32.mrb[0].mxu0
  %v265 = vadd.f32 %v88, %v264
  %v266 = vpop.f32.mrb[0].mxu0
  %v267 = vadd.f32 %v92, %v266
  %268 = vmatprep.mubr.f32.mxu0 0.0
  %269 = vmatmul.mubr.f32.gmra.mrb[0].mxu0 %v106
  %v270 = vpop.f32.mrb[0].mxu0
  %v271 = vadd.f32 %v88, %v270
  %v272 = vpop.f32.mrb[0].mxu0
  %v273 = vadd.f32 %v92, %v272
  %274 = vmatprep.mubr.f32.mxu0 0.0
  %275 = vmatmul.mubr.f32.gmra.mrb[0].mxu0 %v109
  %v276 = vpop.f32.mrb[0].mxu0
  %v277 = vadd.f32 %v88, %v276
  %v278 = vpop.f32.mrb[0].mxu0
  %v279 = vadd.f32 %v92, %v278
  %280 = vmatprep.mubr.f32.mxu0 0.0
  %281 = vmatmul.mubr.f32.gmra.mrb[0].mxu0 %v112
  %v282 = vpop.f32.mrb[0].mxu0
  %v283 = vadd.f32 %v88, %v282
  %v284 = vpop.f32.mrb[0].mxu0
  %v285 = vadd.f32 %v92, %v284
  %286 = vmatprep.mubr.f32.mxu0 0.0
  %287 = vmatmul.mubr.f32.gmra.mrb[0].mxu0 %v115
  %v288 = vpop.f32.mrb[0].mxu0
  %v289 = vadd.f32 %v88, %v288
  %v290 = vpop.f32.mrb[0].mxu0
  %v291 = vadd.f32 %v92, %v290
  %292 = vmatprep.mubr.f32.mxu0 0.0
  %293 = vmatmul.mubr.f32.gmra.mrb[0].mxu0 %v118
  %v294 = vpop.f32.mrb[0].mxu0
  %v295 = vadd.f32 %v88, %v294
  %v296 = vpop.f32.mrb[0].mxu0
  %v297 = vadd.f32 %v92, %v296
  %298 = vmatprep.mubr.f32.mxu0 0.0
  %299 = vmatmul.mubr.f32.gmra.mrb[0].mxu0 %v121
  %v300 = vpop.f32.mrb[0].mxu0
  %v301 = vadd.f32 %v88, %v300
  %v302 = vpop.f32.mrb[0].mxu0
  %v303 = vadd.f32 %v92, %v302
  %304 = vmatprep.mubr.f32.mxu0 0.0
  %305 = vmatmul.mubr.f32.gmra.mrb[0].mxu0 %v124
  %v306 = vpop.f32.mrb[0].mxu0
  %v307 = vadd.f32 %v88, %v306
  %v308 = vpop.f32.mrb[0].mxu0
  %v309 = vadd.f32 %v92, %v308
  %310 = vmatprep.mubr.f32.mxu0 0.0
  %311 = vmatmul.mubr.f32.gmra.mrb[0].mxu0 %v127
  %v312 = vpop.f32.mrb[0].mxu0
  %v313 = vadd.f32 %v88, %v312
  %v314 = vpop.f32.mrb[0].mxu0
  %v315 = vadd.f32 %v92, %v314
  %316 = vmatprep.mubr.f32.mxu0 0.0
  %317 = vmatmul.mubr.f32.gmra.mrb[0].mxu0 %v130
  %v318 = vpop.f32.mrb[0].mxu0
  %v319 = vadd.f32 %v88, %v318
  %v320 = vpop.f32.mrb[0].mxu0
  %v321 = vadd.f32 %v92, %v320
  %322 = vmatprep.mubr.f32.mxu0 0.0
  %323 = vmatmul.mubr.f32.gmra.mrb[0].mxu0 %v133
  %v324 = vpop.f32.mrb[0].mxu0
  %v325 = vadd.f32 %v88, %v324
  %v326 = vpop.f32.mrb[0].mxu0
  %v327 = vadd.f32 %v92, %v326
  %328 = vmatprep.mubr.f32.mxu0 0.0
  %329 = vmatmul.mubr.f32.gmra.mrb[0].mxu0 %v136
  %v330 = vpop.f32.mrb[0].mxu0
  %v331 = vadd.f32 %v88, %v330
  %v332 = vpop.f32.mrb[0].mxu0
  %v333 = vadd.f32 %v92, %v332
  %334 = vmatprep.mubr.f32.mxu0 0.0
  %335 = vmatmul.mubr.f32.gmra.mrb[0].mxu0 %v139
  %v336 = vpop.f32.mrb[0].mxu0
  %v337 = vadd.f32 %v88, %v336
  %v338 = vpop.f32.mrb[0].mxu0
  %v339 = vadd.f32 %v92, %v338
  %340 = vmatprep.mubr.f32.mxu0 0.0
  %341 = vmatmul.mubr.f32.gmra.mrb[0].mxu0 %v142
  %v342 = vpop.f32.mrb[0].mxu0
  %v343 = vadd.f32 %v88, %v342
  %v344 = vpop.f32.mrb[0].mxu0
  %v345 = vadd.f32 %v92, %v344
  %346 = vmatprep.mubr.f32.mxu0 0.0
  %347 = vmatmul.mubr.f32.gmra.mrb[0].mxu0 %v145
  %v348 = vpop.f32.mrb[0].mxu0
  %v349 = vadd.f32 %v88, %v348
  %v350 = vpop.f32.mrb[0].mxu0
  %v351 = vadd.f32 %v92, %v350
  %352 = vmatprep.mubr.f32.mxu0 0.0
  %353 = vmatmul.mubr.f32.gmra.mrb[0].mxu0 %v148
  %v354 = vpop.f32.mrb[0].mxu0
  %v355 = vadd.f32 %v88, %v354
  %v356 = vpop.f32.mrb[0].mxu0
  %v357 = vadd.f32 %v92, %v356
  %358 = vmatprep.mubr.f32.mxu0 0.0
  %359 = vmatmul.mubr.f32.gmra.mrb[0].mxu0 %v151
  %v360 = vpop.f32.mrb[0].mxu0
  %v361 = vadd.f32 %v88, %v360
  %v362 = vpop.f32.mrb[0].mxu0
  %v363 = vadd.f32 %v92, %v362
  %364 = vmatprep.mubr.f32.mxu0 0.0
  %365 = vmatmul.mubr.f32.gmra.mrb[0].mxu0 %v154
  %v366 = vpop.f32.mrb[0].mxu0
  %v367 = vadd.f32 %v88, %v366
  %v368 = vpop.f32.mrb[0].mxu0
  %v369 = vadd.f32 %v92, %v368
  %370 = vmatprep.mubr.f32.mxu0 0.0
  %371 = vmatmul.mubr.f32.gmra.mrb[0].mxu0 %v157
  %v372 = vpop.f32.mrb[0].mxu0
  %v373 = vadd.f32 %v88, %v372
  %v374 = vpop.f32.mrb[0].mxu0
  %v375 = vadd.f32 %v92, %v374
  %376 = vmatprep.mubr.f32.mxu0 0.0
  %377 = vmatmul.mubr.f32.gmra.mrb[0].mxu0 %v160
  %v378 = vpop.f32.mrb[0].mxu0
  %v379 = vadd.f32 %v88, %v378
  %v380 = vpop.f32.mrb[0].mxu0
  %v381 = vadd.f32 %v92, %v380
  %382 = vmatprep.mubr.f32.mxu0 0.0
  %383 = vmatmul.mubr.f32.gmra.mrb[0].mxu0 %v163
  %v384 = vpop.f32.mrb[0].mxu0
  %v385 = vadd.f32 %v88, %v384
  %v386 = vpop.f32.mrb[0].mxu0
  %v387 = vadd.f32 %v92, %v386
  %388 = vmatprep.mubr.f32.mxu0 0.0
  %389 = vmatmul.mubr.f32.gmra.mrb[0].mxu0 %v166
  %v390 = vpop.f32.mrb[0].mxu0
  %v391 = vadd.f32 %v88, %v390
  %v392 = vpop.f32.mrb[0].mxu0
  %v393 = vadd.f32 %v92, %v392
  %394 = vmatprep.mubr.f32.mxu0 0.0
  %395 = vmatmul.mubr.f32.gmra.mrb[0].mxu0 %v169
  %v396 = vpop.f32.mrb[0].mxu0
  %v397 = vadd.f32 %v88, %v396
  %v398 = vpop.f32.mrb[0].mxu0
  %v399 = vadd.f32 %v92, %v398
  %400 = vmatprep.mubr.f32.mxu0 0.0
  %401 = vmatmul.mubr.f32.gmra.mrb[0].mxu0 %v172
  %v402 = vpop.f32.mrb[0].mxu0
  %v403 = vadd.f32 %v88, %v402
  %v404 = vpop.f32.mrb[0].mxu0
  %v405 = vadd.f32 %v92, %v404
  %406 = vmatprep.mubr.f32.mxu0 0.0
  %407 = vmatmul.mubr.f32.gmra.mrb[0].mxu0 %v175
  %v408 = vpop.f32.mrb[0].mxu0
  %v409 = vadd.f32 %v88, %v408
  %v410 = vpop.f32.mrb[0].mxu0
  %v411 = vadd.f32 %v92, %v410
  %412 = vmatprep.mubr.f32.mxu0 0.0
  %413 = vmatmul.mubr.f32.gmra.mrb[0].mxu0 %v178
  %v414 = vpop.f32.mrb[0].mxu0
  %v415 = vadd.f32 %v88, %v414
  %v416 = vpop.f32.mrb[0].mxu0
  %v417 = vadd.f32 %v92, %v416
  %418 = vmatprep.mubr.f32.mxu0 0.0
  %419 = vmatmul.mubr.f32.gmra.mrb[0].mxu0 %v181
  %v420 = vpop.f32.mrb[0].mxu0
  %v421 = vadd.f32 %v88, %v420
  %v422 = vpop.f32.mrb[0].mxu0
  %v423 = vadd.f32 %v92, %v422
  %424 = vmatprep.mubr.f32.mxu0 0.0
  %425 = vmatmul.mubr.f32.gmra.mrb[0].mxu0 %v184
  %v426 = vpop.f32.mrb[0].mxu0
  %v427 = vadd.f32 %v88, %v426
  %v428 = vpop.f32.mrb[0].mxu0
  %v429 = vadd.f32 %v92, %v428
  %430 = vdwg.mxu0
  %v431 = vmax.f32 %v253, 0.0
  %v432 = vmax.f32 %v255, 0.0
  %v433 = vmax.f32 %v259, 0.0
  %v434 = vmax.f32 %v261, 0.0
  %v435 = vmax.f32 %v265, 0.0
  %v436 = vmax.f32 %v267, 0.0
  %v437 = vmax.f32 %v271, 0.0
  %v438 = vmax.f32 %v273, 0.0
  %v439 = vmax.f32 %v277, 0.0
  %v440 = vmax.f32 %v279, 0.0
  %v441 = vmax.f32 %v283, 0.0
  %v442 = vmax.f32 %v285, 0.0
  %v443 = vmax.f32 %v289, 0.0
  %v444 = vmax.f32 %v291, 0.0
  %v445 = vmax.f32 %v295, 0.0
  %v446 = vmax.f32 %v297, 0.0
  %v447 = vmax.f32 %v301, 0.0
  %v448 = vmax.f32 %v303, 0.0
  %v449 = vmax.f32 %v307, 0.0
  %v450 = vmax.f32 %v309, 0.0
  %v451 = vmax.f32 %v313, 0.0
  %v452 = vmax.f32 %v315, 0.0
  %v453 = vmax.f32 %v319, 0.0
  %v454 = vmax.f32 %v321, 0.0
  %v455 = vmax.f32 %v325, 0.0
  %v456 = vmax.f32 %v327, 0.0
  %v457 = vmax.f32 %v331, 0.0
  %v458 = vmax.f32 %v333, 0.0
  %v459 = vmax.f32 %v337, 0.0
  %v460 = vmax.f32 %v339, 0.0
  %v461 = vmax.f32 %v343, 0.0
  %v462 = vmax.f32 %v345, 0.0
  %v463 = vmax.f32 %v349, 0.0
  %v464 = vmax.f32 %v351, 0.0
  %v465 = vmax.f32 %v355, 0.0
  %v466 = vmax.f32 %v357, 0.0
  %v467 = vmax.f32 %v361, 0.0
  %v468 = vmax.f32 %v363, 0.0
  %v469 = vmax.f32 %v367, 0.0
  %v470 = vmax.f32 %v369, 0.0
  %v471 = vmax.f32 %v373, 0.0
  %v472 = vmax.f32 %v375, 0.0
  %v473 = vmax.f32 %v379, 0.0
  %v474 = vmax.f32 %v381, 0.0
  %v475 = vmax.f32 %v385, 0.0
  %v476 = vmax.f32 %v387, 0.0
  %v477 = vmax.f32 %v391, 0.0
  %v478 = vmax.f32 %v393, 0.0
  %v479 = vmax.f32 %v397, 0.0
  %v480 = vmax.f32 %v399, 0.0
  %v481 = vmax.f32 %v403, 0.0
  %v482 = vmax.f32 %v405, 0.0
  %v483 = vmax.f32 %v409, 0.0
  %v484 = vmax.f32 %v411, 0.0
  %v485 = vmax.f32 %v415, 0.0
  %v486 = vmax.f32 %v417, 0.0
  %v487 = vmax.f32 %v421, 0.0
  %v488 = vmax.f32 %v423, 0.0
  %v489 = vmax.f32 %v427, 0.0
  %v490 = vmax.f32 %v429, 0.0
  %491 = vst [vmem:[#allocation2] sm:$0xff] %v431
  %492 = vst [vmem:[#allocation2 + $0x8] sm:$0xff] %v432
  %493 = vst [vmem:[#allocation2 + $0x10] sm:$0xff] %v433
  %494 = vst [vmem:[#allocation2 + $0x18] sm:$0xff] %v434
  %495 = vst [vmem:[#allocation2 + $0x20] sm:$0xff] %v435
  %496 = vst [vmem:[#allocation2 + $0x28] sm:$0xff] %v436
  %497 = vst [vmem:[#allocation2 + $0x30] sm:$0xff] %v437
  %498 = vst [vmem:[#allocation2 + $0x38] sm:$0xff] %v438
  %499 = vst [vmem:[#allocation2 + $0x40] sm:$0xff] %v439
  %500 = vst [vmem:[#allocation2 + $0x48] sm:$0xff] %v440
  %501 = vst [vmem:[#allocation2 + $0x50] sm:$0xff] %v441
  %502 = vst [vmem:[#allocation2 + $0x58] sm:$0xff] %v442
  %503 = vst [vmem:[#allocation2 + $0x60] sm:$0xff] %v443
  %504 = vst [vmem:[#allocation2 + $0x68] sm:$0xff] %v444
  %505 = vst [vmem:[#allocation2 + $0x70] sm:$0xff] %v445
  %506 = vst [vmem:[#allocation2 + $0x78] sm:$0xff] %v446
  %507 = vst [vmem:[#allocation2 + $0x80] sm:$0xff] %v447
  %508 = vst [vmem:[#allocation2 + $0x88] sm:$0xff] %v448
  %509 = vst [vmem:[#allocation2 + $0x90] sm:$0xff] %v449
  %510 = vst [vmem:[#allocation2 + $0x98] sm:$0xff] %v450
  %511 = vst [vmem:[#allocation2 + $0xa0] sm:$0xff] %v451
  %512 = vst [vmem:[#allocation2 + $0xa8] sm:$0xff] %v452
  %513 = vst [vmem:[#allocation2 + $0xb0] sm:$0xff] %v453
  %514 = vst [vmem:[#allocation2 + $0xb8] sm:$0xff] %v454
  %515 = vst [vmem:[#allocation2 + $0xc0] sm:$0xff] %v455
  %516 = vst [vmem:[#allocation2 + $0xc8] sm:$0xff] %v456
  %517 = vst [vmem:[#allocation2 + $0xd0] sm:$0xff] %v457
  %518 = vst [vmem:[#allocation2 + $0xd8] sm:$0xff] %v458
  %519 = vst [vmem:[#allocation2 + $0xe0] sm:$0xff] %v459
  %520 = vst [vmem:[#allocation2 + $0xe8] sm:$0xff] %v460
  %521 = vst [vmem:[#allocation2 + $0xf0] sm:$0xff] %v461
  %522 = vst [vmem:[#allocation2 + $0xf8] sm:$0xff] %v462
  %523 = vst [vmem:[#allocation2 + $0x100] sm:$0xff] %v463
  %524 = vst [vmem:[#allocation2 + $0x108] sm:$0xff] %v464
  %525 = vst [vmem:[#allocation2 + $0x110] sm:$0xff] %v465
  %526 = vst [vmem:[#allocation2 + $0x118] sm:$0xff] %v466
  %527 = vst [vmem:[#allocation2 + $0x120] sm:$0xff] %v467
  %528 = vst [vmem:[#allocation2 + $0x128] sm:$0xff] %v468
  %529 = vst [vmem:[#allocation2 + $0x130] sm:$0xff] %v469
  %530 = vst [vmem:[#allocation2 + $0x138] sm:$0xff] %v470
  %531 = vst [vmem:[#allocation2 + $0x140] sm:$0xff] %v471
  %532 = vst [vmem:[#allocation2 + $0x148] sm:$0xff] %v472
  %533 = vst [vmem:[#allocation2 + $0x150] sm:$0xff] %v473
  %534 = vst [vmem:[#allocation2 + $0x158] sm:$0xff] %v474
  %535 = vst [vmem:[#allocation2 + $0x160] sm:$0xff] %v475
  %536 = vst [vmem:[#allocation2 + $0x168] sm:$0xff] %v476
  %537 = vst [vmem:[#allocation2 + $0x170] sm:$0xff] %v477
  %538 = vst [vmem:[#allocation2 + $0x178] sm:$0xff] %v478
  %539 = vst [vmem:[#allocation2 + $0x180] sm:$0xff] %v479
  %540 = vst [vmem:[#allocation2 + $0x188] sm:$0xff] %v480
  %541 = vst [vmem:[#allocation2 + $0x190] sm:$0xff] %v481
  %542 = vst [vmem:[#allocation2 + $0x198] sm:$0xff] %v482
  %543 = vst [vmem:[#allocation2 + $0x1a0] sm:$0xff] %v483
  %544 = vst [vmem:[#allocation2 + $0x1a8] sm:$0xff] %v484
  %545 = vst [vmem:[#allocation2 + $0x1b0] sm:$0xff] %v485
  %546 = vst [vmem:[#allocation2 + $0x1b8] sm:$0xff] %v486
  %547 = vst [vmem:[#allocation2 + $0x1c0] sm:$0xff] %v487
  %548 = vst [vmem:[#allocation2 + $0x1c8] sm:$0xff] %v488
  %549 = vst [vmem:[#allocation2 + $0x1d0] sm:$0xff] %v489
  %550 = vst [vmem:[#allocation2 + $0x1d8] sm:$0xff] %v490
  %v551 = vld [vmem:[%s0 + $0xf0] sm:$0xff]
  %v552 = vld [vmem:[%s0 + $0xf8] sm:$0xff]
  %v553 = vld [vmem:[%s0 + $0x100] sm:$0xff]
  %v554 = vld [vmem:[%s0 + $0x108] sm:$0xff]
  %v555 = vld [vmem:[%s0 + $0x110] sm:$0xff]
  %v556 = vld [vmem:[%s0 + $0x118] sm:$0xff]
  %v557 = vld [vmem:[%s0 + $0x120] sm:$0xff]
  %v558 = vld [vmem:[%s0 + $0x128] sm:$0xff]
  %v559 = vld [vmem:[%s0 + $0x130] sm:$0xff]
  %v560 = vld [vmem:[%s0 + $0x138] sm:$0xff]
  %v561 = vld [vmem:[%s0 + $0x140] sm:$0xff]
  %v562 = vld [vmem:[%s0 + $0x148] sm:$0xff]
  %v563 = vld [vmem:[%s0 + $0x150] sm:$0xff]
  %v564 = vld [vmem:[%s0 + $0x158] sm:$0xff]
  %v565 = vld [vmem:[%s0 + $0x160] sm:$0xff]
  %v566 = vld [vmem:[%s0 + $0x168] sm:$0xff]
  %v567 = vld [vmem:[%s0 + $0x170] sm:$0xff]
  %v568 = vld [vmem:[%s0 + $0x178] sm:$0xff]
  %v569 = vld [vmem:[%s0 + $0x180] sm:$0xff]
  %v570 = vld [vmem:[%s0 + $0x188] sm:$0xff]
  %v571 = vld [vmem:[%s0 + $0x190] sm:$0xff]
  %v572 = vld [vmem:[%s0 + $0x198] sm:$0xff]
  %v573 = vld [vmem:[%s0 + $0x1a0] sm:$0xff]
  %v574 = vld [vmem:[%s0 + $0x1a8] sm:$0xff]
  %v575 = vld [vmem:[%s0 + $0x1b0] sm:$0xff]
  %v576 = vld [vmem:[%s0 + $0x1b8] sm:$0xff]
  %v577 = vld [vmem:[%s0 + $0x1c0] sm:$0xff]
  %v578 = vld [vmem:[%s0 + $0x1c8] sm:$0xff]
  %v579 = vld [vmem:[%s0 + $0x1d0] sm:$0xff]
  %v580 = vld [vmem:[%s0 + $0x1d8] sm:$0xff]
  %v581 = vld [vmem:[%s1] sm:$0xff]
  %v582 = vld [vmem:[%s1 + $0x8] sm:$0xff]
  %v583 = vld [vmem:[%s2] sm:$0x3]
  %v585 = vlaneseq
  %v586 = vshrl.u32 %v585, 7
  %v587 = vsub.s32 0, %v586
  %v588 = vrot.slane %v583, %v587
  %v589 = vlaneseq
  %v590 = vshrl.u32 %v589, 7
  %v591 = vsub.s32 1, %v590
  %v592 = vrot.slane %v583, %v591
  %v596 = vsel %vm95, %v551, 0
  %v599 = vsel %vm95, %v552, 0
  %v602 = vsel %vm95, %v553, 0
  %v605 = vsel %vm95, %v554, 0
  %v608 = vsel %vm95, %v555, 0
  %v611 = vsel %vm95, %v556, 0
  %v614 = vsel %vm95, %v557, 0
  %v617 = vsel %vm95, %v558, 0
  %v620 = vsel %vm95, %v559, 0
  %v623 = vsel %vm95, %v560, 0
  %v626 = vsel %vm95, %v561, 0
  %v629 = vsel %vm95, %v562, 0
  %v632 = vsel %vm95, %v563, 0
  %v635 = vsel %vm95, %v564, 0
  %v638 = vsel %vm95, %v565, 0
  %v641 = vsel %vm95, %v566, 0
  %v644 = vsel %vm95, %v567, 0
  %v647 = vsel %vm95, %v568, 0
  %v650 = vsel %vm95, %v569, 0
  %v653 = vsel %vm95, %v570, 0
  %v656 = vsel %vm95, %v571, 0
  %v659 = vsel %vm95, %v572, 0
  %v662 = vsel %vm95, %v573, 0
  %v665 = vsel %vm95, %v574, 0
  %v668 = vsel %vm95, %v575, 0
  %v671 = vsel %vm95, %v576, 0
  %v674 = vsel %vm95, %v577, 0
  %v677 = vsel %vm95, %v578, 0
  %v680 = vsel %vm95, %v579, 0
  %v683 = vsel %vm95, %v580, 0
  %685 = vmatprep.subr.mxu0 %v582
  %686 = vmatpush1.msra.mxu0 %v581
  %687 = vmatprep.subr.mxu0 0.0
  %688 = vmatpush1.msra.mxu0 0.0
  %689 = vmatprep.subr.mxu0 0.0
  %690 = vmatpush1.msra.mxu0 0.0
  %691 = vmatprep.subr.mxu0 0.0
  %692 = vmatpush1.msra.mxu0 0.0
  %693 = vmatprep.subr.mxu0 0.0
  %694 = vmatpush1.msra.mxu0 0.0
  %695 = vmatprep.subr.mxu0 0.0
  %696 = vmatpush1.msra.mxu0 0.0
  %697 = vmatprep.subr.mxu0 0.0
  %698 = vmatpush1.msra.mxu0 0.0
  %699 = vmatprep.subr.mxu0 0.0
  %700 = vmatpush1.msra.mxu0 0.0
  %701 = vmatprep.subr.mxu0 0.0
  %702 = vmatpush1.msra.mxu0 0.0
  %703 = vmatprep.subr.mxu0 0.0
  %704 = vmatpush1.msra.mxu0 0.0
  %705 = vmatprep.subr.mxu0 0.0
  %706 = vmatpush1.msra.mxu0 0.0
  %707 = vmatprep.subr.mxu0 0.0
  %708 = vmatpush1.msra.mxu0 0.0
  %709 = vmatprep.subr.mxu0 0.0
  %710 = vmatpush1.msra.mxu0 0.0
  %711 = vmatprep.subr.mxu0 0.0
  %712 = vmatpush1.msra.mxu0 0.0
  %713 = vmatprep.subr.mxu0 0.0
  %714 = vmatpush1.msra.mxu0 0.0
  %715 = vmatprep.subr.mxu0 0.0
  %716 = vmatpush1.msra.mxu0 0.0
  %717 = vmatprep.subr.mxu0 0.0
  %718 = vmatpush1.msra.mxu0 0.0
  %719 = vmatprep.subr.mxu0 0.0
  %720 = vmatpush1.msra.mxu0 0.0
  %721 = vmatprep.subr.mxu0 0.0
  %722 = vmatpush1.msra.mxu0 0.0
  %723 = vmatprep.subr.mxu0 0.0
  %724 = vmatpush1.msra.mxu0 0.0
  %725 = vmatprep.subr.mxu0 0.0
  %726 = vmatpush1.msra.mxu0 0.0
  %727 = vmatprep.subr.mxu0 0.0
  %728 = vmatpush1.msra.mxu0 0.0
  %729 = vmatprep.subr.mxu0 0.0
  %730 = vmatpush1.msra.mxu0 0.0
  %731 = vmatprep.subr.mxu0 0.0
  %732 = vmatpush1.msra.mxu0 0.0
  %733 = vmatprep.subr.mxu0 0.0
  %734 = vmatpush1.msra.mxu0 0.0
  %735 = vmatprep.subr.mxu0 0.0
  %736 = vmatpush1.msra.mxu0 0.0
  %737 = vmatprep.subr.mxu0 0.0
  %738 = vmatpush1.msra.mxu0 0.0
  %739 = vmatprep.subr.mxu0 0.0
  %740 = vmatpush1.msra.mxu0 0.0
  %741 = vmatprep.subr.mxu0 0.0
  %742 = vmatpush1.msra.mxu0 0.0
  %743 = vmatprep.subr.mxu0 0.0
  %744 = vmatpush1.msra.mxu0 0.0
  %745 = vmatprep.subr.mxu0 0.0
  %746 = vmatpush1.msra.mxu0 0.0
  %747 = vmatprep.subr.mxu0 0.0
  %748 = vmatpush1.msra.mxu0 0.0
  %749 = vmatprep.mubr.f32.mxu0 0.0
  %750 = vmatmul.mubr.f32.gmra.mrb[0].mxu0 %v596
  %v751 = vpop.f32.mrb[0].mxu0
  %v752 = vadd.f32 %v588, %v751
  %v753 = vpop.f32.mrb[0].mxu0
  %v754 = vadd.f32 %v592, %v753
  %755 = vmatprep.mubr.f32.mxu0 0.0
  %756 = vmatmul.mubr.f32.gmra.mrb[0].mxu0 %v599
  %v757 = vpop.f32.mrb[0].mxu0
  %v758 = vadd.f32 %v588, %v757
  %v759 = vpop.f32.mrb[0].mxu0
  %v760 = vadd.f32 %v592, %v759
  %761 = vmatprep.mubr.f32.mxu0 0.0
  %762 = vmatmul.mubr.f32.gmra.mrb[0].mxu0 %v602
  %v763 = vpop.f32.mrb[0].mxu0
  %v764 = vadd.f32 %v588, %v763
  %v765 = vpop.f32.mrb[0].mxu0
  %v766 = vadd.f32 %v592, %v765
  %767 = vmatprep.mubr.f32.mxu0 0.0
  %768 = vmatmul.mubr.f32.gmra.mrb[0].mxu0 %v605
  %v769 = vpop.f32.mrb[0].mxu0
  %v770 = vadd.f32 %v588, %v769
  %v771 = vpop.f32.mrb[0].mxu0
  %v772 = vadd.f32 %v592, %v771
  %773 = vmatprep.mubr.f32.mxu0 0.0
  %774 = vmatmul.mubr.f32.gmra.mrb[0].mxu0 %v608
  %v775 = vpop.f32.mrb[0].mxu0
  %v776 = vadd.f32 %v588, %v775
  %v777 = vpop.f32.mrb[0].mxu0
  %v778 = vadd.f32 %v592, %v777
  %779 = vmatprep.mubr.f32.mxu0 0.0
  %780 = vmatmul.mubr.f32.gmra.mrb[0].mxu0 %v611
  %v781 = vpop.f32.mrb[0].mxu0
  %v782 = vadd.f32 %v588, %v781
  %v783 = vpop.f32.mrb[0].mxu0
  %v784 = vadd.f32 %v592, %v783
  %785 = vmatprep.mubr.f32.mxu0 0.0
  %786 = vmatmul.mubr.f32.gmra.mrb[0].mxu0 %v614
  %v787 = vpop.f32.mrb[0].mxu0
  %v788 = vadd.f32 %v588, %v787
  %v789 = vpop.f32.mrb[0].mxu0
  %v790 = vadd.f32 %v592, %v789
  %791 = vmatprep.mubr.f32.mxu0 0.0
  %792 = vmatmul.mubr.f32.gmra.mrb[0].mxu0 %v617
  %v793 = vpop.f32.mrb[0].mxu0
  %v794 = vadd.f32 %v588, %v793
  %v795 = vpop.f32.mrb[0].mxu0
  %v796 = vadd.f32 %v592, %v795
  %797 = vmatprep.mubr.f32.mxu0 0.0
  %798 = vmatmul.mubr.f32.gmra.mrb[0].mxu0 %v620
  %v799 = vpop.f32.mrb[0].mxu0
  %v800 = vadd.f32 %v588, %v799
  %v801 = vpop.f32.mrb[0].mxu0
  %v802 = vadd.f32 %v592, %v801
  %803 = vmatprep.mubr.f32.mxu0 0.0
  %804 = vmatmul.mubr.f32.gmra.mrb[0].mxu0 %v623
  %v805 = vpop.f32.mrb[0].mxu0
  %v806 = vadd.f32 %v588, %v805
  %v807 = vpop.f32.mrb[0].mxu0
  %v808 = vadd.f32 %v592, %v807
  %809 = vmatprep.mubr.f32.mxu0 0.0
  %810 = vmatmul.mubr.f32.gmra.mrb[0].mxu0 %v626
  %v811 = vpop.f32.mrb[0].mxu0
  %v812 = vadd.f32 %v588, %v811
  %v813 = vpop.f32.mrb[0].mxu0
  %v814 = vadd.f32 %v592, %v813
  %815 = vmatprep.mubr.f32.mxu0 0.0
  %816 = vmatmul.mubr.f32.gmra.mrb[0].mxu0 %v629
  %v817 = vpop.f32.mrb[0].mxu0
  %v818 = vadd.f32 %v588, %v817
  %v819 = vpop.f32.mrb[0].mxu0
  %v820 = vadd.f32 %v592, %v819
  %821 = vmatprep.mubr.f32.mxu0 0.0
  %822 = vmatmul.mubr.f32.gmra.mrb[0].mxu0 %v632
  %v823 = vpop.f32.mrb[0].mxu0
  %v824 = vadd.f32 %v588, %v823
  %v825 = vpop.f32.mrb[0].mxu0
  %v826 = vadd.f32 %v592, %v825
  %827 = vmatprep.mubr.f32.mxu0 0.0
  %828 = vmatmul.mubr.f32.gmra.mrb[0].mxu0 %v635
  %v829 = vpop.f32.mrb[0].mxu0
  %v830 = vadd.f32 %v588, %v829
  %v831 = vpop.f32.mrb[0].mxu0
  %v832 = vadd.f32 %v592, %v831
  %833 = vmatprep.mubr.f32.mxu0 0.0
  %834 = vmatmul.mubr.f32.gmra.mrb[0].mxu0 %v638
  %v835 = vpop.f32.mrb[0].mxu0
  %v836 = vadd.f32 %v588, %v835
  %v837 = vpop.f32.mrb[0].mxu0
  %v838 = vadd.f32 %v592, %v837
  %839 = vmatprep.mubr.f32.mxu0 0.0
  %840 = vmatmul.mubr.f32.gmra.mrb[0].mxu0 %v641
  %v841 = vpop.f32.mrb[0].mxu0
  %v842 = vadd.f32 %v588, %v841
  %v843 = vpop.f32.mrb[0].mxu0
  %v844 = vadd.f32 %v592, %v843
  %845 = vmatprep.mubr.f32.mxu0 0.0
  %846 = vmatmul.mubr.f32.gmra.mrb[0].mxu0 %v644
  %v847 = vpop.f32.mrb[0].mxu0
  %v848 = vadd.f32 %v588, %v847
  %v849 = vpop.f32.mrb[0].mxu0
  %v850 = vadd.f32 %v592, %v849
  %851 = vmatprep.mubr.f32.mxu0 0.0
  %852 = vmatmul.mubr.f32.gmra.mrb[0].mxu0 %v647
  %v853 = vpop.f32.mrb[0].mxu0
  %v854 = vadd.f32 %v588, %v853
  %v855 = vpop.f32.mrb[0].mxu0
  %v856 = vadd.f32 %v592, %v855
  %857 = vmatprep.mubr.f32.mxu0 0.0
  %858 = vmatmul.mubr.f32.gmra.mrb[0].mxu0 %v650
  %v859 = vpop.f32.mrb[0].mxu0
  %v860 = vadd.f32 %v588, %v859
  %v861 = vpop.f32.mrb[0].mxu0
  %v862 = vadd.f32 %v592, %v861
  %863 = vmatprep.mubr.f32.mxu0 0.0
  %864 = vmatmul.mubr.f32.gmra.mrb[0].mxu0 %v653
  %v865 = vpop.f32.mrb[0].mxu0
  %v866 = vadd.f32 %v588, %v865
  %v867 = vpop.f32.mrb[0].mxu0
  %v868 = vadd.f32 %v592, %v867
  %869 = vmatprep.mubr.f32.mxu0 0.0
  %870 = vmatmul.mubr.f32.gmra.mrb[0].mxu0 %v656
  %v871 = vpop.f32.mrb[0].mxu0
  %v872 = vadd.f32 %v588, %v871
  %v873 = vpop.f32.mrb[0].mxu0
  %v874 = vadd.f32 %v592, %v873
  %875 = vmatprep.mubr.f32.mxu0 0.0
  %876 = vmatmul.mubr.f32.gmra.mrb[0].mxu0 %v659
  %v877 = vpop.f32.mrb[0].mxu0
  %v878 = vadd.f32 %v588, %v877
  %v879 = vpop.f32.mrb[0].mxu0
  %v880 = vadd.f32 %v592, %v879
  %881 = vmatprep.mubr.f32.mxu0 0.0
  %882 = vmatmul.mubr.f32.gmra.mrb[0].mxu0 %v662
  %v883 = vpop.f32.mrb[0].mxu0
  %v884 = vadd.f32 %v588, %v883
  %v885 = vpop.f32.mrb[0].mxu0
  %v886 = vadd.f32 %v592, %v885
  %887 = vmatprep.mubr.f32.mxu0 0.0
  %888 = vmatmul.mubr.f32.gmra.mrb[0].mxu0 %v665
  %v889 = vpop.f32.mrb[0].mxu0
  %v890 = vadd.f32 %v588, %v889
  %v891 = vpop.f32.mrb[0].mxu0
  %v892 = vadd.f32 %v592, %v891
  %893 = vmatprep.mubr.f32.mxu0 0.0
  %894 = vmatmul.mubr.f32.gmra.mrb[0].mxu0 %v668
  %v895 = vpop.f32.mrb[0].mxu0
  %v896 = vadd.f32 %v588, %v895
  %v897 = vpop.f32.mrb[0].mxu0
  %v898 = vadd.f32 %v592, %v897
  %899 = vmatprep.mubr.f32.mxu0 0.0
  %900 = vmatmul.mubr.f32.gmra.mrb[0].mxu0 %v671
  %v901 = vpop.f32.mrb[0].mxu0
  %v902 = vadd.f32 %v588, %v901
  %v903 = vpop.f32.mrb[0].mxu0
  %v904 = vadd.f32 %v592, %v903
  %905 = vmatprep.mubr.f32.mxu0 0.0
  %906 = vmatmul.mubr.f32.gmra.mrb[0].mxu0 %v674
  %v907 = vpop.f32.mrb[0].mxu0
  %v908 = vadd.f32 %v588, %v907
  %v909 = vpop.f32.mrb[0].mxu0
  %v910 = vadd.f32 %v592, %v909
  %911 = vmatprep.mubr.f32.mxu0 0.0
  %912 = vmatmul.mubr.f32.gmra.mrb[0].mxu0 %v677
  %v913 = vpop.f32.mrb[0].mxu0
  %v914 = vadd.f32 %v588, %v913
  %v915 = vpop.f32.mrb[0].mxu0
  %v916 = vadd.f32 %v592, %v915
  %917 = vmatprep.mubr.f32.mxu0 0.0
  %918 = vmatmul.mubr.f32.gmra.mrb[0].mxu0 %v680
  %v919 = vpop.f32.mrb[0].mxu0
  %v920 = vadd.f32 %v588, %v919
  %v921 = vpop.f32.mrb[0].mxu0
  %v922 = vadd.f32 %v592, %v921
  %923 = vmatprep.mubr.f32.mxu0 0.0
  %924 = vmatmul.mubr.f32.gmra.mrb[0].mxu0 %v683
  %v925 = vpop.f32.mrb[0].mxu0
  %v926 = vadd.f32 %v588, %v925
  %v927 = vpop.f32.mrb[0].mxu0
  %v928 = vadd.f32 %v592, %v927
  %929 = vdwg.mxu0
  %v930 = vmax.f32 %v752, 0.0
  %v931 = vmax.f32 %v754, 0.0
  %v932 = vmax.f32 %v758, 0.0
  %v933 = vmax.f32 %v760, 0.0
  %v934 = vmax.f32 %v764, 0.0
  %v935 = vmax.f32 %v766, 0.0
  %v936 = vmax.f32 %v770, 0.0
  %v937 = vmax.f32 %v772, 0.0
  %v938 = vmax.f32 %v776, 0.0
  %v939 = vmax.f32 %v778, 0.0
  %v940 = vmax.f32 %v782, 0.0
  %v941 = vmax.f32 %v784, 0.0
  %v942 = vmax.f32 %v788, 0.0
  %v943 = vmax.f32 %v790, 0.0
  %v944 = vmax.f32 %v794, 0.0
  %v945 = vmax.f32 %v796, 0.0
  %v946 = vmax.f32 %v800, 0.0
  %v947 = vmax.f32 %v802, 0.0
  %v948 = vmax.f32 %v806, 0.0
  %v949 = vmax.f32 %v808, 0.0
  %v950 = vmax.f32 %v812, 0.0
  %v951 = vmax.f32 %v814, 0.0
  %v952 = vmax.f32 %v818, 0.0
  %v953 = vmax.f32 %v820, 0.0
  %v954 = vmax.f32 %v824, 0.0
  %v955 = vmax.f32 %v826, 0.0
  %v956 = vmax.f32 %v830, 0.0
  %v957 = vmax.f32 %v832, 0.0
  %v958 = vmax.f32 %v836, 0.0
  %v959 = vmax.f32 %v838, 0.0
  %v960 = vmax.f32 %v842, 0.0
  %v961 = vmax.f32 %v844, 0.0
  %v962 = vmax.f32 %v848, 0.0
  %v963 = vmax.f32 %v850, 0.0
  %v964 = vmax.f32 %v854, 0.0
  %v965 = vmax.f32 %v856, 0.0
  %v966 = vmax.f32 %v860, 0.0
  %v967 = vmax.f32 %v862, 0.0
  %v968 = vmax.f32 %v866, 0.0
  %v969 = vmax.f32 %v868, 0.0
  %v970 = vmax.f32 %v872, 0.0
  %v971 = vmax.f32 %v874, 0.0
  %v972 = vmax.f32 %v878, 0.0
  %v973 = vmax.f32 %v880, 0.0
  %v974 = vmax.f32 %v884, 0.0
  %v975 = vmax.f32 %v886, 0.0
  %v976 = vmax.f32 %v890, 0.0
  %v977 = vmax.f32 %v892, 0.0
  %v978 = vmax.f32 %v896, 0.0
  %v979 = vmax.f32 %v898, 0.0
  %v980 = vmax.f32 %v902, 0.0
  %v981 = vmax.f32 %v904, 0.0
  %v982 = vmax.f32 %v908, 0.0
  %v983 = vmax.f32 %v910, 0.0
  %v984 = vmax.f32 %v914, 0.0
  %v985 = vmax.f32 %v916, 0.0
  %v986 = vmax.f32 %v920, 0.0
  %v987 = vmax.f32 %v922, 0.0
  %v988 = vmax.f32 %v926, 0.0
  %v989 = vmax.f32 %v928, 0.0
  %990 = vst [vmem:[#allocation2 + $0x1e0] sm:$0xff] %v930
  %991 = vst [vmem:[#allocation2 + $0x1e8] sm:$0xff] %v931
  %992 = vst [vmem:[#allocation2 + $0x1f0] sm:$0xff] %v932
  %993 = vst [vmem:[#allocation2 + $0x1f8] sm:$0xff] %v933
  %994 = vst [vmem:[#allocation2 + $0x200] sm:$0xff] %v934
  %995 = vst [vmem:[#allocation2 + $0x208] sm:$0xff] %v935
  %996 = vst [vmem:[#allocation2 + $0x210] sm:$0xff] %v936
  %997 = vst [vmem:[#allocation2 + $0x218] sm:$0xff] %v937
  %998 = vst [vmem:[#allocation2 + $0x220] sm:$0xff] %v938
  %999 = vst [vmem:[#allocation2 + $0x228] sm:$0xff] %v939
  %1000 = vst [vmem:[#allocation2 + $0x230] sm:$0xff] %v940
  %1001 = vst [vmem:[#allocation2 + $0x238] sm:$0xff] %v941
  %1002 = vst [vmem:[#allocation2 + $0x240] sm:$0xff] %v942
  %1003 = vst [vmem:[#allocation2 + $0x248] sm:$0xff] %v943
  %1004 = vst [vmem:[#allocation2 + $0x250] sm:$0xff] %v944
  %1005 = vst [vmem:[#allocation2 + $0x258] sm:$0xff] %v945
  %1006 = vst [vmem:[#allocation2 + $0x260] sm:$0xff] %v946
  %1007 = vst [vmem:[#allocation2 + $0x268] sm:$0xff] %v947
  %1008 = vst [vmem:[#allocation2 + $0x270] sm:$0xff] %v948
  %1009 = vst [vmem:[#allocation2 + $0x278] sm:$0xff] %v949
  %1010 = vst [vmem:[#allocation2 + $0x280] sm:$0xff] %v950
  %1011 = vst [vmem:[#allocation2 + $0x288] sm:$0xff] %v951
  %1012 = vst [vmem:[#allocation2 + $0x290] sm:$0xff] %v952
  %1013 = vst [vmem:[#allocation2 + $0x298] sm:$0xff] %v953
  %1014 = vst [vmem:[#allocation2 + $0x2a0] sm:$0xff] %v954
  %1015 = vst [vmem:[#allocation2 + $0x2a8] sm:$0xff] %v955
  %1016 = vst [vmem:[#allocation2 + $0x2b0] sm:$0xff] %v956
  %1017 = vst [vmem:[#allocation2 + $0x2b8] sm:$0xff] %v957
  %1018 = vst [vmem:[#allocation2 + $0x2c0] sm:$0xff] %v958
  %1019 = vst [vmem:[#allocation2 + $0x2c8] sm:$0xff] %v959
  %1020 = vst [vmem:[#allocation2 + $0x2d0] sm:$0xff] %v960
  %1021 = vst [vmem:[#allocation2 + $0x2d8] sm:$0xff] %v961
  %1022 = vst [vmem:[#allocation2 + $0x2e0] sm:$0xff] %v962
  %1023 = vst [vmem:[#allocation2 + $0x2e8] sm:$0xff] %v963
  %1024 = vst [vmem:[#allocation2 + $0x2f0] sm:$0xff] %v964
  %1025 = vst [vmem:[#allocation2 + $0x2f8] sm:$0xff] %v965
  %1026 = vst [vmem:[#allocation2 + $0x300] sm:$0xff] %v966
  %1027 = vst [vmem:[#allocation2 + $0x308] sm:$0xff] %v967
  %1028 = vst [vmem:[#allocation2 + $0x310] sm:$0xff] %v968
  %1029 = vst [vmem:[#allocation2 + $0x318] sm:$0xff] %v969
  %1030 = vst [vmem:[#allocation2 + $0x320] sm:$0xff] %v970
  %1031 = vst [vmem:[#allocation2 + $0x328] sm:$0xff] %v971
  %1032 = vst [vmem:[#allocation2 + $0x330] sm:$0xff] %v972
  %1033 = vst [vmem:[#allocation2 + $0x338] sm:$0xff] %v973
  %1034 = vst [vmem:[#allocation2 + $0x340] sm:$0xff] %v974
  %1035 = vst [vmem:[#allocation2 + $0x348] sm:$0xff] %v975
  %1036 = vst [vmem:[#allocation2 + $0x350] sm:$0xff] %v976
  %1037 = vst [vmem:[#allocation2 + $0x358] sm:$0xff] %v977
  %1038 = vst [vmem:[#allocation2 + $0x360] sm:$0xff] %v978
  %1039 = vst [vmem:[#allocation2 + $0x368] sm:$0xff] %v979
  %1040 = vst [vmem:[#allocation2 + $0x370] sm:$0xff] %v980
  %1041 = vst [vmem:[#allocation2 + $0x378] sm:$0xff] %v981
  %1042 = vst [vmem:[#allocation2 + $0x380] sm:$0xff] %v982
  %1043 = vst [vmem:[#allocation2 + $0x388] sm:$0xff] %v983
  %1044 = vst [vmem:[#allocation2 + $0x390] sm:$0xff] %v984
  %1045 = vst [vmem:[#allocation2 + $0x398] sm:$0xff] %v985
  %1046 = vst [vmem:[#allocation2 + $0x3a0] sm:$0xff] %v986
  %1047 = vst [vmem:[#allocation2 + $0x3a8] sm:$0xff] %v987
  %1048 = vst [vmem:[#allocation2 + $0x3b0] sm:$0xff] %v988
  %1049 = vst [vmem:[#allocation2 + $0x3b8] sm:$0xff] %v989
  %v1050 = vld [vmem:[#allocation2] sm:$0xff]
  %v1051 = vld [vmem:[#allocation2 + $0x8] sm:$0xff]
  %v1052 = vld [vmem:[#allocation2 + $0x10] sm:$0xff]
  %v1053 = vld [vmem:[#allocation2 + $0x18] sm:$0xff]
  %v1054 = vld [vmem:[#allocation2 + $0x20] sm:$0xff]
  %v1055 = vld [vmem:[#allocation2 + $0x28] sm:$0xff]
  %v1056 = vld [vmem:[#allocation2 + $0x30] sm:$0xff]
  %v1057 = vld [vmem:[#allocation2 + $0x38] sm:$0xff]
  %v1058 = vld [vmem:[#allocation2 + $0x40] sm:$0xff]
  %v1059 = vld [vmem:[#allocation2 + $0x48] sm:$0xff]
  %v1060 = vld [vmem:[#allocation2 + $0x50] sm:$0xff]
  %v1061 = vld [vmem:[#allocation2 + $0x58] sm:$0xff]
  %v1062 = vld [vmem:[#allocation2 + $0x60] sm:$0xff]
  %v1063 = vld [vmem:[#allocation2 + $0x68] sm:$0xff]
  %v1064 = vld [vmem:[#allocation2 + $0x70] sm:$0xff]
  %v1065 = vld [vmem:[#allocation2 + $0x78] sm:$0xff]
  %v1066 = vld [vmem:[#allocation2 + $0x80] sm:$0xff]
  %v1067 = vld [vmem:[#allocation2 + $0x88] sm:$0xff]
  %v1068 = vld [vmem:[#allocation2 + $0x90] sm:$0xff]
  %v1069 = vld [vmem:[#allocation2 + $0x98] sm:$0xff]
  %v1070 = vld [vmem:[#allocation2 + $0xa0] sm:$0xff]
  %v1071 = vld [vmem:[#allocation2 + $0xa8] sm:$0xff]
  %v1072 = vld [vmem:[#allocation2 + $0xb0] sm:$0xff]
  %v1073 = vld [vmem:[#allocation2 + $0xb8] sm:$0xff]
  %v1074 = vld [vmem:[#allocation2 + $0xc0] sm:$0xff]
  %v1075 = vld [vmem:[#allocation2 + $0xc8] sm:$0xff]
  %v1076 = vld [vmem:[#allocation2 + $0xd0] sm:$0xff]
  %v1077 = vld [vmem:[#allocation2 + $0xd8] sm:$0xff]
  %v1078 = vld [vmem:[#allocation2 + $0xe0] sm:$0xff]
  %v1079 = vld [vmem:[#allocation2 + $0xe8] sm:$0xff]
  %v1080 = vld [vmem:[#allocation2 + $0xf0] sm:$0xff]
  %v1081 = vld [vmem:[#allocation2 + $0xf8] sm:$0xff]
  %v1082 = vld [vmem:[#allocation2 + $0x100] sm:$0xff]
  %v1083 = vld [vmem:[#allocation2 + $0x108] sm:$0xff]
  %v1084 = vld [vmem:[#allocation2 + $0x110] sm:$0xff]
  %v1085 = vld [vmem:[#allocation2 + $0x118] sm:$0xff]
  %v1086 = vld [vmem:[#allocation2 + $0x120] sm:$0xff]
  %v1087 = vld [vmem:[#allocation2 + $0x128] sm:$0xff]
  %v1088 = vld [vmem:[#allocation2 + $0x130] sm:$0xff]
  %v1089 = vld [vmem:[#allocation2 + $0x138] sm:$0xff]
  %v1090 = vld [vmem:[#allocation2 + $0x140] sm:$0xff]
  %v1091 = vld [vmem:[#allocation2 + $0x148] sm:$0xff]
  %v1092 = vld [vmem:[#allocation2 + $0x150] sm:$0xff]
  %v1093 = vld [vmem:[#allocation2 + $0x158] sm:$0xff]
  %v1094 = vld [vmem:[#allocation2 + $0x160] sm:$0xff]
  %v1095 = vld [vmem:[#allocation2 + $0x168] sm:$0xff]
  %v1096 = vld [vmem:[#allocation2 + $0x170] sm:$0xff]
  %v1097 = vld [vmem:[#allocation2 + $0x178] sm:$0xff]
  %v1098 = vld [vmem:[#allocation2 + $0x180] sm:$0xff]
  %v1099 = vld [vmem:[#allocation2 + $0x188] sm:$0xff]
  %v1100 = vld [vmem:[#allocation2 + $0x190] sm:$0xff]
  %v1101 = vld [vmem:[#allocation2 + $0x198] sm:$0xff]
  %v1102 = vld [vmem:[#allocation2 + $0x1a0] sm:$0xff]
  %v1103 = vld [vmem:[#allocation2 + $0x1a8] sm:$0xff]
  %v1104 = vld [vmem:[#allocation2 + $0x1b0] sm:$0xff]
  %v1105 = vld [vmem:[#allocation2 + $0x1b8] sm:$0xff]
  %v1106 = vpack.c.bf16 %v1052, %v1050
  %v1107 = vpack.c.bf16 %v1053, %v1051
  %v1108 = vpack.c.bf16 %v1056, %v1054
  %v1109 = vpack.c.bf16 %v1057, %v1055
  %v1110 = vpack.c.bf16 %v1060, %v1058
  %v1111 = vpack.c.bf16 %v1061, %v1059
  %v1112 = vpack.c.bf16 %v1064, %v1062
  %v1113 = vpack.c.bf16 %v1065, %v1063
  %v1114 = vpack.c.bf16 %v1068, %v1066
  %v1115 = vpack.c.bf16 %v1069, %v1067
  %v1116 = vpack.c.bf16 %v1072, %v1070
  %v1117 = vpack.c.bf16 %v1073, %v1071
  %v1118 = vpack.c.bf16 %v1076, %v1074
  %v1119 = vpack.c.bf16 %v1077, %v1075
  %v1120 = vpack.c.bf16 %v1080, %v1078
  %v1121 = vpack.c.bf16 %v1081, %v1079
  %v1122 = vpack.c.bf16 %v1084, %v1082
  %v1123 = vpack.c.bf16 %v1085, %v1083
  %v1124 = vpack.c.bf16 %v1088, %v1086
  %v1125 = vpack.c.bf16 %v1089, %v1087
  %v1126 = vpack.c.bf16 %v1092, %v1090
  %v1127 = vpack.c.bf16 %v1093, %v1091
  %v1128 = vpack.c.bf16 %v1096, %v1094
  %v1129 = vpack.c.bf16 %v1097, %v1095
  %v1130 = vpack.c.bf16 %v1100, %v1098
  %v1131 = vpack.c.bf16 %v1101, %v1099
  %v1132 = vpack.c.bf16 %v1104, %v1102
  %v1133 = vpack.c.bf16 %v1105, %v1103
  %v1134 = vld [vmem:[%s3] sm:$0xff]
  %v1135 = vld [vmem:[%s3 + $0x8] sm:$0xff]
  %v1136 = vld [vmem:[%s3 + $0x10] sm:$0xff]
  %v1137 = vld [vmem:[%s3 + $0x18] sm:$0xff]
  %v1138 = vld [vmem:[%s3 + $0x20] sm:$0xff]
  %v1139 = vld [vmem:[%s3 + $0x28] sm:$0xff]
  %v1140 = vld [vmem:[%s3 + $0x30] sm:$0xff]
  %v1141 = vld [vmem:[%s3 + $0x38] sm:$0xff]
  %v1142 = vld [vmem:[%s3 + $0x40] sm:$0xff]
  %v1143 = vld [vmem:[%s3 + $0x48] sm:$0xff]
  %v1144 = vld [vmem:[%s3 + $0x50] sm:$0xff]
  %v1145 = vld [vmem:[%s3 + $0x58] sm:$0xff]
  %v1146 = vld [vmem:[%s3 + $0x60] sm:$0xff]
  %v1147 = vld [vmem:[%s3 + $0x68] sm:$0xff]
  %v1148 = vld [vmem:[%s3 + $0x70] sm:$0xff]
  %v1149 = vld [vmem:[%s3 + $0x78] sm:$0xff]
  %v1150 = vld [vmem:[%s3 + $0x80] sm:$0xff]
  %v1151 = vld [vmem:[%s3 + $0x88] sm:$0xff]
  %v1152 = vld [vmem:[%s3 + $0x90] sm:$0xff]
  %v1153 = vld [vmem:[%s3 + $0x98] sm:$0xff]
  %v1154 = vld [vmem:[%s3 + $0xa0] sm:$0xff]
  %v1155 = vld [vmem:[%s3 + $0xa8] sm:$0xff]
  %v1156 = vld [vmem:[%s3 + $0xb0] sm:$0xff]
  %v1157 = vld [vmem:[%s3 + $0xb8] sm:$0xff]
  %v1158 = vld [vmem:[%s3 + $0xc0] sm:$0xff]
  %v1159 = vld [vmem:[%s3 + $0xc8] sm:$0xff]
  %v1160 = vld [vmem:[%s3 + $0xd0] sm:$0xff]
  %v1161 = vld [vmem:[%s3 + $0xd8] sm:$0xff]
  %v1162 = vld [vmem:[%s3 + $0xe0] sm:$0xff]
  %v1163 = vld [vmem:[%s3 + $0xe8] sm:$0xff]
  %v1164 = vld [vmem:[%s3 + $0xf0] sm:$0xff]
  %v1165 = vld [vmem:[%s3 + $0xf8] sm:$0xff]
  %v1166 = vld [vmem:[#allocation2] sm:$0xfe]
  %v1167 = vld [vmem:[#allocation2 + $0x8] sm:$0xfe]
  %v1168 = vld [vmem:[#allocation2 + $0x1c0] sm:$0x1]
  %v1169 = vld [vmem:[#allocation2 + $0x1c8] sm:$0x1]
  %v1170 = vpack.c.bf16 %v1052, %v1166
  %v1171 = vpack.c.bf16 %v1053, %v1167
  %v1172 = vpack.c.bf16 %v1168, %v1168
  %v1173 = vpack.c.bf16 %v1169, %v1169
  %s1174 = scalar_lea.vmem %s3, 256
  %v1175 = vld [vmem:[%s1174] sm:$0xff]
  %v1176 = vld [vmem:[%s1174 + $0x8] sm:$0xff]
  %v1177 = vld [vmem:[%s1174 + $0x10] sm:$0xff]
  %v1178 = vld [vmem:[%s1174 + $0x18] sm:$0xff]
  %v1179 = vld [vmem:[%s1174 + $0x20] sm:$0xff]
  %v1180 = vld [vmem:[%s1174 + $0x28] sm:$0xff]
  %v1181 = vld [vmem:[%s1174 + $0x30] sm:$0xff]
  %v1182 = vld [vmem:[%s1174 + $0x38] sm:$0xff]
  %v1183 = vld [vmem:[%s1174 + $0x40] sm:$0xff]
  %v1184 = vld [vmem:[%s1174 + $0x48] sm:$0xff]
  %v1185 = vld [vmem:[%s1174 + $0x50] sm:$0xff]
  %v1186 = vld [vmem:[%s1174 + $0x58] sm:$0xff]
  %v1187 = vld [vmem:[%s1174 + $0x60] sm:$0xff]
  %v1188 = vld [vmem:[%s1174 + $0x68] sm:$0xff]
  %v1189 = vld [vmem:[%s1174 + $0x70] sm:$0xff]
  %v1190 = vld [vmem:[%s1174 + $0x78] sm:$0xff]
  %v1191 = vld [vmem:[%s1174 + $0x80] sm:$0xff]
  %v1192 = vld [vmem:[%s1174 + $0x88] sm:$0xff]
  %v1193 = vld [vmem:[%s1174 + $0x90] sm:$0xff]
  %v1194 = vld [vmem:[%s1174 + $0x98] sm:$0xff]
  %v1195 = vld [vmem:[%s1174 + $0xa0] sm:$0xff]
  %v1196 = vld [vmem:[%s1174 + $0xa8] sm:$0xff]
  %v1197 = vld [vmem:[%s1174 + $0xb0] sm:$0xff]
  %v1198 = vld [vmem:[%s1174 + $0xb8] sm:$0xff]
  %v1199 = vld [vmem:[%s1174 + $0xc0] sm:$0xff]
  %v1200 = vld [vmem:[%s1174 + $0xc8] sm:$0xff]
  %v1201 = vld [vmem:[%s1174 + $0xd0] sm:$0xff]
  %v1202 = vld [vmem:[%s1174 + $0xd8] sm:$0xff]
  %v1203 = vld [vmem:[%s1174 + $0xe0] sm:$0xff]
  %v1204 = vld [vmem:[%s1174 + $0xe8] sm:$0xff]
  %v1205 = vld [vmem:[%s1174 + $0xf0] sm:$0xff]
  %v1206 = vld [vmem:[%s1174 + $0xf8] sm:$0xff]
  %vm1207 = vsmask.f32 7424
  %v1209 = vshrl.u32 %v1170, 16
  %v1211 = vshll.u32 %v1170, 16
  %v1213 = vrot.slane %v1211, 1
  %v1214 = vor.u32 %v1209, %v1213
  %v1216 = vshll.u32 %v1108, 16
  %v1218 = vrot.slane %v1216, 1
  %v1219 = vsel %vm1207, %v1214, %v1218
  %v1221 = vshrl.u32 %v1171, 16
  %v1223 = vshll.u32 %v1171, 16
  %v1225 = vrot.slane %v1223, 1
  %v1226 = vor.u32 %v1221, %v1225
  %v1228 = vshll.u32 %v1109, 16
  %v1230 = vrot.slane %v1228, 1
  %v1231 = vsel %vm1207, %v1226, %v1230
  %v1232 = vshrl.u32 %v1108, 16
  %v1234 = vor.u32 %v1232, %v1218
  %v1236 = vshll.u32 %v1110, 16
  %v1238 = vrot.slane %v1236, 1
  %v1239 = vsel %vm1207, %v1234, %v1238
  %v1240 = vshrl.u32 %v1109, 16
  %v1242 = vor.u32 %v1240, %v1230
  %v1244 = vshll.u32 %v1111, 16
  %v1246 = vrot.slane %v1244, 1
  %v1247 = vsel %vm1207, %v1242, %v1246
  %v1248 = vshrl.u32 %v1110, 16
  %v1250 = vor.u32 %v1248, %v1238
  %v1252 = vshll.u32 %v1112, 16
  %v1254 = vrot.slane %v1252, 1
  %v1255 = vsel %vm1207, %v1250, %v1254
  %v1256 = vshrl.u32 %v1111, 16
  %v1258 = vor.u32 %v1256, %v1246
  %v1260 = vshll.u32 %v1113, 16
  %v1262 = vrot.slane %v1260, 1
  %v1263 = vsel %vm1207, %v1258, %v1262
  %v1264 = vshrl.u32 %v1112, 16
  %v1266 = vor.u32 %v1264, %v1254
  %v1268 = vshll.u32 %v1114, 16
  %v1270 = vrot.slane %v1268, 1
  %v1271 = vsel %vm1207, %v1266, %v1270
  %v1272 = vshrl.u32 %v1113, 16
  %v1274 = vor.u32 %v1272, %v1262
  %v1276 = vshll.u32 %v1115, 16
  %v1278 = vrot.slane %v1276, 1
  %v1279 = vsel %vm1207, %v1274, %v1278
  %v1280 = vshrl.u32 %v1114, 16
  %v1282 = vor.u32 %v1280, %v1270
  %v1284 = vshll.u32 %v1116, 16
  %v1286 = vrot.slane %v1284, 1
  %v1287 = vsel %vm1207, %v1282, %v1286
  %v1288 = vshrl.u32 %v1115, 16
  %v1290 = vor.u32 %v1288, %v1278
  %v1292 = vshll.u32 %v1117, 16
  %v1294 = vrot.slane %v1292, 1
  %v1295 = vsel %vm1207, %v1290, %v1294
  %v1296 = vshrl.u32 %v1116, 16
  %v1298 = vor.u32 %v1296, %v1286
  %v1300 = vshll.u32 %v1118, 16
  %v1302 = vrot.slane %v1300, 1
  %v1303 = vsel %vm1207, %v1298, %v1302
  %v1304 = vshrl.u32 %v1117, 16
  %v1306 = vor.u32 %v1304, %v1294
  %v1308 = vshll.u32 %v1119, 16
  %v1310 = vrot.slane %v1308, 1
  %v1311 = vsel %vm1207, %v1306, %v1310
  %v1312 = vshrl.u32 %v1118, 16
  %v1314 = vor.u32 %v1312, %v1302
  %v1316 = vshll.u32 %v1120, 16
  %v1318 = vrot.slane %v1316, 1
  %v1319 = vsel %vm1207, %v1314, %v1318
  %v1320 = vshrl.u32 %v1119, 16
  %v1322 = vor.u32 %v1320, %v1310
  %v1324 = vshll.u32 %v1121, 16
  %v1326 = vrot.slane %v1324, 1
  %v1327 = vsel %vm1207, %v1322, %v1326
  %v1328 = vshrl.u32 %v1120, 16
  %v1330 = vor.u32 %v1328, %v1318
  %v1332 = vshll.u32 %v1122, 16
  %v1334 = vrot.slane %v1332, 1
  %v1335 = vsel %vm1207, %v1330, %v1334
  %v1336 = vshrl.u32 %v1121, 16
  %v1338 = vor.u32 %v1336, %v1326
  %v1340 = vshll.u32 %v1123, 16
  %v1342 = vrot.slane %v1340, 1
  %v1343 = vsel %vm1207, %v1338, %v1342
  %v1344 = vshrl.u32 %v1122, 16
  %v1346 = vor.u32 %v1344, %v1334
  %v1348 = vshll.u32 %v1124, 16
  %v1350 = vrot.slane %v1348, 1
  %v1351 = vsel %vm1207, %v1346, %v1350
  %v1352 = vshrl.u32 %v1123, 16
  %v1354 = vor.u32 %v1352, %v1342
  %v1356 = vshll.u32 %v1125, 16
  %v1358 = vrot.slane %v1356, 1
  %v1359 = vsel %vm1207, %v1354, %v1358
  %v1360 = vshrl.u32 %v1124, 16
  %v1362 = vor.u32 %v1360, %v1350
  %v1364 = vshll.u32 %v1126, 16
  %v1366 = vrot.slane %v1364, 1
  %v1367 = vsel %vm1207, %v1362, %v1366
  %v1368 = vshrl.u32 %v1125, 16
  %v1370 = vor.u32 %v1368, %v1358
  %v1372 = vshll.u32 %v1127, 16
  %v1374 = vrot.slane %v1372, 1
  %v1375 = vsel %vm1207, %v1370, %v1374
  %v1376 = vshrl.u32 %v1126, 16
  %v1378 = vor.u32 %v1376, %v1366
  %v1380 = vshll.u32 %v1128, 16
  %v1382 = vrot.slane %v1380, 1
  %v1383 = vsel %vm1207, %v1378, %v1382
  %v1384 = vshrl.u32 %v1127, 16
  %v1386 = vor.u32 %v1384, %v1374
  %v1388 = vshll.u32 %v1129, 16
  %v1390 = vrot.slane %v1388, 1
  %v1391 = vsel %vm1207, %v1386, %v1390
  %v1392 = vshrl.u32 %v1128, 16
  %v1394 = vor.u32 %v1392, %v1382
  %v1396 = vshll.u32 %v1130, 16
  %v1398 = vrot.slane %v1396, 1
  %v1399 = vsel %vm1207, %v1394, %v1398
  %v1400 = vshrl.u32 %v1129, 16
  %v1402 = vor.u32 %v1400, %v1390
  %v1404 = vshll.u32 %v1131, 16
  %v1406 = vrot.slane %v1404, 1
  %v1407 = vsel %vm1207, %v1402, %v1406
  %v1408 = vshrl.u32 %v1130, 16
  %v1410 = vor.u32 %v1408, %v1398
  %v1412 = vshll.u32 %v1132, 16
  %v1414 = vrot.slane %v1412, 1
  %v1415 = vsel %vm1207, %v1410, %v1414
  %v1416 = vshrl.u32 %v1131, 16
  %v1418 = vor.u32 %v1416, %v1406
  %v1420 = vshll.u32 %v1133, 16
  %v1422 = vrot.slane %v1420, 1
  %v1423 = vsel %vm1207, %v1418, %v1422
  %v1424 = vshrl.u32 %v1132, 16
  %v1426 = vor.u32 %v1424, %v1414
  %v1428 = vshll.u32 %v1172, 16
  %v1430 = vrot.slane %v1428, 1
  %v1431 = vsel %vm1207, %v1426, %v1430
  %v1432 = vshrl.u32 %v1133, 16
  %v1434 = vor.u32 %v1432, %v1422
  %v1436 = vshll.u32 %v1173, 16
  %v1438 = vrot.slane %v1436, 1
  %v1439 = vsel %vm1207, %v1434, %v1438
  %v1500 = vunpack.c.l.b16 %v1175
  %v1501 = vunpack.c.h.b16 %v1175
  %v1502 = vunpack.c.l.b16 %v1176
  %v1503 = vunpack.c.h.b16 %v1176
  %v1504 = vunpack.c.l.b16 %v1177
  %v1505 = vunpack.c.h.b16 %v1177
  %v1506 = vunpack.c.l.b16 %v1178
  %v1507 = vunpack.c.h.b16 %v1178
  %v1508 = vunpack.c.l.b16 %v1179
  %v1509 = vunpack.c.h.b16 %v1179
  %v1510 = vunpack.c.l.b16 %v1180
  %v1511 = vunpack.c.h.b16 %v1180
  %v1512 = vunpack.c.l.b16 %v1181
  %v1513 = vunpack.c.h.b16 %v1181
  %v1514 = vunpack.c.l.b16 %v1182
  %v1515 = vunpack.c.h.b16 %v1182
  %v1516 = vunpack.c.l.b16 %v1183
  %v1517 = vunpack.c.h.b16 %v1183
  %v1518 = vunpack.c.l.b16 %v1184
  %v1519 = vunpack.c.h.b16 %v1184
  %v1520 = vunpack.c.l.b16 %v1185
  %v1521 = vunpack.c.h.b16 %v1185
  %v1522 = vunpack.c.l.b16 %v1186
  %v1523 = vunpack.c.h.b16 %v1186
  %v1524 = vunpack.c.l.b16 %v1187
  %v1525 = vunpack.c.h.b16 %v1187
  %v1526 = vunpack.c.l.b16 %v1188
  %v1527 = vunpack.c.h.b16 %v1188
  %v1528 = vunpack.c.l.b16 %v1189
  %v1529 = vunpack.c.h.b16 %v1189
  %v1530 = vunpack.c.l.b16 %v1190
  %v1531 = vunpack.c.h.b16 %v1190
  %v1532 = vunpack.c.l.b16 %v1191
  %v1533 = vunpack.c.h.b16 %v1191
  %v1534 = vunpack.c.l.b16 %v1192
  %v1535 = vunpack.c.h.b16 %v1192
  %v1536 = vunpack.c.l.b16 %v1193
  %v1537 = vunpack.c.h.b16 %v1193
  %v1538 = vunpack.c.l.b16 %v1194
  %v1539 = vunpack.c.h.b16 %v1194
  %v1540 = vunpack.c.l.b16 %v1195
  %v1541 = vunpack.c.h.b16 %v1195
  %v1542 = vunpack.c.l.b16 %v1196
  %v1543 = vunpack.c.h.b16 %v1196
  %v1544 = vunpack.c.l.b16 %v1197
  %v1545 = vunpack.c.h.b16 %v1197
  %v1546 = vunpack.c.l.b16 %v1198
  %v1547 = vunpack.c.h.b16 %v1198
  %v1548 = vunpack.c.l.b16 %v1199
  %v1549 = vunpack.c.h.b16 %v1199
  %v1550 = vunpack.c.l.b16 %v1200
  %v1551 = vunpack.c.h.b16 %v1200
  %v1552 = vunpack.c.l.b16 %v1201
  %v1553 = vunpack.c.h.b16 %v1201
  %v1554 = vunpack.c.l.b16 %v1202
  %v1555 = vunpack.c.h.b16 %v1202
  %v1556 = vunpack.c.l.b16 %v1203
  %v1557 = vunpack.c.h.b16 %v1203
  %v1558 = vunpack.c.l.b16 %v1204
  %v1559 = vunpack.c.h.b16 %v1204
  %v1560 = vunpack.c.l.b16 %v1205
  %v1561 = vunpack.c.h.b16 %v1205
  %v1562 = vunpack.c.l.b16 %v1206
  %v1563 = vunpack.c.h.b16 %v1206
  %v1564 = vpack.c.b16 %v1502, %v1500
  %v1565 = vpack.c.b16 %v1503, %v1501
  %v1566 = vpack.c.b16 %v1506, %v1504
  %v1567 = vpack.c.b16 %v1507, %v1505
  %v1568 = vpack.c.b16 %v1510, %v1508
  %v1569 = vpack.c.b16 %v1511, %v1509
  %v1570 = vpack.c.b16 %v1514, %v1512
  %v1571 = vpack.c.b16 %v1515, %v1513
  %v1572 = vpack.c.b16 %v1518, %v1516
  %v1573 = vpack.c.b16 %v1519, %v1517
  %v1574 = vpack.c.b16 %v1522, %v1520
  %v1575 = vpack.c.b16 %v1523, %v1521
  %v1576 = vpack.c.b16 %v1526, %v1524
  %v1577 = vpack.c.b16 %v1527, %v1525
  %v1578 = vpack.c.b16 %v1530, %v1528
  %v1579 = vpack.c.b16 %v1531, %v1529
  %v1580 = vpack.c.b16 %v1534, %v1532
  %v1581 = vpack.c.b16 %v1535, %v1533
  %v1582 = vpack.c.b16 %v1538, %v1536
  %v1583 = vpack.c.b16 %v1539, %v1537
  %v1584 = vpack.c.b16 %v1542, %v1540
  %v1585 = vpack.c.b16 %v1543, %v1541
  %v1586 = vpack.c.b16 %v1546, %v1544
  %v1587 = vpack.c.b16 %v1547, %v1545
  %v1588 = vpack.c.b16 %v1550, %v1548
  %v1589 = vpack.c.b16 %v1551, %v1549
  %v1590 = vpack.c.b16 %v1554, %v1552
  %v1591 = vpack.c.b16 %v1555, %v1553
  %v1592 = vpack.c.b16 %v1558, %v1556
  %v1593 = vpack.c.b16 %v1559, %v1557
  %v1594 = vpack.c.b16 %v1562, %v1560
  %v1595 = vpack.c.b16 %v1563, %v1561
  %1628 = vmatprep.subr.bf16.mxu0 %v1565
  %1629 = vmatpush1.bf16.msra.mxu0 %v1564
  %1630 = vmatprep.subr.bf16.mxu0 %v1567
  %1631 = vmatpush1.bf16.msra.mxu0 %v1566
  %1632 = vmatprep.subr.bf16.mxu0 %v1569
  %1633 = vmatpush1.bf16.msra.mxu0 %v1568
  %1634 = vmatprep.subr.bf16.mxu0 %v1571
  %1635 = vmatpush1.bf16.msra.mxu0 %v1570
  %1636 = vmatprep.subr.bf16.mxu0 %v1573
  %1637 = vmatpush1.bf16.msra.mxu0 %v1572
  %1638 = vmatprep.subr.bf16.mxu0 %v1575
  %1639 = vmatpush1.bf16.msra.mxu0 %v1574
  %1640 = vmatprep.subr.bf16.mxu0 %v1577
  %1641 = vmatpush1.bf16.msra.mxu0 %v1576
  %1642 = vmatprep.subr.bf16.mxu0 %v1579
  %1643 = vmatpush1.bf16.msra.mxu0 %v1578
  %1644 = vmatprep.subr.bf16.mxu0 %v1581
  %1645 = vmatpush1.bf16.msra.mxu0 %v1580
  %1646 = vmatprep.subr.bf16.mxu0 %v1583
  %1647 = vmatpush1.bf16.msra.mxu0 %v1582
  %1648 = vmatprep.subr.bf16.mxu0 %v1585
  %1649 = vmatpush1.bf16.msra.mxu0 %v1584
  %1650 = vmatprep.subr.bf16.mxu0 %v1587
  %1651 = vmatpush1.bf16.msra.mxu0 %v1586
  %1652 = vmatprep.subr.bf16.mxu0 %v1589
  %1653 = vmatpush1.bf16.msra.mxu0 %v1588
  %1654 = vmatprep.subr.bf16.mxu0 %v1591
  %1655 = vmatpush1.bf16.msra.mxu0 %v1590
  %1656 = vmatprep.subr.bf16.mxu0 %v1593
  %1657 = vmatpush1.bf16.msra.mxu0 %v1592
  %1658 = vmatprep.subr.bf16.mxu0 %v1595
  %1659 = vmatpush1.bf16.msra.mxu0 %v1594
  %1660 = vmatprep.mubr.bf16.mxu0 %v1231
  %1661 = vmatmul.mubr.bf16.gmra.mrb[0].mxu0 %v1219
  %v1662 = vpop.f32.mrb[0].mxu0
  %v1663 = vadd.f32 0.0, %v1662
  %v1664 = vpop.f32.mrb[0].mxu0
  %v1665 = vadd.f32 0.0, %v1664
  %v1666 = vpop.f32.mrb[0].mxu0
  %v1667 = vadd.f32 0.0, %v1666
  %v1668 = vpop.f32.mrb[0].mxu0
  %v1669 = vadd.f32 0.0, %v1668
  %1670 = vmatprep.mubr.bf16.mxu0 %v1247
  %1671 = vmatmul.mubr.bf16.gmra.mrb[0].mxu0 %v1239
  %v1672 = vpop.f32.mrb[0].mxu0
  %v1673 = vadd.f32 0.0, %v1672
  %v1674 = vpop.f32.mrb[0].mxu0
  %v1675 = vadd.f32 0.0, %v1674
  %v1676 = vpop.f32.mrb[0].mxu0
  %v1677 = vadd.f32 0.0, %v1676
  %v1678 = vpop.f32.mrb[0].mxu0
  %v1679 = vadd.f32 0.0, %v1678
  %1680 = vmatprep.mubr.bf16.mxu0 %v1263
  %1681 = vmatmul.mubr.bf16.gmra.mrb[0].mxu0 %v1255
  %v1682 = vpop.f32.mrb[0].mxu0
  %v1683 = vadd.f32 0.0, %v1682
  %v1684 = vpop.f32.mrb[0].mxu0
  %v1685 = vadd.f32 0.0, %v1684
  %v1686 = vpop.f32.mrb[0].mxu0
  %v1687 = vadd.f32 0.0, %v1686
  %v1688 = vpop.f32.mrb[0].mxu0
  %v1689 = vadd.f32 0.0, %v1688
  %1690 = vmatprep.mubr.bf16.mxu0 %v1279
  %1691 = vmatmul.mubr.bf16.gmra.mrb[0].mxu0 %v1271
  %v1692 = vpop.f32.mrb[0].mxu0
  %v1693 = vadd.f32 0.0, %v1692
  %v1694 = vpop.f32.mrb[0].mxu0
  %v1695 = vadd.f32 0.0, %v1694
  %v1696 = vpop.f32.mrb[0].mxu0
  %v1697 = vadd.f32 0.0, %v1696
  %v1698 = vpop.f32.mrb[0].mxu0
  %v1699 = vadd.f32 0.0, %v1698
  %1700 = vmatprep.mubr.bf16.mxu0 %v1295
  %1701 = vmatmul.mubr.bf16.gmra.mrb[0].mxu0 %v1287
  %v1702 = vpop.f32.mrb[0].mxu0
  %v1703 = vadd.f32 0.0, %v1702
  %v1704 = vpop.f32.mrb[0].mxu0
  %v1705 = vadd.f32 0.0, %v1704
  %v1706 = vpop.f32.mrb[0].mxu0
  %v1707 = vadd.f32 0.0, %v1706
  %v1708 = vpop.f32.mrb[0].mxu0
  %v1709 = vadd.f32 0.0, %v1708
  %1710 = vmatprep.mubr.bf16.mxu0 %v1311
  %1711 = vmatmul.mubr.bf16.gmra.mrb[0].mxu0 %v1303
  %v1712 = vpop.f32.mrb[0].mxu0
  %v1713 = vadd.f32 0.0, %v1712
  %v1714 = vpop.f32.mrb[0].mxu0
  %v1715 = vadd.f32 0.0, %v1714
  %v1716 = vpop.f32.mrb[0].mxu0
  %v1717 = vadd.f32 0.0, %v1716
  %v1718 = vpop.f32.mrb[0].mxu0
  %v1719 = vadd.f32 0.0, %v1718
  %1720 = vmatprep.mubr.bf16.mxu0 %v1327
  %1721 = vmatmul.mubr.bf16.gmra.mrb[0].mxu0 %v1319
  %v1722 = vpop.f32.mrb[0].mxu0
  %v1723 = vadd.f32 0.0, %v1722
  %v1724 = vpop.f32.mrb[0].mxu0
  %v1725 = vadd.f32 0.0, %v1724
  %v1726 = vpop.f32.mrb[0].mxu0
  %v1727 = vadd.f32 0.0, %v1726
  %v1728 = vpop.f32.mrb[0].mxu0
  %v1729 = vadd.f32 0.0, %v1728
  %1730 = vmatprep.mubr.bf16.mxu0 %v1343
  %1731 = vmatmul.mubr.bf16.gmra.mrb[0].mxu0 %v1335
  %v1732 = vpop.f32.mrb[0].mxu0
  %v1733 = vadd.f32 0.0, %v1732
  %v1734 = vpop.f32.mrb[0].mxu0
  %v1735 = vadd.f32 0.0, %v1734
  %v1736 = vpop.f32.mrb[0].mxu0
  %v1737 = vadd.f32 0.0, %v1736
  %v1738 = vpop.f32.mrb[0].mxu0
  %v1739 = vadd.f32 0.0, %v1738
  %1740 = vmatprep.mubr.bf16.mxu0 %v1359
  %1741 = vmatmul.mubr.bf16.gmra.mrb[0].mxu0 %v1351
  %v1742 = vpop.f32.mrb[0].mxu0
  %v1743 = vadd.f32 0.0, %v1742
  %v1744 = vpop.f32.mrb[0].mxu0
  %v1745 = vadd.f32 0.0, %v1744
  %v1746 = vpop.f32.mrb[0].mxu0
  %v1747 = vadd.f32 0.0, %v1746
  %v1748 = vpop.f32.mrb[0].mxu0
  %v1749 = vadd.f32 0.0, %v1748
  %1750 = vmatprep.mubr.bf16.mxu0 %v1375
  %1751 = vmatmul.mubr.bf16.gmra.mrb[0].mxu0 %v1367
  %v1752 = vpop.f32.mrb[0].mxu0
  %v1753 = vadd.f32 0.0, %v1752
  %v1754 = vpop.f32.mrb[0].mxu0
  %v1755 = vadd.f32 0.0, %v1754
  %v1756 = vpop.f32.mrb[0].mxu0
  %v1757 = vadd.f32 0.0, %v1756
  %v1758 = vpop.f32.mrb[0].mxu0
  %v1759 = vadd.f32 0.0, %v1758
  %1760 = vmatprep.mubr.bf16.mxu0 %v1391
  %1761 = vmatmul.mubr.bf16.gmra.mrb[0].mxu0 %v1383
  %v1762 = vpop.f32.mrb[0].mxu0
  %v1763 = vadd.f32 0.0, %v1762
  %v1764 = vpop.f32.mrb[0].mxu0
  %v1765 = vadd.f32 0.0, %v1764
  %v1766 = vpop.f32.mrb[0].mxu0
  %v1767 = vadd.f32 0.0, %v1766
  %v1768 = vpop.f32.mrb[0].mxu0
  %v1769 = vadd.f32 0.0, %v1768
  %1770 = vmatprep.mubr.bf16.mxu0 %v1407
  %1771 = vmatmul.mubr.bf16.gmra.mrb[0].mxu0 %v1399
  %v1772 = vpop.f32.mrb[0].mxu0
  %v1773 = vadd.f32 0.0, %v1772
  %v1774 = vpop.f32.mrb[0].mxu0
  %v1775 = vadd.f32 0.0, %v1774
  %v1776 = vpop.f32.mrb[0].mxu0
  %v1777 = vadd.f32 0.0, %v1776
  %v1778 = vpop.f32.mrb[0].mxu0
  %v1779 = vadd.f32 0.0, %v1778
  %1780 = vmatprep.mubr.bf16.mxu0 %v1423
  %1781 = vmatmul.mubr.bf16.gmra.mrb[0].mxu0 %v1415
  %v1782 = vpop.f32.mrb[0].mxu0
  %v1783 = vadd.f32 0.0, %v1782
  %v1784 = vpop.f32.mrb[0].mxu0
  %v1785 = vadd.f32 0.0, %v1784
  %v1786 = vpop.f32.mrb[0].mxu0
  %v1787 = vadd.f32 0.0, %v1786
  %v1788 = vpop.f32.mrb[0].mxu0
  %v1789 = vadd.f32 0.0, %v1788
  %1790 = vmatprep.mubr.bf16.mxu0 %v1439
  %1791 = vmatmul.mubr.bf16.gmra.mrb[0].mxu0 %v1431
  %v1792 = vpop.f32.mrb[0].mxu0
  %v1793 = vadd.f32 0.0, %v1792
  %v1794 = vpop.f32.mrb[0].mxu0
  %v1795 = vadd.f32 0.0, %v1794
  %v1796 = vpop.f32.mrb[0].mxu0
  %v1797 = vadd.f32 0.0, %v1796
  %v1798 = vpop.f32.mrb[0].mxu0
  %v1799 = vadd.f32 0.0, %v1798
  %1800 = vdwg.mxu0
  %v1833 = vunpack.c.l.b16 %v1134
  %v1834 = vunpack.c.h.b16 %v1134
  %v1835 = vunpack.c.l.b16 %v1135
  %v1836 = vunpack.c.h.b16 %v1135
  %v1837 = vunpack.c.l.b16 %v1136
  %v1838 = vunpack.c.h.b16 %v1136
  %v1839 = vunpack.c.l.b16 %v1137
  %v1840 = vunpack.c.h.b16 %v1137
  %v1841 = vunpack.c.l.b16 %v1138
  %v1842 = vunpack.c.h.b16 %v1138
  %v1843 = vunpack.c.l.b16 %v1139
  %v1844 = vunpack.c.h.b16 %v1139
  %v1845 = vunpack.c.l.b16 %v1140
  %v1846 = vunpack.c.h.b16 %v1140
  %v1847 = vunpack.c.l.b16 %v1141
  %v1848 = vunpack.c.h.b16 %v1141
  %v1849 = vunpack.c.l.b16 %v1142
  %v1850 = vunpack.c.h.b16 %v1142
  %v1851 = vunpack.c.l.b16 %v1143
  %v1852 = vunpack.c.h.b16 %v1143
  %v1853 = vunpack.c.l.b16 %v1144
  %v1854 = vunpack.c.h.b16 %v1144
  %v1855 = vunpack.c.l.b16 %v1145
  %v1856 = vunpack.c.h.b16 %v1145
  %v1857 = vunpack.c.l.b16 %v1146
  %v1858 = vunpack.c.h.b16 %v1146
  %v1859 = vunpack.c.l.b16 %v1147
  %v1860 = vunpack.c.h.b16 %v1147
  %v1861 = vunpack.c.l.b16 %v1148
  %v1862 = vunpack.c.h.b16 %v1148
  %v1863 = vunpack.c.l.b16 %v1149
  %v1864 = vunpack.c.h.b16 %v1149
  %v1865 = vunpack.c.l.b16 %v1150
  %v1866 = vunpack.c.h.b16 %v1150
  %v1867 = vunpack.c.l.b16 %v1151
  %v1868 = vunpack.c.h.b16 %v1151
  %v1869 = vunpack.c.l.b16 %v1152
  %v1870 = vunpack.c.h.b16 %v1152
  %v1871 = vunpack.c.l.b16 %v1153
  %v1872 = vunpack.c.h.b16 %v1153
  %v1873 = vunpack.c.l.b16 %v1154
  %v1874 = vunpack.c.h.b16 %v1154
  %v1875 = vunpack.c.l.b16 %v1155
  %v1876 = vunpack.c.h.b16 %v1155
  %v1877 = vunpack.c.l.b16 %v1156
  %v1878 = vunpack.c.h.b16 %v1156
  %v1879 = vunpack.c.l.b16 %v1157
  %v1880 = vunpack.c.h.b16 %v1157
  %v1881 = vunpack.c.l.b16 %v1158
  %v1882 = vunpack.c.h.b16 %v1158
  %v1883 = vunpack.c.l.b16 %v1159
  %v1884 = vunpack.c.h.b16 %v1159
  %v1885 = vunpack.c.l.b16 %v1160
  %v1886 = vunpack.c.h.b16 %v1160
  %v1887 = vunpack.c.l.b16 %v1161
  %v1888 = vunpack.c.h.b16 %v1161
  %v1889 = vunpack.c.l.b16 %v1162
  %v1890 = vunpack.c.h.b16 %v1162
  %v1891 = vunpack.c.l.b16 %v1163
  %v1892 = vunpack.c.h.b16 %v1163
  %v1893 = vunpack.c.l.b16 %v1164
  %v1894 = vunpack.c.h.b16 %v1164
  %v1895 = vunpack.c.l.b16 %v1165
  %v1896 = vunpack.c.h.b16 %v1165
  %v1897 = vpack.c.b16 %v1835, %v1833
  %v1898 = vpack.c.b16 %v1836, %v1834
  %v1899 = vpack.c.b16 %v1839, %v1837
  %v1900 = vpack.c.b16 %v1840, %v1838
  %v1901 = vpack.c.b16 %v1843, %v1841
  %v1902 = vpack.c.b16 %v1844, %v1842
  %v1903 = vpack.c.b16 %v1847, %v1845
  %v1904 = vpack.c.b16 %v1848, %v1846
  %v1905 = vpack.c.b16 %v1851, %v1849
  %v1906 = vpack.c.b16 %v1852, %v1850
  %v1907 = vpack.c.b16 %v1855, %v1853
  %v1908 = vpack.c.b16 %v1856, %v1854
  %v1909 = vpack.c.b16 %v1859, %v1857
  %v1910 = vpack.c.b16 %v1860, %v1858
  %v1911 = vpack.c.b16 %v1863, %v1861
  %v1912 = vpack.c.b16 %v1864, %v1862
  %v1913 = vpack.c.b16 %v1867, %v1865
  %v1914 = vpack.c.b16 %v1868, %v1866
  %v1915 = vpack.c.b16 %v1871, %v1869
  %v1916 = vpack.c.b16 %v1872, %v1870
  %v1917 = vpack.c.b16 %v1875, %v1873
  %v1918 = vpack.c.b16 %v1876, %v1874
  %v1919 = vpack.c.b16 %v1879, %v1877
  %v1920 = vpack.c.b16 %v1880, %v1878
  %v1921 = vpack.c.b16 %v1883, %v1881
  %v1922 = vpack.c.b16 %v1884, %v1882
  %v1923 = vpack.c.b16 %v1887, %v1885
  %v1924 = vpack.c.b16 %v1888, %v1886
  %v1925 = vpack.c.b16 %v1891, %v1889
  %v1926 = vpack.c.b16 %v1892, %v1890
  %v1927 = vpack.c.b16 %v1895, %v1893
  %v1928 = vpack.c.b16 %v1896, %v1894
  %1961 = vmatprep.subr.bf16.mxu0 %v1898
  %1962 = vmatpush1.bf16.msra.mxu0 %v1897
  %1963 = vmatprep.subr.bf16.mxu0 %v1900
  %1964 = vmatpush1.bf16.msra.mxu0 %v1899
  %1965 = vmatprep.subr.bf16.mxu0 %v1902
  %1966 = vmatpush1.bf16.msra.mxu0 %v1901
  %1967 = vmatprep.subr.bf16.mxu0 %v1904
  %1968 = vmatpush1.bf16.msra.mxu0 %v1903
  %1969 = vmatprep.subr.bf16.mxu0 %v1906
  %1970 = vmatpush1.bf16.msra.mxu0 %v1905
  %1971 = vmatprep.subr.bf16.mxu0 %v1908
  %1972 = vmatpush1.bf16.msra.mxu0 %v1907
  %1973 = vmatprep.subr.bf16.mxu0 %v1910
  %1974 = vmatpush1.bf16.msra.mxu0 %v1909
  %1975 = vmatprep.subr.bf16.mxu0 %v1912
  %1976 = vmatpush1.bf16.msra.mxu0 %v1911
  %1977 = vmatprep.subr.bf16.mxu0 %v1914
  %1978 = vmatpush1.bf16.msra.mxu0 %v1913
  %1979 = vmatprep.subr.bf16.mxu0 %v1916
  %1980 = vmatpush1.bf16.msra.mxu0 %v1915
  %1981 = vmatprep.subr.bf16.mxu0 %v1918
  %1982 = vmatpush1.bf16.msra.mxu0 %v1917
  %1983 = vmatprep.subr.bf16.mxu0 %v1920
  %1984 = vmatpush1.bf16.msra.mxu0 %v1919
  %1985 = vmatprep.subr.bf16.mxu0 %v1922
  %1986 = vmatpush1.bf16.msra.mxu0 %v1921
  %1987 = vmatprep.subr.bf16.mxu0 %v1924
  %1988 = vmatpush1.bf16.msra.mxu0 %v1923
  %1989 = vmatprep.subr.bf16.mxu0 %v1926
  %1990 = vmatpush1.bf16.msra.mxu0 %v1925
  %1991 = vmatprep.subr.bf16.mxu0 %v1928
  %1992 = vmatpush1.bf16.msra.mxu0 %v1927
  %1993 = vmatprep.mubr.bf16.mxu0 %v1107
  %1994 = vmatmul.mubr.bf16.gmra.mrb[0].mxu0 %v1106
  %v1995 = vpop.f32.mrb[0].mxu0
  %v1996 = vadd.f32 %v1663, %v1995
  %v1997 = vpop.f32.mrb[0].mxu0
  %v1998 = vadd.f32 %v1665, %v1997
  %v1999 = vpop.f32.mrb[0].mxu0
  %v2000 = vadd.f32 %v1667, %v1999
  %v2001 = vpop.f32.mrb[0].mxu0
  %v2002 = vadd.f32 %v1669, %v2001
  %2003 = vmatprep.mubr.bf16.mxu0 %v1109
  %2004 = vmatmul.mubr.bf16.gmra.mrb[0].mxu0 %v1108
  %v2005 = vpop.f32.mrb[0].mxu0
  %v2006 = vadd.f32 %v1673, %v2005
  %v2007 = vpop.f32.mrb[0].mxu0
  %v2008 = vadd.f32 %v1675, %v2007
  %v2009 = vpop.f32.mrb[0].mxu0
  %v2010 = vadd.f32 %v1677, %v2009
  %v2011 = vpop.f32.mrb[0].mxu0
  %v2012 = vadd.f32 %v1679, %v2011
  %2013 = vmatprep.mubr.bf16.mxu0 %v1111
  %2014 = vmatmul.mubr.bf16.gmra.mrb[0].mxu0 %v1110
  %v2015 = vpop.f32.mrb[0].mxu0
  %v2016 = vadd.f32 %v1683, %v2015
  %v2017 = vpop.f32.mrb[0].mxu0
  %v2018 = vadd.f32 %v1685, %v2017
  %v2019 = vpop.f32.mrb[0].mxu0
  %v2020 = vadd.f32 %v1687, %v2019
  %v2021 = vpop.f32.mrb[0].mxu0
  %v2022 = vadd.f32 %v1689, %v2021
  %2023 = vmatprep.mubr.bf16.mxu0 %v1113
  %2024 = vmatmul.mubr.bf16.gmra.mrb[0].mxu0 %v1112
  %v2025 = vpop.f32.mrb[0].mxu0
  %v2026 = vadd.f32 %v1693, %v2025
  %v2027 = vpop.f32.mrb[0].mxu0
  %v2028 = vadd.f32 %v1695, %v2027
  %v2029 = vpop.f32.mrb[0].mxu0
  %v2030 = vadd.f32 %v1697, %v2029
  %v2031 = vpop.f32.mrb[0].mxu0
  %v2032 = vadd.f32 %v1699, %v2031
  %2033 = vmatprep.mubr.bf16.mxu0 %v1115
  %2034 = vmatmul.mubr.bf16.gmra.mrb[0].mxu0 %v1114
  %v2035 = vpop.f32.mrb[0].mxu0
  %v2036 = vadd.f32 %v1703, %v2035
  %v2037 = vpop.f32.mrb[0].mxu0
  %v2038 = vadd.f32 %v1705, %v2037
  %v2039 = vpop.f32.mrb[0].mxu0
  %v2040 = vadd.f32 %v1707, %v2039
  %v2041 = vpop.f32.mrb[0].mxu0
  %v2042 = vadd.f32 %v1709, %v2041
  %2043 = vmatprep.mubr.bf16.mxu0 %v1117
  %2044 = vmatmul.mubr.bf16.gmra.mrb[0].mxu0 %v1116
  %v2045 = vpop.f32.mrb[0].mxu0
  %v2046 = vadd.f32 %v1713, %v2045
  %v2047 = vpop.f32.mrb[0].mxu0
  %v2048 = vadd.f32 %v1715, %v2047
  %v2049 = vpop.f32.mrb[0].mxu0
  %v2050 = vadd.f32 %v1717, %v2049
  %v2051 = vpop.f32.mrb[0].mxu0
  %v2052 = vadd.f32 %v1719, %v2051
  %2053 = vmatprep.mubr.bf16.mxu0 %v1119
  %2054 = vmatmul.mubr.bf16.gmra.mrb[0].mxu0 %v1118
  %v2055 = vpop.f32.mrb[0].mxu0
  %v2056 = vadd.f32 %v1723, %v2055
  %v2057 = vpop.f32.mrb[0].mxu0
  %v2058 = vadd.f32 %v1725, %v2057
  %v2059 = vpop.f32.mrb[0].mxu0
  %v2060 = vadd.f32 %v1727, %v2059
  %v2061 = vpop.f32.mrb[0].mxu0
  %v2062 = vadd.f32 %v1729, %v2061
  %2063 = vmatprep.mubr.bf16.mxu0 %v1121
  %2064 = vmatmul.mubr.bf16.gmra.mrb[0].mxu0 %v1120
  %v2065 = vpop.f32.mrb[0].mxu0
  %v2066 = vadd.f32 %v1733, %v2065
  %v2067 = vpop.f32.mrb[0].mxu0
  %v2068 = vadd.f32 %v1735, %v2067
  %v2069 = vpop.f32.mrb[0].mxu0
  %v2070 = vadd.f32 %v1737, %v2069
  %v2071 = vpop.f32.mrb[0].mxu0
  %v2072 = vadd.f32 %v1739, %v2071
  %2073 = vmatprep.mubr.bf16.mxu0 %v1123
  %2074 = vmatmul.mubr.bf16.gmra.mrb[0].mxu0 %v1122
  %v2075 = vpop.f32.mrb[0].mxu0
  %v2076 = vadd.f32 %v1743, %v2075
  %v2077 = vpop.f32.mrb[0].mxu0
  %v2078 = vadd.f32 %v1745, %v2077
  %v2079 = vpop.f32.mrb[0].mxu0
  %v2080 = vadd.f32 %v1747, %v2079
  %v2081 = vpop.f32.mrb[0].mxu0
  %v2082 = vadd.f32 %v1749, %v2081
  %2083 = vmatprep.mubr.bf16.mxu0 %v1125
  %2084 = vmatmul.mubr.bf16.gmra.mrb[0].mxu0 %v1124
  %v2085 = vpop.f32.mrb[0].mxu0
  %v2086 = vadd.f32 %v1753, %v2085
  %v2087 = vpop.f32.mrb[0].mxu0
  %v2088 = vadd.f32 %v1755, %v2087
  %v2089 = vpop.f32.mrb[0].mxu0
  %v2090 = vadd.f32 %v1757, %v2089
  %v2091 = vpop.f32.mrb[0].mxu0
  %v2092 = vadd.f32 %v1759, %v2091
  %2093 = vmatprep.mubr.bf16.mxu0 %v1127
  %2094 = vmatmul.mubr.bf16.gmra.mrb[0].mxu0 %v1126
  %v2095 = vpop.f32.mrb[0].mxu0
  %v2096 = vadd.f32 %v1763, %v2095
  %v2097 = vpop.f32.mrb[0].mxu0
  %v2098 = vadd.f32 %v1765, %v2097
  %v2099 = vpop.f32.mrb[0].mxu0
  %v2100 = vadd.f32 %v1767, %v2099
  %v2101 = vpop.f32.mrb[0].mxu0
  %v2102 = vadd.f32 %v1769, %v2101
  %2103 = vmatprep.mubr.bf16.mxu0 %v1129
  %2104 = vmatmul.mubr.bf16.gmra.mrb[0].mxu0 %v1128
  %v2105 = vpop.f32.mrb[0].mxu0
  %v2106 = vadd.f32 %v1773, %v2105
  %v2107 = vpop.f32.mrb[0].mxu0
  %v2108 = vadd.f32 %v1775, %v2107
  %v2109 = vpop.f32.mrb[0].mxu0
  %v2110 = vadd.f32 %v1777, %v2109
  %v2111 = vpop.f32.mrb[0].mxu0
  %v2112 = vadd.f32 %v1779, %v2111
  %2113 = vmatprep.mubr.bf16.mxu0 %v1131
  %2114 = vmatmul.mubr.bf16.gmra.mrb[0].mxu0 %v1130
  %v2115 = vpop.f32.mrb[0].mxu0
  %v2116 = vadd.f32 %v1783, %v2115
  %v2117 = vpop.f32.mrb[0].mxu0
  %v2118 = vadd.f32 %v1785, %v2117
  %v2119 = vpop.f32.mrb[0].mxu0
  %v2120 = vadd.f32 %v1787, %v2119
  %v2121 = vpop.f32.mrb[0].mxu0
  %v2122 = vadd.f32 %v1789, %v2121
  %2123 = vmatprep.mubr.bf16.mxu0 %v1133
  %2124 = vmatmul.mubr.bf16.gmra.mrb[0].mxu0 %v1132
  %v2125 = vpop.f32.mrb[0].mxu0
  %v2126 = vadd.f32 %v1793, %v2125
  %v2127 = vpop.f32.mrb[0].mxu0
  %v2128 = vadd.f32 %v1795, %v2127
  %v2129 = vpop.f32.mrb[0].mxu0
  %v2130 = vadd.f32 %v1797, %v2129
  %v2131 = vpop.f32.mrb[0].mxu0
  %v2132 = vadd.f32 %v1799, %v2131
  %2133 = vdwg.mxu0
  %v2134 = vld [vmem:[#allocation2 + $0x20] sm:$0xff]
  %v2135 = vld [vmem:[#allocation2 + $0x28] sm:$0xff]
  %v2136 = vld [vmem:[#allocation2 + $0x30] sm:$0xff]
  %v2137 = vld [vmem:[#allocation2 + $0x38] sm:$0xff]
  %v2138 = vld [vmem:[#allocation2 + $0x40] sm:$0xff]
  %v2139 = vld [vmem:[#allocation2 + $0x48] sm:$0xff]
  %v2140 = vld [vmem:[#allocation2 + $0x50] sm:$0xff]
  %v2141 = vld [vmem:[#allocation2 + $0x58] sm:$0xff]
  %v2142 = vld [vmem:[#allocation2 + $0x60] sm:$0xff]
  %v2143 = vld [vmem:[#allocation2 + $0x68] sm:$0xff]
  %v2144 = vld [vmem:[#allocation2 + $0x70] sm:$0xff]
  %v2145 = vld [vmem:[#allocation2 + $0x78] sm:$0xff]
  %v2146 = vld [vmem:[#allocation2 + $0x80] sm:$0xff]
  %v2147 = vld [vmem:[#allocation2 + $0x88] sm:$0xff]
  %v2148 = vld [vmem:[#allocation2 + $0x90] sm:$0xff]
  %v2149 = vld [vmem:[#allocation2 + $0x98] sm:$0xff]
  %v2150 = vld [vmem:[#allocation2 + $0xa0] sm:$0xff]
  %v2151 = vld [vmem:[#allocation2 + $0xa8] sm:$0xff]
  %v2152 = vld [vmem:[#allocation2 + $0xb0] sm:$0xff]
  %v2153 = vld [vmem:[#allocation2 + $0xb8] sm:$0xff]
  %v2154 = vld [vmem:[#allocation2 + $0xc0] sm:$0xff]
  %v2155 = vld [vmem:[#allocation2 + $0xc8] sm:$0xff]
  %v2156 = vld [vmem:[#allocation2 + $0xd0] sm:$0xff]
  %v2157 = vld [vmem:[#allocation2 + $0xd8] sm:$0xff]
  %v2158 = vld [vmem:[#allocation2 + $0xe0] sm:$0xff]
  %v2159 = vld [vmem:[#allocation2 + $0xe8] sm:$0xff]
  %v2160 = vld [vmem:[#allocation2 + $0xf0] sm:$0xff]
  %v2161 = vld [vmem:[#allocation2 + $0xf8] sm:$0xff]
  %v2162 = vld [vmem:[#allocation2 + $0x100] sm:$0xff]
  %v2163 = vld [vmem:[#allocation2 + $0x108] sm:$0xff]
  %v2164 = vld [vmem:[#allocation2 + $0x110] sm:$0xff]
  %v2165 = vld [vmem:[#allocation2 + $0x118] sm:$0xff]
  %v2166 = vld [vmem:[#allocation2 + $0x120] sm:$0xff]
  %v2167 = vld [vmem:[#allocation2 + $0x128] sm:$0xff]
  %v2168 = vld [vmem:[#allocation2 + $0x130] sm:$0xff]
  %v2169 = vld [vmem:[#allocation2 + $0x138] sm:$0xff]
  %v2170 = vld [vmem:[#allocation2 + $0x140] sm:$0xff]
  %v2171 = vld [vmem:[#allocation2 + $0x148] sm:$0xff]
  %v2172 = vld [vmem:[#allocation2 + $0x150] sm:$0xff]
  %v2173 = vld [vmem:[#allocation2 + $0x158] sm:$0xff]
  %v2174 = vld [vmem:[#allocation2 + $0x160] sm:$0xff]
  %v2175 = vld [vmem:[#allocation2 + $0x168] sm:$0xff]
  %v2176 = vld [vmem:[#allocation2 + $0x170] sm:$0xff]
  %v2177 = vld [vmem:[#allocation2 + $0x178] sm:$0xff]
  %v2178 = vld [vmem:[#allocation2 + $0x180] sm:$0xff]
  %v2179 = vld [vmem:[#allocation2 + $0x188] sm:$0xff]
  %v2180 = vld [vmem:[#allocation2 + $0x190] sm:$0xff]
  %v2181 = vld [vmem:[#allocation2 + $0x198] sm:$0xff]
  %v2182 = vld [vmem:[#allocation2 + $0x1a0] sm:$0xff]
  %v2183 = vld [vmem:[#allocation2 + $0x1a8] sm:$0xff]
  %v2184 = vld [vmem:[#allocation2 + $0x1b0] sm:$0xff]
  %v2185 = vld [vmem:[#allocation2 + $0x1b8] sm:$0xff]
  %v2186 = vld [vmem:[#allocation2 + $0x1c0] sm:$0xff]
  %v2187 = vld [vmem:[#allocation2 + $0x1c8] sm:$0xff]
  %v2188 = vld [vmem:[#allocation2 + $0x1d0] sm:$0xff]
  %v2189 = vld [vmem:[#allocation2 + $0x1d8] sm:$0xff]
  %v2190 = vpack.c.bf16 %v2136, %v2134
  %v2191 = vpack.c.bf16 %v2137, %v2135
  %v2192 = vpack.c.bf16 %v2140, %v2138
  %v2193 = vpack.c.bf16 %v2141, %v2139
  %v2194 = vpack.c.bf16 %v2144, %v2142
  %v2195 = vpack.c.bf16 %v2145, %v2143
  %v2196 = vpack.c.bf16 %v2148, %v2146
  %v2197 = vpack.c.bf16 %v2149, %v2147
  %v2198 = vpack.c.bf16 %v2152, %v2150
  %v2199 = vpack.c.bf16 %v2153, %v2151
  %v2200 = vpack.c.bf16 %v2156, %v2154
  %v2201 = vpack.c.bf16 %v2157, %v2155
  %v2202 = vpack.c.bf16 %v2160, %v2158
  %v2203 = vpack.c.bf16 %v2161, %v2159
  %v2204 = vpack.c.bf16 %v2164, %v2162
  %v2205 = vpack.c.bf16 %v2165, %v2163
  %v2206 = vpack.c.bf16 %v2168, %v2166
  %v2207 = vpack.c.bf16 %v2169, %v2167
  %v2208 = vpack.c.bf16 %v2172, %v2170
  %v2209 = vpack.c.bf16 %v2173, %v2171
  %v2210 = vpack.c.bf16 %v2176, %v2174
  %v2211 = vpack.c.bf16 %v2177, %v2175
  %v2212 = vpack.c.bf16 %v2180, %v2178
  %v2213 = vpack.c.bf16 %v2181, %v2179
  %v2214 = vpack.c.bf16 %v2184, %v2182
  %v2215 = vpack.c.bf16 %v2185, %v2183
  %v2216 = vpack.c.bf16 %v2188, %v2186
  %v2217 = vpack.c.bf16 %v2189, %v2187
  %s2218 = scalar_lea.vmem %s3, 512
  %v2219 = vld [vmem:[%s2218] sm:$0xff]
  %v2220 = vld [vmem:[%s2218 + $0x8] sm:$0xff]
  %v2221 = vld [vmem:[%s2218 + $0x10] sm:$0xff]
  %v2222 = vld [vmem:[%s2218 + $0x18] sm:$0xff]
  %v2223 = vld [vmem:[%s2218 + $0x20] sm:$0xff]
  %v2224 = vld [vmem:[%s2218 + $0x28] sm:$0xff]
  %v2225 = vld [vmem:[%s2218 + $0x30] sm:$0xff]
  %v2226 = vld [vmem:[%s2218 + $0x38] sm:$0xff]
  %v2227 = vld [vmem:[%s2218 + $0x40] sm:$0xff]
  %v2228 = vld [vmem:[%s2218 + $0x48] sm:$0xff]
  %v2229 = vld [vmem:[%s2218 + $0x50] sm:$0xff]
  %v2230 = vld [vmem:[%s2218 + $0x58] sm:$0xff]
  %v2231 = vld [vmem:[%s2218 + $0x60] sm:$0xff]
  %v2232 = vld [vmem:[%s2218 + $0x68] sm:$0xff]
  %v2233 = vld [vmem:[%s2218 + $0x70] sm:$0xff]
  %v2234 = vld [vmem:[%s2218 + $0x78] sm:$0xff]
  %v2235 = vld [vmem:[%s2218 + $0x80] sm:$0xff]
  %v2236 = vld [vmem:[%s2218 + $0x88] sm:$0xff]
  %v2237 = vld [vmem:[%s2218 + $0x90] sm:$0xff]
  %v2238 = vld [vmem:[%s2218 + $0x98] sm:$0xff]
  %v2239 = vld [vmem:[%s2218 + $0xa0] sm:$0xff]
  %v2240 = vld [vmem:[%s2218 + $0xa8] sm:$0xff]
  %v2241 = vld [vmem:[%s2218 + $0xb0] sm:$0xff]
  %v2242 = vld [vmem:[%s2218 + $0xb8] sm:$0xff]
  %v2243 = vld [vmem:[%s2218 + $0xc0] sm:$0xff]
  %v2244 = vld [vmem:[%s2218 + $0xc8] sm:$0xff]
  %v2245 = vld [vmem:[%s2218 + $0xd0] sm:$0xff]
  %v2246 = vld [vmem:[%s2218 + $0xd8] sm:$0xff]
  %v2247 = vld [vmem:[%s2218 + $0xe0] sm:$0xff]
  %v2248 = vld [vmem:[%s2218 + $0xe8] sm:$0xff]
  %v2249 = vld [vmem:[%s2218 + $0xf0] sm:$0xff]
  %v2250 = vld [vmem:[%s2218 + $0xf8] sm:$0xff]
  %v2283 = vunpack.c.l.b16 %v2219
  %v2284 = vunpack.c.h.b16 %v2219
  %v2285 = vunpack.c.l.b16 %v2220
  %v2286 = vunpack.c.h.b16 %v2220
  %v2287 = vunpack.c.l.b16 %v2221
  %v2288 = vunpack.c.h.b16 %v2221
  %v2289 = vunpack.c.l.b16 %v2222
  %v2290 = vunpack.c.h.b16 %v2222
  %v2291 = vunpack.c.l.b16 %v2223
  %v2292 = vunpack.c.h.b16 %v2223
  %v2293 = vunpack.c.l.b16 %v2224
  %v2294 = vunpack.c.h.b16 %v2224
  %v2295 = vunpack.c.l.b16 %v2225
  %v2296 = vunpack.c.h.b16 %v2225
  %v2297 = vunpack.c.l.b16 %v2226
  %v2298 = vunpack.c.h.b16 %v2226
  %v2299 = vunpack.c.l.b16 %v2227
  %v2300 = vunpack.c.h.b16 %v2227
  %v2301 = vunpack.c.l.b16 %v2228
  %v2302 = vunpack.c.h.b16 %v2228
  %v2303 = vunpack.c.l.b16 %v2229
  %v2304 = vunpack.c.h.b16 %v2229
  %v2305 = vunpack.c.l.b16 %v2230
  %v2306 = vunpack.c.h.b16 %v2230
  %v2307 = vunpack.c.l.b16 %v2231
  %v2308 = vunpack.c.h.b16 %v2231
  %v2309 = vunpack.c.l.b16 %v2232
  %v2310 = vunpack.c.h.b16 %v2232
  %v2311 = vunpack.c.l.b16 %v2233
  %v2312 = vunpack.c.h.b16 %v2233
  %v2313 = vunpack.c.l.b16 %v2234
  %v2314 = vunpack.c.h.b16 %v2234
  %v2315 = vunpack.c.l.b16 %v2235
  %v2316 = vunpack.c.h.b16 %v2235
  %v2317 = vunpack.c.l.b16 %v2236
  %v2318 = vunpack.c.h.b16 %v2236
  %v2319 = vunpack.c.l.b16 %v2237
  %v2320 = vunpack.c.h.b16 %v2237
  %v2321 = vunpack.c.l.b16 %v2238
  %v2322 = vunpack.c.h.b16 %v2238
  %v2323 = vunpack.c.l.b16 %v2239
  %v2324 = vunpack.c.h.b16 %v2239
  %v2325 = vunpack.c.l.b16 %v2240
  %v2326 = vunpack.c.h.b16 %v2240
  %v2327 = vunpack.c.l.b16 %v2241
  %v2328 = vunpack.c.h.b16 %v2241
  %v2329 = vunpack.c.l.b16 %v2242
  %v2330 = vunpack.c.h.b16 %v2242
  %v2331 = vunpack.c.l.b16 %v2243
  %v2332 = vunpack.c.h.b16 %v2243
  %v2333 = vunpack.c.l.b16 %v2244
  %v2334 = vunpack.c.h.b16 %v2244
  %v2335 = vunpack.c.l.b16 %v2245
  %v2336 = vunpack.c.h.b16 %v2245
  %v2337 = vunpack.c.l.b16 %v2246
  %v2338 = vunpack.c.h.b16 %v2246
  %v2339 = vunpack.c.l.b16 %v2247
  %v2340 = vunpack.c.h.b16 %v2247
  %v2341 = vunpack.c.l.b16 %v2248
  %v2342 = vunpack.c.h.b16 %v2248
  %v2343 = vunpack.c.l.b16 %v2249
  %v2344 = vunpack.c.h.b16 %v2249
  %v2345 = vunpack.c.l.b16 %v2250
  %v2346 = vunpack.c.h.b16 %v2250
  %v2347 = vpack.c.b16 %v2285, %v2283
  %v2348 = vpack.c.b16 %v2286, %v2284
  %v2349 = vpack.c.b16 %v2289, %v2287
  %v2350 = vpack.c.b16 %v2290, %v2288
  %v2351 = vpack.c.b16 %v2293, %v2291
  %v2352 = vpack.c.b16 %v2294, %v2292
  %v2353 = vpack.c.b16 %v2297, %v2295
  %v2354 = vpack.c.b16 %v2298, %v2296
  %v2355 = vpack.c.b16 %v2301, %v2299
  %v2356 = vpack.c.b16 %v2302, %v2300
  %v2357 = vpack.c.b16 %v2305, %v2303
  %v2358 = vpack.c.b16 %v2306, %v2304
  %v2359 = vpack.c.b16 %v2309, %v2307
  %v2360 = vpack.c.b16 %v2310, %v2308
  %v2361 = vpack.c.b16 %v2313, %v2311
  %v2362 = vpack.c.b16 %v2314, %v2312
  %v2363 = vpack.c.b16 %v2317, %v2315
  %v2364 = vpack.c.b16 %v2318, %v2316
  %v2365 = vpack.c.b16 %v2321, %v2319
  %v2366 = vpack.c.b16 %v2322, %v2320
  %v2367 = vpack.c.b16 %v2325, %v2323
  %v2368 = vpack.c.b16 %v2326, %v2324
  %v2369 = vpack.c.b16 %v2329, %v2327
  %v2370 = vpack.c.b16 %v2330, %v2328
  %v2371 = vpack.c.b16 %v2333, %v2331
  %v2372 = vpack.c.b16 %v2334, %v2332
  %v2373 = vpack.c.b16 %v2337, %v2335
  %v2374 = vpack.c.b16 %v2338, %v2336
  %v2375 = vpack.c.b16 %v2341, %v2339
  %v2376 = vpack.c.b16 %v2342, %v2340
  %v2377 = vpack.c.b16 %v2345, %v2343
  %v2378 = vpack.c.b16 %v2346, %v2344
  %2411 = vmatprep.subr.bf16.mxu0 %v2348
  %2412 = vmatpush1.bf16.msra.mxu0 %v2347
  %2413 = vmatprep.subr.bf16.mxu0 %v2350
  %2414 = vmatpush1.bf16.msra.mxu0 %v2349
  %2415 = vmatprep.subr.bf16.mxu0 %v2352
  %2416 = vmatpush1.bf16.msra.mxu0 %v2351
  %2417 = vmatprep.subr.bf16.mxu0 %v2354
  %2418 = vmatpush1.bf16.msra.mxu0 %v2353
  %2419 = vmatprep.subr.bf16.mxu0 %v2356
  %2420 = vmatpush1.bf16.msra.mxu0 %v2355
  %2421 = vmatprep.subr.bf16.mxu0 %v2358
  %2422 = vmatpush1.bf16.msra.mxu0 %v2357
  %2423 = vmatprep.subr.bf16.mxu0 %v2360
  %2424 = vmatpush1.bf16.msra.mxu0 %v2359
  %2425 = vmatprep.subr.bf16.mxu0 %v2362
  %2426 = vmatpush1.bf16.msra.mxu0 %v2361
  %2427 = vmatprep.subr.bf16.mxu0 %v2364
  %2428 = vmatpush1.bf16.msra.mxu0 %v2363
  %2429 = vmatprep.subr.bf16.mxu0 %v2366
  %2430 = vmatpush1.bf16.msra.mxu0 %v2365
  %2431 = vmatprep.subr.bf16.mxu0 %v2368
  %2432 = vmatpush1.bf16.msra.mxu0 %v2367
  %2433 = vmatprep.subr.bf16.mxu0 %v2370
  %2434 = vmatpush1.bf16.msra.mxu0 %v2369
  %2435 = vmatprep.subr.bf16.mxu0 %v2372
  %2436 = vmatpush1.bf16.msra.mxu0 %v2371
  %2437 = vmatprep.subr.bf16.mxu0 %v2374
  %2438 = vmatpush1.bf16.msra.mxu0 %v2373
  %2439 = vmatprep.subr.bf16.mxu0 %v2376
  %2440 = vmatpush1.bf16.msra.mxu0 %v2375
  %2441 = vmatprep.subr.bf16.mxu0 %v2378
  %2442 = vmatpush1.bf16.msra.mxu0 %v2377
  %2443 = vmatprep.mubr.bf16.mxu0 %v2191
  %2444 = vmatmul.mubr.bf16.gmra.mrb[0].mxu0 %v2190
  %v2445 = vpop.f32.mrb[0].mxu0
  %v2446 = vadd.f32 0.0, %v2445
  %v2447 = vpop.f32.mrb[0].mxu0
  %v2448 = vadd.f32 0.0, %v2447
  %v2449 = vpop.f32.mrb[0].mxu0
  %v2450 = vadd.f32 0.0, %v2449
  %v2451 = vpop.f32.mrb[0].mxu0
  %v2452 = vadd.f32 0.0, %v2451
  %2453 = vmatprep.mubr.bf16.mxu0 %v2193
  %2454 = vmatmul.mubr.bf16.gmra.mrb[0].mxu0 %v2192
  %v2455 = vpop.f32.mrb[0].mxu0
  %v2456 = vadd.f32 0.0, %v2455
  %v2457 = vpop.f32.mrb[0].mxu0
  %v2458 = vadd.f32 0.0, %v2457
  %v2459 = vpop.f32.mrb[0].mxu0
  %v2460 = vadd.f32 0.0, %v2459
  %v2461 = vpop.f32.mrb[0].mxu0
  %v2462 = vadd.f32 0.0, %v2461
  %2463 = vmatprep.mubr.bf16.mxu0 %v2195
  %2464 = vmatmul.mubr.bf16.gmra.mrb[0].mxu0 %v2194
  %v2465 = vpop.f32.mrb[0].mxu0
  %v2466 = vadd.f32 0.0, %v2465
  %v2467 = vpop.f32.mrb[0].mxu0
  %v2468 = vadd.f32 0.0, %v2467
  %v2469 = vpop.f32.mrb[0].mxu0
  %v2470 = vadd.f32 0.0, %v2469
  %v2471 = vpop.f32.mrb[0].mxu0
  %v2472 = vadd.f32 0.0, %v2471
  %2473 = vmatprep.mubr.bf16.mxu0 %v2197
  %2474 = vmatmul.mubr.bf16.gmra.mrb[0].mxu0 %v2196
  %v2475 = vpop.f32.mrb[0].mxu0
  %v2476 = vadd.f32 0.0, %v2475
  %v2477 = vpop.f32.mrb[0].mxu0
  %v2478 = vadd.f32 0.0, %v2477
  %v2479 = vpop.f32.mrb[0].mxu0
  %v2480 = vadd.f32 0.0, %v2479
  %v2481 = vpop.f32.mrb[0].mxu0
  %v2482 = vadd.f32 0.0, %v2481
  %2483 = vmatprep.mubr.bf16.mxu0 %v2199
  %2484 = vmatmul.mubr.bf16.gmra.mrb[0].mxu0 %v2198
  %v2485 = vpop.f32.mrb[0].mxu0
  %v2486 = vadd.f32 0.0, %v2485
  %v2487 = vpop.f32.mrb[0].mxu0
  %v2488 = vadd.f32 0.0, %v2487
  %v2489 = vpop.f32.mrb[0].mxu0
  %v2490 = vadd.f32 0.0, %v2489
  %v2491 = vpop.f32.mrb[0].mxu0
  %v2492 = vadd.f32 0.0, %v2491
  %2493 = vmatprep.mubr.bf16.mxu0 %v2201
  %2494 = vmatmul.mubr.bf16.gmra.mrb[0].mxu0 %v2200
  %v2495 = vpop.f32.mrb[0].mxu0
  %v2496 = vadd.f32 0.0, %v2495
  %v2497 = vpop.f32.mrb[0].mxu0
  %v2498 = vadd.f32 0.0, %v2497
  %v2499 = vpop.f32.mrb[0].mxu0
  %v2500 = vadd.f32 0.0, %v2499
  %v2501 = vpop.f32.mrb[0].mxu0
  %v2502 = vadd.f32 0.0, %v2501
  %2503 = vmatprep.mubr.bf16.mxu0 %v2203
  %2504 = vmatmul.mubr.bf16.gmra.mrb[0].mxu0 %v2202
  %v2505 = vpop.f32.mrb[0].mxu0
  %v2506 = vadd.f32 0.0, %v2505
  %v2507 = vpop.f32.mrb[0].mxu0
  %v2508 = vadd.f32 0.0, %v2507
  %v2509 = vpop.f32.mrb[0].mxu0
  %v2510 = vadd.f32 0.0, %v2509
  %v2511 = vpop.f32.mrb[0].mxu0
  %v2512 = vadd.f32 0.0, %v2511
  %2513 = vmatprep.mubr.bf16.mxu0 %v2205
  %2514 = vmatmul.mubr.bf16.gmra.mrb[0].mxu0 %v2204
  %v2515 = vpop.f32.mrb[0].mxu0
  %v2516 = vadd.f32 0.0, %v2515
  %v2517 = vpop.f32.mrb[0].mxu0
  %v2518 = vadd.f32 0.0, %v2517
  %v2519 = vpop.f32.mrb[0].mxu0
  %v2520 = vadd.f32 0.0, %v2519
  %v2521 = vpop.f32.mrb[0].mxu0
  %v2522 = vadd.f32 0.0, %v2521
  %2523 = vmatprep.mubr.bf16.mxu0 %v2207
  %2524 = vmatmul.mubr.bf16.gmra.mrb[0].mxu0 %v2206
  %v2525 = vpop.f32.mrb[0].mxu0
  %v2526 = vadd.f32 0.0, %v2525
  %v2527 = vpop.f32.mrb[0].mxu0
  %v2528 = vadd.f32 0.0, %v2527
  %v2529 = vpop.f32.mrb[0].mxu0
  %v2530 = vadd.f32 0.0, %v2529
  %v2531 = vpop.f32.mrb[0].mxu0
  %v2532 = vadd.f32 0.0, %v2531
  %2533 = vmatprep.mubr.bf16.mxu0 %v2209
  %2534 = vmatmul.mubr.bf16.gmra.mrb[0].mxu0 %v2208
  %v2535 = vpop.f32.mrb[0].mxu0
  %v2536 = vadd.f32 0.0, %v2535
  %v2537 = vpop.f32.mrb[0].mxu0
  %v2538 = vadd.f32 0.0, %v2537
  %v2539 = vpop.f32.mrb[0].mxu0
  %v2540 = vadd.f32 0.0, %v2539
  %v2541 = vpop.f32.mrb[0].mxu0
  %v2542 = vadd.f32 0.0, %v2541
  %2543 = vmatprep.mubr.bf16.mxu0 %v2211
  %2544 = vmatmul.mubr.bf16.gmra.mrb[0].mxu0 %v2210
  %v2545 = vpop.f32.mrb[0].mxu0
  %v2546 = vadd.f32 0.0, %v2545
  %v2547 = vpop.f32.mrb[0].mxu0
  %v2548 = vadd.f32 0.0, %v2547
  %v2549 = vpop.f32.mrb[0].mxu0
  %v2550 = vadd.f32 0.0, %v2549
  %v2551 = vpop.f32.mrb[0].mxu0
  %v2552 = vadd.f32 0.0, %v2551
  %2553 = vmatprep.mubr.bf16.mxu0 %v2213
  %2554 = vmatmul.mubr.bf16.gmra.mrb[0].mxu0 %v2212
  %v2555 = vpop.f32.mrb[0].mxu0
  %v2556 = vadd.f32 0.0, %v2555
  %v2557 = vpop.f32.mrb[0].mxu0
  %v2558 = vadd.f32 0.0, %v2557
  %v2559 = vpop.f32.mrb[0].mxu0
  %v2560 = vadd.f32 0.0, %v2559
  %v2561 = vpop.f32.mrb[0].mxu0
  %v2562 = vadd.f32 0.0, %v2561
  %2563 = vmatprep.mubr.bf16.mxu0 %v2215
  %2564 = vmatmul.mubr.bf16.gmra.mrb[0].mxu0 %v2214
  %v2565 = vpop.f32.mrb[0].mxu0
  %v2566 = vadd.f32 0.0, %v2565
  %v2567 = vpop.f32.mrb[0].mxu0
  %v2568 = vadd.f32 0.0, %v2567
  %v2569 = vpop.f32.mrb[0].mxu0
  %v2570 = vadd.f32 0.0, %v2569
  %v2571 = vpop.f32.mrb[0].mxu0
  %v2572 = vadd.f32 0.0, %v2571
  %2573 = vmatprep.mubr.bf16.mxu0 %v2217
  %2574 = vmatmul.mubr.bf16.gmra.mrb[0].mxu0 %v2216
  %v2575 = vpop.f32.mrb[0].mxu0
  %v2576 = vadd.f32 0.0, %v2575
  %v2577 = vpop.f32.mrb[0].mxu0
  %v2578 = vadd.f32 0.0, %v2577
  %v2579 = vpop.f32.mrb[0].mxu0
  %v2580 = vadd.f32 0.0, %v2579
  %v2581 = vpop.f32.mrb[0].mxu0
  %v2582 = vadd.f32 0.0, %v2581
  %2583 = vdwg.mxu0
  %v2584 = vadd.f32 %v1996, %v2446
  %v2585 = vadd.f32 %v1998, %v2448
  %v2586 = vadd.f32 %v2000, %v2450
  %v2587 = vadd.f32 %v2002, %v2452
  %v2588 = vadd.f32 %v2006, %v2456
  %v2589 = vadd.f32 %v2008, %v2458
  %v2590 = vadd.f32 %v2010, %v2460
  %v2591 = vadd.f32 %v2012, %v2462
  %v2592 = vadd.f32 %v2016, %v2466
  %v2593 = vadd.f32 %v2018, %v2468
  %v2594 = vadd.f32 %v2020, %v2470
  %v2595 = vadd.f32 %v2022, %v2472
  %v2596 = vadd.f32 %v2026, %v2476
  %v2597 = vadd.f32 %v2028, %v2478
  %v2598 = vadd.f32 %v2030, %v2480
  %v2599 = vadd.f32 %v2032, %v2482
  %v2600 = vadd.f32 %v2036, %v2486
  %v2601 = vadd.f32 %v2038, %v2488
  %v2602 = vadd.f32 %v2040, %v2490
  %v2603 = vadd.f32 %v2042, %v2492
  %v2604 = vadd.f32 %v2046, %v2496
  %v2605 = vadd.f32 %v2048, %v2498
  %v2606 = vadd.f32 %v2050, %v2500
  %v2607 = vadd.f32 %v2052, %v2502
  %v2608 = vadd.f32 %v2056, %v2506
  %v2609 = vadd.f32 %v2058, %v2508
  %v2610 = vadd.f32 %v2060, %v2510
  %v2611 = vadd.f32 %v2062, %v2512
  %v2612 = vadd.f32 %v2066, %v2516
  %v2613 = vadd.f32 %v2068, %v2518
  %v2614 = vadd.f32 %v2070, %v2520
  %v2615 = vadd.f32 %v2072, %v2522
  %v2616 = vadd.f32 %v2076, %v2526
  %v2617 = vadd.f32 %v2078, %v2528
  %v2618 = vadd.f32 %v2080, %v2530
  %v2619 = vadd.f32 %v2082, %v2532
  %v2620 = vadd.f32 %v2086, %v2536
  %v2621 = vadd.f32 %v2088, %v2538
  %v2622 = vadd.f32 %v2090, %v2540
  %v2623 = vadd.f32 %v2092, %v2542
  %v2624 = vadd.f32 %v2096, %v2546
  %v2625 = vadd.f32 %v2098, %v2548
  %v2626 = vadd.f32 %v2100, %v2550
  %v2627 = vadd.f32 %v2102, %v2552
  %v2628 = vadd.f32 %v2106, %v2556
  %v2629 = vadd.f32 %v2108, %v2558
  %v2630 = vadd.f32 %v2110, %v2560
  %v2631 = vadd.f32 %v2112, %v2562
  %v2632 = vadd.f32 %v2116, %v2566
  %v2633 = vadd.f32 %v2118, %v2568
  %v2634 = vadd.f32 %v2120, %v2570
  %v2635 = vadd.f32 %v2122, %v2572
  %v2636 = vadd.f32 %v2126, %v2576
  %v2637 = vadd.f32 %v2128, %v2578
  %v2638 = vadd.f32 %v2130, %v2580
  %v2639 = vadd.f32 %v2132, %v2582
  %v2640 = vld [vmem:[#allocation2 + $0x20] sm:$0xfe]
  %v2641 = vld [vmem:[#allocation2 + $0x28] sm:$0xfe]
  %v2642 = vld [vmem:[#allocation2 + $0x30] sm:$0xff]
  %v2643 = vld [vmem:[#allocation2 + $0x38] sm:$0xff]
  %v2644 = vld [vmem:[#allocation2 + $0x40] sm:$0xff]
  %v2645 = vld [vmem:[#allocation2 + $0x48] sm:$0xff]
  %v2646 = vld [vmem:[#allocation2 + $0x50] sm:$0xff]
  %v2647 = vld [vmem:[#allocation2 + $0x58] sm:$0xff]
  %v2648 = vld [vmem:[#allocation2 + $0x60] sm:$0xff]
  %v2649 = vld [vmem:[#allocation2 + $0x68] sm:$0xff]
  %v2650 = vld [vmem:[#allocation2 + $0x70] sm:$0xff]
  %v2651 = vld [vmem:[#allocation2 + $0x78] sm:$0xff]
  %v2652 = vld [vmem:[#allocation2 + $0x80] sm:$0xff]
  %v2653 = vld [vmem:[#allocation2 + $0x88] sm:$0xff]
  %v2654 = vld [vmem:[#allocation2 + $0x90] sm:$0xff]
  %v2655 = vld [vmem:[#allocation2 + $0x98] sm:$0xff]
  %v2656 = vld [vmem:[#allocation2 + $0xa0] sm:$0xff]
  %v2657 = vld [vmem:[#allocation2 + $0xa8] sm:$0xff]
  %v2658 = vld [vmem:[#allocation2 + $0xb0] sm:$0xff]
  %v2659 = vld [vmem:[#allocation2 + $0xb8] sm:$0xff]
  %v2660 = vld [vmem:[#allocation2 + $0xc0] sm:$0xff]
  %v2661 = vld [vmem:[#allocation2 + $0xc8] sm:$0xff]
  %v2662 = vld [vmem:[#allocation2 + $0xd0] sm:$0xff]
  %v2663 = vld [vmem:[#allocation2 + $0xd8] sm:$0xff]
  %v2664 = vld [vmem:[#allocation2 + $0xe0] sm:$0xff]
  %v2665 = vld [vmem:[#allocation2 + $0xe8] sm:$0xff]
  %v2666 = vld [vmem:[#allocation2 + $0xf0] sm:$0xff]
  %v2667 = vld [vmem:[#allocation2 + $0xf8] sm:$0xff]
  %v2668 = vld [vmem:[#allocation2 + $0x100] sm:$0xff]
  %v2669 = vld [vmem:[#allocation2 + $0x108] sm:$0xff]
  %v2670 = vld [vmem:[#allocation2 + $0x110] sm:$0xff]
  %v2671 = vld [vmem:[#allocation2 + $0x118] sm:$0xff]
  %v2672 = vld [vmem:[#allocation2 + $0x120] sm:$0xff]
  %v2673 = vld [vmem:[#allocation2 + $0x128] sm:$0xff]
  %v2674 = vld [vmem:[#allocation2 + $0x130] sm:$0xff]
  %v2675 = vld [vmem:[#allocation2 + $0x138] sm:$0xff]
  %v2676 = vld [vmem:[#allocation2 + $0x140] sm:$0xff]
  %v2677 = vld [vmem:[#allocation2 + $0x148] sm:$0xff]
  %v2678 = vld [vmem:[#allocation2 + $0x150] sm:$0xff]
  %v2679 = vld [vmem:[#allocation2 + $0x158] sm:$0xff]
  %v2680 = vld [vmem:[#allocation2 + $0x160] sm:$0xff]
  %v2681 = vld [vmem:[#allocation2 + $0x168] sm:$0xff]
  %v2682 = vld [vmem:[#allocation2 + $0x170] sm:$0xff]
  %v2683 = vld [vmem:[#allocation2 + $0x178] sm:$0xff]
  %v2684 = vld [vmem:[#allocation2 + $0x180] sm:$0xff]
  %v2685 = vld [vmem:[#allocation2 + $0x188] sm:$0xff]
  %v2686 = vld [vmem:[#allocation2 + $0x190] sm:$0xff]
  %v2687 = vld [vmem:[#allocation2 + $0x198] sm:$0xff]
  %v2688 = vld [vmem:[#allocation2 + $0x1a0] sm:$0xff]
  %v2689 = vld [vmem:[#allocation2 + $0x1a8] sm:$0xff]
  %v2690 = vld [vmem:[#allocation2 + $0x1b0] sm:$0xff]
  %v2691 = vld [vmem:[#allocation2 + $0x1b8] sm:$0xff]
  %v2692 = vld [vmem:[#allocation2 + $0x1c0] sm:$0xff]
  %v2693 = vld [vmem:[#allocation2 + $0x1c8] sm:$0xff]
  %v2694 = vld [vmem:[#allocation2 + $0x1d0] sm:$0xff]
  %v2695 = vld [vmem:[#allocation2 + $0x1d8] sm:$0xff]
  %v2696 = vld [vmem:[#allocation2 + $0x1e0] sm:$0x1]
  %v2697 = vld [vmem:[#allocation2 + $0x1e8] sm:$0x1]
  %v2698 = vpack.c.bf16 %v2642, %v2640
  %v2699 = vpack.c.bf16 %v2643, %v2641
  %v2700 = vpack.c.bf16 %v2646, %v2644
  %v2701 = vpack.c.bf16 %v2647, %v2645
  %v2702 = vpack.c.bf16 %v2650, %v2648
  %v2703 = vpack.c.bf16 %v2651, %v2649
  %v2704 = vpack.c.bf16 %v2654, %v2652
  %v2705 = vpack.c.bf16 %v2655, %v2653
  %v2706 = vpack.c.bf16 %v2658, %v2656
  %v2707 = vpack.c.bf16 %v2659, %v2657
  %v2708 = vpack.c.bf16 %v2662, %v2660
  %v2709 = vpack.c.bf16 %v2663, %v2661
  %v2710 = vpack.c.bf16 %v2666, %v2664
  %v2711 = vpack.c.bf16 %v2667, %v2665
  %v2712 = vpack.c.bf16 %v2670, %v2668
  %v2713 = vpack.c.bf16 %v2671, %v2669
  %v2714 = vpack.c.bf16 %v2674, %v2672
  %v2715 = vpack.c.bf16 %v2675, %v2673
  %v2716 = vpack.c.bf16 %v2678, %v2676
  %v2717 = vpack.c.bf16 %v2679, %v2677
  %v2718 = vpack.c.bf16 %v2682, %v2680
  %v2719 = vpack.c.bf16 %v2683, %v2681
  %v2720 = vpack.c.bf16 %v2686, %v2684
  %v2721 = vpack.c.bf16 %v2687, %v2685
  %v2722 = vpack.c.bf16 %v2690, %v2688
  %v2723 = vpack.c.bf16 %v2691, %v2689
  %v2724 = vpack.c.bf16 %v2694, %v2692
  %v2725 = vpack.c.bf16 %v2695, %v2693
  %v2726 = vpack.c.bf16 %v2696, %v2696
  %v2727 = vpack.c.bf16 %v2697, %v2697
  %s2728 = scalar_lea.vmem %s3, 768
  %v2729 = vld [vmem:[%s2728] sm:$0xff]
  %v2730 = vld [vmem:[%s2728 + $0x8] sm:$0xff]
  %v2731 = vld [vmem:[%s2728 + $0x10] sm:$0xff]
  %v2732 = vld [vmem:[%s2728 + $0x18] sm:$0xff]
  %v2733 = vld [vmem:[%s2728 + $0x20] sm:$0xff]
  %v2734 = vld [vmem:[%s2728 + $0x28] sm:$0xff]
  %v2735 = vld [vmem:[%s2728 + $0x30] sm:$0xff]
  %v2736 = vld [vmem:[%s2728 + $0x38] sm:$0xff]
  %v2737 = vld [vmem:[%s2728 + $0x40] sm:$0xff]
  %v2738 = vld [vmem:[%s2728 + $0x48] sm:$0xff]
  %v2739 = vld [vmem:[%s2728 + $0x50] sm:$0xff]
  %v2740 = vld [vmem:[%s2728 + $0x58] sm:$0xff]
  %v2741 = vld [vmem:[%s2728 + $0x60] sm:$0xff]
  %v2742 = vld [vmem:[%s2728 + $0x68] sm:$0xff]
  %v2743 = vld [vmem:[%s2728 + $0x70] sm:$0xff]
  %v2744 = vld [vmem:[%s2728 + $0x78] sm:$0xff]
  %v2745 = vld [vmem:[%s2728 + $0x80] sm:$0xff]
  %v2746 = vld [vmem:[%s2728 + $0x88] sm:$0xff]
  %v2747 = vld [vmem:[%s2728 + $0x90] sm:$0xff]
  %v2748 = vld [vmem:[%s2728 + $0x98] sm:$0xff]
  %v2749 = vld [vmem:[%s2728 + $0xa0] sm:$0xff]
  %v2750 = vld [vmem:[%s2728 + $0xa8] sm:$0xff]
  %v2751 = vld [vmem:[%s2728 + $0xb0] sm:$0xff]
  %v2752 = vld [vmem:[%s2728 + $0xb8] sm:$0xff]
  %v2753 = vld [vmem:[%s2728 + $0xc0] sm:$0xff]
  %v2754 = vld [vmem:[%s2728 + $0xc8] sm:$0xff]
  %v2755 = vld [vmem:[%s2728 + $0xd0] sm:$0xff]
  %v2756 = vld [vmem:[%s2728 + $0xd8] sm:$0xff]
  %v2757 = vld [vmem:[%s2728 + $0xe0] sm:$0xff]
  %v2758 = vld [vmem:[%s2728 + $0xe8] sm:$0xff]
  %v2759 = vld [vmem:[%s2728 + $0xf0] sm:$0xff]
  %v2760 = vld [vmem:[%s2728 + $0xf8] sm:$0xff]
  %v2762 = vshrl.u32 %v2698, 16
  %v2764 = vshll.u32 %v2698, 16
  %v2766 = vrot.slane %v2764, 1
  %v2767 = vor.u32 %v2762, %v2766
  %v2769 = vshll.u32 %v2700, 16
  %v2771 = vrot.slane %v2769, 1
  %v2772 = vsel %vm1207, %v2767, %v2771
  %v2774 = vshrl.u32 %v2699, 16
  %v2776 = vshll.u32 %v2699, 16
  %v2778 = vrot.slane %v2776, 1
  %v2779 = vor.u32 %v2774, %v2778
  %v2781 = vshll.u32 %v2701, 16
  %v2783 = vrot.slane %v2781, 1
  %v2784 = vsel %vm1207, %v2779, %v2783
  %v2785 = vshrl.u32 %v2700, 16
  %v2787 = vor.u32 %v2785, %v2771
  %v2789 = vshll.u32 %v2702, 16
  %v2791 = vrot.slane %v2789, 1
  %v2792 = vsel %vm1207, %v2787, %v2791
  %v2793 = vshrl.u32 %v2701, 16
  %v2795 = vor.u32 %v2793, %v2783
  %v2797 = vshll.u32 %v2703, 16
  %v2799 = vrot.slane %v2797, 1
  %v2800 = vsel %vm1207, %v2795, %v2799
  %v2801 = vshrl.u32 %v2702, 16
  %v2803 = vor.u32 %v2801, %v2791
  %v2805 = vshll.u32 %v2704, 16
  %v2807 = vrot.slane %v2805, 1
  %v2808 = vsel %vm1207, %v2803, %v2807
  %v2809 = vshrl.u32 %v2703, 16
  %v2811 = vor.u32 %v2809, %v2799
  %v2813 = vshll.u32 %v2705, 16
  %v2815 = vrot.slane %v2813, 1
  %v2816 = vsel %vm1207, %v2811, %v2815
  %v2817 = vshrl.u32 %v2704, 16
  %v2819 = vor.u32 %v2817, %v2807
  %v2821 = vshll.u32 %v2706, 16
  %v2823 = vrot.slane %v2821, 1
  %v2824 = vsel %vm1207, %v2819, %v2823
  %v2825 = vshrl.u32 %v2705, 16
  %v2827 = vor.u32 %v2825, %v2815
  %v2829 = vshll.u32 %v2707, 16
  %v2831 = vrot.slane %v2829, 1
  %v2832 = vsel %vm1207, %v2827, %v2831
  %v2833 = vshrl.u32 %v2706, 16
  %v2835 = vor.u32 %v2833, %v2823
  %v2837 = vshll.u32 %v2708, 16
  %v2839 = vrot.slane %v2837, 1
  %v2840 = vsel %vm1207, %v2835, %v2839
  %v2841 = vshrl.u32 %v2707, 16
  %v2843 = vor.u32 %v2841, %v2831
  %v2845 = vshll.u32 %v2709, 16
  %v2847 = vrot.slane %v2845, 1
  %v2848 = vsel %vm1207, %v2843, %v2847
  %v2849 = vshrl.u32 %v2708, 16
  %v2851 = vor.u32 %v2849, %v2839
  %v2853 = vshll.u32 %v2710, 16
  %v2855 = vrot.slane %v2853, 1
  %v2856 = vsel %vm1207, %v2851, %v2855
  %v2857 = vshrl.u32 %v2709, 16
  %v2859 = vor.u32 %v2857, %v2847
  %v2861 = vshll.u32 %v2711, 16
  %v2863 = vrot.slane %v2861, 1
  %v2864 = vsel %vm1207, %v2859, %v2863
  %v2865 = vshrl.u32 %v2710, 16
  %v2867 = vor.u32 %v2865, %v2855
  %v2869 = vshll.u32 %v2712, 16
  %v2871 = vrot.slane %v2869, 1
  %v2872 = vsel %vm1207, %v2867, %v2871
  %v2873 = vshrl.u32 %v2711, 16
  %v2875 = vor.u32 %v2873, %v2863
  %v2877 = vshll.u32 %v2713, 16
  %v2879 = vrot.slane %v2877, 1
  %v2880 = vsel %vm1207, %v2875, %v2879
  %v2881 = vshrl.u32 %v2712, 16
  %v2883 = vor.u32 %v2881, %v2871
  %v2885 = vshll.u32 %v2714, 16
  %v2887 = vrot.slane %v2885, 1
  %v2888 = vsel %vm1207, %v2883, %v2887
  %v2889 = vshrl.u32 %v2713, 16
  %v2891 = vor.u32 %v2889, %v2879
  %v2893 = vshll.u32 %v2715, 16
  %v2895 = vrot.slane %v2893, 1
  %v2896 = vsel %vm1207, %v2891, %v2895
  %v2897 = vshrl.u32 %v2714, 16
  %v2899 = vor.u32 %v2897, %v2887
  %v2901 = vshll.u32 %v2716, 16
  %v2903 = vrot.slane %v2901, 1
  %v2904 = vsel %vm1207, %v2899, %v2903
  %v2905 = vshrl.u32 %v2715, 16
  %v2907 = vor.u32 %v2905, %v2895
  %v2909 = vshll.u32 %v2717, 16
  %v2911 = vrot.slane %v2909, 1
  %v2912 = vsel %vm1207, %v2907, %v2911
  %v2913 = vshrl.u32 %v2716, 16
  %v2915 = vor.u32 %v2913, %v2903
  %v2917 = vshll.u32 %v2718, 16
  %v2919 = vrot.slane %v2917, 1
  %v2920 = vsel %vm1207, %v2915, %v2919
  %v2921 = vshrl.u32 %v2717, 16
  %v2923 = vor.u32 %v2921, %v2911
  %v2925 = vshll.u32 %v2719, 16
  %v2927 = vrot.slane %v2925, 1
  %v2928 = vsel %vm1207, %v2923, %v2927
  %v2929 = vshrl.u32 %v2718, 16
  %v2931 = vor.u32 %v2929, %v2919
  %v2933 = vshll.u32 %v2720, 16
  %v2935 = vrot.slane %v2933, 1
  %v2936 = vsel %vm1207, %v2931, %v2935
  %v2937 = vshrl.u32 %v2719, 16
  %v2939 = vor.u32 %v2937, %v2927
  %v2941 = vshll.u32 %v2721, 16
  %v2943 = vrot.slane %v2941, 1
  %v2944 = vsel %vm1207, %v2939, %v2943
  %v2945 = vshrl.u32 %v2720, 16
  %v2947 = vor.u32 %v2945, %v2935
  %v2949 = vshll.u32 %v2722, 16
  %v2951 = vrot.slane %v2949, 1
  %v2952 = vsel %vm1207, %v2947, %v2951
  %v2953 = vshrl.u32 %v2721, 16
  %v2955 = vor.u32 %v2953, %v2943
  %v2957 = vshll.u32 %v2723, 16
  %v2959 = vrot.slane %v2957, 1
  %v2960 = vsel %vm1207, %v2955, %v2959
  %v2961 = vshrl.u32 %v2722, 16
  %v2963 = vor.u32 %v2961, %v2951
  %v2965 = vshll.u32 %v2724, 16
  %v2967 = vrot.slane %v2965, 1
  %v2968 = vsel %vm1207, %v2963, %v2967
  %v2969 = vshrl.u32 %v2723, 16
  %v2971 = vor.u32 %v2969, %v2959
  %v2973 = vshll.u32 %v2725, 16
  %v2975 = vrot.slane %v2973, 1
  %v2976 = vsel %vm1207, %v2971, %v2975
  %v2977 = vshrl.u32 %v2724, 16
  %v2979 = vor.u32 %v2977, %v2967
  %v2981 = vshll.u32 %v2726, 16
  %v2983 = vrot.slane %v2981, 1
  %v2984 = vsel %vm1207, %v2979, %v2983
  %v2985 = vshrl.u32 %v2725, 16
  %v2987 = vor.u32 %v2985, %v2975
  %v2989 = vshll.u32 %v2727, 16
  %v2991 = vrot.slane %v2989, 1
  %v2992 = vsel %vm1207, %v2987, %v2991
  %v3053 = vunpack.c.l.b16 %v2729
  %v3054 = vunpack.c.h.b16 %v2729
  %v3055 = vunpack.c.l.b16 %v2730
  %v3056 = vunpack.c.h.b16 %v2730
  %v3057 = vunpack.c.l.b16 %v2731
  %v3058 = vunpack.c.h.b16 %v2731
  %v3059 = vunpack.c.l.b16 %v2732
  %v3060 = vunpack.c.h.b16 %v2732
  %v3061 = vunpack.c.l.b16 %v2733
  %v3062 = vunpack.c.h.b16 %v2733
  %v3063 = vunpack.c.l.b16 %v2734
  %v3064 = vunpack.c.h.b16 %v2734
  %v3065 = vunpack.c.l.b16 %v2735
  %v3066 = vunpack.c.h.b16 %v2735
  %v3067 = vunpack.c.l.b16 %v2736
  %v3068 = vunpack.c.h.b16 %v2736
  %v3069 = vunpack.c.l.b16 %v2737
  %v3070 = vunpack.c.h.b16 %v2737
  %v3071 = vunpack.c.l.b16 %v2738
  %v3072 = vunpack.c.h.b16 %v2738
  %v3073 = vunpack.c.l.b16 %v2739
  %v3074 = vunpack.c.h.b16 %v2739
  %v3075 = vunpack.c.l.b16 %v2740
  %v3076 = vunpack.c.h.b16 %v2740
  %v3077 = vunpack.c.l.b16 %v2741
  %v3078 = vunpack.c.h.b16 %v2741
  %v3079 = vunpack.c.l.b16 %v2742
  %v3080 = vunpack.c.h.b16 %v2742
  %v3081 = vunpack.c.l.b16 %v2743
  %v3082 = vunpack.c.h.b16 %v2743
  %v3083 = vunpack.c.l.b16 %v2744
  %v3084 = vunpack.c.h.b16 %v2744
  %v3085 = vunpack.c.l.b16 %v2745
  %v3086 = vunpack.c.h.b16 %v2745
  %v3087 = vunpack.c.l.b16 %v2746
  %v3088 = vunpack.c.h.b16 %v2746
  %v3089 = vunpack.c.l.b16 %v2747
  %v3090 = vunpack.c.h.b16 %v2747
  %v3091 = vunpack.c.l.b16 %v2748
  %v3092 = vunpack.c.h.b16 %v2748
  %v3093 = vunpack.c.l.b16 %v2749
  %v3094 = vunpack.c.h.b16 %v2749
  %v3095 = vunpack.c.l.b16 %v2750
  %v3096 = vunpack.c.h.b16 %v2750
  %v3097 = vunpack.c.l.b16 %v2751
  %v3098 = vunpack.c.h.b16 %v2751
  %v3099 = vunpack.c.l.b16 %v2752
  %v3100 = vunpack.c.h.b16 %v2752
  %v3101 = vunpack.c.l.b16 %v2753
  %v3102 = vunpack.c.h.b16 %v2753
  %v3103 = vunpack.c.l.b16 %v2754
  %v3104 = vunpack.c.h.b16 %v2754
  %v3105 = vunpack.c.l.b16 %v2755
  %v3106 = vunpack.c.h.b16 %v2755
  %v3107 = vunpack.c.l.b16 %v2756
  %v3108 = vunpack.c.h.b16 %v2756
  %v3109 = vunpack.c.l.b16 %v2757
  %v3110 = vunpack.c.h.b16 %v2757
  %v3111 = vunpack.c.l.b16 %v2758
  %v3112 = vunpack.c.h.b16 %v2758
  %v3113 = vunpack.c.l.b16 %v2759
  %v3114 = vunpack.c.h.b16 %v2759
  %v3115 = vunpack.c.l.b16 %v2760
  %v3116 = vunpack.c.h.b16 %v2760
  %v3117 = vpack.c.b16 %v3055, %v3053
  %v3118 = vpack.c.b16 %v3056, %v3054
  %v3119 = vpack.c.b16 %v3059, %v3057
  %v3120 = vpack.c.b16 %v3060, %v3058
  %v3121 = vpack.c.b16 %v3063, %v3061
  %v3122 = vpack.c.b16 %v3064, %v3062
  %v3123 = vpack.c.b16 %v3067, %v3065
  %v3124 = vpack.c.b16 %v3068, %v3066
  %v3125 = vpack.c.b16 %v3071, %v3069
  %v3126 = vpack.c.b16 %v3072, %v3070
  %v3127 = vpack.c.b16 %v3075, %v3073
  %v3128 = vpack.c.b16 %v3076, %v3074
  %v3129 = vpack.c.b16 %v3079, %v3077
  %v3130 = vpack.c.b16 %v3080, %v3078
  %v3131 = vpack.c.b16 %v3083, %v3081
  %v3132 = vpack.c.b16 %v3084, %v3082
  %v3133 = vpack.c.b16 %v3087, %v3085
  %v3134 = vpack.c.b16 %v3088, %v3086
  %v3135 = vpack.c.b16 %v3091, %v3089
  %v3136 = vpack.c.b16 %v3092, %v3090
  %v3137 = vpack.c.b16 %v3095, %v3093
  %v3138 = vpack.c.b16 %v3096, %v3094
  %v3139 = vpack.c.b16 %v3099, %v3097
  %v3140 = vpack.c.b16 %v3100, %v3098
  %v3141 = vpack.c.b16 %v3103, %v3101
  %v3142 = vpack.c.b16 %v3104, %v3102
  %v3143 = vpack.c.b16 %v3107, %v3105
  %v3144 = vpack.c.b16 %v3108, %v3106
  %v3145 = vpack.c.b16 %v3111, %v3109
  %v3146 = vpack.c.b16 %v3112, %v3110
  %v3147 = vpack.c.b16 %v3115, %v3113
  %v3148 = vpack.c.b16 %v3116, %v3114
  %3181 = vmatprep.subr.bf16.mxu0 %v3118
  %3182 = vmatpush1.bf16.msra.mxu0 %v3117
  %3183 = vmatprep.subr.bf16.mxu0 %v3120
  %3184 = vmatpush1.bf16.msra.mxu0 %v3119
  %3185 = vmatprep.subr.bf16.mxu0 %v3122
  %3186 = vmatpush1.bf16.msra.mxu0 %v3121
  %3187 = vmatprep.subr.bf16.mxu0 %v3124
  %3188 = vmatpush1.bf16.msra.mxu0 %v3123
  %3189 = vmatprep.subr.bf16.mxu0 %v3126
  %3190 = vmatpush1.bf16.msra.mxu0 %v3125
  %3191 = vmatprep.subr.bf16.mxu0 %v3128
  %3192 = vmatpush1.bf16.msra.mxu0 %v3127
  %3193 = vmatprep.subr.bf16.mxu0 %v3130
  %3194 = vmatpush1.bf16.msra.mxu0 %v3129
  %3195 = vmatprep.subr.bf16.mxu0 %v3132
  %3196 = vmatpush1.bf16.msra.mxu0 %v3131
  %3197 = vmatprep.subr.bf16.mxu0 %v3134
  %3198 = vmatpush1.bf16.msra.mxu0 %v3133
  %3199 = vmatprep.subr.bf16.mxu0 %v3136
  %3200 = vmatpush1.bf16.msra.mxu0 %v3135
  %3201 = vmatprep.subr.bf16.mxu0 %v3138
  %3202 = vmatpush1.bf16.msra.mxu0 %v3137
  %3203 = vmatprep.subr.bf16.mxu0 %v3140
  %3204 = vmatpush1.bf16.msra.mxu0 %v3139
  %3205 = vmatprep.subr.bf16.mxu0 %v3142
  %3206 = vmatpush1.bf16.msra.mxu0 %v3141
  %3207 = vmatprep.subr.bf16.mxu0 %v3144
  %3208 = vmatpush1.bf16.msra.mxu0 %v3143
  %3209 = vmatprep.subr.bf16.mxu0 %v3146
  %3210 = vmatpush1.bf16.msra.mxu0 %v3145
  %3211 = vmatprep.subr.bf16.mxu0 %v3148
  %3212 = vmatpush1.bf16.msra.mxu0 %v3147
  %3213 = vmatprep.mubr.bf16.mxu0 %v2784
  %3214 = vmatmul.mubr.bf16.gmra.mrb[0].mxu0 %v2772
  %v3215 = vpop.f32.mrb[0].mxu0
  %v3216 = vadd.f32 0.0, %v3215
  %v3217 = vpop.f32.mrb[0].mxu0
  %v3218 = vadd.f32 0.0, %v3217
  %v3219 = vpop.f32.mrb[0].mxu0
  %v3220 = vadd.f32 0.0, %v3219
  %v3221 = vpop.f32.mrb[0].mxu0
  %v3222 = vadd.f32 0.0, %v3221
  %3223 = vmatprep.mubr.bf16.mxu0 %v2800
  %3224 = vmatmul.mubr.bf16.gmra.mrb[0].mxu0 %v2792
  %v3225 = vpop.f32.mrb[0].mxu0
  %v3226 = vadd.f32 0.0, %v3225
  %v3227 = vpop.f32.mrb[0].mxu0
  %v3228 = vadd.f32 0.0, %v3227
  %v3229 = vpop.f32.mrb[0].mxu0
  %v3230 = vadd.f32 0.0, %v3229
  %v3231 = vpop.f32.mrb[0].mxu0
  %v3232 = vadd.f32 0.0, %v3231
  %3233 = vmatprep.mubr.bf16.mxu0 %v2816
  %3234 = vmatmul.mubr.bf16.gmra.mrb[0].mxu0 %v2808
  %v3235 = vpop.f32.mrb[0].mxu0
  %v3236 = vadd.f32 0.0, %v3235
  %v3237 = vpop.f32.mrb[0].mxu0
  %v3238 = vadd.f32 0.0, %v3237
  %v3239 = vpop.f32.mrb[0].mxu0
  %v3240 = vadd.f32 0.0, %v3239
  %v3241 = vpop.f32.mrb[0].mxu0
  %v3242 = vadd.f32 0.0, %v3241
  %3243 = vmatprep.mubr.bf16.mxu0 %v2832
  %3244 = vmatmul.mubr.bf16.gmra.mrb[0].mxu0 %v2824
  %v3245 = vpop.f32.mrb[0].mxu0
  %v3246 = vadd.f32 0.0, %v3245
  %v3247 = vpop.f32.mrb[0].mxu0
  %v3248 = vadd.f32 0.0, %v3247
  %v3249 = vpop.f32.mrb[0].mxu0
  %v3250 = vadd.f32 0.0, %v3249
  %v3251 = vpop.f32.mrb[0].mxu0
  %v3252 = vadd.f32 0.0, %v3251
  %3253 = vmatprep.mubr.bf16.mxu0 %v2848
  %3254 = vmatmul.mubr.bf16.gmra.mrb[0].mxu0 %v2840
  %v3255 = vpop.f32.mrb[0].mxu0
  %v3256 = vadd.f32 0.0, %v3255
  %v3257 = vpop.f32.mrb[0].mxu0
  %v3258 = vadd.f32 0.0, %v3257
  %v3259 = vpop.f32.mrb[0].mxu0
  %v3260 = vadd.f32 0.0, %v3259
  %v3261 = vpop.f32.mrb[0].mxu0
  %v3262 = vadd.f32 0.0, %v3261
  %3263 = vmatprep.mubr.bf16.mxu0 %v2864
  %3264 = vmatmul.mubr.bf16.gmra.mrb[0].mxu0 %v2856
  %v3265 = vpop.f32.mrb[0].mxu0
  %v3266 = vadd.f32 0.0, %v3265
  %v3267 = vpop.f32.mrb[0].mxu0
  %v3268 = vadd.f32 0.0, %v3267
  %v3269 = vpop.f32.mrb[0].mxu0
  %v3270 = vadd.f32 0.0, %v3269
  %v3271 = vpop.f32.mrb[0].mxu0
  %v3272 = vadd.f32 0.0, %v3271
  %3273 = vmatprep.mubr.bf16.mxu0 %v2880
  %3274 = vmatmul.mubr.bf16.gmra.mrb[0].mxu0 %v2872
  %v3275 = vpop.f32.mrb[0].mxu0
  %v3276 = vadd.f32 0.0, %v3275
  %v3277 = vpop.f32.mrb[0].mxu0
  %v3278 = vadd.f32 0.0, %v3277
  %v3279 = vpop.f32.mrb[0].mxu0
  %v3280 = vadd.f32 0.0, %v3279
  %v3281 = vpop.f32.mrb[0].mxu0
  %v3282 = vadd.f32 0.0, %v3281
  %3283 = vmatprep.mubr.bf16.mxu0 %v2896
  %3284 = vmatmul.mubr.bf16.gmra.mrb[0].mxu0 %v2888
  %v3285 = vpop.f32.mrb[0].mxu0
  %v3286 = vadd.f32 0.0, %v3285
  %v3287 = vpop.f32.mrb[0].mxu0
  %v3288 = vadd.f32 0.0, %v3287
  %v3289 = vpop.f32.mrb[0].mxu0
  %v3290 = vadd.f32 0.0, %v3289
  %v3291 = vpop.f32.mrb[0].mxu0
  %v3292 = vadd.f32 0.0, %v3291
  %3293 = vmatprep.mubr.bf16.mxu0 %v2912
  %3294 = vmatmul.mubr.bf16.gmra.mrb[0].mxu0 %v2904
  %v3295 = vpop.f32.mrb[0].mxu0
  %v3296 = vadd.f32 0.0, %v3295
  %v3297 = vpop.f32.mrb[0].mxu0
  %v3298 = vadd.f32 0.0, %v3297
  %v3299 = vpop.f32.mrb[0].mxu0
  %v3300 = vadd.f32 0.0, %v3299
  %v3301 = vpop.f32.mrb[0].mxu0
  %v3302 = vadd.f32 0.0, %v3301
  %3303 = vmatprep.mubr.bf16.mxu0 %v2928
  %3304 = vmatmul.mubr.bf16.gmra.mrb[0].mxu0 %v2920
  %v3305 = vpop.f32.mrb[0].mxu0
  %v3306 = vadd.f32 0.0, %v3305
  %v3307 = vpop.f32.mrb[0].mxu0
  %v3308 = vadd.f32 0.0, %v3307
  %v3309 = vpop.f32.mrb[0].mxu0
  %v3310 = vadd.f32 0.0, %v3309
  %v3311 = vpop.f32.mrb[0].mxu0
  %v3312 = vadd.f32 0.0, %v3311
  %3313 = vmatprep.mubr.bf16.mxu0 %v2944
  %3314 = vmatmul.mubr.bf16.gmra.mrb[0].mxu0 %v2936
  %v3315 = vpop.f32.mrb[0].mxu0
  %v3316 = vadd.f32 0.0, %v3315
  %v3317 = vpop.f32.mrb[0].mxu0
  %v3318 = vadd.f32 0.0, %v3317
  %v3319 = vpop.f32.mrb[0].mxu0
  %v3320 = vadd.f32 0.0, %v3319
  %v3321 = vpop.f32.mrb[0].mxu0
  %v3322 = vadd.f32 0.0, %v3321
  %3323 = vmatprep.mubr.bf16.mxu0 %v2960
  %3324 = vmatmul.mubr.bf16.gmra.mrb[0].mxu0 %v2952
  %v3325 = vpop.f32.mrb[0].mxu0
  %v3326 = vadd.f32 0.0, %v3325
  %v3327 = vpop.f32.mrb[0].mxu0
  %v3328 = vadd.f32 0.0, %v3327
  %v3329 = vpop.f32.mrb[0].mxu0
  %v3330 = vadd.f32 0.0, %v3329
  %v3331 = vpop.f32.mrb[0].mxu0
  %v3332 = vadd.f32 0.0, %v3331
  %3333 = vmatprep.mubr.bf16.mxu0 %v2976
  %3334 = vmatmul.mubr.bf16.gmra.mrb[0].mxu0 %v2968
  %v3335 = vpop.f32.mrb[0].mxu0
  %v3336 = vadd.f32 0.0, %v3335
  %v3337 = vpop.f32.mrb[0].mxu0
  %v3338 = vadd.f32 0.0, %v3337
  %v3339 = vpop.f32.mrb[0].mxu0
  %v3340 = vadd.f32 0.0, %v3339
  %v3341 = vpop.f32.mrb[0].mxu0
  %v3342 = vadd.f32 0.0, %v3341
  %3343 = vmatprep.mubr.bf16.mxu0 %v2992
  %3344 = vmatmul.mubr.bf16.gmra.mrb[0].mxu0 %v2984
  %v3345 = vpop.f32.mrb[0].mxu0
  %v3346 = vadd.f32 0.0, %v3345
  %v3347 = vpop.f32.mrb[0].mxu0
  %v3348 = vadd.f32 0.0, %v3347
  %v3349 = vpop.f32.mrb[0].mxu0
  %v3350 = vadd.f32 0.0, %v3349
  %v3351 = vpop.f32.mrb[0].mxu0
  %v3352 = vadd.f32 0.0, %v3351
  %3353 = vdwg.mxu0
  %v3354 = vadd.f32 %v2584, %v3216
  %v3355 = vadd.f32 %v2585, %v3218
  %v3356 = vadd.f32 %v2586, %v3220
  %v3357 = vadd.f32 %v2587, %v3222
  %v3358 = vadd.f32 %v2588, %v3226
  %v3359 = vadd.f32 %v2589, %v3228
  %v3360 = vadd.f32 %v2590, %v3230
  %v3361 = vadd.f32 %v2591, %v3232
  %v3362 = vadd.f32 %v2592, %v3236
  %v3363 = vadd.f32 %v2593, %v3238
  %v3364 = vadd.f32 %v2594, %v3240
  %v3365 = vadd.f32 %v2595, %v3242
  %v3366 = vadd.f32 %v2596, %v3246
  %v3367 = vadd.f32 %v2597, %v3248
  %v3368 = vadd.f32 %v2598, %v3250
  %v3369 = vadd.f32 %v2599, %v3252
  %v3370 = vadd.f32 %v2600, %v3256
  %v3371 = vadd.f32 %v2601, %v3258
  %v3372 = vadd.f32 %v2602, %v3260
  %v3373 = vadd.f32 %v2603, %v3262
  %v3374 = vadd.f32 %v2604, %v3266
  %v3375 = vadd.f32 %v2605, %v3268
  %v3376 = vadd.f32 %v2606, %v3270
  %v3377 = vadd.f32 %v2607, %v3272
  %v3378 = vadd.f32 %v2608, %v3276
  %v3379 = vadd.f32 %v2609, %v3278
  %v3380 = vadd.f32 %v2610, %v3280
  %v3381 = vadd.f32 %v2611, %v3282
  %v3382 = vadd.f32 %v2612, %v3286
  %v3383 = vadd.f32 %v2613, %v3288
  %v3384 = vadd.f32 %v2614, %v3290
  %v3385 = vadd.f32 %v2615, %v3292
  %v3386 = vadd.f32 %v2616, %v3296
  %v3387 = vadd.f32 %v2617, %v3298
  %v3388 = vadd.f32 %v2618, %v3300
  %v3389 = vadd.f32 %v2619, %v3302
  %v3390 = vadd.f32 %v2620, %v3306
  %v3391 = vadd.f32 %v2621, %v3308
  %v3392 = vadd.f32 %v2622, %v3310
  %v3393 = vadd.f32 %v2623, %v3312
  %v3394 = vadd.f32 %v2624, %v3316
  %v3395 = vadd.f32 %v2625, %v3318
  %v3396 = vadd.f32 %v2626, %v3320
  %v3397 = vadd.f32 %v2627, %v3322
  %v3398 = vadd.f32 %v2628, %v3326
  %v3399 = vadd.f32 %v2629, %v3328
  %v3400 = vadd.f32 %v2630, %v3330
  %v3401 = vadd.f32 %v2631, %v3332
  %v3402 = vadd.f32 %v2632, %v3336
  %v3403 = vadd.f32 %v2633, %v3338
  %v3404 = vadd.f32 %v2634, %v3340
  %v3405 = vadd.f32 %v2635, %v3342
  %v3406 = vadd.f32 %v2636, %v3346
  %v3407 = vadd.f32 %v2637, %v3348
  %v3408 = vadd.f32 %v2638, %v3350
  %v3409 = vadd.f32 %v2639, %v3352
  %v3410 = vld [vmem:[%s4] sm:$0x3]
  %v3412 = vlaneseq
  %v3413 = vshrl.u32 %v3412, 7
  %v3414 = vsub.s32 0, %v3413
  %v3415 = vrot.slane %v3410, %v3414
  %v3416 = vlaneseq
  %v3417 = vshrl.u32 %v3416, 7
  %v3418 = vsub.s32 1, %v3417
  %v3419 = vrot.slane %v3410, %v3418
  %v3422 = vadd.f32 %v3354, %v3415
  %v3423 = vadd.f32 %v3355, %v3419
  %v3424 = vadd.f32 %v3356, %v3415
  %v3425 = vadd.f32 %v3357, %v3419
  %v3426 = vadd.f32 %v3358, %v3415
  %v3427 = vadd.f32 %v3359, %v3419
  %v3428 = vadd.f32 %v3360, %v3415
  %v3429 = vadd.f32 %v3361, %v3419
  %v3430 = vadd.f32 %v3362, %v3415
  %v3431 = vadd.f32 %v3363, %v3419
  %v3432 = vadd.f32 %v3364, %v3415
  %v3433 = vadd.f32 %v3365, %v3419
  %v3434 = vadd.f32 %v3366, %v3415
  %v3435 = vadd.f32 %v3367, %v3419
  %v3436 = vadd.f32 %v3368, %v3415
  %v3437 = vadd.f32 %v3369, %v3419
  %v3438 = vadd.f32 %v3370, %v3415
  %v3439 = vadd.f32 %v3371, %v3419
  %v3440 = vadd.f32 %v3372, %v3415
  %v3441 = vadd.f32 %v3373, %v3419
  %v3442 = vadd.f32 %v3374, %v3415
  %v3443 = vadd.f32 %v3375, %v3419
  %v3444 = vadd.f32 %v3376, %v3415
  %v3445 = vadd.f32 %v3377, %v3419
  %v3446 = vadd.f32 %v3378, %v3415
  %v3447 = vadd.f32 %v3379, %v3419
  %v3448 = vadd.f32 %v3380, %v3415
  %v3449 = vadd.f32 %v3381, %v3419
  %v3450 = vadd.f32 %v3382, %v3415
  %v3451 = vadd.f32 %v3383, %v3419
  %v3452 = vadd.f32 %v3384, %v3415
  %v3453 = vadd.f32 %v3385, %v3419
  %v3454 = vadd.f32 %v3386, %v3415
  %v3455 = vadd.f32 %v3387, %v3419
  %v3456 = vadd.f32 %v3388, %v3415
  %v3457 = vadd.f32 %v3389, %v3419
  %v3458 = vadd.f32 %v3390, %v3415
  %v3459 = vadd.f32 %v3391, %v3419
  %v3460 = vadd.f32 %v3392, %v3415
  %v3461 = vadd.f32 %v3393, %v3419
  %v3462 = vadd.f32 %v3394, %v3415
  %v3463 = vadd.f32 %v3395, %v3419
  %v3464 = vadd.f32 %v3396, %v3415
  %v3465 = vadd.f32 %v3397, %v3419
  %v3466 = vadd.f32 %v3398, %v3415
  %v3467 = vadd.f32 %v3399, %v3419
  %v3468 = vadd.f32 %v3400, %v3415
  %v3469 = vadd.f32 %v3401, %v3419
  %v3470 = vadd.f32 %v3402, %v3415
  %v3471 = vadd.f32 %v3403, %v3419
  %v3472 = vadd.f32 %v3404, %v3415
  %v3473 = vadd.f32 %v3405, %v3419
  %v3474 = vadd.f32 %v3406, %v3415
  %v3475 = vadd.f32 %v3407, %v3419
  %v3476 = vadd.f32 %v3408, %v3415
  %v3477 = vadd.f32 %v3409, %v3419
  %v3478 = vmax.f32 %v3422, 0.0
  %v3479 = vmax.f32 %v3423, 0.0
  %v3480 = vmax.f32 %v3424, 0.0
  %v3481 = vmax.f32 %v3425, 0.0
  %v3482 = vmax.f32 %v3426, 0.0
  %v3483 = vmax.f32 %v3427, 0.0
  %v3484 = vmax.f32 %v3428, 0.0
  %v3485 = vmax.f32 %v3429, 0.0
  %v3486 = vmax.f32 %v3430, 0.0
  %v3487 = vmax.f32 %v3431, 0.0
  %v3488 = vmax.f32 %v3432, 0.0
  %v3489 = vmax.f32 %v3433, 0.0
  %v3490 = vmax.f32 %v3434, 0.0
  %v3491 = vmax.f32 %v3435, 0.0
  %v3492 = vmax.f32 %v3436, 0.0
  %v3493 = vmax.f32 %v3437, 0.0
  %v3494 = vmax.f32 %v3438, 0.0
  %v3495 = vmax.f32 %v3439, 0.0
  %v3496 = vmax.f32 %v3440, 0.0
  %v3497 = vmax.f32 %v3441, 0.0
  %v3498 = vmax.f32 %v3442, 0.0
  %v3499 = vmax.f32 %v3443, 0.0
  %v3500 = vmax.f32 %v3444, 0.0
  %v3501 = vmax.f32 %v3445, 0.0
  %v3502 = vmax.f32 %v3446, 0.0
  %v3503 = vmax.f32 %v3447, 0.0
  %v3504 = vmax.f32 %v3448, 0.0
  %v3505 = vmax.f32 %v3449, 0.0
  %v3506 = vmax.f32 %v3450, 0.0
  %v3507 = vmax.f32 %v3451, 0.0
  %v3508 = vmax.f32 %v3452, 0.0
  %v3509 = vmax.f32 %v3453, 0.0
  %v3510 = vmax.f32 %v3454, 0.0
  %v3511 = vmax.f32 %v3455, 0.0
  %v3512 = vmax.f32 %v3456, 0.0
  %v3513 = vmax.f32 %v3457, 0.0
  %v3514 = vmax.f32 %v3458, 0.0
  %v3515 = vmax.f32 %v3459, 0.0
  %v3516 = vmax.f32 %v3460, 0.0
  %v3517 = vmax.f32 %v3461, 0.0
  %v3518 = vmax.f32 %v3462, 0.0
  %v3519 = vmax.f32 %v3463, 0.0
  %v3520 = vmax.f32 %v3464, 0.0
  %v3521 = vmax.f32 %v3465, 0.0
  %v3522 = vmax.f32 %v3466, 0.0
  %v3523 = vmax.f32 %v3467, 0.0
  %v3524 = vmax.f32 %v3468, 0.0
  %v3525 = vmax.f32 %v3469, 0.0
  %v3526 = vmax.f32 %v3470, 0.0
  %v3527 = vmax.f32 %v3471, 0.0
  %v3528 = vmax.f32 %v3472, 0.0
  %v3529 = vmax.f32 %v3473, 0.0
  %v3530 = vmax.f32 %v3474, 0.0
  %v3531 = vmax.f32 %v3475, 0.0
  %v3532 = vmax.f32 %v3476, 0.0
  %v3533 = vmax.f32 %v3477, 0.0
  %3534 = vst [vmem:[#allocation3] sm:$0xff] %v3478
  %3535 = vst [vmem:[#allocation3 + $0x8] sm:$0xff] %v3479
  %3536 = vst [vmem:[#allocation3 + $0x10] sm:$0xff] %v3480
  %3537 = vst [vmem:[#allocation3 + $0x18] sm:$0xff] %v3481
  %3538 = vst [vmem:[#allocation3 + $0x20] sm:$0xff] %v3482
  %3539 = vst [vmem:[#allocation3 + $0x28] sm:$0xff] %v3483
  %3540 = vst [vmem:[#allocation3 + $0x30] sm:$0xff] %v3484
  %3541 = vst [vmem:[#allocation3 + $0x38] sm:$0xff] %v3485
  %3542 = vst [vmem:[#allocation3 + $0x40] sm:$0xff] %v3486
  %3543 = vst [vmem:[#allocation3 + $0x48] sm:$0xff] %v3487
  %3544 = vst [vmem:[#allocation3 + $0x50] sm:$0xff] %v3488
  %3545 = vst [vmem:[#allocation3 + $0x58] sm:$0xff] %v3489
  %3546 = vst [vmem:[#allocation3 + $0x60] sm:$0xff] %v3490
  %3547 = vst [vmem:[#allocation3 + $0x68] sm:$0xff] %v3491
  %3548 = vst [vmem:[#allocation3 + $0x70] sm:$0xff] %v3492
  %3549 = vst [vmem:[#allocation3 + $0x78] sm:$0xff] %v3493
  %3550 = vst [vmem:[#allocation3 + $0x80] sm:$0xff] %v3494
  %3551 = vst [vmem:[#allocation3 + $0x88] sm:$0xff] %v3495
  %3552 = vst [vmem:[#allocation3 + $0x90] sm:$0xff] %v3496
  %3553 = vst [vmem:[#allocation3 + $0x98] sm:$0xff] %v3497
  %3554 = vst [vmem:[#allocation3 + $0xa0] sm:$0xff] %v3498
  %3555 = vst [vmem:[#allocation3 + $0xa8] sm:$0xff] %v3499
  %3556 = vst [vmem:[#allocation3 + $0xb0] sm:$0xff] %v3500
  %3557 = vst [vmem:[#allocation3 + $0xb8] sm:$0xff] %v3501
  %3558 = vst [vmem:[#allocation3 + $0xc0] sm:$0xff] %v3502
  %3559 = vst [vmem:[#allocation3 + $0xc8] sm:$0xff] %v3503
  %3560 = vst [vmem:[#allocation3 + $0xd0] sm:$0xff] %v3504
  %3561 = vst [vmem:[#allocation3 + $0xd8] sm:$0xff] %v3505
  %3562 = vst [vmem:[#allocation3 + $0xe0] sm:$0xff] %v3506
  %3563 = vst [vmem:[#allocation3 + $0xe8] sm:$0xff] %v3507
  %3564 = vst [vmem:[#allocation3 + $0xf0] sm:$0xff] %v3508
  %3565 = vst [vmem:[#allocation3 + $0xf8] sm:$0xff] %v3509
  %3566 = vst [vmem:[#allocation3 + $0x100] sm:$0xff] %v3510
  %3567 = vst [vmem:[#allocation3 + $0x108] sm:$0xff] %v3511
  %3568 = vst [vmem:[#allocation3 + $0x110] sm:$0xff] %v3512
  %3569 = vst [vmem:[#allocation3 + $0x118] sm:$0xff] %v3513
  %3570 = vst [vmem:[#allocation3 + $0x120] sm:$0xff] %v3514
  %3571 = vst [vmem:[#allocation3 + $0x128] sm:$0xff] %v3515
  %3572 = vst [vmem:[#allocation3 + $0x130] sm:$0xff] %v3516
  %3573 = vst [vmem:[#allocation3 + $0x138] sm:$0xff] %v3517
  %3574 = vst [vmem:[#allocation3 + $0x140] sm:$0xff] %v3518
  %3575 = vst [vmem:[#allocation3 + $0x148] sm:$0xff] %v3519
  %3576 = vst [vmem:[#allocation3 + $0x150] sm:$0xff] %v3520
  %3577 = vst [vmem:[#allocation3 + $0x158] sm:$0xff] %v3521
  %3578 = vst [vmem:[#allocation3 + $0x160] sm:$0xff] %v3522
  %3579 = vst [vmem:[#allocation3 + $0x168] sm:$0xff] %v3523
  %3580 = vst [vmem:[#allocation3 + $0x170] sm:$0xff] %v3524
  %3581 = vst [vmem:[#allocation3 + $0x178] sm:$0xff] %v3525
  %3582 = vst [vmem:[#allocation3 + $0x180] sm:$0xff] %v3526
  %3583 = vst [vmem:[#allocation3 + $0x188] sm:$0xff] %v3527
  %3584 = vst [vmem:[#allocation3 + $0x190] sm:$0xff] %v3528
  %3585 = vst [vmem:[#allocation3 + $0x198] sm:$0xff] %v3529
  %3586 = vst [vmem:[#allocation3 + $0x1a0] sm:$0xff] %v3530
  %3587 = vst [vmem:[#allocation3 + $0x1a8] sm:$0xff] %v3531
  %3588 = vst [vmem:[#allocation3 + $0x1b0] sm:$0xff] %v3532
  %3589 = vst [vmem:[#allocation3 + $0x1b8] sm:$0xff] %v3533
  %v3590 = vld [vmem:[#allocation2 + $0x1e0] sm:$0xff]
  %v3591 = vld [vmem:[#allocation2 + $0x1e8] sm:$0xff]
  %v3592 = vld [vmem:[#allocation2 + $0x1f0] sm:$0xff]
  %v3593 = vld [vmem:[#allocation2 + $0x1f8] sm:$0xff]
  %v3594 = vld [vmem:[#allocation2 + $0x200] sm:$0xff]
  %v3595 = vld [vmem:[#allocation2 + $0x208] sm:$0xff]
  %v3596 = vld [vmem:[#allocation2 + $0x210] sm:$0xff]
  %v3597 = vld [vmem:[#allocation2 + $0x218] sm:$0xff]
  %v3598 = vld [vmem:[#allocation2 + $0x220] sm:$0xff]
  %v3599 = vld [vmem:[#allocation2 + $0x228] sm:$0xff]
  %v3600 = vld [vmem:[#allocation2 + $0x230] sm:$0xff]
  %v3601 = vld [vmem:[#allocation2 + $0x238] sm:$0xff]
  %v3602 = vld [vmem:[#allocation2 + $0x240] sm:$0xff]
  %v3603 = vld [vmem:[#allocation2 + $0x248] sm:$0xff]
  %v3604 = vld [vmem:[#allocation2 + $0x250] sm:$0xff]
  %v3605 = vld [vmem:[#allocation2 + $0x258] sm:$0xff]
  %v3606 = vld [vmem:[#allocation2 + $0x260] sm:$0xff]
  %v3607 = vld [vmem:[#allocation2 + $0x268] sm:$0xff]
  %v3608 = vld [vmem:[#allocation2 + $0x270] sm:$0xff]
  %v3609 = vld [vmem:[#allocation2 + $0x278] sm:$0xff]
  %v3610 = vld [vmem:[#allocation2 + $0x280] sm:$0xff]
  %v3611 = vld [vmem:[#allocation2 + $0x288] sm:$0xff]
  %v3612 = vld [vmem:[#allocation2 + $0x290] sm:$0xff]
  %v3613 = vld [vmem:[#allocation2 + $0x298] sm:$0xff]
  %v3614 = vld [vmem:[#allocation2 + $0x2a0] sm:$0xff]
  %v3615 = vld [vmem:[#allocation2 + $0x2a8] sm:$0xff]
  %v3616 = vld [vmem:[#allocation2 + $0x2b0] sm:$0xff]
  %v3617 = vld [vmem:[#allocation2 + $0x2b8] sm:$0xff]
  %v3618 = vld [vmem:[#allocation2 + $0x2c0] sm:$0xff]
  %v3619 = vld [vmem:[#allocation2 + $0x2c8] sm:$0xff]
  %v3620 = vld [vmem:[#allocation2 + $0x2d0] sm:$0xff]
  %v3621 = vld [vmem:[#allocation2 + $0x2d8] sm:$0xff]
  %v3622 = vld [vmem:[#allocation2 + $0x2e0] sm:$0xff]
  %v3623 = vld [vmem:[#allocation2 + $0x2e8] sm:$0xff]
  %v3624 = vld [vmem:[#allocation2 + $0x2f0] sm:$0xff]
  %v3625 = vld [vmem:[#allocation2 + $0x2f8] sm:$0xff]
  %v3626 = vld [vmem:[#allocation2 + $0x300] sm:$0xff]
  %v3627 = vld [vmem:[#allocation2 + $0x308] sm:$0xff]
  %v3628 = vld [vmem:[#allocation2 + $0x310] sm:$0xff]
  %v3629 = vld [vmem:[#allocation2 + $0x318] sm:$0xff]
  %v3630 = vld [vmem:[#allocation2 + $0x320] sm:$0xff]
  %v3631 = vld [vmem:[#allocation2 + $0x328] sm:$0xff]
  %v3632 = vld [vmem:[#allocation2 + $0x330] sm:$0xff]
  %v3633 = vld [vmem:[#allocation2 + $0x338] sm:$0xff]
  %v3634 = vld [vmem:[#allocation2 + $0x340] sm:$0xff]
  %v3635 = vld [vmem:[#allocation2 + $0x348] sm:$0xff]
  %v3636 = vld [vmem:[#allocation2 + $0x350] sm:$0xff]
  %v3637 = vld [vmem:[#allocation2 + $0x358] sm:$0xff]
  %v3638 = vld [vmem:[#allocation2 + $0x360] sm:$0xff]
  %v3639 = vld [vmem:[#allocation2 + $0x368] sm:$0xff]
  %v3640 = vld [vmem:[#allocation2 + $0x370] sm:$0xff]
  %v3641 = vld [vmem:[#allocation2 + $0x378] sm:$0xff]
  %v3642 = vld [vmem:[#allocation2 + $0x380] sm:$0xff]
  %v3643 = vld [vmem:[#allocation2 + $0x388] sm:$0xff]
  %v3644 = vld [vmem:[#allocation2 + $0x390] sm:$0xff]
  %v3645 = vld [vmem:[#allocation2 + $0x398] sm:$0xff]
  %v3646 = vpack.c.bf16 %v3592, %v3590
  %v3647 = vpack.c.bf16 %v3593, %v3591
  %v3648 = vpack.c.bf16 %v3596, %v3594
  %v3649 = vpack.c.bf16 %v3597, %v3595
  %v3650 = vpack.c.bf16 %v3600, %v3598
  %v3651 = vpack.c.bf16 %v3601, %v3599
  %v3652 = vpack.c.bf16 %v3604, %v3602
  %v3653 = vpack.c.bf16 %v3605, %v3603
  %v3654 = vpack.c.bf16 %v3608, %v3606
  %v3655 = vpack.c.bf16 %v3609, %v3607
  %v3656 = vpack.c.bf16 %v3612, %v3610
  %v3657 = vpack.c.bf16 %v3613, %v3611
  %v3658 = vpack.c.bf16 %v3616, %v3614
  %v3659 = vpack.c.bf16 %v3617, %v3615
  %v3660 = vpack.c.bf16 %v3620, %v3618
  %v3661 = vpack.c.bf16 %v3621, %v3619
  %v3662 = vpack.c.bf16 %v3624, %v3622
  %v3663 = vpack.c.bf16 %v3625, %v3623
  %v3664 = vpack.c.bf16 %v3628, %v3626
  %v3665 = vpack.c.bf16 %v3629, %v3627
  %v3666 = vpack.c.bf16 %v3632, %v3630
  %v3667 = vpack.c.bf16 %v3633, %v3631
  %v3668 = vpack.c.bf16 %v3636, %v3634
  %v3669 = vpack.c.bf16 %v3637, %v3635
  %v3670 = vpack.c.bf16 %v3640, %v3638
  %v3671 = vpack.c.bf16 %v3641, %v3639
  %v3672 = vpack.c.bf16 %v3644, %v3642
  %v3673 = vpack.c.bf16 %v3645, %v3643
  %v3674 = vld [vmem:[%s3] sm:$0xff]
  %v3675 = vld [vmem:[%s3 + $0x8] sm:$0xff]
  %v3676 = vld [vmem:[%s3 + $0x10] sm:$0xff]
  %v3677 = vld [vmem:[%s3 + $0x18] sm:$0xff]
  %v3678 = vld [vmem:[%s3 + $0x20] sm:$0xff]
  %v3679 = vld [vmem:[%s3 + $0x28] sm:$0xff]
  %v3680 = vld [vmem:[%s3 + $0x30] sm:$0xff]
  %v3681 = vld [vmem:[%s3 + $0x38] sm:$0xff]
  %v3682 = vld [vmem:[%s3 + $0x40] sm:$0xff]
  %v3683 = vld [vmem:[%s3 + $0x48] sm:$0xff]
  %v3684 = vld [vmem:[%s3 + $0x50] sm:$0xff]
  %v3685 = vld [vmem:[%s3 + $0x58] sm:$0xff]
  %v3686 = vld [vmem:[%s3 + $0x60] sm:$0xff]
  %v3687 = vld [vmem:[%s3 + $0x68] sm:$0xff]
  %v3688 = vld [vmem:[%s3 + $0x70] sm:$0xff]
  %v3689 = vld [vmem:[%s3 + $0x78] sm:$0xff]
  %v3690 = vld [vmem:[%s3 + $0x80] sm:$0xff]
  %v3691 = vld [vmem:[%s3 + $0x88] sm:$0xff]
  %v3692 = vld [vmem:[%s3 + $0x90] sm:$0xff]
  %v3693 = vld [vmem:[%s3 + $0x98] sm:$0xff]
  %v3694 = vld [vmem:[%s3 + $0xa0] sm:$0xff]
  %v3695 = vld [vmem:[%s3 + $0xa8] sm:$0xff]
  %v3696 = vld [vmem:[%s3 + $0xb0] sm:$0xff]
  %v3697 = vld [vmem:[%s3 + $0xb8] sm:$0xff]
  %v3698 = vld [vmem:[%s3 + $0xc0] sm:$0xff]
  %v3699 = vld [vmem:[%s3 + $0xc8] sm:$0xff]
  %v3700 = vld [vmem:[%s3 + $0xd0] sm:$0xff]
  %v3701 = vld [vmem:[%s3 + $0xd8] sm:$0xff]
  %v3702 = vld [vmem:[%s3 + $0xe0] sm:$0xff]
  %v3703 = vld [vmem:[%s3 + $0xe8] sm:$0xff]
  %v3704 = vld [vmem:[%s3 + $0xf0] sm:$0xff]
  %v3705 = vld [vmem:[%s3 + $0xf8] sm:$0xff]
  %v3706 = vld [vmem:[#allocation2 + $0x1e0] sm:$0xfe]
  %v3707 = vld [vmem:[#allocation2 + $0x1e8] sm:$0xfe]
  %v3708 = vld [vmem:[#allocation2 + $0x3a0] sm:$0x1]
  %v3709 = vld [vmem:[#allocation2 + $0x3a8] sm:$0x1]
  %v3710 = vpack.c.bf16 %v3592, %v3706
  %v3711 = vpack.c.bf16 %v3593, %v3707
  %v3712 = vpack.c.bf16 %v3708, %v3708
  %v3713 = vpack.c.bf16 %v3709, %v3709
  %v3714 = vld [vmem:[%s1174] sm:$0xff]
  %v3715 = vld [vmem:[%s1174 + $0x8] sm:$0xff]
  %v3716 = vld [vmem:[%s1174 + $0x10] sm:$0xff]
  %v3717 = vld [vmem:[%s1174 + $0x18] sm:$0xff]
  %v3718 = vld [vmem:[%s1174 + $0x20] sm:$0xff]
  %v3719 = vld [vmem:[%s1174 + $0x28] sm:$0xff]
  %v3720 = vld [vmem:[%s1174 + $0x30] sm:$0xff]
  %v3721 = vld [vmem:[%s1174 + $0x38] sm:$0xff]
  %v3722 = vld [vmem:[%s1174 + $0x40] sm:$0xff]
  %v3723 = vld [vmem:[%s1174 + $0x48] sm:$0xff]
  %v3724 = vld [vmem:[%s1174 + $0x50] sm:$0xff]
  %v3725 = vld [vmem:[%s1174 + $0x58] sm:$0xff]
  %v3726 = vld [vmem:[%s1174 + $0x60] sm:$0xff]
  %v3727 = vld [vmem:[%s1174 + $0x68] sm:$0xff]
  %v3728 = vld [vmem:[%s1174 + $0x70] sm:$0xff]
  %v3729 = vld [vmem:[%s1174 + $0x78] sm:$0xff]
  %v3730 = vld [vmem:[%s1174 + $0x80] sm:$0xff]
  %v3731 = vld [vmem:[%s1174 + $0x88] sm:$0xff]
  %v3732 = vld [vmem:[%s1174 + $0x90] sm:$0xff]
  %v3733 = vld [vmem:[%s1174 + $0x98] sm:$0xff]
  %v3734 = vld [vmem:[%s1174 + $0xa0] sm:$0xff]
  %v3735 = vld [vmem:[%s1174 + $0xa8] sm:$0xff]
  %v3736 = vld [vmem:[%s1174 + $0xb0] sm:$0xff]
  %v3737 = vld [vmem:[%s1174 + $0xb8] sm:$0xff]
  %v3738 = vld [vmem:[%s1174 + $0xc0] sm:$0xff]
  %v3739 = vld [vmem:[%s1174 + $0xc8] sm:$0xff]
  %v3740 = vld [vmem:[%s1174 + $0xd0] sm:$0xff]
  %v3741 = vld [vmem:[%s1174 + $0xd8] sm:$0xff]
  %v3742 = vld [vmem:[%s1174 + $0xe0] sm:$0xff]
  %v3743 = vld [vmem:[%s1174 + $0xe8] sm:$0xff]
  %v3744 = vld [vmem:[%s1174 + $0xf0] sm:$0xff]
  %v3745 = vld [vmem:[%s1174 + $0xf8] sm:$0xff]
  %v3747 = vshrl.u32 %v3710, 16
  %v3749 = vshll.u32 %v3710, 16
  %v3751 = vrot.slane %v3749, 1
  %v3752 = vor.u32 %v3747, %v3751
  %v3754 = vshll.u32 %v3648, 16
  %v3756 = vrot.slane %v3754, 1
  %v3757 = vsel %vm1207, %v3752, %v3756
  %v3759 = vshrl.u32 %v3711, 16
  %v3761 = vshll.u32 %v3711, 16
  %v3763 = vrot.slane %v3761, 1
  %v3764 = vor.u32 %v3759, %v3763
  %v3766 = vshll.u32 %v3649, 16
  %v3768 = vrot.slane %v3766, 1
  %v3769 = vsel %vm1207, %v3764, %v3768
  %v3770 = vshrl.u32 %v3648, 16
  %v3772 = vor.u32 %v3770, %v3756
  %v3774 = vshll.u32 %v3650, 16
  %v3776 = vrot.slane %v3774, 1
  %v3777 = vsel %vm1207, %v3772, %v3776
  %v3778 = vshrl.u32 %v3649, 16
  %v3780 = vor.u32 %v3778, %v3768
  %v3782 = vshll.u32 %v3651, 16
  %v3784 = vrot.slane %v3782, 1
  %v3785 = vsel %vm1207, %v3780, %v3784
  %v3786 = vshrl.u32 %v3650, 16
  %v3788 = vor.u32 %v3786, %v3776
  %v3790 = vshll.u32 %v3652, 16
  %v3792 = vrot.slane %v3790, 1
  %v3793 = vsel %vm1207, %v3788, %v3792
  %v3794 = vshrl.u32 %v3651, 16
  %v3796 = vor.u32 %v3794, %v3784
  %v3798 = vshll.u32 %v3653, 16
  %v3800 = vrot.slane %v3798, 1
  %v3801 = vsel %vm1207, %v3796, %v3800
  %v3802 = vshrl.u32 %v3652, 16
  %v3804 = vor.u32 %v3802, %v3792
  %v3806 = vshll.u32 %v3654, 16
  %v3808 = vrot.slane %v3806, 1
  %v3809 = vsel %vm1207, %v3804, %v3808
  %v3810 = vshrl.u32 %v3653, 16
  %v3812 = vor.u32 %v3810, %v3800
  %v3814 = vshll.u32 %v3655, 16
  %v3816 = vrot.slane %v3814, 1
  %v3817 = vsel %vm1207, %v3812, %v3816
  %v3818 = vshrl.u32 %v3654, 16
  %v3820 = vor.u32 %v3818, %v3808
  %v3822 = vshll.u32 %v3656, 16
  %v3824 = vrot.slane %v3822, 1
  %v3825 = vsel %vm1207, %v3820, %v3824
  %v3826 = vshrl.u32 %v3655, 16
  %v3828 = vor.u32 %v3826, %v3816
  %v3830 = vshll.u32 %v3657, 16
  %v3832 = vrot.slane %v3830, 1
  %v3833 = vsel %vm1207, %v3828, %v3832
  %v3834 = vshrl.u32 %v3656, 16
  %v3836 = vor.u32 %v3834, %v3824
  %v3838 = vshll.u32 %v3658, 16
  %v3840 = vrot.slane %v3838, 1
  %v3841 = vsel %vm1207, %v3836, %v3840
  %v3842 = vshrl.u32 %v3657, 16
  %v3844 = vor.u32 %v3842, %v3832
  %v3846 = vshll.u32 %v3659, 16
  %v3848 = vrot.slane %v3846, 1
  %v3849 = vsel %vm1207, %v3844, %v3848
  %v3850 = vshrl.u32 %v3658, 16
  %v3852 = vor.u32 %v3850, %v3840
  %v3854 = vshll.u32 %v3660, 16
  %v3856 = vrot.slane %v3854, 1
  %v3857 = vsel %vm1207, %v3852, %v3856
  %v3858 = vshrl.u32 %v3659, 16
  %v3860 = vor.u32 %v3858, %v3848
  %v3862 = vshll.u32 %v3661, 16
  %v3864 = vrot.slane %v3862, 1
  %v3865 = vsel %vm1207, %v3860, %v3864
  %v3866 = vshrl.u32 %v3660, 16
  %v3868 = vor.u32 %v3866, %v3856
  %v3870 = vshll.u32 %v3662, 16
  %v3872 = vrot.slane %v3870, 1
  %v3873 = vsel %vm1207, %v3868, %v3872
  %v3874 = vshrl.u32 %v3661, 16
  %v3876 = vor.u32 %v3874, %v3864
  %v3878 = vshll.u32 %v3663, 16
  %v3880 = vrot.slane %v3878, 1
  %v3881 = vsel %vm1207, %v3876, %v3880
  %v3882 = vshrl.u32 %v3662, 16
  %v3884 = vor.u32 %v3882, %v3872
  %v3886 = vshll.u32 %v3664, 16
  %v3888 = vrot.slane %v3886, 1
  %v3889 = vsel %vm1207, %v3884, %v3888
  %v3890 = vshrl.u32 %v3663, 16
  %v3892 = vor.u32 %v3890, %v3880
  %v3894 = vshll.u32 %v3665, 16
  %v3896 = vrot.slane %v3894, 1
  %v3897 = vsel %vm1207, %v3892, %v3896
  %v3898 = vshrl.u32 %v3664, 16
  %v3900 = vor.u32 %v3898, %v3888
  %v3902 = vshll.u32 %v3666, 16
  %v3904 = vrot.slane %v3902, 1
  %v3905 = vsel %vm1207, %v3900, %v3904
  %v3906 = vshrl.u32 %v3665, 16
  %v3908 = vor.u32 %v3906, %v3896
  %v3910 = vshll.u32 %v3667, 16
  %v3912 = vrot.slane %v3910, 1
  %v3913 = vsel %vm1207, %v3908, %v3912
  %v3914 = vshrl.u32 %v3666, 16
  %v3916 = vor.u32 %v3914, %v3904
  %v3918 = vshll.u32 %v3668, 16
  %v3920 = vrot.slane %v3918, 1
  %v3921 = vsel %vm1207, %v3916, %v3920
  %v3922 = vshrl.u32 %v3667, 16
  %v3924 = vor.u32 %v3922, %v3912
  %v3926 = vshll.u32 %v3669, 16
  %v3928 = vrot.slane %v3926, 1
  %v3929 = vsel %vm1207, %v3924, %v3928
  %v3930 = vshrl.u32 %v3668, 16
  %v3932 = vor.u32 %v3930, %v3920
  %v3934 = vshll.u32 %v3670, 16
  %v3936 = vrot.slane %v3934, 1
  %v3937 = vsel %vm1207, %v3932, %v3936
  %v3938 = vshrl.u32 %v3669, 16
  %v3940 = vor.u32 %v3938, %v3928
  %v3942 = vshll.u32 %v3671, 16
  %v3944 = vrot.slane %v3942, 1
  %v3945 = vsel %vm1207, %v3940, %v3944
  %v3946 = vshrl.u32 %v3670, 16
  %v3948 = vor.u32 %v3946, %v3936
  %v3950 = vshll.u32 %v3672, 16
  %v3952 = vrot.slane %v3950, 1
  %v3953 = vsel %vm1207, %v3948, %v3952
  %v3954 = vshrl.u32 %v3671, 16
  %v3956 = vor.u32 %v3954, %v3944
  %v3958 = vshll.u32 %v3673, 16
  %v3960 = vrot.slane %v3958, 1
  %v3961 = vsel %vm1207, %v3956, %v3960
  %v3962 = vshrl.u32 %v3672, 16
  %v3964 = vor.u32 %v3962, %v3952
  %v3966 = vshll.u32 %v3712, 16
  %v3968 = vrot.slane %v3966, 1
  %v3969 = vsel %vm1207, %v3964, %v3968
  %v3970 = vshrl.u32 %v3673, 16
  %v3972 = vor.u32 %v3970, %v3960
  %v3974 = vshll.u32 %v3713, 16
  %v3976 = vrot.slane %v3974, 1
  %v3977 = vsel %vm1207, %v3972, %v3976
  %v4038 = vunpack.c.l.b16 %v3714
  %v4039 = vunpack.c.h.b16 %v3714
  %v4040 = vunpack.c.l.b16 %v3715
  %v4041 = vunpack.c.h.b16 %v3715
  %v4042 = vunpack.c.l.b16 %v3716
  %v4043 = vunpack.c.h.b16 %v3716
  %v4044 = vunpack.c.l.b16 %v3717
  %v4045 = vunpack.c.h.b16 %v3717
  %v4046 = vunpack.c.l.b16 %v3718
  %v4047 = vunpack.c.h.b16 %v3718
  %v4048 = vunpack.c.l.b16 %v3719
  %v4049 = vunpack.c.h.b16 %v3719
  %v4050 = vunpack.c.l.b16 %v3720
  %v4051 = vunpack.c.h.b16 %v3720
  %v4052 = vunpack.c.l.b16 %v3721
  %v4053 = vunpack.c.h.b16 %v3721
  %v4054 = vunpack.c.l.b16 %v3722
  %v4055 = vunpack.c.h.b16 %v3722
  %v4056 = vunpack.c.l.b16 %v3723
  %v4057 = vunpack.c.h.b16 %v3723
  %v4058 = vunpack.c.l.b16 %v3724
  %v4059 = vunpack.c.h.b16 %v3724
  %v4060 = vunpack.c.l.b16 %v3725
  %v4061 = vunpack.c.h.b16 %v3725
  %v4062 = vunpack.c.l.b16 %v3726
  %v4063 = vunpack.c.h.b16 %v3726
  %v4064 = vunpack.c.l.b16 %v3727
  %v4065 = vunpack.c.h.b16 %v3727
  %v4066 = vunpack.c.l.b16 %v3728
  %v4067 = vunpack.c.h.b16 %v3728
  %v4068 = vunpack.c.l.b16 %v3729
  %v4069 = vunpack.c.h.b16 %v3729
  %v4070 = vunpack.c.l.b16 %v3730
  %v4071 = vunpack.c.h.b16 %v3730
  %v4072 = vunpack.c.l.b16 %v3731
  %v4073 = vunpack.c.h.b16 %v3731
  %v4074 = vunpack.c.l.b16 %v3732
  %v4075 = vunpack.c.h.b16 %v3732
  %v4076 = vunpack.c.l.b16 %v3733
  %v4077 = vunpack.c.h.b16 %v3733
  %v4078 = vunpack.c.l.b16 %v3734
  %v4079 = vunpack.c.h.b16 %v3734
  %v4080 = vunpack.c.l.b16 %v3735
  %v4081 = vunpack.c.h.b16 %v3735
  %v4082 = vunpack.c.l.b16 %v3736
  %v4083 = vunpack.c.h.b16 %v3736
  %v4084 = vunpack.c.l.b16 %v3737
  %v4085 = vunpack.c.h.b16 %v3737
  %v4086 = vunpack.c.l.b16 %v3738
  %v4087 = vunpack.c.h.b16 %v3738
  %v4088 = vunpack.c.l.b16 %v3739
  %v4089 = vunpack.c.h.b16 %v3739
  %v4090 = vunpack.c.l.b16 %v3740
  %v4091 = vunpack.c.h.b16 %v3740
  %v4092 = vunpack.c.l.b16 %v3741
  %v4093 = vunpack.c.h.b16 %v3741
  %v4094 = vunpack.c.l.b16 %v3742
  %v4095 = vunpack.c.h.b16 %v3742
  %v4096 = vunpack.c.l.b16 %v3743
  %v4097 = vunpack.c.h.b16 %v3743
  %v4098 = vunpack.c.l.b16 %v3744
  %v4099 = vunpack.c.h.b16 %v3744
  %v4100 = vunpack.c.l.b16 %v3745
  %v4101 = vunpack.c.h.b16 %v3745
  %v4102 = vpack.c.b16 %v4040, %v4038
  %v4103 = vpack.c.b16 %v4041, %v4039
  %v4104 = vpack.c.b16 %v4044, %v4042
  %v4105 = vpack.c.b16 %v4045, %v4043
  %v4106 = vpack.c.b16 %v4048, %v4046
  %v4107 = vpack.c.b16 %v4049, %v4047
  %v4108 = vpack.c.b16 %v4052, %v4050
  %v4109 = vpack.c.b16 %v4053, %v4051
  %v4110 = vpack.c.b16 %v4056, %v4054
  %v4111 = vpack.c.b16 %v4057, %v4055
  %v4112 = vpack.c.b16 %v4060, %v4058
  %v4113 = vpack.c.b16 %v4061, %v4059
  %v4114 = vpack.c.b16 %v4064, %v4062
  %v4115 = vpack.c.b16 %v4065, %v4063
  %v4116 = vpack.c.b16 %v4068, %v4066
  %v4117 = vpack.c.b16 %v4069, %v4067
  %v4118 = vpack.c.b16 %v4072, %v4070
  %v4119 = vpack.c.b16 %v4073, %v4071
  %v4120 = vpack.c.b16 %v4076, %v4074
  %v4121 = vpack.c.b16 %v4077, %v4075
  %v4122 = vpack.c.b16 %v4080, %v4078
  %v4123 = vpack.c.b16 %v4081, %v4079
  %v4124 = vpack.c.b16 %v4084, %v4082
  %v4125 = vpack.c.b16 %v4085, %v4083
  %v4126 = vpack.c.b16 %v4088, %v4086
  %v4127 = vpack.c.b16 %v4089, %v4087
  %v4128 = vpack.c.b16 %v4092, %v4090
  %v4129 = vpack.c.b16 %v4093, %v4091
  %v4130 = vpack.c.b16 %v4096, %v4094
  %v4131 = vpack.c.b16 %v4097, %v4095
  %v4132 = vpack.c.b16 %v4100, %v4098
  %v4133 = vpack.c.b16 %v4101, %v4099
  %4166 = vmatprep.subr.bf16.mxu0 %v4103
  %4167 = vmatpush1.bf16.msra.mxu0 %v4102
  %4168 = vmatprep.subr.bf16.mxu0 %v4105
  %4169 = vmatpush1.bf16.msra.mxu0 %v4104
  %4170 = vmatprep.subr.bf16.mxu0 %v4107
  %4171 = vmatpush1.bf16.msra.mxu0 %v4106
  %4172 = vmatprep.subr.bf16.mxu0 %v4109
  %4173 = vmatpush1.bf16.msra.mxu0 %v4108
  %4174 = vmatprep.subr.bf16.mxu0 %v4111
  %4175 = vmatpush1.bf16.msra.mxu0 %v4110
  %4176 = vmatprep.subr.bf16.mxu0 %v4113
  %4177 = vmatpush1.bf16.msra.mxu0 %v4112
  %4178 = vmatprep.subr.bf16.mxu0 %v4115
  %4179 = vmatpush1.bf16.msra.mxu0 %v4114
  %4180 = vmatprep.subr.bf16.mxu0 %v4117
  %4181 = vmatpush1.bf16.msra.mxu0 %v4116
  %4182 = vmatprep.subr.bf16.mxu0 %v4119
  %4183 = vmatpush1.bf16.msra.mxu0 %v4118
  %4184 = vmatprep.subr.bf16.mxu0 %v4121
  %4185 = vmatpush1.bf16.msra.mxu0 %v4120
  %4186 = vmatprep.subr.bf16.mxu0 %v4123
  %4187 = vmatpush1.bf16.msra.mxu0 %v4122
  %4188 = vmatprep.subr.bf16.mxu0 %v4125
  %4189 = vmatpush1.bf16.msra.mxu0 %v4124
  %4190 = vmatprep.subr.bf16.mxu0 %v4127
  %4191 = vmatpush1.bf16.msra.mxu0 %v4126
  %4192 = vmatprep.subr.bf16.mxu0 %v4129
  %4193 = vmatpush1.bf16.msra.mxu0 %v4128
  %4194 = vmatprep.subr.bf16.mxu0 %v4131
  %4195 = vmatpush1.bf16.msra.mxu0 %v4130
  %4196 = vmatprep.subr.bf16.mxu0 %v4133
  %4197 = vmatpush1.bf16.msra.mxu0 %v4132
  %4198 = vmatprep.mubr.bf16.mxu0 %v3769
  %4199 = vmatmul.mubr.bf16.gmra.mrb[0].mxu0 %v3757
  %v4200 = vpop.f32.mrb[0].mxu0
  %v4201 = vadd.f32 0.0, %v4200
  %v4202 = vpop.f32.mrb[0].mxu0
  %v4203 = vadd.f32 0.0, %v4202
  %v4204 = vpop.f32.mrb[0].mxu0
  %v4205 = vadd.f32 0.0, %v4204
  %v4206 = vpop.f32.mrb[0].mxu0
  %v4207 = vadd.f32 0.0, %v4206
  %4208 = vmatprep.mubr.bf16.mxu0 %v3785
  %4209 = vmatmul.mubr.bf16.gmra.mrb[0].mxu0 %v3777
  %v4210 = vpop.f32.mrb[0].mxu0
  %v4211 = vadd.f32 0.0, %v4210
  %v4212 = vpop.f32.mrb[0].mxu0
  %v4213 = vadd.f32 0.0, %v4212
  %v4214 = vpop.f32.mrb[0].mxu0
  %v4215 = vadd.f32 0.0, %v4214
  %v4216 = vpop.f32.mrb[0].mxu0
  %v4217 = vadd.f32 0.0, %v4216
  %4218 = vmatprep.mubr.bf16.mxu0 %v3801
  %4219 = vmatmul.mubr.bf16.gmra.mrb[0].mxu0 %v3793
  %v4220 = vpop.f32.mrb[0].mxu0
  %v4221 = vadd.f32 0.0, %v4220
  %v4222 = vpop.f32.mrb[0].mxu0
  %v4223 = vadd.f32 0.0, %v4222
  %v4224 = vpop.f32.mrb[0].mxu0
  %v4225 = vadd.f32 0.0, %v4224
  %v4226 = vpop.f32.mrb[0].mxu0
  %v4227 = vadd.f32 0.0, %v4226
  %4228 = vmatprep.mubr.bf16.mxu0 %v3817
  %4229 = vmatmul.mubr.bf16.gmra.mrb[0].mxu0 %v3809
  %v4230 = vpop.f32.mrb[0].mxu0
  %v4231 = vadd.f32 0.0, %v4230
  %v4232 = vpop.f32.mrb[0].mxu0
  %v4233 = vadd.f32 0.0, %v4232
  %v4234 = vpop.f32.mrb[0].mxu0
  %v4235 = vadd.f32 0.0, %v4234
  %v4236 = vpop.f32.mrb[0].mxu0
  %v4237 = vadd.f32 0.0, %v4236
  %4238 = vmatprep.mubr.bf16.mxu0 %v3833
  %4239 = vmatmul.mubr.bf16.gmra.mrb[0].mxu0 %v3825
  %v4240 = vpop.f32.mrb[0].mxu0
  %v4241 = vadd.f32 0.0, %v4240
  %v4242 = vpop.f32.mrb[0].mxu0
  %v4243 = vadd.f32 0.0, %v4242
  %v4244 = vpop.f32.mrb[0].mxu0
  %v4245 = vadd.f32 0.0, %v4244
  %v4246 = vpop.f32.mrb[0].mxu0
  %v4247 = vadd.f32 0.0, %v4246
  %4248 = vmatprep.mubr.bf16.mxu0 %v3849
  %4249 = vmatmul.mubr.bf16.gmra.mrb[0].mxu0 %v3841
  %v4250 = vpop.f32.mrb[0].mxu0
  %v4251 = vadd.f32 0.0, %v4250
  %v4252 = vpop.f32.mrb[0].mxu0
  %v4253 = vadd.f32 0.0, %v4252
  %v4254 = vpop.f32.mrb[0].mxu0
  %v4255 = vadd.f32 0.0, %v4254
  %v4256 = vpop.f32.mrb[0].mxu0
  %v4257 = vadd.f32 0.0, %v4256
  %4258 = vmatprep.mubr.bf16.mxu0 %v3865
  %4259 = vmatmul.mubr.bf16.gmra.mrb[0].mxu0 %v3857
  %v4260 = vpop.f32.mrb[0].mxu0
  %v4261 = vadd.f32 0.0, %v4260
  %v4262 = vpop.f32.mrb[0].mxu0
  %v4263 = vadd.f32 0.0, %v4262
  %v4264 = vpop.f32.mrb[0].mxu0
  %v4265 = vadd.f32 0.0, %v4264
  %v4266 = vpop.f32.mrb[0].mxu0
  %v4267 = vadd.f32 0.0, %v4266
  %4268 = vmatprep.mubr.bf16.mxu0 %v3881
  %4269 = vmatmul.mubr.bf16.gmra.mrb[0].mxu0 %v3873
  %v4270 = vpop.f32.mrb[0].mxu0
  %v4271 = vadd.f32 0.0, %v4270
  %v4272 = vpop.f32.mrb[0].mxu0
  %v4273 = vadd.f32 0.0, %v4272
  %v4274 = vpop.f32.mrb[0].mxu0
  %v4275 = vadd.f32 0.0, %v4274
  %v4276 = vpop.f32.mrb[0].mxu0
  %v4277 = vadd.f32 0.0, %v4276
  %4278 = vmatprep.mubr.bf16.mxu0 %v3897
  %4279 = vmatmul.mubr.bf16.gmra.mrb[0].mxu0 %v3889
  %v4280 = vpop.f32.mrb[0].mxu0
  %v4281 = vadd.f32 0.0, %v4280
  %v4282 = vpop.f32.mrb[0].mxu0
  %v4283 = vadd.f32 0.0, %v4282
  %v4284 = vpop.f32.mrb[0].mxu0
  %v4285 = vadd.f32 0.0, %v4284
  %v4286 = vpop.f32.mrb[0].mxu0
  %v4287 = vadd.f32 0.0, %v4286
  %4288 = vmatprep.mubr.bf16.mxu0 %v3913
  %4289 = vmatmul.mubr.bf16.gmra.mrb[0].mxu0 %v3905
  %v4290 = vpop.f32.mrb[0].mxu0
  %v4291 = vadd.f32 0.0, %v4290
  %v4292 = vpop.f32.mrb[0].mxu0
  %v4293 = vadd.f32 0.0, %v4292
  %v4294 = vpop.f32.mrb[0].mxu0
  %v4295 = vadd.f32 0.0, %v4294
  %v4296 = vpop.f32.mrb[0].mxu0
  %v4297 = vadd.f32 0.0, %v4296
  %4298 = vmatprep.mubr.bf16.mxu0 %v3929
  %4299 = vmatmul.mubr.bf16.gmra.mrb[0].mxu0 %v3921
  %v4300 = vpop.f32.mrb[0].mxu0
  %v4301 = vadd.f32 0.0, %v4300
  %v4302 = vpop.f32.mrb[0].mxu0
  %v4303 = vadd.f32 0.0, %v4302
  %v4304 = vpop.f32.mrb[0].mxu0
  %v4305 = vadd.f32 0.0, %v4304
  %v4306 = vpop.f32.mrb[0].mxu0
  %v4307 = vadd.f32 0.0, %v4306
  %4308 = vmatprep.mubr.bf16.mxu0 %v3945
  %4309 = vmatmul.mubr.bf16.gmra.mrb[0].mxu0 %v3937
  %v4310 = vpop.f32.mrb[0].mxu0
  %v4311 = vadd.f32 0.0, %v4310
  %v4312 = vpop.f32.mrb[0].mxu0
  %v4313 = vadd.f32 0.0, %v4312
  %v4314 = vpop.f32.mrb[0].mxu0
  %v4315 = vadd.f32 0.0, %v4314
  %v4316 = vpop.f32.mrb[0].mxu0
  %v4317 = vadd.f32 0.0, %v4316
  %4318 = vmatprep.mubr.bf16.mxu0 %v3961
  %4319 = vmatmul.mubr.bf16.gmra.mrb[0].mxu0 %v3953
  %v4320 = vpop.f32.mrb[0].mxu0
  %v4321 = vadd.f32 0.0, %v4320
  %v4322 = vpop.f32.mrb[0].mxu0
  %v4323 = vadd.f32 0.0, %v4322
  %v4324 = vpop.f32.mrb[0].mxu0
  %v4325 = vadd.f32 0.0, %v4324
  %v4326 = vpop.f32.mrb[0].mxu0
  %v4327 = vadd.f32 0.0, %v4326
  %4328 = vmatprep.mubr.bf16.mxu0 %v3977
  %4329 = vmatmul.mubr.bf16.gmra.mrb[0].mxu0 %v3969
  %v4330 = vpop.f32.mrb[0].mxu0
  %v4331 = vadd.f32 0.0, %v4330
  %v4332 = vpop.f32.mrb[0].mxu0
  %v4333 = vadd.f32 0.0, %v4332
  %v4334 = vpop.f32.mrb[0].mxu0
  %v4335 = vadd.f32 0.0, %v4334
  %v4336 = vpop.f32.mrb[0].mxu0
  %v4337 = vadd.f32 0.0, %v4336
  %4338 = vdwg.mxu0
  %v4371 = vunpack.c.l.b16 %v3674
  %v4372 = vunpack.c.h.b16 %v3674
  %v4373 = vunpack.c.l.b16 %v3675
  %v4374 = vunpack.c.h.b16 %v3675
  %v4375 = vunpack.c.l.b16 %v3676
  %v4376 = vunpack.c.h.b16 %v3676
  %v4377 = vunpack.c.l.b16 %v3677
  %v4378 = vunpack.c.h.b16 %v3677
  %v4379 = vunpack.c.l.b16 %v3678
  %v4380 = vunpack.c.h.b16 %v3678
  %v4381 = vunpack.c.l.b16 %v3679
  %v4382 = vunpack.c.h.b16 %v3679
  %v4383 = vunpack.c.l.b16 %v3680
  %v4384 = vunpack.c.h.b16 %v3680
  %v4385 = vunpack.c.l.b16 %v3681
  %v4386 = vunpack.c.h.b16 %v3681
  %v4387 = vunpack.c.l.b16 %v3682
  %v4388 = vunpack.c.h.b16 %v3682
  %v4389 = vunpack.c.l.b16 %v3683
  %v4390 = vunpack.c.h.b16 %v3683
  %v4391 = vunpack.c.l.b16 %v3684
  %v4392 = vunpack.c.h.b16 %v3684
  %v4393 = vunpack.c.l.b16 %v3685
  %v4394 = vunpack.c.h.b16 %v3685
  %v4395 = vunpack.c.l.b16 %v3686
  %v4396 = vunpack.c.h.b16 %v3686
  %v4397 = vunpack.c.l.b16 %v3687
  %v4398 = vunpack.c.h.b16 %v3687
  %v4399 = vunpack.c.l.b16 %v3688
  %v4400 = vunpack.c.h.b16 %v3688
  %v4401 = vunpack.c.l.b16 %v3689
  %v4402 = vunpack.c.h.b16 %v3689
  %v4403 = vunpack.c.l.b16 %v3690
  %v4404 = vunpack.c.h.b16 %v3690
  %v4405 = vunpack.c.l.b16 %v3691
  %v4406 = vunpack.c.h.b16 %v3691
  %v4407 = vunpack.c.l.b16 %v3692
  %v4408 = vunpack.c.h.b16 %v3692
  %v4409 = vunpack.c.l.b16 %v3693
  %v4410 = vunpack.c.h.b16 %v3693
  %v4411 = vunpack.c.l.b16 %v3694
  %v4412 = vunpack.c.h.b16 %v3694
  %v4413 = vunpack.c.l.b16 %v3695
  %v4414 = vunpack.c.h.b16 %v3695
  %v4415 = vunpack.c.l.b16 %v3696
  %v4416 = vunpack.c.h.b16 %v3696
  %v4417 = vunpack.c.l.b16 %v3697
  %v4418 = vunpack.c.h.b16 %v3697
  %v4419 = vunpack.c.l.b16 %v3698
  %v4420 = vunpack.c.h.b16 %v3698
  %v4421 = vunpack.c.l.b16 %v3699
  %v4422 = vunpack.c.h.b16 %v3699
  %v4423 = vunpack.c.l.b16 %v3700
  %v4424 = vunpack.c.h.b16 %v3700
  %v4425 = vunpack.c.l.b16 %v3701
  %v4426 = vunpack.c.h.b16 %v3701
  %v4427 = vunpack.c.l.b16 %v3702
  %v4428 = vunpack.c.h.b16 %v3702
  %v4429 = vunpack.c.l.b16 %v3703
  %v4430 = vunpack.c.h.b16 %v3703
  %v4431 = vunpack.c.l.b16 %v3704
  %v4432 = vunpack.c.h.b16 %v3704
  %v4433 = vunpack.c.l.b16 %v3705
  %v4434 = vunpack.c.h.b16 %v3705
  %v4435 = vpack.c.b16 %v4373, %v4371
  %v4436 = vpack.c.b16 %v4374, %v4372
  %v4437 = vpack.c.b16 %v4377, %v4375
  %v4438 = vpack.c.b16 %v4378, %v4376
  %v4439 = vpack.c.b16 %v4381, %v4379
  %v4440 = vpack.c.b16 %v4382, %v4380
  %v4441 = vpack.c.b16 %v4385, %v4383
  %v4442 = vpack.c.b16 %v4386, %v4384
  %v4443 = vpack.c.b16 %v4389, %v4387
  %v4444 = vpack.c.b16 %v4390, %v4388
  %v4445 = vpack.c.b16 %v4393, %v4391
  %v4446 = vpack.c.b16 %v4394, %v4392
  %v4447 = vpack.c.b16 %v4397, %v4395
  %v4448 = vpack.c.b16 %v4398, %v4396
  %v4449 = vpack.c.b16 %v4401, %v4399
  %v4450 = vpack.c.b16 %v4402, %v4400
  %v4451 = vpack.c.b16 %v4405, %v4403
  %v4452 = vpack.c.b16 %v4406, %v4404
  %v4453 = vpack.c.b16 %v4409, %v4407
  %v4454 = vpack.c.b16 %v4410, %v4408
  %v4455 = vpack.c.b16 %v4413, %v4411
  %v4456 = vpack.c.b16 %v4414, %v4412
  %v4457 = vpack.c.b16 %v4417, %v4415
  %v4458 = vpack.c.b16 %v4418, %v4416
  %v4459 = vpack.c.b16 %v4421, %v4419
  %v4460 = vpack.c.b16 %v4422, %v4420
  %v4461 = vpack.c.b16 %v4425, %v4423
  %v4462 = vpack.c.b16 %v4426, %v4424
  %v4463 = vpack.c.b16 %v4429, %v4427
  %v4464 = vpack.c.b16 %v4430, %v4428
  %v4465 = vpack.c.b16 %v4433, %v4431
  %v4466 = vpack.c.b16 %v4434, %v4432
  %4499 = vmatprep.subr.bf16.mxu0 %v4436
  %4500 = vmatpush1.bf16.msra.mxu0 %v4435
  %4501 = vmatprep.subr.bf16.mxu0 %v4438
  %4502 = vmatpush1.bf16.msra.mxu0 %v4437
  %4503 = vmatprep.subr.bf16.mxu0 %v4440
  %4504 = vmatpush1.bf16.msra.mxu0 %v4439
  %4505 = vmatprep.subr.bf16.mxu0 %v4442
  %4506 = vmatpush1.bf16.msra.mxu0 %v4441
  %4507 = vmatprep.subr.bf16.mxu0 %v4444
  %4508 = vmatpush1.bf16.msra.mxu0 %v4443
  %4509 = vmatprep.subr.bf16.mxu0 %v4446
  %4510 = vmatpush1.bf16.msra.mxu0 %v4445
  %4511 = vmatprep.subr.bf16.mxu0 %v4448
  %4512 = vmatpush1.bf16.msra.mxu0 %v4447
  %4513 = vmatprep.subr.bf16.mxu0 %v4450
  %4514 = vmatpush1.bf16.msra.mxu0 %v4449
  %4515 = vmatprep.subr.bf16.mxu0 %v4452
  %4516 = vmatpush1.bf16.msra.mxu0 %v4451
  %4517 = vmatprep.subr.bf16.mxu0 %v4454
  %4518 = vmatpush1.bf16.msra.mxu0 %v4453
  %4519 = vmatprep.subr.bf16.mxu0 %v4456
  %4520 = vmatpush1.bf16.msra.mxu0 %v4455
  %4521 = vmatprep.subr.bf16.mxu0 %v4458
  %4522 = vmatpush1.bf16.msra.mxu0 %v4457
  %4523 = vmatprep.subr.bf16.mxu0 %v4460
  %4524 = vmatpush1.bf16.msra.mxu0 %v4459
  %4525 = vmatprep.subr.bf16.mxu0 %v4462
  %4526 = vmatpush1.bf16.msra.mxu0 %v4461
  %4527 = vmatprep.subr.bf16.mxu0 %v4464
  %4528 = vmatpush1.bf16.msra.mxu0 %v4463
  %4529 = vmatprep.subr.bf16.mxu0 %v4466
  %4530 = vmatpush1.bf16.msra.mxu0 %v4465
  %4531 = vmatprep.mubr.bf16.mxu0 %v3647
  %4532 = vmatmul.mubr.bf16.gmra.mrb[0].mxu0 %v3646
  %v4533 = vpop.f32.mrb[0].mxu0
  %v4534 = vadd.f32 %v4201, %v4533
  %v4535 = vpop.f32.mrb[0].mxu0
  %v4536 = vadd.f32 %v4203, %v4535
  %v4537 = vpop.f32.mrb[0].mxu0
  %v4538 = vadd.f32 %v4205, %v4537
  %v4539 = vpop.f32.mrb[0].mxu0
  %v4540 = vadd.f32 %v4207, %v4539
  %4541 = vmatprep.mubr.bf16.mxu0 %v3649
  %4542 = vmatmul.mubr.bf16.gmra.mrb[0].mxu0 %v3648
  %v4543 = vpop.f32.mrb[0].mxu0
  %v4544 = vadd.f32 %v4211, %v4543
  %v4545 = vpop.f32.mrb[0].mxu0
  %v4546 = vadd.f32 %v4213, %v4545
  %v4547 = vpop.f32.mrb[0].mxu0
  %v4548 = vadd.f32 %v4215, %v4547
  %v4549 = vpop.f32.mrb[0].mxu0
  %v4550 = vadd.f32 %v4217, %v4549
  %4551 = vmatprep.mubr.bf16.mxu0 %v3651
  %4552 = vmatmul.mubr.bf16.gmra.mrb[0].mxu0 %v3650
  %v4553 = vpop.f32.mrb[0].mxu0
  %v4554 = vadd.f32 %v4221, %v4553
  %v4555 = vpop.f32.mrb[0].mxu0
  %v4556 = vadd.f32 %v4223, %v4555
  %v4557 = vpop.f32.mrb[0].mxu0
  %v4558 = vadd.f32 %v4225, %v4557
  %v4559 = vpop.f32.mrb[0].mxu0
  %v4560 = vadd.f32 %v4227, %v4559
  %4561 = vmatprep.mubr.bf16.mxu0 %v3653
  %4562 = vmatmul.mubr.bf16.gmra.mrb[0].mxu0 %v3652
  %v4563 = vpop.f32.mrb[0].mxu0
  %v4564 = vadd.f32 %v4231, %v4563
  %v4565 = vpop.f32.mrb[0].mxu0
  %v4566 = vadd.f32 %v4233, %v4565
  %v4567 = vpop.f32.mrb[0].mxu0
  %v4568 = vadd.f32 %v4235, %v4567
  %v4569 = vpop.f32.mrb[0].mxu0
  %v4570 = vadd.f32 %v4237, %v4569
  %4571 = vmatprep.mubr.bf16.mxu0 %v3655
  %4572 = vmatmul.mubr.bf16.gmra.mrb[0].mxu0 %v3654
  %v4573 = vpop.f32.mrb[0].mxu0
  %v4574 = vadd.f32 %v4241, %v4573
  %v4575 = vpop.f32.mrb[0].mxu0
  %v4576 = vadd.f32 %v4243, %v4575
  %v4577 = vpop.f32.mrb[0].mxu0
  %v4578 = vadd.f32 %v4245, %v4577
  %v4579 = vpop.f32.mrb[0].mxu0
  %v4580 = vadd.f32 %v4247, %v4579
  %4581 = vmatprep.mubr.bf16.mxu0 %v3657
  %4582 = vmatmul.mubr.bf16.gmra.mrb[0].mxu0 %v3656
  %v4583 = vpop.f32.mrb[0].mxu0
  %v4584 = vadd.f32 %v4251, %v4583
  %v4585 = vpop.f32.mrb[0].mxu0
  %v4586 = vadd.f32 %v4253, %v4585
  %v4587 = vpop.f32.mrb[0].mxu0
  %v4588 = vadd.f32 %v4255, %v4587
  %v4589 = vpop.f32.mrb[0].mxu0
  %v4590 = vadd.f32 %v4257, %v4589
  %4591 = vmatprep.mubr.bf16.mxu0 %v3659
  %4592 = vmatmul.mubr.bf16.gmra.mrb[0].mxu0 %v3658
  %v4593 = vpop.f32.mrb[0].mxu0
  %v4594 = vadd.f32 %v4261, %v4593
  %v4595 = vpop.f32.mrb[0].mxu0
  %v4596 = vadd.f32 %v4263, %v4595
  %v4597 = vpop.f32.mrb[0].mxu0
  %v4598 = vadd.f32 %v4265, %v4597
  %v4599 = vpop.f32.mrb[0].mxu0
  %v4600 = vadd.f32 %v4267, %v4599
  %4601 = vmatprep.mubr.bf16.mxu0 %v3661
  %4602 = vmatmul.mubr.bf16.gmra.mrb[0].mxu0 %v3660
  %v4603 = vpop.f32.mrb[0].mxu0
  %v4604 = vadd.f32 %v4271, %v4603
  %v4605 = vpop.f32.mrb[0].mxu0
  %v4606 = vadd.f32 %v4273, %v4605
  %v4607 = vpop.f32.mrb[0].mxu0
  %v4608 = vadd.f32 %v4275, %v4607
  %v4609 = vpop.f32.mrb[0].mxu0
  %v4610 = vadd.f32 %v4277, %v4609
  %4611 = vmatprep.mubr.bf16.mxu0 %v3663
  %4612 = vmatmul.mubr.bf16.gmra.mrb[0].mxu0 %v3662
  %v4613 = vpop.f32.mrb[0].mxu0
  %v4614 = vadd.f32 %v4281, %v4613
  %v4615 = vpop.f32.mrb[0].mxu0
  %v4616 = vadd.f32 %v4283, %v4615
  %v4617 = vpop.f32.mrb[0].mxu0
  %v4618 = vadd.f32 %v4285, %v4617
  %v4619 = vpop.f32.mrb[0].mxu0
  %v4620 = vadd.f32 %v4287, %v4619
  %4621 = vmatprep.mubr.bf16.mxu0 %v3665
  %4622 = vmatmul.mubr.bf16.gmra.mrb[0].mxu0 %v3664
  %v4623 = vpop.f32.mrb[0].mxu0
  %v4624 = vadd.f32 %v4291, %v4623
  %v4625 = vpop.f32.mrb[0].mxu0
  %v4626 = vadd.f32 %v4293, %v4625
  %v4627 = vpop.f32.mrb[0].mxu0
  %v4628 = vadd.f32 %v4295, %v4627
  %v4629 = vpop.f32.mrb[0].mxu0
  %v4630 = vadd.f32 %v4297, %v4629
  %4631 = vmatprep.mubr.bf16.mxu0 %v3667
  %4632 = vmatmul.mubr.bf16.gmra.mrb[0].mxu0 %v3666
  %v4633 = vpop.f32.mrb[0].mxu0
  %v4634 = vadd.f32 %v4301, %v4633
  %v4635 = vpop.f32.mrb[0].mxu0
  %v4636 = vadd.f32 %v4303, %v4635
  %v4637 = vpop.f32.mrb[0].mxu0
  %v4638 = vadd.f32 %v4305, %v4637
  %v4639 = vpop.f32.mrb[0].mxu0
  %v4640 = vadd.f32 %v4307, %v4639
  %4641 = vmatprep.mubr.bf16.mxu0 %v3669
  %4642 = vmatmul.mubr.bf16.gmra.mrb[0].mxu0 %v3668
  %v4643 = vpop.f32.mrb[0].mxu0
  %v4644 = vadd.f32 %v4311, %v4643
  %v4645 = vpop.f32.mrb[0].mxu0
  %v4646 = vadd.f32 %v4313, %v4645
  %v4647 = vpop.f32.mrb[0].mxu0
  %v4648 = vadd.f32 %v4315, %v4647
  %v4649 = vpop.f32.mrb[0].mxu0
  %v4650 = vadd.f32 %v4317, %v4649
  %4651 = vmatprep.mubr.bf16.mxu0 %v3671
  %4652 = vmatmul.mubr.bf16.gmra.mrb[0].mxu0 %v3670
  %v4653 = vpop.f32.mrb[0].mxu0
  %v4654 = vadd.f32 %v4321, %v4653
  %v4655 = vpop.f32.mrb[0].mxu0
  %v4656 = vadd.f32 %v4323, %v4655
  %v4657 = vpop.f32.mrb[0].mxu0
  %v4658 = vadd.f32 %v4325, %v4657
  %v4659 = vpop.f32.mrb[0].mxu0
  %v4660 = vadd.f32 %v4327, %v4659
  %4661 = vmatprep.mubr.bf16.mxu0 %v3673
  %4662 = vmatmul.mubr.bf16.gmra.mrb[0].mxu0 %v3672
  %v4663 = vpop.f32.mrb[0].mxu0
  %v4664 = vadd.f32 %v4331, %v4663
  %v4665 = vpop.f32.mrb[0].mxu0
  %v4666 = vadd.f32 %v4333, %v4665
  %v4667 = vpop.f32.mrb[0].mxu0
  %v4668 = vadd.f32 %v4335, %v4667
  %v4669 = vpop.f32.mrb[0].mxu0
  %v4670 = vadd.f32 %v4337, %v4669
  %4671 = vdwg.mxu0
  %v4672 = vld [vmem:[#allocation2 + $0x200] sm:$0xff]
  %v4673 = vld [vmem:[#allocation2 + $0x208] sm:$0xff]
  %v4674 = vld [vmem:[#allocation2 + $0x210] sm:$0xff]
  %v4675 = vld [vmem:[#allocation2 + $0x218] sm:$0xff]
  %v4676 = vld [vmem:[#allocation2 + $0x220] sm:$0xff]
  %v4677 = vld [vmem:[#allocation2 + $0x228] sm:$0xff]
  %v4678 = vld [vmem:[#allocation2 + $0x230] sm:$0xff]
  %v4679 = vld [vmem:[#allocation2 + $0x238] sm:$0xff]
  %v4680 = vld [vmem:[#allocation2 + $0x240] sm:$0xff]
  %v4681 = vld [vmem:[#allocation2 + $0x248] sm:$0xff]
  %v4682 = vld [vmem:[#allocation2 + $0x250] sm:$0xff]
  %v4683 = vld [vmem:[#allocation2 + $0x258] sm:$0xff]
  %v4684 = vld [vmem:[#allocation2 + $0x260] sm:$0xff]
  %v4685 = vld [vmem:[#allocation2 + $0x268] sm:$0xff]
  %v4686 = vld [vmem:[#allocation2 + $0x270] sm:$0xff]
  %v4687 = vld [vmem:[#allocation2 + $0x278] sm:$0xff]
  %v4688 = vld [vmem:[#allocation2 + $0x280] sm:$0xff]
  %v4689 = vld [vmem:[#allocation2 + $0x288] sm:$0xff]
  %v4690 = vld [vmem:[#allocation2 + $0x290] sm:$0xff]
  %v4691 = vld [vmem:[#allocation2 + $0x298] sm:$0xff]
  %v4692 = vld [vmem:[#allocation2 + $0x2a0] sm:$0xff]
  %v4693 = vld [vmem:[#allocation2 + $0x2a8] sm:$0xff]
  %v4694 = vld [vmem:[#allocation2 + $0x2b0] sm:$0xff]
  %v4695 = vld [vmem:[#allocation2 + $0x2b8] sm:$0xff]
  %v4696 = vld [vmem:[#allocation2 + $0x2c0] sm:$0xff]
  %v4697 = vld [vmem:[#allocation2 + $0x2c8] sm:$0xff]
  %v4698 = vld [vmem:[#allocation2 + $0x2d0] sm:$0xff]
  %v4699 = vld [vmem:[#allocation2 + $0x2d8] sm:$0xff]
  %v4700 = vld [vmem:[#allocation2 + $0x2e0] sm:$0xff]
  %v4701 = vld [vmem:[#allocation2 + $0x2e8] sm:$0xff]
  %v4702 = vld [vmem:[#allocation2 + $0x2f0] sm:$0xff]
  %v4703 = vld [vmem:[#allocation2 + $0x2f8] sm:$0xff]
  %v4704 = vld [vmem:[#allocation2 + $0x300] sm:$0xff]
  %v4705 = vld [vmem:[#allocation2 + $0x308] sm:$0xff]
  %v4706 = vld [vmem:[#allocation2 + $0x310] sm:$0xff]
  %v4707 = vld [vmem:[#allocation2 + $0x318] sm:$0xff]
  %v4708 = vld [vmem:[#allocation2 + $0x320] sm:$0xff]
  %v4709 = vld [vmem:[#allocation2 + $0x328] sm:$0xff]
  %v4710 = vld [vmem:[#allocation2 + $0x330] sm:$0xff]
  %v4711 = vld [vmem:[#allocation2 + $0x338] sm:$0xff]
  %v4712 = vld [vmem:[#allocation2 + $0x340] sm:$0xff]
  %v4713 = vld [vmem:[#allocation2 + $0x348] sm:$0xff]
  %v4714 = vld [vmem:[#allocation2 + $0x350] sm:$0xff]
  %v4715 = vld [vmem:[#allocation2 + $0x358] sm:$0xff]
  %v4716 = vld [vmem:[#allocation2 + $0x360] sm:$0xff]
  %v4717 = vld [vmem:[#allocation2 + $0x368] sm:$0xff]
  %v4718 = vld [vmem:[#allocation2 + $0x370] sm:$0xff]
  %v4719 = vld [vmem:[#allocation2 + $0x378] sm:$0xff]
  %v4720 = vld [vmem:[#allocation2 + $0x380] sm:$0xff]
  %v4721 = vld [vmem:[#allocation2 + $0x388] sm:$0xff]
  %v4722 = vld [vmem:[#allocation2 + $0x390] sm:$0xff]
  %v4723 = vld [vmem:[#allocation2 + $0x398] sm:$0xff]
  %v4724 = vld [vmem:[#allocation2 + $0x3a0] sm:$0xff]
  %v4725 = vld [vmem:[#allocation2 + $0x3a8] sm:$0xff]
  %v4726 = vld [vmem:[#allocation2 + $0x3b0] sm:$0xff]
  %v4727 = vld [vmem:[#allocation2 + $0x3b8] sm:$0xff]
  %v4728 = vpack.c.bf16 %v4674, %v4672
  %v4729 = vpack.c.bf16 %v4675, %v4673
  %v4730 = vpack.c.bf16 %v4678, %v4676
  %v4731 = vpack.c.bf16 %v4679, %v4677
  %v4732 = vpack.c.bf16 %v4682, %v4680
  %v4733 = vpack.c.bf16 %v4683, %v4681
  %v4734 = vpack.c.bf16 %v4686, %v4684
  %v4735 = vpack.c.bf16 %v4687, %v4685
  %v4736 = vpack.c.bf16 %v4690, %v4688
  %v4737 = vpack.c.bf16 %v4691, %v4689
  %v4738 = vpack.c.bf16 %v4694, %v4692
  %v4739 = vpack.c.bf16 %v4695, %v4693
  %v4740 = vpack.c.bf16 %v4698, %v4696
  %v4741 = vpack.c.bf16 %v4699, %v4697
  %v4742 = vpack.c.bf16 %v4702, %v4700
  %v4743 = vpack.c.bf16 %v4703, %v4701
  %v4744 = vpack.c.bf16 %v4706, %v4704
  %v4745 = vpack.c.bf16 %v4707, %v4705
  %v4746 = vpack.c.bf16 %v4710, %v4708
  %v4747 = vpack.c.bf16 %v4711, %v4709
  %v4748 = vpack.c.bf16 %v4714, %v4712
  %v4749 = vpack.c.bf16 %v4715, %v4713
  %v4750 = vpack.c.bf16 %v4718, %v4716
  %v4751 = vpack.c.bf16 %v4719, %v4717
  %v4752 = vpack.c.bf16 %v4722, %v4720
  %v4753 = vpack.c.bf16 %v4723, %v4721
  %v4754 = vpack.c.bf16 %v4726, %v4724
  %v4755 = vpack.c.bf16 %v4727, %v4725
  %v4756 = vld [vmem:[%s2218] sm:$0xff]
  %v4757 = vld [vmem:[%s2218 + $0x8] sm:$0xff]
  %v4758 = vld [vmem:[%s2218 + $0x10] sm:$0xff]
  %v4759 = vld [vmem:[%s2218 + $0x18] sm:$0xff]
  %v4760 = vld [vmem:[%s2218 + $0x20] sm:$0xff]
  %v4761 = vld [vmem:[%s2218 + $0x28] sm:$0xff]
  %v4762 = vld [vmem:[%s2218 + $0x30] sm:$0xff]
  %v4763 = vld [vmem:[%s2218 + $0x38] sm:$0xff]
  %v4764 = vld [vmem:[%s2218 + $0x40] sm:$0xff]
  %v4765 = vld [vmem:[%s2218 + $0x48] sm:$0xff]
  %v4766 = vld [vmem:[%s2218 + $0x50] sm:$0xff]
  %v4767 = vld [vmem:[%s2218 + $0x58] sm:$0xff]
  %v4768 = vld [vmem:[%s2218 + $0x60] sm:$0xff]
  %v4769 = vld [vmem:[%s2218 + $0x68] sm:$0xff]
  %v4770 = vld [vmem:[%s2218 + $0x70] sm:$0xff]
  %v4771 = vld [vmem:[%s2218 + $0x78] sm:$0xff]
  %v4772 = vld [vmem:[%s2218 + $0x80] sm:$0xff]
  %v4773 = vld [vmem:[%s2218 + $0x88] sm:$0xff]
  %v4774 = vld [vmem:[%s2218 + $0x90] sm:$0xff]
  %v4775 = vld [vmem:[%s2218 + $0x98] sm:$0xff]
  %v4776 = vld [vmem:[%s2218 + $0xa0] sm:$0xff]
  %v4777 = vld [vmem:[%s2218 + $0xa8] sm:$0xff]
  %v4778 = vld [vmem:[%s2218 + $0xb0] sm:$0xff]
  %v4779 = vld [vmem:[%s2218 + $0xb8] sm:$0xff]
  %v4780 = vld [vmem:[%s2218 + $0xc0] sm:$0xff]
  %v4781 = vld [vmem:[%s2218 + $0xc8] sm:$0xff]
  %v4782 = vld [vmem:[%s2218 + $0xd0] sm:$0xff]
  %v4783 = vld [vmem:[%s2218 + $0xd8] sm:$0xff]
  %v4784 = vld [vmem:[%s2218 + $0xe0] sm:$0xff]
  %v4785 = vld [vmem:[%s2218 + $0xe8] sm:$0xff]
  %v4786 = vld [vmem:[%s2218 + $0xf0] sm:$0xff]
  %v4787 = vld [vmem:[%s2218 + $0xf8] sm:$0xff]
  %v4820 = vunpack.c.l.b16 %v4756
  %v4821 = vunpack.c.h.b16 %v4756
  %v4822 = vunpack.c.l.b16 %v4757
  %v4823 = vunpack.c.h.b16 %v4757
  %v4824 = vunpack.c.l.b16 %v4758
  %v4825 = vunpack.c.h.b16 %v4758
  %v4826 = vunpack.c.l.b16 %v4759
  %v4827 = vunpack.c.h.b16 %v4759
  %v4828 = vunpack.c.l.b16 %v4760
  %v4829 = vunpack.c.h.b16 %v4760
  %v4830 = vunpack.c.l.b16 %v4761
  %v4831 = vunpack.c.h.b16 %v4761
  %v4832 = vunpack.c.l.b16 %v4762
  %v4833 = vunpack.c.h.b16 %v4762
  %v4834 = vunpack.c.l.b16 %v4763
  %v4835 = vunpack.c.h.b16 %v4763
  %v4836 = vunpack.c.l.b16 %v4764
  %v4837 = vunpack.c.h.b16 %v4764
  %v4838 = vunpack.c.l.b16 %v4765
  %v4839 = vunpack.c.h.b16 %v4765
  %v4840 = vunpack.c.l.b16 %v4766
  %v4841 = vunpack.c.h.b16 %v4766
  %v4842 = vunpack.c.l.b16 %v4767
  %v4843 = vunpack.c.h.b16 %v4767
  %v4844 = vunpack.c.l.b16 %v4768
  %v4845 = vunpack.c.h.b16 %v4768
  %v4846 = vunpack.c.l.b16 %v4769
  %v4847 = vunpack.c.h.b16 %v4769
  %v4848 = vunpack.c.l.b16 %v4770
  %v4849 = vunpack.c.h.b16 %v4770
  %v4850 = vunpack.c.l.b16 %v4771
  %v4851 = vunpack.c.h.b16 %v4771
  %v4852 = vunpack.c.l.b16 %v4772
  %v4853 = vunpack.c.h.b16 %v4772
  %v4854 = vunpack.c.l.b16 %v4773
  %v4855 = vunpack.c.h.b16 %v4773
  %v4856 = vunpack.c.l.b16 %v4774
  %v4857 = vunpack.c.h.b16 %v4774
  %v4858 = vunpack.c.l.b16 %v4775
  %v4859 = vunpack.c.h.b16 %v4775
  %v4860 = vunpack.c.l.b16 %v4776
  %v4861 = vunpack.c.h.b16 %v4776
  %v4862 = vunpack.c.l.b16 %v4777
  %v4863 = vunpack.c.h.b16 %v4777
  %v4864 = vunpack.c.l.b16 %v4778
  %v4865 = vunpack.c.h.b16 %v4778
  %v4866 = vunpack.c.l.b16 %v4779
  %v4867 = vunpack.c.h.b16 %v4779
  %v4868 = vunpack.c.l.b16 %v4780
  %v4869 = vunpack.c.h.b16 %v4780
  %v4870 = vunpack.c.l.b16 %v4781
  %v4871 = vunpack.c.h.b16 %v4781
  %v4872 = vunpack.c.l.b16 %v4782
  %v4873 = vunpack.c.h.b16 %v4782
  %v4874 = vunpack.c.l.b16 %v4783
  %v4875 = vunpack.c.h.b16 %v4783
  %v4876 = vunpack.c.l.b16 %v4784
  %v4877 = vunpack.c.h.b16 %v4784
  %v4878 = vunpack.c.l.b16 %v4785
  %v4879 = vunpack.c.h.b16 %v4785
  %v4880 = vunpack.c.l.b16 %v4786
  %v4881 = vunpack.c.h.b16 %v4786
  %v4882 = vunpack.c.l.b16 %v4787
  %v4883 = vunpack.c.h.b16 %v4787
  %v4884 = vpack.c.b16 %v4822, %v4820
  %v4885 = vpack.c.b16 %v4823, %v4821
  %v4886 = vpack.c.b16 %v4826, %v4824
  %v4887 = vpack.c.b16 %v4827, %v4825
  %v4888 = vpack.c.b16 %v4830, %v4828
  %v4889 = vpack.c.b16 %v4831, %v4829
  %v4890 = vpack.c.b16 %v4834, %v4832
  %v4891 = vpack.c.b16 %v4835, %v4833
  %v4892 = vpack.c.b16 %v4838, %v4836
  %v4893 = vpack.c.b16 %v4839, %v4837
  %v4894 = vpack.c.b16 %v4842, %v4840
  %v4895 = vpack.c.b16 %v4843, %v4841
  %v4896 = vpack.c.b16 %v4846, %v4844
  %v4897 = vpack.c.b16 %v4847, %v4845
  %v4898 = vpack.c.b16 %v4850, %v4848
  %v4899 = vpack.c.b16 %v4851, %v4849
  %v4900 = vpack.c.b16 %v4854, %v4852
  %v4901 = vpack.c.b16 %v4855, %v4853
  %v4902 = vpack.c.b16 %v4858, %v4856
  %v4903 = vpack.c.b16 %v4859, %v4857
  %v4904 = vpack.c.b16 %v4862, %v4860
  %v4905 = vpack.c.b16 %v4863, %v4861
  %v4906 = vpack.c.b16 %v4866, %v4864
  %v4907 = vpack.c.b16 %v4867, %v4865
  %v4908 = vpack.c.b16 %v4870, %v4868
  %v4909 = vpack.c.b16 %v4871, %v4869
  %v4910 = vpack.c.b16 %v4874, %v4872
  %v4911 = vpack.c.b16 %v4875, %v4873
  %v4912 = vpack.c.b16 %v4878, %v4876
  %v4913 = vpack.c.b16 %v4879, %v4877
  %v4914 = vpack.c.b16 %v4882, %v4880
  %v4915 = vpack.c.b16 %v4883, %v4881
  %4948 = vmatprep.subr.bf16.mxu0 %v4885
  %4949 = vmatpush1.bf16.msra.mxu0 %v4884
  %4950 = vmatprep.subr.bf16.mxu0 %v4887
  %4951 = vmatpush1.bf16.msra.mxu0 %v4886
  %4952 = vmatprep.subr.bf16.mxu0 %v4889
  %4953 = vmatpush1.bf16.msra.mxu0 %v4888
  %4954 = vmatprep.subr.bf16.mxu0 %v4891
  %4955 = vmatpush1.bf16.msra.mxu0 %v4890
  %4956 = vmatprep.subr.bf16.mxu0 %v4893
  %4957 = vmatpush1.bf16.msra.mxu0 %v4892
  %4958 = vmatprep.subr.bf16.mxu0 %v4895
  %4959 = vmatpush1.bf16.msra.mxu0 %v4894
  %4960 = vmatprep.subr.bf16.mxu0 %v4897
  %4961 = vmatpush1.bf16.msra.mxu0 %v4896
  %4962 = vmatprep.subr.bf16.mxu0 %v4899
  %4963 = vmatpush1.bf16.msra.mxu0 %v4898
  %4964 = vmatprep.subr.bf16.mxu0 %v4901
  %4965 = vmatpush1.bf16.msra.mxu0 %v4900
  %4966 = vmatprep.subr.bf16.mxu0 %v4903
  %4967 = vmatpush1.bf16.msra.mxu0 %v4902
  %4968 = vmatprep.subr.bf16.mxu0 %v4905
  %4969 = vmatpush1.bf16.msra.mxu0 %v4904
  %4970 = vmatprep.subr.bf16.mxu0 %v4907
  %4971 = vmatpush1.bf16.msra.mxu0 %v4906
  %4972 = vmatprep.subr.bf16.mxu0 %v4909
  %4973 = vmatpush1.bf16.msra.mxu0 %v4908
  %4974 = vmatprep.subr.bf16.mxu0 %v4911
  %4975 = vmatpush1.bf16.msra.mxu0 %v4910
  %4976 = vmatprep.subr.bf16.mxu0 %v4913
  %4977 = vmatpush1.bf16.msra.mxu0 %v4912
  %4978 = vmatprep.subr.bf16.mxu0 %v4915
  %4979 = vmatpush1.bf16.msra.mxu0 %v4914
  %4980 = vmatprep.mubr.bf16.mxu0 %v4729
  %4981 = vmatmul.mubr.bf16.gmra.mrb[0].mxu0 %v4728
  %v4982 = vpop.f32.mrb[0].mxu0
  %v4983 = vadd.f32 0.0, %v4982
  %v4984 = vpop.f32.mrb[0].mxu0
  %v4985 = vadd.f32 0.0, %v4984
  %v4986 = vpop.f32.mrb[0].mxu0
  %v4987 = vadd.f32 0.0, %v4986
  %v4988 = vpop.f32.mrb[0].mxu0
  %v4989 = vadd.f32 0.0, %v4988
  %4990 = vmatprep.mubr.bf16.mxu0 %v4731
  %4991 = vmatmul.mubr.bf16.gmra.mrb[0].mxu0 %v4730
  %v4992 = vpop.f32.mrb[0].mxu0
  %v4993 = vadd.f32 0.0, %v4992
  %v4994 = vpop.f32.mrb[0].mxu0
  %v4995 = vadd.f32 0.0, %v4994
  %v4996 = vpop.f32.mrb[0].mxu0
  %v4997 = vadd.f32 0.0, %v4996
  %v4998 = vpop.f32.mrb[0].mxu0
  %v4999 = vadd.f32 0.0, %v4998
  %5000 = vmatprep.mubr.bf16.mxu0 %v4733
  %5001 = vmatmul.mubr.bf16.gmra.mrb[0].mxu0 %v4732
  %v5002 = vpop.f32.mrb[0].mxu0
  %v5003 = vadd.f32 0.0, %v5002
  %v5004 = vpop.f32.mrb[0].mxu0
  %v5005 = vadd.f32 0.0, %v5004
  %v5006 = vpop.f32.mrb[0].mxu0
  %v5007 = vadd.f32 0.0, %v5006
  %v5008 = vpop.f32.mrb[0].mxu0
  %v5009 = vadd.f32 0.0, %v5008
  %5010 = vmatprep.mubr.bf16.mxu0 %v4735
  %5011 = vmatmul.mubr.bf16.gmra.mrb[0].mxu0 %v4734
  %v5012 = vpop.f32.mrb[0].mxu0
  %v5013 = vadd.f32 0.0, %v5012
  %v5014 = vpop.f32.mrb[0].mxu0
  %v5015 = vadd.f32 0.0, %v5014
  %v5016 = vpop.f32.mrb[0].mxu0
  %v5017 = vadd.f32 0.0, %v5016
  %v5018 = vpop.f32.mrb[0].mxu0
  %v5019 = vadd.f32 0.0, %v5018
  %5020 = vmatprep.mubr.bf16.mxu0 %v4737
  %5021 = vmatmul.mubr.bf16.gmra.mrb[0].mxu0 %v4736
  %v5022 = vpop.f32.mrb[0].mxu0
  %v5023 = vadd.f32 0.0, %v5022
  %v5024 = vpop.f32.mrb[0].mxu0
  %v5025 = vadd.f32 0.0, %v5024
  %v5026 = vpop.f32.mrb[0].mxu0
  %v5027 = vadd.f32 0.0, %v5026
  %v5028 = vpop.f32.mrb[0].mxu0
  %v5029 = vadd.f32 0.0, %v5028
  %5030 = vmatprep.mubr.bf16.mxu0 %v4739
  %5031 = vmatmul.mubr.bf16.gmra.mrb[0].mxu0 %v4738
  %v5032 = vpop.f32.mrb[0].mxu0
  %v5033 = vadd.f32 0.0, %v5032
  %v5034 = vpop.f32.mrb[0].mxu0
  %v5035 = vadd.f32 0.0, %v5034
  %v5036 = vpop.f32.mrb[0].mxu0
  %v5037 = vadd.f32 0.0, %v5036
  %v5038 = vpop.f32.mrb[0].mxu0
  %v5039 = vadd.f32 0.0, %v5038
  %5040 = vmatprep.mubr.bf16.mxu0 %v4741
  %5041 = vmatmul.mubr.bf16.gmra.mrb[0].mxu0 %v4740
  %v5042 = vpop.f32.mrb[0].mxu0
  %v5043 = vadd.f32 0.0, %v5042
  %v5044 = vpop.f32.mrb[0].mxu0
  %v5045 = vadd.f32 0.0, %v5044
  %v5046 = vpop.f32.mrb[0].mxu0
  %v5047 = vadd.f32 0.0, %v5046
  %v5048 = vpop.f32.mrb[0].mxu0
  %v5049 = vadd.f32 0.0, %v5048
  %5050 = vmatprep.mubr.bf16.mxu0 %v4743
  %5051 = vmatmul.mubr.bf16.gmra.mrb[0].mxu0 %v4742
  %v5052 = vpop.f32.mrb[0].mxu0
  %v5053 = vadd.f32 0.0, %v5052
  %v5054 = vpop.f32.mrb[0].mxu0
  %v5055 = vadd.f32 0.0, %v5054
  %v5056 = vpop.f32.mrb[0].mxu0
  %v5057 = vadd.f32 0.0, %v5056
  %v5058 = vpop.f32.mrb[0].mxu0
  %v5059 = vadd.f32 0.0, %v5058
  %5060 = vmatprep.mubr.bf16.mxu0 %v4745
  %5061 = vmatmul.mubr.bf16.gmra.mrb[0].mxu0 %v4744
  %v5062 = vpop.f32.mrb[0].mxu0
  %v5063 = vadd.f32 0.0, %v5062
  %v5064 = vpop.f32.mrb[0].mxu0
  %v5065 = vadd.f32 0.0, %v5064
  %v5066 = vpop.f32.mrb[0].mxu0
  %v5067 = vadd.f32 0.0, %v5066
  %v5068 = vpop.f32.mrb[0].mxu0
  %v5069 = vadd.f32 0.0, %v5068
  %5070 = vmatprep.mubr.bf16.mxu0 %v4747
  %5071 = vmatmul.mubr.bf16.gmra.mrb[0].mxu0 %v4746
  %v5072 = vpop.f32.mrb[0].mxu0
  %v5073 = vadd.f32 0.0, %v5072
  %v5074 = vpop.f32.mrb[0].mxu0
  %v5075 = vadd.f32 0.0, %v5074
  %v5076 = vpop.f32.mrb[0].mxu0
  %v5077 = vadd.f32 0.0, %v5076
  %v5078 = vpop.f32.mrb[0].mxu0
  %v5079 = vadd.f32 0.0, %v5078
  %5080 = vmatprep.mubr.bf16.mxu0 %v4749
  %5081 = vmatmul.mubr.bf16.gmra.mrb[0].mxu0 %v4748
  %v5082 = vpop.f32.mrb[0].mxu0
  %v5083 = vadd.f32 0.0, %v5082
  %v5084 = vpop.f32.mrb[0].mxu0
  %v5085 = vadd.f32 0.0, %v5084
  %v5086 = vpop.f32.mrb[0].mxu0
  %v5087 = vadd.f32 0.0, %v5086
  %v5088 = vpop.f32.mrb[0].mxu0
  %v5089 = vadd.f32 0.0, %v5088
  %5090 = vmatprep.mubr.bf16.mxu0 %v4751
  %5091 = vmatmul.mubr.bf16.gmra.mrb[0].mxu0 %v4750
  %v5092 = vpop.f32.mrb[0].mxu0
  %v5093 = vadd.f32 0.0, %v5092
  %v5094 = vpop.f32.mrb[0].mxu0
  %v5095 = vadd.f32 0.0, %v5094
  %v5096 = vpop.f32.mrb[0].mxu0
  %v5097 = vadd.f32 0.0, %v5096
  %v5098 = vpop.f32.mrb[0].mxu0
  %v5099 = vadd.f32 0.0, %v5098
  %5100 = vmatprep.mubr.bf16.mxu0 %v4753
  %5101 = vmatmul.mubr.bf16.gmra.mrb[0].mxu0 %v4752
  %v5102 = vpop.f32.mrb[0].mxu0
  %v5103 = vadd.f32 0.0, %v5102
  %v5104 = vpop.f32.mrb[0].mxu0
  %v5105 = vadd.f32 0.0, %v5104
  %v5106 = vpop.f32.mrb[0].mxu0
  %v5107 = vadd.f32 0.0, %v5106
  %v5108 = vpop.f32.mrb[0].mxu0
  %v5109 = vadd.f32 0.0, %v5108
  %5110 = vmatprep.mubr.bf16.mxu0 %v4755
  %5111 = vmatmul.mubr.bf16.gmra.mrb[0].mxu0 %v4754
  %v5112 = vpop.f32.mrb[0].mxu0
  %v5113 = vadd.f32 0.0, %v5112
  %v5114 = vpop.f32.mrb[0].mxu0
  %v5115 = vadd.f32 0.0, %v5114
  %v5116 = vpop.f32.mrb[0].mxu0
  %v5117 = vadd.f32 0.0, %v5116
  %v5118 = vpop.f32.mrb[0].mxu0
  %v5119 = vadd.f32 0.0, %v5118
  %5120 = vdwg.mxu0
  %v5121 = vadd.f32 %v4534, %v4983
  %v5122 = vadd.f32 %v4536, %v4985
  %v5123 = vadd.f32 %v4538, %v4987
  %v5124 = vadd.f32 %v4540, %v4989
  %v5125 = vadd.f32 %v4544, %v4993
  %v5126 = vadd.f32 %v4546, %v4995
  %v5127 = vadd.f32 %v4548, %v4997
  %v5128 = vadd.f32 %v4550, %v4999
  %v5129 = vadd.f32 %v4554, %v5003
  %v5130 = vadd.f32 %v4556, %v5005
  %v5131 = vadd.f32 %v4558, %v5007
  %v5132 = vadd.f32 %v4560, %v5009
  %v5133 = vadd.f32 %v4564, %v5013
  %v5134 = vadd.f32 %v4566, %v5015
  %v5135 = vadd.f32 %v4568, %v5017
  %v5136 = vadd.f32 %v4570, %v5019
  %v5137 = vadd.f32 %v4574, %v5023
  %v5138 = vadd.f32 %v4576, %v5025
  %v5139 = vadd.f32 %v4578, %v5027
  %v5140 = vadd.f32 %v4580, %v5029
  %v5141 = vadd.f32 %v4584, %v5033
  %v5142 = vadd.f32 %v4586, %v5035
  %v5143 = vadd.f32 %v4588, %v5037
  %v5144 = vadd.f32 %v4590, %v5039
  %v5145 = vadd.f32 %v4594, %v5043
  %v5146 = vadd.f32 %v4596, %v5045
  %v5147 = vadd.f32 %v4598, %v5047
  %v5148 = vadd.f32 %v4600, %v5049
  %v5149 = vadd.f32 %v4604, %v5053
  %v5150 = vadd.f32 %v4606, %v5055
  %v5151 = vadd.f32 %v4608, %v5057
  %v5152 = vadd.f32 %v4610, %v5059
  %v5153 = vadd.f32 %v4614, %v5063
  %v5154 = vadd.f32 %v4616, %v5065
  %v5155 = vadd.f32 %v4618, %v5067
  %v5156 = vadd.f32 %v4620, %v5069
  %v5157 = vadd.f32 %v4624, %v5073
  %v5158 = vadd.f32 %v4626, %v5075
  %v5159 = vadd.f32 %v4628, %v5077
  %v5160 = vadd.f32 %v4630, %v5079
  %v5161 = vadd.f32 %v4634, %v5083
  %v5162 = vadd.f32 %v4636, %v5085
  %v5163 = vadd.f32 %v4638, %v5087
  %v5164 = vadd.f32 %v4640, %v5089
  %v5165 = vadd.f32 %v4644, %v5093
  %v5166 = vadd.f32 %v4646, %v5095
  %v5167 = vadd.f32 %v4648, %v5097
  %v5168 = vadd.f32 %v4650, %v5099
  %v5169 = vadd.f32 %v4654, %v5103
  %v5170 = vadd.f32 %v4656, %v5105
  %v5171 = vadd.f32 %v4658, %v5107
  %v5172 = vadd.f32 %v4660, %v5109
  %v5173 = vadd.f32 %v4664, %v5113
  %v5174 = vadd.f32 %v4666, %v5115
  %v5175 = vadd.f32 %v4668, %v5117
  %v5176 = vadd.f32 %v4670, %v5119
  %v5177 = vld [vmem:[#allocation2 + $0x200] sm:$0xfe]
  %v5178 = vld [vmem:[#allocation2 + $0x208] sm:$0xfe]
  %v5179 = vld [vmem:[#allocation2 + $0x210] sm:$0xff]
  %v5180 = vld [vmem:[#allocation2 + $0x218] sm:$0xff]
  %v5181 = vld [vmem:[#allocation2 + $0x220] sm:$0xff]
  %v5182 = vld [vmem:[#allocation2 + $0x228] sm:$0xff]
  %v5183 = vld [vmem:[#allocation2 + $0x230] sm:$0xff]
  %v5184 = vld [vmem:[#allocation2 + $0x238] sm:$0xff]
  %v5185 = vld [vmem:[#allocation2 + $0x240] sm:$0xff]
  %v5186 = vld [vmem:[#allocation2 + $0x248] sm:$0xff]
  %v5187 = vld [vmem:[#allocation2 + $0x250] sm:$0xff]
  %v5188 = vld [vmem:[#allocation2 + $0x258] sm:$0xff]
  %v5189 = vld [vmem:[#allocation2 + $0x260] sm:$0xff]
  %v5190 = vld [vmem:[#allocation2 + $0x268] sm:$0xff]
  %v5191 = vld [vmem:[#allocation2 + $0x270] sm:$0xff]
  %v5192 = vld [vmem:[#allocation2 + $0x278] sm:$0xff]
  %v5193 = vld [vmem:[#allocation2 + $0x280] sm:$0xff]
  %v5194 = vld [vmem:[#allocation2 + $0x288] sm:$0xff]
  %v5195 = vld [vmem:[#allocation2 + $0x290] sm:$0xff]
  %v5196 = vld [vmem:[#allocation2 + $0x298] sm:$0xff]
  %v5197 = vld [vmem:[#allocation2 + $0x2a0] sm:$0xff]
  %v5198 = vld [vmem:[#allocation2 + $0x2a8] sm:$0xff]
  %v5199 = vld [vmem:[#allocation2 + $0x2b0] sm:$0xff]
  %v5200 = vld [vmem:[#allocation2 + $0x2b8] sm:$0xff]
  %v5201 = vld [vmem:[#allocation2 + $0x2c0] sm:$0xff]
  %v5202 = vld [vmem:[#allocation2 + $0x2c8] sm:$0xff]
  %v5203 = vld [vmem:[#allocation2 + $0x2d0] sm:$0xff]
  %v5204 = vld [vmem:[#allocation2 + $0x2d8] sm:$0xff]
  %v5205 = vld [vmem:[#allocation2 + $0x2e0] sm:$0xff]
  %v5206 = vld [vmem:[#allocation2 + $0x2e8] sm:$0xff]
  %v5207 = vld [vmem:[#allocation2 + $0x2f0] sm:$0xff]
  %v5208 = vld [vmem:[#allocation2 + $0x2f8] sm:$0xff]
  %v5209 = vld [vmem:[#allocation2 + $0x300] sm:$0xff]
  %v5210 = vld [vmem:[#allocation2 + $0x308] sm:$0xff]
  %v5211 = vld [vmem:[#allocation2 + $0x310] sm:$0xff]
  %v5212 = vld [vmem:[#allocation2 + $0x318] sm:$0xff]
  %v5213 = vld [vmem:[#allocation2 + $0x320] sm:$0xff]
  %v5214 = vld [vmem:[#allocation2 + $0x328] sm:$0xff]
  %v5215 = vld [vmem:[#allocation2 + $0x330] sm:$0xff]
  %v5216 = vld [vmem:[#allocation2 + $0x338] sm:$0xff]
  %v5217 = vld [vmem:[#allocation2 + $0x340] sm:$0xff]
  %v5218 = vld [vmem:[#allocation2 + $0x348] sm:$0xff]
  %v5219 = vld [vmem:[#allocation2 + $0x350] sm:$0xff]
  %v5220 = vld [vmem:[#allocation2 + $0x358] sm:$0xff]
  %v5221 = vld [vmem:[#allocation2 + $0x360] sm:$0xff]
  %v5222 = vld [vmem:[#allocation2 + $0x368] sm:$0xff]
  %v5223 = vld [vmem:[#allocation2 + $0x370] sm:$0xff]
  %v5224 = vld [vmem:[#allocation2 + $0x378] sm:$0xff]
  %v5225 = vld [vmem:[#allocation2 + $0x380] sm:$0xff]
  %v5226 = vld [vmem:[#allocation2 + $0x388] sm:$0xff]
  %v5227 = vld [vmem:[#allocation2 + $0x390] sm:$0xff]
  %v5228 = vld [vmem:[#allocation2 + $0x398] sm:$0xff]
  %v5229 = vld [vmem:[#allocation2 + $0x3a0] sm:$0xff]
  %v5230 = vld [vmem:[#allocation2 + $0x3a8] sm:$0xff]
  %v5231 = vld [vmem:[#allocation2 + $0x3b0] sm:$0xff]
  %v5232 = vld [vmem:[#allocation2 + $0x3b8] sm:$0xff]
  %v5233 = vld [vmem:[#allocation2 + $0x3c0] sm:$0x1]
  %v5234 = vld [vmem:[#allocation2 + $0x3c8] sm:$0x1]
  %v5235 = vpack.c.bf16 %v5179, %v5177
  %v5236 = vpack.c.bf16 %v5180, %v5178
  %v5237 = vpack.c.bf16 %v5183, %v5181
  %v5238 = vpack.c.bf16 %v5184, %v5182
  %v5239 = vpack.c.bf16 %v5187, %v5185
  %v5240 = vpack.c.bf16 %v5188, %v5186
  %v5241 = vpack.c.bf16 %v5191, %v5189
  %v5242 = vpack.c.bf16 %v5192, %v5190
  %v5243 = vpack.c.bf16 %v5195, %v5193
  %v5244 = vpack.c.bf16 %v5196, %v5194
  %v5245 = vpack.c.bf16 %v5199, %v5197
  %v5246 = vpack.c.bf16 %v5200, %v5198
  %v5247 = vpack.c.bf16 %v5203, %v5201
  %v5248 = vpack.c.bf16 %v5204, %v5202
  %v5249 = vpack.c.bf16 %v5207, %v5205
  %v5250 = vpack.c.bf16 %v5208, %v5206
  %v5251 = vpack.c.bf16 %v5211, %v5209
  %v5252 = vpack.c.bf16 %v5212, %v5210
  %v5253 = vpack.c.bf16 %v5215, %v5213
  %v5254 = vpack.c.bf16 %v5216, %v5214
  %v5255 = vpack.c.bf16 %v5219, %v5217
  %v5256 = vpack.c.bf16 %v5220, %v5218
  %v5257 = vpack.c.bf16 %v5223, %v5221
  %v5258 = vpack.c.bf16 %v5224, %v5222
  %v5259 = vpack.c.bf16 %v5227, %v5225
  %v5260 = vpack.c.bf16 %v5228, %v5226
  %v5261 = vpack.c.bf16 %v5231, %v5229
  %v5262 = vpack.c.bf16 %v5232, %v5230
  %v5263 = vpack.c.bf16 %v5233, %v5233
  %v5264 = vpack.c.bf16 %v5234, %v5234
  %v5265 = vld [vmem:[%s2728] sm:$0xff]
  %v5266 = vld [vmem:[%s2728 + $0x8] sm:$0xff]
  %v5267 = vld [vmem:[%s2728 + $0x10] sm:$0xff]
  %v5268 = vld [vmem:[%s2728 + $0x18] sm:$0xff]
  %v5269 = vld [vmem:[%s2728 + $0x20] sm:$0xff]
  %v5270 = vld [vmem:[%s2728 + $0x28] sm:$0xff]
  %v5271 = vld [vmem:[%s2728 + $0x30] sm:$0xff]
  %v5272 = vld [vmem:[%s2728 + $0x38] sm:$0xff]
  %v5273 = vld [vmem:[%s2728 + $0x40] sm:$0xff]
  %v5274 = vld [vmem:[%s2728 + $0x48] sm:$0xff]
  %v5275 = vld [vmem:[%s2728 + $0x50] sm:$0xff]
  %v5276 = vld [vmem:[%s2728 + $0x58] sm:$0xff]
  %v5277 = vld [vmem:[%s2728 + $0x60] sm:$0xff]
  %v5278 = vld [vmem:[%s2728 + $0x68] sm:$0xff]
  %v5279 = vld [vmem:[%s2728 + $0x70] sm:$0xff]
  %v5280 = vld [vmem:[%s2728 + $0x78] sm:$0xff]
  %v5281 = vld [vmem:[%s2728 + $0x80] sm:$0xff]
  %v5282 = vld [vmem:[%s2728 + $0x88] sm:$0xff]
  %v5283 = vld [vmem:[%s2728 + $0x90] sm:$0xff]
  %v5284 = vld [vmem:[%s2728 + $0x98] sm:$0xff]
  %v5285 = vld [vmem:[%s2728 + $0xa0] sm:$0xff]
  %v5286 = vld [vmem:[%s2728 + $0xa8] sm:$0xff]
  %v5287 = vld [vmem:[%s2728 + $0xb0] sm:$0xff]
  %v5288 = vld [vmem:[%s2728 + $0xb8] sm:$0xff]
  %v5289 = vld [vmem:[%s2728 + $0xc0] sm:$0xff]
  %v5290 = vld [vmem:[%s2728 + $0xc8] sm:$0xff]
  %v5291 = vld [vmem:[%s2728 + $0xd0] sm:$0xff]
  %v5292 = vld [vmem:[%s2728 + $0xd8] sm:$0xff]
  %v5293 = vld [vmem:[%s2728 + $0xe0] sm:$0xff]
  %v5294 = vld [vmem:[%s2728 + $0xe8] sm:$0xff]
  %v5295 = vld [vmem:[%s2728 + $0xf0] sm:$0xff]
  %v5296 = vld [vmem:[%s2728 + $0xf8] sm:$0xff]
  %v5298 = vshrl.u32 %v5235, 16
  %v5300 = vshll.u32 %v5235, 16
  %v5302 = vrot.slane %v5300, 1
  %v5303 = vor.u32 %v5298, %v5302
  %v5305 = vshll.u32 %v5237, 16
  %v5307 = vrot.slane %v5305, 1
  %v5308 = vsel %vm1207, %v5303, %v5307
  %v5310 = vshrl.u32 %v5236, 16
  %v5312 = vshll.u32 %v5236, 16
  %v5314 = vrot.slane %v5312, 1
  %v5315 = vor.u32 %v5310, %v5314
  %v5317 = vshll.u32 %v5238, 16
  %v5319 = vrot.slane %v5317, 1
  %v5320 = vsel %vm1207, %v5315, %v5319
  %v5321 = vshrl.u32 %v5237, 16
  %v5323 = vor.u32 %v5321, %v5307
  %v5325 = vshll.u32 %v5239, 16
  %v5327 = vrot.slane %v5325, 1
  %v5328 = vsel %vm1207, %v5323, %v5327
  %v5329 = vshrl.u32 %v5238, 16
  %v5331 = vor.u32 %v5329, %v5319
  %v5333 = vshll.u32 %v5240, 16
  %v5335 = vrot.slane %v5333, 1
  %v5336 = vsel %vm1207, %v5331, %v5335
  %v5337 = vshrl.u32 %v5239, 16
  %v5339 = vor.u32 %v5337, %v5327
  %v5341 = vshll.u32 %v5241, 16
  %v5343 = vrot.slane %v5341, 1
  %v5344 = vsel %vm1207, %v5339, %v5343
  %v5345 = vshrl.u32 %v5240, 16
  %v5347 = vor.u32 %v5345, %v5335
  %v5349 = vshll.u32 %v5242, 16
  %v5351 = vrot.slane %v5349, 1
  %v5352 = vsel %vm1207, %v5347, %v5351
  %v5353 = vshrl.u32 %v5241, 16
  %v5355 = vor.u32 %v5353, %v5343
  %v5357 = vshll.u32 %v5243, 16
  %v5359 = vrot.slane %v5357, 1
  %v5360 = vsel %vm1207, %v5355, %v5359
  %v5361 = vshrl.u32 %v5242, 16
  %v5363 = vor.u32 %v5361, %v5351
  %v5365 = vshll.u32 %v5244, 16
  %v5367 = vrot.slane %v5365, 1
  %v5368 = vsel %vm1207, %v5363, %v5367
  %v5369 = vshrl.u32 %v5243, 16
  %v5371 = vor.u32 %v5369, %v5359
  %v5373 = vshll.u32 %v5245, 16
  %v5375 = vrot.slane %v5373, 1
  %v5376 = vsel %vm1207, %v5371, %v5375
  %v5377 = vshrl.u32 %v5244, 16
  %v5379 = vor.u32 %v5377, %v5367
  %v5381 = vshll.u32 %v5246, 16
  %v5383 = vrot.slane %v5381, 1
  %v5384 = vsel %vm1207, %v5379, %v5383
  %v5385 = vshrl.u32 %v5245, 16
  %v5387 = vor.u32 %v5385, %v5375
  %v5389 = vshll.u32 %v5247, 16
  %v5391 = vrot.slane %v5389, 1
  %v5392 = vsel %vm1207, %v5387, %v5391
  %v5393 = vshrl.u32 %v5246, 16
  %v5395 = vor.u32 %v5393, %v5383
  %v5397 = vshll.u32 %v5248, 16
  %v5399 = vrot.slane %v5397, 1
  %v5400 = vsel %vm1207, %v5395, %v5399
  %v5401 = vshrl.u32 %v5247, 16
  %v5403 = vor.u32 %v5401, %v5391
  %v5405 = vshll.u32 %v5249, 16
  %v5407 = vrot.slane %v5405, 1
  %v5408 = vsel %vm1207, %v5403, %v5407
  %v5409 = vshrl.u32 %v5248, 16
  %v5411 = vor.u32 %v5409, %v5399
  %v5413 = vshll.u32 %v5250, 16
  %v5415 = vrot.slane %v5413, 1
  %v5416 = vsel %vm1207, %v5411, %v5415
  %v5417 = vshrl.u32 %v5249, 16
  %v5419 = vor.u32 %v5417, %v5407
  %v5421 = vshll.u32 %v5251, 16
  %v5423 = vrot.slane %v5421, 1
  %v5424 = vsel %vm1207, %v5419, %v5423
  %v5425 = vshrl.u32 %v5250, 16
  %v5427 = vor.u32 %v5425, %v5415
  %v5429 = vshll.u32 %v5252, 16
  %v5431 = vrot.slane %v5429, 1
  %v5432 = vsel %vm1207, %v5427, %v5431
  %v5433 = vshrl.u32 %v5251, 16
  %v5435 = vor.u32 %v5433, %v5423
  %v5437 = vshll.u32 %v5253, 16
  %v5439 = vrot.slane %v5437, 1
  %v5440 = vsel %vm1207, %v5435, %v5439
  %v5441 = vshrl.u32 %v5252, 16
  %v5443 = vor.u32 %v5441, %v5431
  %v5445 = vshll.u32 %v5254, 16
  %v5447 = vrot.slane %v5445, 1
  %v5448 = vsel %vm1207, %v5443, %v5447
  %v5449 = vshrl.u32 %v5253, 16
  %v5451 = vor.u32 %v5449, %v5439
  %v5453 = vshll.u32 %v5255, 16
  %v5455 = vrot.slane %v5453, 1
  %v5456 = vsel %vm1207, %v5451, %v5455
  %v5457 = vshrl.u32 %v5254, 16
  %v5459 = vor.u32 %v5457, %v5447
  %v5461 = vshll.u32 %v5256, 16
  %v5463 = vrot.slane %v5461, 1
  %v5464 = vsel %vm1207, %v5459, %v5463
  %v5465 = vshrl.u32 %v5255, 16
  %v5467 = vor.u32 %v5465, %v5455
  %v5469 = vshll.u32 %v5257, 16
  %v5471 = vrot.slane %v5469, 1
  %v5472 = vsel %vm1207, %v5467, %v5471
  %v5473 = vshrl.u32 %v5256, 16
  %v5475 = vor.u32 %v5473, %v5463
  %v5477 = vshll.u32 %v5258, 16
  %v5479 = vrot.slane %v5477, 1
  %v5480 = vsel %vm1207, %v5475, %v5479
  %v5481 = vshrl.u32 %v5257, 16
  %v5483 = vor.u32 %v5481, %v5471
  %v5485 = vshll.u32 %v5259, 16
  %v5487 = vrot.slane %v5485, 1
  %v5488 = vsel %vm1207, %v5483, %v5487
  %v5489 = vshrl.u32 %v5258, 16
  %v5491 = vor.u32 %v5489, %v5479
  %v5493 = vshll.u32 %v5260, 16
  %v5495 = vrot.slane %v5493, 1
  %v5496 = vsel %vm1207, %v5491, %v5495
  %v5497 = vshrl.u32 %v5259, 16
  %v5499 = vor.u32 %v5497, %v5487
  %v5501 = vshll.u32 %v5261, 16
  %v5503 = vrot.slane %v5501, 1
  %v5504 = vsel %vm1207, %v5499, %v5503
  %v5505 = vshrl.u32 %v5260, 16
  %v5507 = vor.u32 %v5505, %v5495
  %v5509 = vshll.u32 %v5262, 16
  %v5511 = vrot.slane %v5509, 1
  %v5512 = vsel %vm1207, %v5507, %v5511
  %v5513 = vshrl.u32 %v5261, 16
  %v5515 = vor.u32 %v5513, %v5503
  %v5517 = vshll.u32 %v5263, 16
  %v5519 = vrot.slane %v5517, 1
  %v5520 = vsel %vm1207, %v5515, %v5519
  %v5521 = vshrl.u32 %v5262, 16
  %v5523 = vor.u32 %v5521, %v5511
  %v5525 = vshll.u32 %v5264, 16
  %v5527 = vrot.slane %v5525, 1
  %v5528 = vsel %vm1207, %v5523, %v5527
  %v5589 = vunpack.c.l.b16 %v5265
  %v5590 = vunpack.c.h.b16 %v5265
  %v5591 = vunpack.c.l.b16 %v5266
  %v5592 = vunpack.c.h.b16 %v5266
  %v5593 = vunpack.c.l.b16 %v5267
  %v5594 = vunpack.c.h.b16 %v5267
  %v5595 = vunpack.c.l.b16 %v5268
  %v5596 = vunpack.c.h.b16 %v5268
  %v5597 = vunpack.c.l.b16 %v5269
  %v5598 = vunpack.c.h.b16 %v5269
  %v5599 = vunpack.c.l.b16 %v5270
  %v5600 = vunpack.c.h.b16 %v5270
  %v5601 = vunpack.c.l.b16 %v5271
  %v5602 = vunpack.c.h.b16 %v5271
  %v5603 = vunpack.c.l.b16 %v5272
  %v5604 = vunpack.c.h.b16 %v5272
  %v5605 = vunpack.c.l.b16 %v5273
  %v5606 = vunpack.c.h.b16 %v5273
  %v5607 = vunpack.c.l.b16 %v5274
  %v5608 = vunpack.c.h.b16 %v5274
  %v5609 = vunpack.c.l.b16 %v5275
  %v5610 = vunpack.c.h.b16 %v5275
  %v5611 = vunpack.c.l.b16 %v5276
  %v5612 = vunpack.c.h.b16 %v5276
  %v5613 = vunpack.c.l.b16 %v5277
  %v5614 = vunpack.c.h.b16 %v5277
  %v5615 = vunpack.c.l.b16 %v5278
  %v5616 = vunpack.c.h.b16 %v5278
  %v5617 = vunpack.c.l.b16 %v5279
  %v5618 = vunpack.c.h.b16 %v5279
  %v5619 = vunpack.c.l.b16 %v5280
  %v5620 = vunpack.c.h.b16 %v5280
  %v5621 = vunpack.c.l.b16 %v5281
  %v5622 = vunpack.c.h.b16 %v5281
  %v5623 = vunpack.c.l.b16 %v5282
  %v5624 = vunpack.c.h.b16 %v5282
  %v5625 = vunpack.c.l.b16 %v5283
  %v5626 = vunpack.c.h.b16 %v5283
  %v5627 = vunpack.c.l.b16 %v5284
  %v5628 = vunpack.c.h.b16 %v5284
  %v5629 = vunpack.c.l.b16 %v5285
  %v5630 = vunpack.c.h.b16 %v5285
  %v5631 = vunpack.c.l.b16 %v5286
  %v5632 = vunpack.c.h.b16 %v5286
  %v5633 = vunpack.c.l.b16 %v5287
  %v5634 = vunpack.c.h.b16 %v5287
  %v5635 = vunpack.c.l.b16 %v5288
  %v5636 = vunpack.c.h.b16 %v5288
  %v5637 = vunpack.c.l.b16 %v5289
  %v5638 = vunpack.c.h.b16 %v5289
  %v5639 = vunpack.c.l.b16 %v5290
  %v5640 = vunpack.c.h.b16 %v5290
  %v5641 = vunpack.c.l.b16 %v5291
  %v5642 = vunpack.c.h.b16 %v5291
  %v5643 = vunpack.c.l.b16 %v5292
  %v5644 = vunpack.c.h.b16 %v5292
  %v5645 = vunpack.c.l.b16 %v5293
  %v5646 = vunpack.c.h.b16 %v5293
  %v5647 = vunpack.c.l.b16 %v5294
  %v5648 = vunpack.c.h.b16 %v5294
  %v5649 = vunpack.c.l.b16 %v5295
  %v5650 = vunpack.c.h.b16 %v5295
  %v5651 = vunpack.c.l.b16 %v5296
  %v5652 = vunpack.c.h.b16 %v5296
  %v5653 = vpack.c.b16 %v5591, %v5589
  %v5654 = vpack.c.b16 %v5592, %v5590
  %v5655 = vpack.c.b16 %v5595, %v5593
  %v5656 = vpack.c.b16 %v5596, %v5594
  %v5657 = vpack.c.b16 %v5599, %v5597
  %v5658 = vpack.c.b16 %v5600, %v5598
  %v5659 = vpack.c.b16 %v5603, %v5601
  %v5660 = vpack.c.b16 %v5604, %v5602
  %v5661 = vpack.c.b16 %v5607, %v5605
  %v5662 = vpack.c.b16 %v5608, %v5606
  %v5663 = vpack.c.b16 %v5611, %v5609
  %v5664 = vpack.c.b16 %v5612, %v5610
  %v5665 = vpack.c.b16 %v5615, %v5613
  %v5666 = vpack.c.b16 %v5616, %v5614
  %v5667 = vpack.c.b16 %v5619, %v5617
  %v5668 = vpack.c.b16 %v5620, %v5618
  %v5669 = vpack.c.b16 %v5623, %v5621
  %v5670 = vpack.c.b16 %v5624, %v5622
  %v5671 = vpack.c.b16 %v5627, %v5625
  %v5672 = vpack.c.b16 %v5628, %v5626
  %v5673 = vpack.c.b16 %v5631, %v5629
  %v5674 = vpack.c.b16 %v5632, %v5630
  %v5675 = vpack.c.b16 %v5635, %v5633
  %v5676 = vpack.c.b16 %v5636, %v5634
  %v5677 = vpack.c.b16 %v5639, %v5637
  %v5678 = vpack.c.b16 %v5640, %v5638
  %v5679 = vpack.c.b16 %v5643, %v5641
  %v5680 = vpack.c.b16 %v5644, %v5642
  %v5681 = vpack.c.b16 %v5647, %v5645
  %v5682 = vpack.c.b16 %v5648, %v5646
  %v5683 = vpack.c.b16 %v5651, %v5649
  %v5684 = vpack.c.b16 %v5652, %v5650
  %5717 = vmatprep.subr.bf16.mxu0 %v5654
  %5718 = vmatpush1.bf16.msra.mxu0 %v5653
  %5719 = vmatprep.subr.bf16.mxu0 %v5656
  %5720 = vmatpush1.bf16.msra.mxu0 %v5655
  %5721 = vmatprep.subr.bf16.mxu0 %v5658
  %5722 = vmatpush1.bf16.msra.mxu0 %v5657
  %5723 = vmatprep.subr.bf16.mxu0 %v5660
  %5724 = vmatpush1.bf16.msra.mxu0 %v5659
  %5725 = vmatprep.subr.bf16.mxu0 %v5662
  %5726 = vmatpush1.bf16.msra.mxu0 %v5661
  %5727 = vmatprep.subr.bf16.mxu0 %v5664
  %5728 = vmatpush1.bf16.msra.mxu0 %v5663
  %5729 = vmatprep.subr.bf16.mxu0 %v5666
  %5730 = vmatpush1.bf16.msra.mxu0 %v5665
  %5731 = vmatprep.subr.bf16.mxu0 %v5668
  %5732 = vmatpush1.bf16.msra.mxu0 %v5667
  %5733 = vmatprep.subr.bf16.mxu0 %v5670
  %5734 = vmatpush1.bf16.msra.mxu0 %v5669
  %5735 = vmatprep.subr.bf16.mxu0 %v5672
  %5736 = vmatpush1.bf16.msra.mxu0 %v5671
  %5737 = vmatprep.subr.bf16.mxu0 %v5674
  %5738 = vmatpush1.bf16.msra.mxu0 %v5673
  %5739 = vmatprep.subr.bf16.mxu0 %v5676
  %5740 = vmatpush1.bf16.msra.mxu0 %v5675
  %5741 = vmatprep.subr.bf16.mxu0 %v5678
  %5742 = vmatpush1.bf16.msra.mxu0 %v5677
  %5743 = vmatprep.subr.bf16.mxu0 %v5680
  %5744 = vmatpush1.bf16.msra.mxu0 %v5679
  %5745 = vmatprep.subr.bf16.mxu0 %v5682
  %5746 = vmatpush1.bf16.msra.mxu0 %v5681
  %5747 = vmatprep.subr.bf16.mxu0 %v5684
  %5748 = vmatpush1.bf16.msra.mxu0 %v5683
  %5749 = vmatprep.mubr.bf16.mxu0 %v5320
  %5750 = vmatmul.mubr.bf16.gmra.mrb[0].mxu0 %v5308
  %v5751 = vpop.f32.mrb[0].mxu0
  %v5752 = vadd.f32 0.0, %v5751
  %v5753 = vpop.f32.mrb[0].mxu0
  %v5754 = vadd.f32 0.0, %v5753
  %v5755 = vpop.f32.mrb[0].mxu0
  %v5756 = vadd.f32 0.0, %v5755
  %v5757 = vpop.f32.mrb[0].mxu0
  %v5758 = vadd.f32 0.0, %v5757
  %5759 = vmatprep.mubr.bf16.mxu0 %v5336
  %5760 = vmatmul.mubr.bf16.gmra.mrb[0].mxu0 %v5328
  %v5761 = vpop.f32.mrb[0].mxu0
  %v5762 = vadd.f32 0.0, %v5761
  %v5763 = vpop.f32.mrb[0].mxu0
  %v5764 = vadd.f32 0.0, %v5763
  %v5765 = vpop.f32.mrb[0].mxu0
  %v5766 = vadd.f32 0.0, %v5765
  %v5767 = vpop.f32.mrb[0].mxu0
  %v5768 = vadd.f32 0.0, %v5767
  %5769 = vmatprep.mubr.bf16.mxu0 %v5352
  %5770 = vmatmul.mubr.bf16.gmra.mrb[0].mxu0 %v5344
  %v5771 = vpop.f32.mrb[0].mxu0
  %v5772 = vadd.f32 0.0, %v5771
  %v5773 = vpop.f32.mrb[0].mxu0
  %v5774 = vadd.f32 0.0, %v5773
  %v5775 = vpop.f32.mrb[0].mxu0
  %v5776 = vadd.f32 0.0, %v5775
  %v5777 = vpop.f32.mrb[0].mxu0
  %v5778 = vadd.f32 0.0, %v5777
  %5779 = vmatprep.mubr.bf16.mxu0 %v5368
  %5780 = vmatmul.mubr.bf16.gmra.mrb[0].mxu0 %v5360
  %v5781 = vpop.f32.mrb[0].mxu0
  %v5782 = vadd.f32 0.0, %v5781
  %v5783 = vpop.f32.mrb[0].mxu0
  %v5784 = vadd.f32 0.0, %v5783
  %v5785 = vpop.f32.mrb[0].mxu0
  %v5786 = vadd.f32 0.0, %v5785
  %v5787 = vpop.f32.mrb[0].mxu0
  %v5788 = vadd.f32 0.0, %v5787
  %5789 = vmatprep.mubr.bf16.mxu0 %v5384
  %5790 = vmatmul.mubr.bf16.gmra.mrb[0].mxu0 %v5376
  %v5791 = vpop.f32.mrb[0].mxu0
  %v5792 = vadd.f32 0.0, %v5791
  %v5793 = vpop.f32.mrb[0].mxu0
  %v5794 = vadd.f32 0.0, %v5793
  %v5795 = vpop.f32.mrb[0].mxu0
  %v5796 = vadd.f32 0.0, %v5795
  %v5797 = vpop.f32.mrb[0].mxu0
  %v5798 = vadd.f32 0.0, %v5797
  %5799 = vmatprep.mubr.bf16.mxu0 %v5400
  %5800 = vmatmul.mubr.bf16.gmra.mrb[0].mxu0 %v5392
  %v5801 = vpop.f32.mrb[0].mxu0
  %v5802 = vadd.f32 0.0, %v5801
  %v5803 = vpop.f32.mrb[0].mxu0
  %v5804 = vadd.f32 0.0, %v5803
  %v5805 = vpop.f32.mrb[0].mxu0
  %v5806 = vadd.f32 0.0, %v5805
  %v5807 = vpop.f32.mrb[0].mxu0
  %v5808 = vadd.f32 0.0, %v5807
  %5809 = vmatprep.mubr.bf16.mxu0 %v5416
  %5810 = vmatmul.mubr.bf16.gmra.mrb[0].mxu0 %v5408
  %v5811 = vpop.f32.mrb[0].mxu0
  %v5812 = vadd.f32 0.0, %v5811
  %v5813 = vpop.f32.mrb[0].mxu0
  %v5814 = vadd.f32 0.0, %v5813
  %v5815 = vpop.f32.mrb[0].mxu0
  %v5816 = vadd.f32 0.0, %v5815
  %v5817 = vpop.f32.mrb[0].mxu0
  %v5818 = vadd.f32 0.0, %v5817
  %5819 = vmatprep.mubr.bf16.mxu0 %v5432
  %5820 = vmatmul.mubr.bf16.gmra.mrb[0].mxu0 %v5424
  %v5821 = vpop.f32.mrb[0].mxu0
  %v5822 = vadd.f32 0.0, %v5821
  %v5823 = vpop.f32.mrb[0].mxu0
  %v5824 = vadd.f32 0.0, %v5823
  %v5825 = vpop.f32.mrb[0].mxu0
  %v5826 = vadd.f32 0.0, %v5825
  %v5827 = vpop.f32.mrb[0].mxu0
  %v5828 = vadd.f32 0.0, %v5827
  %5829 = vmatprep.mubr.bf16.mxu0 %v5448
  %5830 = vmatmul.mubr.bf16.gmra.mrb[0].mxu0 %v5440
  %v5831 = vpop.f32.mrb[0].mxu0
  %v5832 = vadd.f32 0.0, %v5831
  %v5833 = vpop.f32.mrb[0].mxu0
  %v5834 = vadd.f32 0.0, %v5833
  %v5835 = vpop.f32.mrb[0].mxu0
  %v5836 = vadd.f32 0.0, %v5835
  %v5837 = vpop.f32.mrb[0].mxu0
  %v5838 = vadd.f32 0.0, %v5837
  %5839 = vmatprep.mubr.bf16.mxu0 %v5464
  %5840 = vmatmul.mubr.bf16.gmra.mrb[0].mxu0 %v5456
  %v5841 = vpop.f32.mrb[0].mxu0
  %v5842 = vadd.f32 0.0, %v5841
  %v5843 = vpop.f32.mrb[0].mxu0
  %v5844 = vadd.f32 0.0, %v5843
  %v5845 = vpop.f32.mrb[0].mxu0
  %v5846 = vadd.f32 0.0, %v5845
  %v5847 = vpop.f32.mrb[0].mxu0
  %v5848 = vadd.f32 0.0, %v5847
  %5849 = vmatprep.mubr.bf16.mxu0 %v5480
  %5850 = vmatmul.mubr.bf16.gmra.mrb[0].mxu0 %v5472
  %v5851 = vpop.f32.mrb[0].mxu0
  %v5852 = vadd.f32 0.0, %v5851
  %v5853 = vpop.f32.mrb[0].mxu0
  %v5854 = vadd.f32 0.0, %v5853
  %v5855 = vpop.f32.mrb[0].mxu0
  %v5856 = vadd.f32 0.0, %v5855
  %v5857 = vpop.f32.mrb[0].mxu0
  %v5858 = vadd.f32 0.0, %v5857
  %5859 = vmatprep.mubr.bf16.mxu0 %v5496
  %5860 = vmatmul.mubr.bf16.gmra.mrb[0].mxu0 %v5488
  %v5861 = vpop.f32.mrb[0].mxu0
  %v5862 = vadd.f32 0.0, %v5861
  %v5863 = vpop.f32.mrb[0].mxu0
  %v5864 = vadd.f32 0.0, %v5863
  %v5865 = vpop.f32.mrb[0].mxu0
  %v5866 = vadd.f32 0.0, %v5865
  %v5867 = vpop.f32.mrb[0].mxu0
  %v5868 = vadd.f32 0.0, %v5867
  %5869 = vmatprep.mubr.bf16.mxu0 %v5512
  %5870 = vmatmul.mubr.bf16.gmra.mrb[0].mxu0 %v5504
  %v5871 = vpop.f32.mrb[0].mxu0
  %v5872 = vadd.f32 0.0, %v5871
  %v5873 = vpop.f32.mrb[0].mxu0
  %v5874 = vadd.f32 0.0, %v5873
  %v5875 = vpop.f32.mrb[0].mxu0
  %v5876 = vadd.f32 0.0, %v5875
  %v5877 = vpop.f32.mrb[0].mxu0
  %v5878 = vadd.f32 0.0, %v5877
  %5879 = vmatprep.mubr.bf16.mxu0 %v5528
  %5880 = vmatmul.mubr.bf16.gmra.mrb[0].mxu0 %v5520
  %v5881 = vpop.f32.mrb[0].mxu0
  %v5882 = vadd.f32 0.0, %v5881
  %v5883 = vpop.f32.mrb[0].mxu0
  %v5884 = vadd.f32 0.0, %v5883
  %v5885 = vpop.f32.mrb[0].mxu0
  %v5886 = vadd.f32 0.0, %v5885
  %v5887 = vpop.f32.mrb[0].mxu0
  %v5888 = vadd.f32 0.0, %v5887
  %5889 = vdwg.mxu0
  %v5890 = vadd.f32 %v5121, %v5752
  %v5891 = vadd.f32 %v5122, %v5754
  %v5892 = vadd.f32 %v5123, %v5756
  %v5893 = vadd.f32 %v5124, %v5758
  %v5894 = vadd.f32 %v5125, %v5762
  %v5895 = vadd.f32 %v5126, %v5764
  %v5896 = vadd.f32 %v5127, %v5766
  %v5897 = vadd.f32 %v5128, %v5768
  %v5898 = vadd.f32 %v5129, %v5772
  %v5899 = vadd.f32 %v5130, %v5774
  %v5900 = vadd.f32 %v5131, %v5776
  %v5901 = vadd.f32 %v5132, %v5778
  %v5902 = vadd.f32 %v5133, %v5782
  %v5903 = vadd.f32 %v5134, %v5784
  %v5904 = vadd.f32 %v5135, %v5786
  %v5905 = vadd.f32 %v5136, %v5788
  %v5906 = vadd.f32 %v5137, %v5792
  %v5907 = vadd.f32 %v5138, %v5794
  %v5908 = vadd.f32 %v5139, %v5796
  %v5909 = vadd.f32 %v5140, %v5798
  %v5910 = vadd.f32 %v5141, %v5802
  %v5911 = vadd.f32 %v5142, %v5804
  %v5912 = vadd.f32 %v5143, %v5806
  %v5913 = vadd.f32 %v5144, %v5808
  %v5914 = vadd.f32 %v5145, %v5812
  %v5915 = vadd.f32 %v5146, %v5814
  %v5916 = vadd.f32 %v5147, %v5816
  %v5917 = vadd.f32 %v5148, %v5818
  %v5918 = vadd.f32 %v5149, %v5822
  %v5919 = vadd.f32 %v5150, %v5824
  %v5920 = vadd.f32 %v5151, %v5826
  %v5921 = vadd.f32 %v5152, %v5828
  %v5922 = vadd.f32 %v5153, %v5832
  %v5923 = vadd.f32 %v5154, %v5834
  %v5924 = vadd.f32 %v5155, %v5836
  %v5925 = vadd.f32 %v5156, %v5838
  %v5926 = vadd.f32 %v5157, %v5842
  %v5927 = vadd.f32 %v5158, %v5844
  %v5928 = vadd.f32 %v5159, %v5846
  %v5929 = vadd.f32 %v5160, %v5848
  %v5930 = vadd.f32 %v5161, %v5852
  %v5931 = vadd.f32 %v5162, %v5854
  %v5932 = vadd.f32 %v5163, %v5856
  %v5933 = vadd.f32 %v5164, %v5858
  %v5934 = vadd.f32 %v5165, %v5862
  %v5935 = vadd.f32 %v5166, %v5864
  %v5936 = vadd.f32 %v5167, %v5866
  %v5937 = vadd.f32 %v5168, %v5868
  %v5938 = vadd.f32 %v5169, %v5872
  %v5939 = vadd.f32 %v5170, %v5874
  %v5940 = vadd.f32 %v5171, %v5876
  %v5941 = vadd.f32 %v5172, %v5878
  %v5942 = vadd.f32 %v5173, %v5882
  %v5943 = vadd.f32 %v5174, %v5884
  %v5944 = vadd.f32 %v5175, %v5886
  %v5945 = vadd.f32 %v5176, %v5888
  %v5946 = vld [vmem:[%s4] sm:$0x3]
  %v5948 = vlaneseq
  %v5949 = vshrl.u32 %v5948, 7
  %v5950 = vsub.s32 0, %v5949
  %v5951 = vrot.slane %v5946, %v5950
  %v5952 = vlaneseq
  %v5953 = vshrl.u32 %v5952, 7
  %v5954 = vsub.s32 1, %v5953
  %v5955 = vrot.slane %v5946, %v5954
  %v5958 = vadd.f32 %v5890, %v5951
  %v5959 = vadd.f32 %v5891, %v5955
  %v5960 = vadd.f32 %v5892, %v5951
  %v5961 = vadd.f32 %v5893, %v5955
  %v5962 = vadd.f32 %v5894, %v5951
  %v5963 = vadd.f32 %v5895, %v5955
  %v5964 = vadd.f32 %v5896, %v5951
  %v5965 = vadd.f32 %v5897, %v5955
  %v5966 = vadd.f32 %v5898, %v5951
  %v5967 = vadd.f32 %v5899, %v5955
  %v5968 = vadd.f32 %v5900, %v5951
  %v5969 = vadd.f32 %v5901, %v5955
  %v5970 = vadd.f32 %v5902, %v5951
  %v5971 = vadd.f32 %v5903, %v5955
  %v5972 = vadd.f32 %v5904, %v5951
  %v5973 = vadd.f32 %v5905, %v5955
  %v5974 = vadd.f32 %v5906, %v5951
  %v5975 = vadd.f32 %v5907, %v5955
  %v5976 = vadd.f32 %v5908, %v5951
  %v5977 = vadd.f32 %v5909, %v5955
  %v5978 = vadd.f32 %v5910, %v5951
  %v5979 = vadd.f32 %v5911, %v5955
  %v5980 = vadd.f32 %v5912, %v5951
  %v5981 = vadd.f32 %v5913, %v5955
  %v5982 = vadd.f32 %v5914, %v5951
  %v5983 = vadd.f32 %v5915, %v5955
  %v5984 = vadd.f32 %v5916, %v5951
  %v5985 = vadd.f32 %v5917, %v5955
  %v5986 = vadd.f32 %v5918, %v5951
  %v5987 = vadd.f32 %v5919, %v5955
  %v5988 = vadd.f32 %v5920, %v5951
  %v5989 = vadd.f32 %v5921, %v5955
  %v5990 = vadd.f32 %v5922, %v5951
  %v5991 = vadd.f32 %v5923, %v5955
  %v5992 = vadd.f32 %v5924, %v5951
  %v5993 = vadd.f32 %v5925, %v5955
  %v5994 = vadd.f32 %v5926, %v5951
  %v5995 = vadd.f32 %v5927, %v5955
  %v5996 = vadd.f32 %v5928, %v5951
  %v5997 = vadd.f32 %v5929, %v5955
  %v5998 = vadd.f32 %v5930, %v5951
  %v5999 = vadd.f32 %v5931, %v5955
  %v6000 = vadd.f32 %v5932, %v5951
  %v6001 = vadd.f32 %v5933, %v5955
  %v6002 = vadd.f32 %v5934, %v5951
  %v6003 = vadd.f32 %v5935, %v5955
  %v6004 = vadd.f32 %v5936, %v5951
  %v6005 = vadd.f32 %v5937, %v5955
  %v6006 = vadd.f32 %v5938, %v5951
  %v6007 = vadd.f32 %v5939, %v5955
  %v6008 = vadd.f32 %v5940, %v5951
  %v6009 = vadd.f32 %v5941, %v5955
  %v6010 = vadd.f32 %v5942, %v5951
  %v6011 = vadd.f32 %v5943, %v5955
  %v6012 = vadd.f32 %v5944, %v5951
  %v6013 = vadd.f32 %v5945, %v5955
  %v6014 = vmax.f32 %v5958, 0.0
  %v6015 = vmax.f32 %v5959, 0.0
  %v6016 = vmax.f32 %v5960, 0.0
  %v6017 = vmax.f32 %v5961, 0.0
  %v6018 = vmax.f32 %v5962, 0.0
  %v6019 = vmax.f32 %v5963, 0.0
  %v6020 = vmax.f32 %v5964, 0.0
  %v6021 = vmax.f32 %v5965, 0.0
  %v6022 = vmax.f32 %v5966, 0.0
  %v6023 = vmax.f32 %v5967, 0.0
  %v6024 = vmax.f32 %v5968, 0.0
  %v6025 = vmax.f32 %v5969, 0.0
  %v6026 = vmax.f32 %v5970, 0.0
  %v6027 = vmax.f32 %v5971, 0.0
  %v6028 = vmax.f32 %v5972, 0.0
  %v6029 = vmax.f32 %v5973, 0.0
  %v6030 = vmax.f32 %v5974, 0.0
  %v6031 = vmax.f32 %v5975, 0.0
  %v6032 = vmax.f32 %v5976, 0.0
  %v6033 = vmax.f32 %v5977, 0.0
  %v6034 = vmax.f32 %v5978, 0.0
  %v6035 = vmax.f32 %v5979, 0.0
  %v6036 = vmax.f32 %v5980, 0.0
  %v6037 = vmax.f32 %v5981, 0.0
  %v6038 = vmax.f32 %v5982, 0.0
  %v6039 = vmax.f32 %v5983, 0.0
  %v6040 = vmax.f32 %v5984, 0.0
  %v6041 = vmax.f32 %v5985, 0.0
  %v6042 = vmax.f32 %v5986, 0.0
  %v6043 = vmax.f32 %v5987, 0.0
  %v6044 = vmax.f32 %v5988, 0.0
  %v6045 = vmax.f32 %v5989, 0.0
  %v6046 = vmax.f32 %v5990, 0.0
  %v6047 = vmax.f32 %v5991, 0.0
  %v6048 = vmax.f32 %v5992, 0.0
  %v6049 = vmax.f32 %v5993, 0.0
  %v6050 = vmax.f32 %v5994, 0.0
  %v6051 = vmax.f32 %v5995, 0.0
  %v6052 = vmax.f32 %v5996, 0.0
  %v6053 = vmax.f32 %v5997, 0.0
  %v6054 = vmax.f32 %v5998, 0.0
  %v6055 = vmax.f32 %v5999, 0.0
  %v6056 = vmax.f32 %v6000, 0.0
  %v6057 = vmax.f32 %v6001, 0.0
  %v6058 = vmax.f32 %v6002, 0.0
  %v6059 = vmax.f32 %v6003, 0.0
  %v6060 = vmax.f32 %v6004, 0.0
  %v6061 = vmax.f32 %v6005, 0.0
  %v6062 = vmax.f32 %v6006, 0.0
  %v6063 = vmax.f32 %v6007, 0.0
  %v6064 = vmax.f32 %v6008, 0.0
  %v6065 = vmax.f32 %v6009, 0.0
  %v6066 = vmax.f32 %v6010, 0.0
  %v6067 = vmax.f32 %v6011, 0.0
  %v6068 = vmax.f32 %v6012, 0.0
  %v6069 = vmax.f32 %v6013, 0.0
  %6070 = vst [vmem:[#allocation3 + $0x1c0] sm:$0xff] %v6014
  %6071 = vst [vmem:[#allocation3 + $0x1c8] sm:$0xff] %v6015
  %6072 = vst [vmem:[#allocation3 + $0x1d0] sm:$0xff] %v6016
  %6073 = vst [vmem:[#allocation3 + $0x1d8] sm:$0xff] %v6017
  %6074 = vst [vmem:[#allocation3 + $0x1e0] sm:$0xff] %v6018
  %6075 = vst [vmem:[#allocation3 + $0x1e8] sm:$0xff] %v6019
  %6076 = vst [vmem:[#allocation3 + $0x1f0] sm:$0xff] %v6020
  %6077 = vst [vmem:[#allocation3 + $0x1f8] sm:$0xff] %v6021
  %6078 = vst [vmem:[#allocation3 + $0x200] sm:$0xff] %v6022
  %6079 = vst [vmem:[#allocation3 + $0x208] sm:$0xff] %v6023
  %6080 = vst [vmem:[#allocation3 + $0x210] sm:$0xff] %v6024
  %6081 = vst [vmem:[#allocation3 + $0x218] sm:$0xff] %v6025
  %6082 = vst [vmem:[#allocation3 + $0x220] sm:$0xff] %v6026
  %6083 = vst [vmem:[#allocation3 + $0x228] sm:$0xff] %v6027
  %6084 = vst [vmem:[#allocation3 + $0x230] sm:$0xff] %v6028
  %6085 = vst [vmem:[#allocation3 + $0x238] sm:$0xff] %v6029
  %6086 = vst [vmem:[#allocation3 + $0x240] sm:$0xff] %v6030
  %6087 = vst [vmem:[#allocation3 + $0x248] sm:$0xff] %v6031
  %6088 = vst [vmem:[#allocation3 + $0x250] sm:$0xff] %v6032
  %6089 = vst [vmem:[#allocation3 + $0x258] sm:$0xff] %v6033
  %6090 = vst [vmem:[#allocation3 + $0x260] sm:$0xff] %v6034
  %6091 = vst [vmem:[#allocation3 + $0x268] sm:$0xff] %v6035
  %6092 = vst [vmem:[#allocation3 + $0x270] sm:$0xff] %v6036
  %6093 = vst [vmem:[#allocation3 + $0x278] sm:$0xff] %v6037
  %6094 = vst [vmem:[#allocation3 + $0x280] sm:$0xff] %v6038
  %6095 = vst [vmem:[#allocation3 + $0x288] sm:$0xff] %v6039
  %6096 = vst [vmem:[#allocation3 + $0x290] sm:$0xff] %v6040
  %6097 = vst [vmem:[#allocation3 + $0x298] sm:$0xff] %v6041
  %6098 = vst [vmem:[#allocation3 + $0x2a0] sm:$0xff] %v6042
  %6099 = vst [vmem:[#allocation3 + $0x2a8] sm:$0xff] %v6043
  %6100 = vst [vmem:[#allocation3 + $0x2b0] sm:$0xff] %v6044
  %6101 = vst [vmem:[#allocation3 + $0x2b8] sm:$0xff] %v6045
  %6102 = vst [vmem:[#allocation3 + $0x2c0] sm:$0xff] %v6046
  %6103 = vst [vmem:[#allocation3 + $0x2c8] sm:$0xff] %v6047
  %6104 = vst [vmem:[#allocation3 + $0x2d0] sm:$0xff] %v6048
  %6105 = vst [vmem:[#allocation3 + $0x2d8] sm:$0xff] %v6049
  %6106 = vst [vmem:[#allocation3 + $0x2e0] sm:$0xff] %v6050
  %6107 = vst [vmem:[#allocation3 + $0x2e8] sm:$0xff] %v6051
  %6108 = vst [vmem:[#allocation3 + $0x2f0] sm:$0xff] %v6052
  %6109 = vst [vmem:[#allocation3 + $0x2f8] sm:$0xff] %v6053
  %6110 = vst [vmem:[#allocation3 + $0x300] sm:$0xff] %v6054
  %6111 = vst [vmem:[#allocation3 + $0x308] sm:$0xff] %v6055
  %6112 = vst [vmem:[#allocation3 + $0x310] sm:$0xff] %v6056
  %6113 = vst [vmem:[#allocation3 + $0x318] sm:$0xff] %v6057
  %6114 = vst [vmem:[#allocation3 + $0x320] sm:$0xff] %v6058
  %6115 = vst [vmem:[#allocation3 + $0x328] sm:$0xff] %v6059
  %6116 = vst [vmem:[#allocation3 + $0x330] sm:$0xff] %v6060
  %6117 = vst [vmem:[#allocation3 + $0x338] sm:$0xff] %v6061
  %6118 = vst [vmem:[#allocation3 + $0x340] sm:$0xff] %v6062
  %6119 = vst [vmem:[#allocation3 + $0x348] sm:$0xff] %v6063
  %6120 = vst [vmem:[#allocation3 + $0x350] sm:$0xff] %v6064
  %6121 = vst [vmem:[#allocation3 + $0x358] sm:$0xff] %v6065
  %6122 = vst [vmem:[#allocation3 + $0x360] sm:$0xff] %v6066
  %6123 = vst [vmem:[#allocation3 + $0x368] sm:$0xff] %v6067
  %6124 = vst [vmem:[#allocation3 + $0x370] sm:$0xff] %v6068
  %6125 = vst [vmem:[#allocation3 + $0x378] sm:$0xff] %v6069
  %v6126 = vld [vmem:[#allocation3] sm:$0xff]
  %v6127 = vld [vmem:[#allocation3 + $0x8] sm:$0xff]
  %v6128 = vld [vmem:[#allocation3 + $0x10] sm:$0xff]
  %v6129 = vld [vmem:[#allocation3 + $0x18] sm:$0xff]
  %v6130 = vld [vmem:[#allocation3 + $0x20] sm:$0xff]
  %v6131 = vld [vmem:[#allocation3 + $0x28] sm:$0xff]
  %v6132 = vld [vmem:[#allocation3 + $0x30] sm:$0xff]
  %v6133 = vld [vmem:[#allocation3 + $0x38] sm:$0xff]
  %v6134 = vld [vmem:[#allocation3 + $0x40] sm:$0xff]
  %v6135 = vld [vmem:[#allocation3 + $0x48] sm:$0xff]
  %v6136 = vld [vmem:[#allocation3 + $0x50] sm:$0xff]
  %v6137 = vld [vmem:[#allocation3 + $0x58] sm:$0xff]
  %v6138 = vld [vmem:[#allocation3 + $0x60] sm:$0xff]
  %v6139 = vld [vmem:[#allocation3 + $0x68] sm:$0xff]
  %v6140 = vld [vmem:[#allocation3 + $0x70] sm:$0xff]
  %v6141 = vld [vmem:[#allocation3 + $0x78] sm:$0xff]
  %v6142 = vld [vmem:[#allocation3 + $0x80] sm:$0xff]
  %v6143 = vld [vmem:[#allocation3 + $0x88] sm:$0xff]
  %v6144 = vld [vmem:[#allocation3 + $0x90] sm:$0xff]
  %v6145 = vld [vmem:[#allocation3 + $0x98] sm:$0xff]
  %v6146 = vld [vmem:[#allocation3 + $0xa0] sm:$0xff]
  %v6147 = vld [vmem:[#allocation3 + $0xa8] sm:$0xff]
  %v6148 = vld [vmem:[#allocation3 + $0xb0] sm:$0xff]
  %v6149 = vld [vmem:[#allocation3 + $0xb8] sm:$0xff]
  %v6150 = vld [vmem:[#allocation3 + $0xc0] sm:$0xff]
  %v6151 = vld [vmem:[#allocation3 + $0xc8] sm:$0xff]
  %v6152 = vld [vmem:[#allocation3 + $0xd0] sm:$0xff]
  %v6153 = vld [vmem:[#allocation3 + $0xd8] sm:$0xff]
  %v6154 = vld [vmem:[#allocation3 + $0xe0] sm:$0xff]
  %v6155 = vld [vmem:[#allocation3 + $0xe8] sm:$0xff]
  %v6156 = vld [vmem:[#allocation3 + $0xf0] sm:$0xff]
  %v6157 = vld [vmem:[#allocation3 + $0xf8] sm:$0xff]
  %v6158 = vld [vmem:[#allocation3 + $0x100] sm:$0xff]
  %v6159 = vld [vmem:[#allocation3 + $0x108] sm:$0xff]
  %v6160 = vld [vmem:[#allocation3 + $0x110] sm:$0xff]
  %v6161 = vld [vmem:[#allocation3 + $0x118] sm:$0xff]
  %v6162 = vld [vmem:[#allocation3 + $0x120] sm:$0xff]
  %v6163 = vld [vmem:[#allocation3 + $0x128] sm:$0xff]
  %v6164 = vld [vmem:[#allocation3 + $0x130] sm:$0xff]
  %v6165 = vld [vmem:[#allocation3 + $0x138] sm:$0xff]
  %v6166 = vld [vmem:[#allocation3 + $0x140] sm:$0xff]
  %v6167 = vld [vmem:[#allocation3 + $0x148] sm:$0xff]
  %v6168 = vld [vmem:[#allocation3 + $0x150] sm:$0xff]
  %v6169 = vld [vmem:[#allocation3 + $0x158] sm:$0xff]
  %v6170 = vld [vmem:[#allocation3 + $0x160] sm:$0xff]
  %v6171 = vld [vmem:[#allocation3 + $0x168] sm:$0xff]
  %v6172 = vld [vmem:[#allocation3 + $0x170] sm:$0xff]
  %v6173 = vld [vmem:[#allocation3 + $0x178] sm:$0xff]
  %v6174 = vld [vmem:[#allocation3 + $0x180] sm:$0xff]
  %v6175 = vld [vmem:[#allocation3 + $0x188] sm:$0xff]
  %v6176 = vld [vmem:[#allocation3 + $0x190] sm:$0xff]
  %v6177 = vld [vmem:[#allocation3 + $0x198] sm:$0xff]
  %v6178 = vpack.c.bf16 %v6128, %v6126
  %v6179 = vpack.c.bf16 %v6129, %v6127
  %v6180 = vpack.c.bf16 %v6132, %v6130
  %v6181 = vpack.c.bf16 %v6133, %v6131
  %v6182 = vpack.c.bf16 %v6136, %v6134
  %v6183 = vpack.c.bf16 %v6137, %v6135
  %v6184 = vpack.c.bf16 %v6140, %v6138
  %v6185 = vpack.c.bf16 %v6141, %v6139
  %v6186 = vpack.c.bf16 %v6144, %v6142
  %v6187 = vpack.c.bf16 %v6145, %v6143
  %v6188 = vpack.c.bf16 %v6148, %v6146
  %v6189 = vpack.c.bf16 %v6149, %v6147
  %v6190 = vpack.c.bf16 %v6152, %v6150
  %v6191 = vpack.c.bf16 %v6153, %v6151
  %v6192 = vpack.c.bf16 %v6156, %v6154
  %v6193 = vpack.c.bf16 %v6157, %v6155
  %v6194 = vpack.c.bf16 %v6160, %v6158
  %v6195 = vpack.c.bf16 %v6161, %v6159
  %v6196 = vpack.c.bf16 %v6164, %v6162
  %v6197 = vpack.c.bf16 %v6165, %v6163
  %v6198 = vpack.c.bf16 %v6168, %v6166
  %v6199 = vpack.c.bf16 %v6169, %v6167
  %v6200 = vpack.c.bf16 %v6172, %v6170
  %v6201 = vpack.c.bf16 %v6173, %v6171
  %v6202 = vpack.c.bf16 %v6176, %v6174
  %v6203 = vpack.c.bf16 %v6177, %v6175
  %v6204 = vld [vmem:[%s5] sm:$0xff]
  %v6205 = vld [vmem:[%s5 + $0x8] sm:$0xff]
  %v6206 = vld [vmem:[%s5 + $0x10] sm:$0xff]
  %v6207 = vld [vmem:[%s5 + $0x18] sm:$0xff]
  %v6208 = vld [vmem:[%s5 + $0x20] sm:$0xff]
  %v6209 = vld [vmem:[%s5 + $0x28] sm:$0xff]
  %v6210 = vld [vmem:[%s5 + $0x30] sm:$0xff]
  %v6211 = vld [vmem:[%s5 + $0x38] sm:$0xff]
  %v6212 = vld [vmem:[%s5 + $0x40] sm:$0xff]
  %v6213 = vld [vmem:[%s5 + $0x48] sm:$0xff]
  %v6214 = vld [vmem:[%s5 + $0x50] sm:$0xff]
  %v6215 = vld [vmem:[%s5 + $0x58] sm:$0xff]
  %v6216 = vld [vmem:[%s5 + $0x60] sm:$0xff]
  %v6217 = vld [vmem:[%s5 + $0x68] sm:$0xff]
  %v6218 = vld [vmem:[%s5 + $0x70] sm:$0xff]
  %v6219 = vld [vmem:[%s5 + $0x78] sm:$0xff]
  %v6220 = vld [vmem:[%s5 + $0x80] sm:$0xff]
  %v6221 = vld [vmem:[%s5 + $0x88] sm:$0xff]
  %v6222 = vld [vmem:[%s5 + $0x90] sm:$0xff]
  %v6223 = vld [vmem:[%s5 + $0x98] sm:$0xff]
  %v6224 = vld [vmem:[%s5 + $0xa0] sm:$0xff]
  %v6225 = vld [vmem:[%s5 + $0xa8] sm:$0xff]
  %v6226 = vld [vmem:[%s5 + $0xb0] sm:$0xff]
  %v6227 = vld [vmem:[%s5 + $0xb8] sm:$0xff]
  %v6228 = vld [vmem:[%s5 + $0xc0] sm:$0xff]
  %v6229 = vld [vmem:[%s5 + $0xc8] sm:$0xff]
  %v6230 = vld [vmem:[%s5 + $0xd0] sm:$0xff]
  %v6231 = vld [vmem:[%s5 + $0xd8] sm:$0xff]
  %v6232 = vld [vmem:[%s5 + $0xe0] sm:$0xff]
  %v6233 = vld [vmem:[%s5 + $0xe8] sm:$0xff]
  %v6234 = vld [vmem:[%s5 + $0xf0] sm:$0xff]
  %v6235 = vld [vmem:[%s5 + $0xf8] sm:$0xff]
  %v6236 = vld [vmem:[#allocation3] sm:$0xfe]
  %v6237 = vld [vmem:[#allocation3 + $0x8] sm:$0xfe]
  %v6238 = vld [vmem:[#allocation3 + $0x1a0] sm:$0x1]
  %v6239 = vld [vmem:[#allocation3 + $0x1a8] sm:$0x1]
  %v6240 = vpack.c.bf16 %v6128, %v6236
  %v6241 = vpack.c.bf16 %v6129, %v6237
  %v6242 = vpack.c.bf16 %v6238, %v6238
  %v6243 = vpack.c.bf16 %v6239, %v6239
  %s6244 = scalar_lea.vmem %s5, 256
  %v6245 = vld [vmem:[%s6244] sm:$0xff]
  %v6246 = vld [vmem:[%s6244 + $0x8] sm:$0xff]
  %v6247 = vld [vmem:[%s6244 + $0x10] sm:$0xff]
  %v6248 = vld [vmem:[%s6244 + $0x18] sm:$0xff]
  %v6249 = vld [vmem:[%s6244 + $0x20] sm:$0xff]
  %v6250 = vld [vmem:[%s6244 + $0x28] sm:$0xff]
  %v6251 = vld [vmem:[%s6244 + $0x30] sm:$0xff]
  %v6252 = vld [vmem:[%s6244 + $0x38] sm:$0xff]
  %v6253 = vld [vmem:[%s6244 + $0x40] sm:$0xff]
  %v6254 = vld [vmem:[%s6244 + $0x48] sm:$0xff]
  %v6255 = vld [vmem:[%s6244 + $0x50] sm:$0xff]
  %v6256 = vld [vmem:[%s6244 + $0x58] sm:$0xff]
  %v6257 = vld [vmem:[%s6244 + $0x60] sm:$0xff]
  %v6258 = vld [vmem:[%s6244 + $0x68] sm:$0xff]
  %v6259 = vld [vmem:[%s6244 + $0x70] sm:$0xff]
  %v6260 = vld [vmem:[%s6244 + $0x78] sm:$0xff]
  %v6261 = vld [vmem:[%s6244 + $0x80] sm:$0xff]
  %v6262 = vld [vmem:[%s6244 + $0x88] sm:$0xff]
  %v6263 = vld [vmem:[%s6244 + $0x90] sm:$0xff]
  %v6264 = vld [vmem:[%s6244 + $0x98] sm:$0xff]
  %v6265 = vld [vmem:[%s6244 + $0xa0] sm:$0xff]
  %v6266 = vld [vmem:[%s6244 + $0xa8] sm:$0xff]
  %v6267 = vld [vmem:[%s6244 + $0xb0] sm:$0xff]
  %v6268 = vld [vmem:[%s6244 + $0xb8] sm:$0xff]
  %v6269 = vld [vmem:[%s6244 + $0xc0] sm:$0xff]
  %v6270 = vld [vmem:[%s6244 + $0xc8] sm:$0xff]
  %v6271 = vld [vmem:[%s6244 + $0xd0] sm:$0xff]
  %v6272 = vld [vmem:[%s6244 + $0xd8] sm:$0xff]
  %v6273 = vld [vmem:[%s6244 + $0xe0] sm:$0xff]
  %v6274 = vld [vmem:[%s6244 + $0xe8] sm:$0xff]
  %v6275 = vld [vmem:[%s6244 + $0xf0] sm:$0xff]
  %v6276 = vld [vmem:[%s6244 + $0xf8] sm:$0xff]
  %v6278 = vshrl.u32 %v6240, 16
  %v6280 = vshll.u32 %v6240, 16
  %v6282 = vrot.slane %v6280, 1
  %v6283 = vor.u32 %v6278, %v6282
  %v6285 = vshll.u32 %v6180, 16
  %v6287 = vrot.slane %v6285, 1
  %v6288 = vsel %vm1207, %v6283, %v6287
  %v6290 = vshrl.u32 %v6241, 16
  %v6292 = vshll.u32 %v6241, 16
  %v6294 = vrot.slane %v6292, 1
  %v6295 = vor.u32 %v6290, %v6294
  %v6297 = vshll.u32 %v6181, 16
  %v6299 = vrot.slane %v6297, 1
  %v6300 = vsel %vm1207, %v6295, %v6299
  %v6301 = vshrl.u32 %v6180, 16
  %v6303 = vor.u32 %v6301, %v6287
  %v6305 = vshll.u32 %v6182, 16
  %v6307 = vrot.slane %v6305, 1
  %v6308 = vsel %vm1207, %v6303, %v6307
  %v6309 = vshrl.u32 %v6181, 16
  %v6311 = vor.u32 %v6309, %v6299
  %v6313 = vshll.u32 %v6183, 16
  %v6315 = vrot.slane %v6313, 1
  %v6316 = vsel %vm1207, %v6311, %v6315
  %v6317 = vshrl.u32 %v6182, 16
  %v6319 = vor.u32 %v6317, %v6307
  %v6321 = vshll.u32 %v6184, 16
  %v6323 = vrot.slane %v6321, 1
  %v6324 = vsel %vm1207, %v6319, %v6323
  %v6325 = vshrl.u32 %v6183, 16
  %v6327 = vor.u32 %v6325, %v6315
  %v6329 = vshll.u32 %v6185, 16
  %v6331 = vrot.slane %v6329, 1
  %v6332 = vsel %vm1207, %v6327, %v6331
  %v6333 = vshrl.u32 %v6184, 16
  %v6335 = vor.u32 %v6333, %v6323
  %v6337 = vshll.u32 %v6186, 16
  %v6339 = vrot.slane %v6337, 1
  %v6340 = vsel %vm1207, %v6335, %v6339
  %v6341 = vshrl.u32 %v6185, 16
  %v6343 = vor.u32 %v6341, %v6331
  %v6345 = vshll.u32 %v6187, 16
  %v6347 = vrot.slane %v6345, 1
  %v6348 = vsel %vm1207, %v6343, %v6347
  %v6349 = vshrl.u32 %v6186, 16
  %v6351 = vor.u32 %v6349, %v6339
  %v6353 = vshll.u32 %v6188, 16
  %v6355 = vrot.slane %v6353, 1
  %v6356 = vsel %vm1207, %v6351, %v6355
  %v6357 = vshrl.u32 %v6187, 16
  %v6359 = vor.u32 %v6357, %v6347
  %v6361 = vshll.u32 %v6189, 16
  %v6363 = vrot.slane %v6361, 1
  %v6364 = vsel %vm1207, %v6359, %v6363
  %v6365 = vshrl.u32 %v6188, 16
  %v6367 = vor.u32 %v6365, %v6355
  %v6369 = vshll.u32 %v6190, 16
  %v6371 = vrot.slane %v6369, 1
  %v6372 = vsel %vm1207, %v6367, %v6371
  %v6373 = vshrl.u32 %v6189, 16
  %v6375 = vor.u32 %v6373, %v6363
  %v6377 = vshll.u32 %v6191, 16
  %v6379 = vrot.slane %v6377, 1
  %v6380 = vsel %vm1207, %v6375, %v6379
  %v6381 = vshrl.u32 %v6190, 16
  %v6383 = vor.u32 %v6381, %v6371
  %v6385 = vshll.u32 %v6192, 16
  %v6387 = vrot.slane %v6385, 1
  %v6388 = vsel %vm1207, %v6383, %v6387
  %v6389 = vshrl.u32 %v6191, 16
  %v6391 = vor.u32 %v6389, %v6379
  %v6393 = vshll.u32 %v6193, 16
  %v6395 = vrot.slane %v6393, 1
  %v6396 = vsel %vm1207, %v6391, %v6395
  %v6397 = vshrl.u32 %v6192, 16
  %v6399 = vor.u32 %v6397, %v6387
  %v6401 = vshll.u32 %v6194, 16
  %v6403 = vrot.slane %v6401, 1
  %v6404 = vsel %vm1207, %v6399, %v6403
  %v6405 = vshrl.u32 %v6193, 16
  %v6407 = vor.u32 %v6405, %v6395
  %v6409 = vshll.u32 %v6195, 16
  %v6411 = vrot.slane %v6409, 1
  %v6412 = vsel %vm1207, %v6407, %v6411
  %v6413 = vshrl.u32 %v6194, 16
  %v6415 = vor.u32 %v6413, %v6403
  %v6417 = vshll.u32 %v6196, 16
  %v6419 = vrot.slane %v6417, 1
  %v6420 = vsel %vm1207, %v6415, %v6419
  %v6421 = vshrl.u32 %v6195, 16
  %v6423 = vor.u32 %v6421, %v6411
  %v6425 = vshll.u32 %v6197, 16
  %v6427 = vrot.slane %v6425, 1
  %v6428 = vsel %vm1207, %v6423, %v6427
  %v6429 = vshrl.u32 %v6196, 16
  %v6431 = vor.u32 %v6429, %v6419
  %v6433 = vshll.u32 %v6198, 16
  %v6435 = vrot.slane %v6433, 1
  %v6436 = vsel %vm1207, %v6431, %v6435
  %v6437 = vshrl.u32 %v6197, 16
  %v6439 = vor.u32 %v6437, %v6427
  %v6441 = vshll.u32 %v6199, 16
  %v6443 = vrot.slane %v6441, 1
  %v6444 = vsel %vm1207, %v6439, %v6443
  %v6445 = vshrl.u32 %v6198, 16
  %v6447 = vor.u32 %v6445, %v6435
  %v6449 = vshll.u32 %v6200, 16
  %v6451 = vrot.slane %v6449, 1
  %v6452 = vsel %vm1207, %v6447, %v6451
  %v6453 = vshrl.u32 %v6199, 16
  %v6455 = vor.u32 %v6453, %v6443
  %v6457 = vshll.u32 %v6201, 16
  %v6459 = vrot.slane %v6457, 1
  %v6460 = vsel %vm1207, %v6455, %v6459
  %v6461 = vshrl.u32 %v6200, 16
  %v6463 = vor.u32 %v6461, %v6451
  %v6465 = vshll.u32 %v6202, 16
  %v6467 = vrot.slane %v6465, 1
  %v6468 = vsel %vm1207, %v6463, %v6467
  %v6469 = vshrl.u32 %v6201, 16
  %v6471 = vor.u32 %v6469, %v6459
  %v6473 = vshll.u32 %v6203, 16
  %v6475 = vrot.slane %v6473, 1
  %v6476 = vsel %vm1207, %v6471, %v6475
  %v6477 = vshrl.u32 %v6202, 16
  %v6479 = vor.u32 %v6477, %v6467
  %v6481 = vshll.u32 %v6242, 16
  %v6483 = vrot.slane %v6481, 1
  %v6484 = vsel %vm1207, %v6479, %v6483
  %v6485 = vshrl.u32 %v6203, 16
  %v6487 = vor.u32 %v6485, %v6475
  %v6489 = vshll.u32 %v6243, 16
  %v6491 = vrot.slane %v6489, 1
  %v6492 = vsel %vm1207, %v6487, %v6491
  %v6551 = vunpack.c.l.b16 %v6245
  %v6552 = vunpack.c.h.b16 %v6245
  %v6553 = vunpack.c.l.b16 %v6246
  %v6554 = vunpack.c.h.b16 %v6246
  %v6555 = vunpack.c.l.b16 %v6247
  %v6556 = vunpack.c.h.b16 %v6247
  %v6557 = vunpack.c.l.b16 %v6248
  %v6558 = vunpack.c.h.b16 %v6248
  %v6559 = vunpack.c.l.b16 %v6249
  %v6560 = vunpack.c.h.b16 %v6249
  %v6561 = vunpack.c.l.b16 %v6250
  %v6562 = vunpack.c.h.b16 %v6250
  %v6563 = vunpack.c.l.b16 %v6251
  %v6564 = vunpack.c.h.b16 %v6251
  %v6565 = vunpack.c.l.b16 %v6252
  %v6566 = vunpack.c.h.b16 %v6252
  %v6567 = vunpack.c.l.b16 %v6253
  %v6568 = vunpack.c.h.b16 %v6253
  %v6569 = vunpack.c.l.b16 %v6254
  %v6570 = vunpack.c.h.b16 %v6254
  %v6571 = vunpack.c.l.b16 %v6255
  %v6572 = vunpack.c.h.b16 %v6255
  %v6573 = vunpack.c.l.b16 %v6256
  %v6574 = vunpack.c.h.b16 %v6256
  %v6575 = vunpack.c.l.b16 %v6257
  %v6576 = vunpack.c.h.b16 %v6257
  %v6577 = vunpack.c.l.b16 %v6258
  %v6578 = vunpack.c.h.b16 %v6258
  %v6579 = vunpack.c.l.b16 %v6259
  %v6580 = vunpack.c.h.b16 %v6259
  %v6581 = vunpack.c.l.b16 %v6260
  %v6582 = vunpack.c.h.b16 %v6260
  %v6583 = vunpack.c.l.b16 %v6261
  %v6584 = vunpack.c.h.b16 %v6261
  %v6585 = vunpack.c.l.b16 %v6262
  %v6586 = vunpack.c.h.b16 %v6262
  %v6587 = vunpack.c.l.b16 %v6263
  %v6588 = vunpack.c.h.b16 %v6263
  %v6589 = vunpack.c.l.b16 %v6264
  %v6590 = vunpack.c.h.b16 %v6264
  %v6591 = vunpack.c.l.b16 %v6265
  %v6592 = vunpack.c.h.b16 %v6265
  %v6593 = vunpack.c.l.b16 %v6266
  %v6594 = vunpack.c.h.b16 %v6266
  %v6595 = vunpack.c.l.b16 %v6267
  %v6596 = vunpack.c.h.b16 %v6267
  %v6597 = vunpack.c.l.b16 %v6268
  %v6598 = vunpack.c.h.b16 %v6268
  %v6599 = vunpack.c.l.b16 %v6269
  %v6600 = vunpack.c.h.b16 %v6269
  %v6601 = vunpack.c.l.b16 %v6270
  %v6602 = vunpack.c.h.b16 %v6270
  %v6603 = vunpack.c.l.b16 %v6271
  %v6604 = vunpack.c.h.b16 %v6271
  %v6605 = vunpack.c.l.b16 %v6272
  %v6606 = vunpack.c.h.b16 %v6272
  %v6607 = vunpack.c.l.b16 %v6273
  %v6608 = vunpack.c.h.b16 %v6273
  %v6609 = vunpack.c.l.b16 %v6274
  %v6610 = vunpack.c.h.b16 %v6274
  %v6611 = vunpack.c.l.b16 %v6275
  %v6612 = vunpack.c.h.b16 %v6275
  %v6613 = vunpack.c.l.b16 %v6276
  %v6614 = vunpack.c.h.b16 %v6276
  %v6615 = vpack.c.b16 %v6553, %v6551
  %v6616 = vpack.c.b16 %v6554, %v6552
  %v6617 = vpack.c.b16 %v6557, %v6555
  %v6618 = vpack.c.b16 %v6558, %v6556
  %v6619 = vpack.c.b16 %v6561, %v6559
  %v6620 = vpack.c.b16 %v6562, %v6560
  %v6621 = vpack.c.b16 %v6565, %v6563
  %v6622 = vpack.c.b16 %v6566, %v6564
  %v6623 = vpack.c.b16 %v6569, %v6567
  %v6624 = vpack.c.b16 %v6570, %v6568
  %v6625 = vpack.c.b16 %v6573, %v6571
  %v6626 = vpack.c.b16 %v6574, %v6572
  %v6627 = vpack.c.b16 %v6577, %v6575
  %v6628 = vpack.c.b16 %v6578, %v6576
  %v6629 = vpack.c.b16 %v6581, %v6579
  %v6630 = vpack.c.b16 %v6582, %v6580
  %v6631 = vpack.c.b16 %v6585, %v6583
  %v6632 = vpack.c.b16 %v6586, %v6584
  %v6633 = vpack.c.b16 %v6589, %v6587
  %v6634 = vpack.c.b16 %v6590, %v6588
  %v6635 = vpack.c.b16 %v6593, %v6591
  %v6636 = vpack.c.b16 %v6594, %v6592
  %v6637 = vpack.c.b16 %v6597, %v6595
  %v6638 = vpack.c.b16 %v6598, %v6596
  %v6639 = vpack.c.b16 %v6601, %v6599
  %v6640 = vpack.c.b16 %v6602, %v6600
  %v6641 = vpack.c.b16 %v6605, %v6603
  %v6642 = vpack.c.b16 %v6606, %v6604
  %v6643 = vpack.c.b16 %v6609, %v6607
  %v6644 = vpack.c.b16 %v6610, %v6608
  %v6645 = vpack.c.b16 %v6613, %v6611
  %v6646 = vpack.c.b16 %v6614, %v6612
  %6679 = vmatprep.subr.bf16.mxu0 %v6616
  %6680 = vmatpush1.bf16.msra.mxu0 %v6615
  %6681 = vmatprep.subr.bf16.mxu0 %v6618
  %6682 = vmatpush1.bf16.msra.mxu0 %v6617
  %6683 = vmatprep.subr.bf16.mxu0 %v6620
  %6684 = vmatpush1.bf16.msra.mxu0 %v6619
  %6685 = vmatprep.subr.bf16.mxu0 %v6622
  %6686 = vmatpush1.bf16.msra.mxu0 %v6621
  %6687 = vmatprep.subr.bf16.mxu0 %v6624
  %6688 = vmatpush1.bf16.msra.mxu0 %v6623
  %6689 = vmatprep.subr.bf16.mxu0 %v6626
  %6690 = vmatpush1.bf16.msra.mxu0 %v6625
  %6691 = vmatprep.subr.bf16.mxu0 %v6628
  %6692 = vmatpush1.bf16.msra.mxu0 %v6627
  %6693 = vmatprep.subr.bf16.mxu0 %v6630
  %6694 = vmatpush1.bf16.msra.mxu0 %v6629
  %6695 = vmatprep.subr.bf16.mxu0 %v6632
  %6696 = vmatpush1.bf16.msra.mxu0 %v6631
  %6697 = vmatprep.subr.bf16.mxu0 %v6634
  %6698 = vmatpush1.bf16.msra.mxu0 %v6633
  %6699 = vmatprep.subr.bf16.mxu0 %v6636
  %6700 = vmatpush1.bf16.msra.mxu0 %v6635
  %6701 = vmatprep.subr.bf16.mxu0 %v6638
  %6702 = vmatpush1.bf16.msra.mxu0 %v6637
  %6703 = vmatprep.subr.bf16.mxu0 %v6640
  %6704 = vmatpush1.bf16.msra.mxu0 %v6639
  %6705 = vmatprep.subr.bf16.mxu0 %v6642
  %6706 = vmatpush1.bf16.msra.mxu0 %v6641
  %6707 = vmatprep.subr.bf16.mxu0 %v6644
  %6708 = vmatpush1.bf16.msra.mxu0 %v6643
  %6709 = vmatprep.subr.bf16.mxu0 %v6646
  %6710 = vmatpush1.bf16.msra.mxu0 %v6645
  %6711 = vmatprep.mubr.bf16.mxu0 %v6300
  %6712 = vmatmul.mubr.bf16.gmra.mrb[0].mxu0 %v6288
  %v6713 = vpop.f32.mrb[0].mxu0
  %v6714 = vadd.f32 0.0, %v6713
  %v6715 = vpop.f32.mrb[0].mxu0
  %v6716 = vadd.f32 0.0, %v6715
  %v6717 = vpop.f32.mrb[0].mxu0
  %v6718 = vadd.f32 0.0, %v6717
  %v6719 = vpop.f32.mrb[0].mxu0
  %v6720 = vadd.f32 0.0, %v6719
  %6721 = vmatprep.mubr.bf16.mxu0 %v6316
  %6722 = vmatmul.mubr.bf16.gmra.mrb[0].mxu0 %v6308
  %v6723 = vpop.f32.mrb[0].mxu0
  %v6724 = vadd.f32 0.0, %v6723
  %v6725 = vpop.f32.mrb[0].mxu0
  %v6726 = vadd.f32 0.0, %v6725
  %v6727 = vpop.f32.mrb[0].mxu0
  %v6728 = vadd.f32 0.0, %v6727
  %v6729 = vpop.f32.mrb[0].mxu0
  %v6730 = vadd.f32 0.0, %v6729
  %6731 = vmatprep.mubr.bf16.mxu0 %v6332
  %6732 = vmatmul.mubr.bf16.gmra.mrb[0].mxu0 %v6324
  %v6733 = vpop.f32.mrb[0].mxu0
  %v6734 = vadd.f32 0.0, %v6733
  %v6735 = vpop.f32.mrb[0].mxu0
  %v6736 = vadd.f32 0.0, %v6735
  %v6737 = vpop.f32.mrb[0].mxu0
  %v6738 = vadd.f32 0.0, %v6737
  %v6739 = vpop.f32.mrb[0].mxu0
  %v6740 = vadd.f32 0.0, %v6739
  %6741 = vmatprep.mubr.bf16.mxu0 %v6348
  %6742 = vmatmul.mubr.bf16.gmra.mrb[0].mxu0 %v6340
  %v6743 = vpop.f32.mrb[0].mxu0
  %v6744 = vadd.f32 0.0, %v6743
  %v6745 = vpop.f32.mrb[0].mxu0
  %v6746 = vadd.f32 0.0, %v6745
  %v6747 = vpop.f32.mrb[0].mxu0
  %v6748 = vadd.f32 0.0, %v6747
  %v6749 = vpop.f32.mrb[0].mxu0
  %v6750 = vadd.f32 0.0, %v6749
  %6751 = vmatprep.mubr.bf16.mxu0 %v6364
  %6752 = vmatmul.mubr.bf16.gmra.mrb[0].mxu0 %v6356
  %v6753 = vpop.f32.mrb[0].mxu0
  %v6754 = vadd.f32 0.0, %v6753
  %v6755 = vpop.f32.mrb[0].mxu0
  %v6756 = vadd.f32 0.0, %v6755
  %v6757 = vpop.f32.mrb[0].mxu0
  %v6758 = vadd.f32 0.0, %v6757
  %v6759 = vpop.f32.mrb[0].mxu0
  %v6760 = vadd.f32 0.0, %v6759
  %6761 = vmatprep.mubr.bf16.mxu0 %v6380
  %6762 = vmatmul.mubr.bf16.gmra.mrb[0].mxu0 %v6372
  %v6763 = vpop.f32.mrb[0].mxu0
  %v6764 = vadd.f32 0.0, %v6763
  %v6765 = vpop.f32.mrb[0].mxu0
  %v6766 = vadd.f32 0.0, %v6765
  %v6767 = vpop.f32.mrb[0].mxu0
  %v6768 = vadd.f32 0.0, %v6767
  %v6769 = vpop.f32.mrb[0].mxu0
  %v6770 = vadd.f32 0.0, %v6769
  %6771 = vmatprep.mubr.bf16.mxu0 %v6396
  %6772 = vmatmul.mubr.bf16.gmra.mrb[0].mxu0 %v6388
  %v6773 = vpop.f32.mrb[0].mxu0
  %v6774 = vadd.f32 0.0, %v6773
  %v6775 = vpop.f32.mrb[0].mxu0
  %v6776 = vadd.f32 0.0, %v6775
  %v6777 = vpop.f32.mrb[0].mxu0
  %v6778 = vadd.f32 0.0, %v6777
  %v6779 = vpop.f32.mrb[0].mxu0
  %v6780 = vadd.f32 0.0, %v6779
  %6781 = vmatprep.mubr.bf16.mxu0 %v6412
  %6782 = vmatmul.mubr.bf16.gmra.mrb[0].mxu0 %v6404
  %v6783 = vpop.f32.mrb[0].mxu0
  %v6784 = vadd.f32 0.0, %v6783
  %v6785 = vpop.f32.mrb[0].mxu0
  %v6786 = vadd.f32 0.0, %v6785
  %v6787 = vpop.f32.mrb[0].mxu0
  %v6788 = vadd.f32 0.0, %v6787
  %v6789 = vpop.f32.mrb[0].mxu0
  %v6790 = vadd.f32 0.0, %v6789
  %6791 = vmatprep.mubr.bf16.mxu0 %v6428
  %6792 = vmatmul.mubr.bf16.gmra.mrb[0].mxu0 %v6420
  %v6793 = vpop.f32.mrb[0].mxu0
  %v6794 = vadd.f32 0.0, %v6793
  %v6795 = vpop.f32.mrb[0].mxu0
  %v6796 = vadd.f32 0.0, %v6795
  %v6797 = vpop.f32.mrb[0].mxu0
  %v6798 = vadd.f32 0.0, %v6797
  %v6799 = vpop.f32.mrb[0].mxu0
  %v6800 = vadd.f32 0.0, %v6799
  %6801 = vmatprep.mubr.bf16.mxu0 %v6444
  %6802 = vmatmul.mubr.bf16.gmra.mrb[0].mxu0 %v6436
  %v6803 = vpop.f32.mrb[0].mxu0
  %v6804 = vadd.f32 0.0, %v6803
  %v6805 = vpop.f32.mrb[0].mxu0
  %v6806 = vadd.f32 0.0, %v6805
  %v6807 = vpop.f32.mrb[0].mxu0
  %v6808 = vadd.f32 0.0, %v6807
  %v6809 = vpop.f32.mrb[0].mxu0
  %v6810 = vadd.f32 0.0, %v6809
  %6811 = vmatprep.mubr.bf16.mxu0 %v6460
  %6812 = vmatmul.mubr.bf16.gmra.mrb[0].mxu0 %v6452
  %v6813 = vpop.f32.mrb[0].mxu0
  %v6814 = vadd.f32 0.0, %v6813
  %v6815 = vpop.f32.mrb[0].mxu0
  %v6816 = vadd.f32 0.0, %v6815
  %v6817 = vpop.f32.mrb[0].mxu0
  %v6818 = vadd.f32 0.0, %v6817
  %v6819 = vpop.f32.mrb[0].mxu0
  %v6820 = vadd.f32 0.0, %v6819
  %6821 = vmatprep.mubr.bf16.mxu0 %v6476
  %6822 = vmatmul.mubr.bf16.gmra.mrb[0].mxu0 %v6468
  %v6823 = vpop.f32.mrb[0].mxu0
  %v6824 = vadd.f32 0.0, %v6823
  %v6825 = vpop.f32.mrb[0].mxu0
  %v6826 = vadd.f32 0.0, %v6825
  %v6827 = vpop.f32.mrb[0].mxu0
  %v6828 = vadd.f32 0.0, %v6827
  %v6829 = vpop.f32.mrb[0].mxu0
  %v6830 = vadd.f32 0.0, %v6829
  %6831 = vmatprep.mubr.bf16.mxu0 %v6492
  %6832 = vmatmul.mubr.bf16.gmra.mrb[0].mxu0 %v6484
  %v6833 = vpop.f32.mrb[0].mxu0
  %v6834 = vadd.f32 0.0, %v6833
  %v6835 = vpop.f32.mrb[0].mxu0
  %v6836 = vadd.f32 0.0, %v6835
  %v6837 = vpop.f32.mrb[0].mxu0
  %v6838 = vadd.f32 0.0, %v6837
  %v6839 = vpop.f32.mrb[0].mxu0
  %v6840 = vadd.f32 0.0, %v6839
  %6841 = vdwg.mxu0
  %v6874 = vunpack.c.l.b16 %v6204
  %v6875 = vunpack.c.h.b16 %v6204
  %v6876 = vunpack.c.l.b16 %v6205
  %v6877 = vunpack.c.h.b16 %v6205
  %v6878 = vunpack.c.l.b16 %v6206
  %v6879 = vunpack.c.h.b16 %v6206
  %v6880 = vunpack.c.l.b16 %v6207
  %v6881 = vunpack.c.h.b16 %v6207
  %v6882 = vunpack.c.l.b16 %v6208
  %v6883 = vunpack.c.h.b16 %v6208
  %v6884 = vunpack.c.l.b16 %v6209
  %v6885 = vunpack.c.h.b16 %v6209
  %v6886 = vunpack.c.l.b16 %v6210
  %v6887 = vunpack.c.h.b16 %v6210
  %v6888 = vunpack.c.l.b16 %v6211
  %v6889 = vunpack.c.h.b16 %v6211
  %v6890 = vunpack.c.l.b16 %v6212
  %v6891 = vunpack.c.h.b16 %v6212
  %v6892 = vunpack.c.l.b16 %v6213
  %v6893 = vunpack.c.h.b16 %v6213
  %v6894 = vunpack.c.l.b16 %v6214
  %v6895 = vunpack.c.h.b16 %v6214
  %v6896 = vunpack.c.l.b16 %v6215
  %v6897 = vunpack.c.h.b16 %v6215
  %v6898 = vunpack.c.l.b16 %v6216
  %v6899 = vunpack.c.h.b16 %v6216
  %v6900 = vunpack.c.l.b16 %v6217
  %v6901 = vunpack.c.h.b16 %v6217
  %v6902 = vunpack.c.l.b16 %v6218
  %v6903 = vunpack.c.h.b16 %v6218
  %v6904 = vunpack.c.l.b16 %v6219
  %v6905 = vunpack.c.h.b16 %v6219
  %v6906 = vunpack.c.l.b16 %v6220
  %v6907 = vunpack.c.h.b16 %v6220
  %v6908 = vunpack.c.l.b16 %v6221
  %v6909 = vunpack.c.h.b16 %v6221
  %v6910 = vunpack.c.l.b16 %v6222
  %v6911 = vunpack.c.h.b16 %v6222
  %v6912 = vunpack.c.l.b16 %v6223
  %v6913 = vunpack.c.h.b16 %v6223
  %v6914 = vunpack.c.l.b16 %v6224
  %v6915 = vunpack.c.h.b16 %v6224
  %v6916 = vunpack.c.l.b16 %v6225
  %v6917 = vunpack.c.h.b16 %v6225
  %v6918 = vunpack.c.l.b16 %v6226
  %v6919 = vunpack.c.h.b16 %v6226
  %v6920 = vunpack.c.l.b16 %v6227
  %v6921 = vunpack.c.h.b16 %v6227
  %v6922 = vunpack.c.l.b16 %v6228
  %v6923 = vunpack.c.h.b16 %v6228
  %v6924 = vunpack.c.l.b16 %v6229
  %v6925 = vunpack.c.h.b16 %v6229
  %v6926 = vunpack.c.l.b16 %v6230
  %v6927 = vunpack.c.h.b16 %v6230
  %v6928 = vunpack.c.l.b16 %v6231
  %v6929 = vunpack.c.h.b16 %v6231
  %v6930 = vunpack.c.l.b16 %v6232
  %v6931 = vunpack.c.h.b16 %v6232
  %v6932 = vunpack.c.l.b16 %v6233
  %v6933 = vunpack.c.h.b16 %v6233
  %v6934 = vunpack.c.l.b16 %v6234
  %v6935 = vunpack.c.h.b16 %v6234
  %v6936 = vunpack.c.l.b16 %v6235
  %v6937 = vunpack.c.h.b16 %v6235
  %v6938 = vpack.c.b16 %v6876, %v6874
  %v6939 = vpack.c.b16 %v6877, %v6875
  %v6940 = vpack.c.b16 %v6880, %v6878
  %v6941 = vpack.c.b16 %v6881, %v6879
  %v6942 = vpack.c.b16 %v6884, %v6882
  %v6943 = vpack.c.b16 %v6885, %v6883
  %v6944 = vpack.c.b16 %v6888, %v6886
  %v6945 = vpack.c.b16 %v6889, %v6887
  %v6946 = vpack.c.b16 %v6892, %v6890
  %v6947 = vpack.c.b16 %v6893, %v6891
  %v6948 = vpack.c.b16 %v6896, %v6894
  %v6949 = vpack.c.b16 %v6897, %v6895
  %v6950 = vpack.c.b16 %v6900, %v6898
  %v6951 = vpack.c.b16 %v6901, %v6899
  %v6952 = vpack.c.b16 %v6904, %v6902
  %v6953 = vpack.c.b16 %v6905, %v6903
  %v6954 = vpack.c.b16 %v6908, %v6906
  %v6955 = vpack.c.b16 %v6909, %v6907
  %v6956 = vpack.c.b16 %v6912, %v6910
  %v6957 = vpack.c.b16 %v6913, %v6911
  %v6958 = vpack.c.b16 %v6916, %v6914
  %v6959 = vpack.c.b16 %v6917, %v6915
  %v6960 = vpack.c.b16 %v6920, %v6918
  %v6961 = vpack.c.b16 %v6921, %v6919
  %v6962 = vpack.c.b16 %v6924, %v6922
  %v6963 = vpack.c.b16 %v6925, %v6923
  %v6964 = vpack.c.b16 %v6928, %v6926
  %v6965 = vpack.c.b16 %v6929, %v6927
  %v6966 = vpack.c.b16 %v6932, %v6930
  %v6967 = vpack.c.b16 %v6933, %v6931
  %v6968 = vpack.c.b16 %v6936, %v6934
  %v6969 = vpack.c.b16 %v6937, %v6935
  %7002 = vmatprep.subr.bf16.mxu0 %v6939
  %7003 = vmatpush1.bf16.msra.mxu0 %v6938
  %7004 = vmatprep.subr.bf16.mxu0 %v6941
  %7005 = vmatpush1.bf16.msra.mxu0 %v6940
  %7006 = vmatprep.subr.bf16.mxu0 %v6943
  %7007 = vmatpush1.bf16.msra.mxu0 %v6942
  %7008 = vmatprep.subr.bf16.mxu0 %v6945
  %7009 = vmatpush1.bf16.msra.mxu0 %v6944
  %7010 = vmatprep.subr.bf16.mxu0 %v6947
  %7011 = vmatpush1.bf16.msra.mxu0 %v6946
  %7012 = vmatprep.subr.bf16.mxu0 %v6949
  %7013 = vmatpush1.bf16.msra.mxu0 %v6948
  %7014 = vmatprep.subr.bf16.mxu0 %v6951
  %7015 = vmatpush1.bf16.msra.mxu0 %v6950
  %7016 = vmatprep.subr.bf16.mxu0 %v6953
  %7017 = vmatpush1.bf16.msra.mxu0 %v6952
  %7018 = vmatprep.subr.bf16.mxu0 %v6955
  %7019 = vmatpush1.bf16.msra.mxu0 %v6954
  %7020 = vmatprep.subr.bf16.mxu0 %v6957
  %7021 = vmatpush1.bf16.msra.mxu0 %v6956
  %7022 = vmatprep.subr.bf16.mxu0 %v6959
  %7023 = vmatpush1.bf16.msra.mxu0 %v6958
  %7024 = vmatprep.subr.bf16.mxu0 %v6961
  %7025 = vmatpush1.bf16.msra.mxu0 %v6960
  %7026 = vmatprep.subr.bf16.mxu0 %v6963
  %7027 = vmatpush1.bf16.msra.mxu0 %v6962
  %7028 = vmatprep.subr.bf16.mxu0 %v6965
  %7029 = vmatpush1.bf16.msra.mxu0 %v6964
  %7030 = vmatprep.subr.bf16.mxu0 %v6967
  %7031 = vmatpush1.bf16.msra.mxu0 %v6966
  %7032 = vmatprep.subr.bf16.mxu0 %v6969
  %7033 = vmatpush1.bf16.msra.mxu0 %v6968
  %7034 = vmatprep.mubr.bf16.mxu0 %v6179
  %7035 = vmatmul.mubr.bf16.gmra.mrb[0].mxu0 %v6178
  %v7036 = vpop.f32.mrb[0].mxu0
  %v7037 = vadd.f32 %v6714, %v7036
  %v7038 = vpop.f32.mrb[0].mxu0
  %v7039 = vadd.f32 %v6716, %v7038
  %v7040 = vpop.f32.mrb[0].mxu0
  %v7041 = vadd.f32 %v6718, %v7040
  %v7042 = vpop.f32.mrb[0].mxu0
  %v7043 = vadd.f32 %v6720, %v7042
  %7044 = vmatprep.mubr.bf16.mxu0 %v6181
  %7045 = vmatmul.mubr.bf16.gmra.mrb[0].mxu0 %v6180
  %v7046 = vpop.f32.mrb[0].mxu0
  %v7047 = vadd.f32 %v6724, %v7046
  %v7048 = vpop.f32.mrb[0].mxu0
  %v7049 = vadd.f32 %v6726, %v7048
  %v7050 = vpop.f32.mrb[0].mxu0
  %v7051 = vadd.f32 %v6728, %v7050
  %v7052 = vpop.f32.mrb[0].mxu0
  %v7053 = vadd.f32 %v6730, %v7052
  %7054 = vmatprep.mubr.bf16.mxu0 %v6183
  %7055 = vmatmul.mubr.bf16.gmra.mrb[0].mxu0 %v6182
  %v7056 = vpop.f32.mrb[0].mxu0
  %v7057 = vadd.f32 %v6734, %v7056
  %v7058 = vpop.f32.mrb[0].mxu0
  %v7059 = vadd.f32 %v6736, %v7058
  %v7060 = vpop.f32.mrb[0].mxu0
  %v7061 = vadd.f32 %v6738, %v7060
  %v7062 = vpop.f32.mrb[0].mxu0
  %v7063 = vadd.f32 %v6740, %v7062
  %7064 = vmatprep.mubr.bf16.mxu0 %v6185
  %7065 = vmatmul.mubr.bf16.gmra.mrb[0].mxu0 %v6184
  %v7066 = vpop.f32.mrb[0].mxu0
  %v7067 = vadd.f32 %v6744, %v7066
  %v7068 = vpop.f32.mrb[0].mxu0
  %v7069 = vadd.f32 %v6746, %v7068
  %v7070 = vpop.f32.mrb[0].mxu0
  %v7071 = vadd.f32 %v6748, %v7070
  %v7072 = vpop.f32.mrb[0].mxu0
  %v7073 = vadd.f32 %v6750, %v7072
  %7074 = vmatprep.mubr.bf16.mxu0 %v6187
  %7075 = vmatmul.mubr.bf16.gmra.mrb[0].mxu0 %v6186
  %v7076 = vpop.f32.mrb[0].mxu0
  %v7077 = vadd.f32 %v6754, %v7076
  %v7078 = vpop.f32.mrb[0].mxu0
  %v7079 = vadd.f32 %v6756, %v7078
  %v7080 = vpop.f32.mrb[0].mxu0
  %v7081 = vadd.f32 %v6758, %v7080
  %v7082 = vpop.f32.mrb[0].mxu0
  %v7083 = vadd.f32 %v6760, %v7082
  %7084 = vmatprep.mubr.bf16.mxu0 %v6189
  %7085 = vmatmul.mubr.bf16.gmra.mrb[0].mxu0 %v6188
  %v7086 = vpop.f32.mrb[0].mxu0
  %v7087 = vadd.f32 %v6764, %v7086
  %v7088 = vpop.f32.mrb[0].mxu0
  %v7089 = vadd.f32 %v6766, %v7088
  %v7090 = vpop.f32.mrb[0].mxu0
  %v7091 = vadd.f32 %v6768, %v7090
  %v7092 = vpop.f32.mrb[0].mxu0
  %v7093 = vadd.f32 %v6770, %v7092
  %7094 = vmatprep.mubr.bf16.mxu0 %v6191
  %7095 = vmatmul.mubr.bf16.gmra.mrb[0].mxu0 %v6190
  %v7096 = vpop.f32.mrb[0].mxu0
  %v7097 = vadd.f32 %v6774, %v7096
  %v7098 = vpop.f32.mrb[0].mxu0
  %v7099 = vadd.f32 %v6776, %v7098
  %v7100 = vpop.f32.mrb[0].mxu0
  %v7101 = vadd.f32 %v6778, %v7100
  %v7102 = vpop.f32.mrb[0].mxu0
  %v7103 = vadd.f32 %v6780, %v7102
  %7104 = vmatprep.mubr.bf16.mxu0 %v6193
  %7105 = vmatmul.mubr.bf16.gmra.mrb[0].mxu0 %v6192
  %v7106 = vpop.f32.mrb[0].mxu0
  %v7107 = vadd.f32 %v6784, %v7106
  %v7108 = vpop.f32.mrb[0].mxu0
  %v7109 = vadd.f32 %v6786, %v7108
  %v7110 = vpop.f32.mrb[0].mxu0
  %v7111 = vadd.f32 %v6788, %v7110
  %v7112 = vpop.f32.mrb[0].mxu0
  %v7113 = vadd.f32 %v6790, %v7112
  %7114 = vmatprep.mubr.bf16.mxu0 %v6195
  %7115 = vmatmul.mubr.bf16.gmra.mrb[0].mxu0 %v6194
  %v7116 = vpop.f32.mrb[0].mxu0
  %v7117 = vadd.f32 %v6794, %v7116
  %v7118 = vpop.f32.mrb[0].mxu0
  %v7119 = vadd.f32 %v6796, %v7118
  %v7120 = vpop.f32.mrb[0].mxu0
  %v7121 = vadd.f32 %v6798, %v7120
  %v7122 = vpop.f32.mrb[0].mxu0
  %v7123 = vadd.f32 %v6800, %v7122
  %7124 = vmatprep.mubr.bf16.mxu0 %v6197
  %7125 = vmatmul.mubr.bf16.gmra.mrb[0].mxu0 %v6196
  %v7126 = vpop.f32.mrb[0].mxu0
  %v7127 = vadd.f32 %v6804, %v7126
  %v7128 = vpop.f32.mrb[0].mxu0
  %v7129 = vadd.f32 %v6806, %v7128
  %v7130 = vpop.f32.mrb[0].mxu0
  %v7131 = vadd.f32 %v6808, %v7130
  %v7132 = vpop.f32.mrb[0].mxu0
  %v7133 = vadd.f32 %v6810, %v7132
  %7134 = vmatprep.mubr.bf16.mxu0 %v6199
  %7135 = vmatmul.mubr.bf16.gmra.mrb[0].mxu0 %v6198
  %v7136 = vpop.f32.mrb[0].mxu0
  %v7137 = vadd.f32 %v6814, %v7136
  %v7138 = vpop.f32.mrb[0].mxu0
  %v7139 = vadd.f32 %v6816, %v7138
  %v7140 = vpop.f32.mrb[0].mxu0
  %v7141 = vadd.f32 %v6818, %v7140
  %v7142 = vpop.f32.mrb[0].mxu0
  %v7143 = vadd.f32 %v6820, %v7142
  %7144 = vmatprep.mubr.bf16.mxu0 %v6201
  %7145 = vmatmul.mubr.bf16.gmra.mrb[0].mxu0 %v6200
  %v7146 = vpop.f32.mrb[0].mxu0
  %v7147 = vadd.f32 %v6824, %v7146
  %v7148 = vpop.f32.mrb[0].mxu0
  %v7149 = vadd.f32 %v6826, %v7148
  %v7150 = vpop.f32.mrb[0].mxu0
  %v7151 = vadd.f32 %v6828, %v7150
  %v7152 = vpop.f32.mrb[0].mxu0
  %v7153 = vadd.f32 %v6830, %v7152
  %7154 = vmatprep.mubr.bf16.mxu0 %v6203
  %7155 = vmatmul.mubr.bf16.gmra.mrb[0].mxu0 %v6202
  %v7156 = vpop.f32.mrb[0].mxu0
  %v7157 = vadd.f32 %v6834, %v7156
  %v7158 = vpop.f32.mrb[0].mxu0
  %v7159 = vadd.f32 %v6836, %v7158
  %v7160 = vpop.f32.mrb[0].mxu0
  %v7161 = vadd.f32 %v6838, %v7160
  %v7162 = vpop.f32.mrb[0].mxu0
  %v7163 = vadd.f32 %v6840, %v7162
  %7164 = vdwg.mxu0
  %v7165 = vld [vmem:[#allocation3 + $0x20] sm:$0xff]
  %v7166 = vld [vmem:[#allocation3 + $0x28] sm:$0xff]
  %v7167 = vld [vmem:[#allocation3 + $0x30] sm:$0xff]
  %v7168 = vld [vmem:[#allocation3 + $0x38] sm:$0xff]
  %v7169 = vld [vmem:[#allocation3 + $0x40] sm:$0xff]
  %v7170 = vld [vmem:[#allocation3 + $0x48] sm:$0xff]
  %v7171 = vld [vmem:[#allocation3 + $0x50] sm:$0xff]
  %v7172 = vld [vmem:[#allocation3 + $0x58] sm:$0xff]
  %v7173 = vld [vmem:[#allocation3 + $0x60] sm:$0xff]
  %v7174 = vld [vmem:[#allocation3 + $0x68] sm:$0xff]
  %v7175 = vld [vmem:[#allocation3 + $0x70] sm:$0xff]
  %v7176 = vld [vmem:[#allocation3 + $0x78] sm:$0xff]
  %v7177 = vld [vmem:[#allocation3 + $0x80] sm:$0xff]
  %v7178 = vld [vmem:[#allocation3 + $0x88] sm:$0xff]
  %v7179 = vld [vmem:[#allocation3 + $0x90] sm:$0xff]
  %v7180 = vld [vmem:[#allocation3 + $0x98] sm:$0xff]
  %v7181 = vld [vmem:[#allocation3 + $0xa0] sm:$0xff]
  %v7182 = vld [vmem:[#allocation3 + $0xa8] sm:$0xff]
  %v7183 = vld [vmem:[#allocation3 + $0xb0] sm:$0xff]
  %v7184 = vld [vmem:[#allocation3 + $0xb8] sm:$0xff]
  %v7185 = vld [vmem:[#allocation3 + $0xc0] sm:$0xff]
  %v7186 = vld [vmem:[#allocation3 + $0xc8] sm:$0xff]
  %v7187 = vld [vmem:[#allocation3 + $0xd0] sm:$0xff]
  %v7188 = vld [vmem:[#allocation3 + $0xd8] sm:$0xff]
  %v7189 = vld [vmem:[#allocation3 + $0xe0] sm:$0xff]
  %v7190 = vld [vmem:[#allocation3 + $0xe8] sm:$0xff]
  %v7191 = vld [vmem:[#allocation3 + $0xf0] sm:$0xff]
  %v7192 = vld [vmem:[#allocation3 + $0xf8] sm:$0xff]
  %v7193 = vld [vmem:[#allocation3 + $0x100] sm:$0xff]
  %v7194 = vld [vmem:[#allocation3 + $0x108] sm:$0xff]
  %v7195 = vld [vmem:[#allocation3 + $0x110] sm:$0xff]
  %v7196 = vld [vmem:[#allocation3 + $0x118] sm:$0xff]
  %v7197 = vld [vmem:[#allocation3 + $0x120] sm:$0xff]
  %v7198 = vld [vmem:[#allocation3 + $0x128] sm:$0xff]
  %v7199 = vld [vmem:[#allocation3 + $0x130] sm:$0xff]
  %v7200 = vld [vmem:[#allocation3 + $0x138] sm:$0xff]
  %v7201 = vld [vmem:[#allocation3 + $0x140] sm:$0xff]
  %v7202 = vld [vmem:[#allocation3 + $0x148] sm:$0xff]
  %v7203 = vld [vmem:[#allocation3 + $0x150] sm:$0xff]
  %v7204 = vld [vmem:[#allocation3 + $0x158] sm:$0xff]
  %v7205 = vld [vmem:[#allocation3 + $0x160] sm:$0xff]
  %v7206 = vld [vmem:[#allocation3 + $0x168] sm:$0xff]
  %v7207 = vld [vmem:[#allocation3 + $0x170] sm:$0xff]
  %v7208 = vld [vmem:[#allocation3 + $0x178] sm:$0xff]
  %v7209 = vld [vmem:[#allocation3 + $0x180] sm:$0xff]
  %v7210 = vld [vmem:[#allocation3 + $0x188] sm:$0xff]
  %v7211 = vld [vmem:[#allocation3 + $0x190] sm:$0xff]
  %v7212 = vld [vmem:[#allocation3 + $0x198] sm:$0xff]
  %v7213 = vld [vmem:[#allocation3 + $0x1a0] sm:$0xff]
  %v7214 = vld [vmem:[#allocation3 + $0x1a8] sm:$0xff]
  %v7215 = vld [vmem:[#allocation3 + $0x1b0] sm:$0xff]
  %v7216 = vld [vmem:[#allocation3 + $0x1b8] sm:$0xff]
  %v7217 = vpack.c.bf16 %v7167, %v7165
  %v7218 = vpack.c.bf16 %v7168, %v7166
  %v7219 = vpack.c.bf16 %v7171, %v7169
  %v7220 = vpack.c.bf16 %v7172, %v7170
  %v7221 = vpack.c.bf16 %v7175, %v7173
  %v7222 = vpack.c.bf16 %v7176, %v7174
  %v7223 = vpack.c.bf16 %v7179, %v7177
  %v7224 = vpack.c.bf16 %v7180, %v7178
  %v7225 = vpack.c.bf16 %v7183, %v7181
  %v7226 = vpack.c.bf16 %v7184, %v7182
  %v7227 = vpack.c.bf16 %v7187, %v7185
  %v7228 = vpack.c.bf16 %v7188, %v7186
  %v7229 = vpack.c.bf16 %v7191, %v7189
  %v7230 = vpack.c.bf16 %v7192, %v7190
  %v7231 = vpack.c.bf16 %v7195, %v7193
  %v7232 = vpack.c.bf16 %v7196, %v7194
  %v7233 = vpack.c.bf16 %v7199, %v7197
  %v7234 = vpack.c.bf16 %v7200, %v7198
  %v7235 = vpack.c.bf16 %v7203, %v7201
  %v7236 = vpack.c.bf16 %v7204, %v7202
  %v7237 = vpack.c.bf16 %v7207, %v7205
  %v7238 = vpack.c.bf16 %v7208, %v7206
  %v7239 = vpack.c.bf16 %v7211, %v7209
  %v7240 = vpack.c.bf16 %v7212, %v7210
  %v7241 = vpack.c.bf16 %v7215, %v7213
  %v7242 = vpack.c.bf16 %v7216, %v7214
  %s7243 = scalar_lea.vmem %s5, 512
  %v7244 = vld [vmem:[%s7243] sm:$0xff]
  %v7245 = vld [vmem:[%s7243 + $0x8] sm:$0xff]
  %v7246 = vld [vmem:[%s7243 + $0x10] sm:$0xff]
  %v7247 = vld [vmem:[%s7243 + $0x18] sm:$0xff]
  %v7248 = vld [vmem:[%s7243 + $0x20] sm:$0xff]
  %v7249 = vld [vmem:[%s7243 + $0x28] sm:$0xff]
  %v7250 = vld [vmem:[%s7243 + $0x30] sm:$0xff]
  %v7251 = vld [vmem:[%s7243 + $0x38] sm:$0xff]
  %v7252 = vld [vmem:[%s7243 + $0x40] sm:$0xff]
  %v7253 = vld [vmem:[%s7243 + $0x48] sm:$0xff]
  %v7254 = vld [vmem:[%s7243 + $0x50] sm:$0xff]
  %v7255 = vld [vmem:[%s7243 + $0x58] sm:$0xff]
  %v7256 = vld [vmem:[%s7243 + $0x60] sm:$0xff]
  %v7257 = vld [vmem:[%s7243 + $0x68] sm:$0xff]
  %v7258 = vld [vmem:[%s7243 + $0x70] sm:$0xff]
  %v7259 = vld [vmem:[%s7243 + $0x78] sm:$0xff]
  %v7260 = vld [vmem:[%s7243 + $0x80] sm:$0xff]
  %v7261 = vld [vmem:[%s7243 + $0x88] sm:$0xff]
  %v7262 = vld [vmem:[%s7243 + $0x90] sm:$0xff]
  %v7263 = vld [vmem:[%s7243 + $0x98] sm:$0xff]
  %v7264 = vld [vmem:[%s7243 + $0xa0] sm:$0xff]
  %v7265 = vld [vmem:[%s7243 + $0xa8] sm:$0xff]
  %v7266 = vld [vmem:[%s7243 + $0xb0] sm:$0xff]
  %v7267 = vld [vmem:[%s7243 + $0xb8] sm:$0xff]
  %v7268 = vld [vmem:[%s7243 + $0xc0] sm:$0xff]
  %v7269 = vld [vmem:[%s7243 + $0xc8] sm:$0xff]
  %v7270 = vld [vmem:[%s7243 + $0xd0] sm:$0xff]
  %v7271 = vld [vmem:[%s7243 + $0xd8] sm:$0xff]
  %v7272 = vld [vmem:[%s7243 + $0xe0] sm:$0xff]
  %v7273 = vld [vmem:[%s7243 + $0xe8] sm:$0xff]
  %v7274 = vld [vmem:[%s7243 + $0xf0] sm:$0xff]
  %v7275 = vld [vmem:[%s7243 + $0xf8] sm:$0xff]
  %v7308 = vunpack.c.l.b16 %v7244
  %v7309 = vunpack.c.h.b16 %v7244
  %v7310 = vunpack.c.l.b16 %v7245
  %v7311 = vunpack.c.h.b16 %v7245
  %v7312 = vunpack.c.l.b16 %v7246
  %v7313 = vunpack.c.h.b16 %v7246
  %v7314 = vunpack.c.l.b16 %v7247
  %v7315 = vunpack.c.h.b16 %v7247
  %v7316 = vunpack.c.l.b16 %v7248
  %v7317 = vunpack.c.h.b16 %v7248
  %v7318 = vunpack.c.l.b16 %v7249
  %v7319 = vunpack.c.h.b16 %v7249
  %v7320 = vunpack.c.l.b16 %v7250
  %v7321 = vunpack.c.h.b16 %v7250
  %v7322 = vunpack.c.l.b16 %v7251
  %v7323 = vunpack.c.h.b16 %v7251
  %v7324 = vunpack.c.l.b16 %v7252
  %v7325 = vunpack.c.h.b16 %v7252
  %v7326 = vunpack.c.l.b16 %v7253
  %v7327 = vunpack.c.h.b16 %v7253
  %v7328 = vunpack.c.l.b16 %v7254
  %v7329 = vunpack.c.h.b16 %v7254
  %v7330 = vunpack.c.l.b16 %v7255
  %v7331 = vunpack.c.h.b16 %v7255
  %v7332 = vunpack.c.l.b16 %v7256
  %v7333 = vunpack.c.h.b16 %v7256
  %v7334 = vunpack.c.l.b16 %v7257
  %v7335 = vunpack.c.h.b16 %v7257
  %v7336 = vunpack.c.l.b16 %v7258
  %v7337 = vunpack.c.h.b16 %v7258
  %v7338 = vunpack.c.l.b16 %v7259
  %v7339 = vunpack.c.h.b16 %v7259
  %v7340 = vunpack.c.l.b16 %v7260
  %v7341 = vunpack.c.h.b16 %v7260
  %v7342 = vunpack.c.l.b16 %v7261
  %v7343 = vunpack.c.h.b16 %v7261
  %v7344 = vunpack.c.l.b16 %v7262
  %v7345 = vunpack.c.h.b16 %v7262
  %v7346 = vunpack.c.l.b16 %v7263
  %v7347 = vunpack.c.h.b16 %v7263
  %v7348 = vunpack.c.l.b16 %v7264
  %v7349 = vunpack.c.h.b16 %v7264
  %v7350 = vunpack.c.l.b16 %v7265
  %v7351 = vunpack.c.h.b16 %v7265
  %v7352 = vunpack.c.l.b16 %v7266
  %v7353 = vunpack.c.h.b16 %v7266
  %v7354 = vunpack.c.l.b16 %v7267
  %v7355 = vunpack.c.h.b16 %v7267
  %v7356 = vunpack.c.l.b16 %v7268
  %v7357 = vunpack.c.h.b16 %v7268
  %v7358 = vunpack.c.l.b16 %v7269
  %v7359 = vunpack.c.h.b16 %v7269
  %v7360 = vunpack.c.l.b16 %v7270
  %v7361 = vunpack.c.h.b16 %v7270
  %v7362 = vunpack.c.l.b16 %v7271
  %v7363 = vunpack.c.h.b16 %v7271
  %v7364 = vunpack.c.l.b16 %v7272
  %v7365 = vunpack.c.h.b16 %v7272
  %v7366 = vunpack.c.l.b16 %v7273
  %v7367 = vunpack.c.h.b16 %v7273
  %v7368 = vunpack.c.l.b16 %v7274
  %v7369 = vunpack.c.h.b16 %v7274
  %v7370 = vunpack.c.l.b16 %v7275
  %v7371 = vunpack.c.h.b16 %v7275
  %v7372 = vpack.c.b16 %v7310, %v7308
  %v7373 = vpack.c.b16 %v7311, %v7309
  %v7374 = vpack.c.b16 %v7314, %v7312
  %v7375 = vpack.c.b16 %v7315, %v7313
  %v7376 = vpack.c.b16 %v7318, %v7316
  %v7377 = vpack.c.b16 %v7319, %v7317
  %v7378 = vpack.c.b16 %v7322, %v7320
  %v7379 = vpack.c.b16 %v7323, %v7321
  %v7380 = vpack.c.b16 %v7326, %v7324
  %v7381 = vpack.c.b16 %v7327, %v7325
  %v7382 = vpack.c.b16 %v7330, %v7328
  %v7383 = vpack.c.b16 %v7331, %v7329
  %v7384 = vpack.c.b16 %v7334, %v7332
  %v7385 = vpack.c.b16 %v7335, %v7333
  %v7386 = vpack.c.b16 %v7338, %v7336
  %v7387 = vpack.c.b16 %v7339, %v7337
  %v7388 = vpack.c.b16 %v7342, %v7340
  %v7389 = vpack.c.b16 %v7343, %v7341
  %v7390 = vpack.c.b16 %v7346, %v7344
  %v7391 = vpack.c.b16 %v7347, %v7345
  %v7392 = vpack.c.b16 %v7350, %v7348
  %v7393 = vpack.c.b16 %v7351, %v7349
  %v7394 = vpack.c.b16 %v7354, %v7352
  %v7395 = vpack.c.b16 %v7355, %v7353
  %v7396 = vpack.c.b16 %v7358, %v7356
  %v7397 = vpack.c.b16 %v7359, %v7357
  %v7398 = vpack.c.b16 %v7362, %v7360
  %v7399 = vpack.c.b16 %v7363, %v7361
  %v7400 = vpack.c.b16 %v7366, %v7364
  %v7401 = vpack.c.b16 %v7367, %v7365
  %v7402 = vpack.c.b16 %v7370, %v7368
  %v7403 = vpack.c.b16 %v7371, %v7369
  %7436 = vmatprep.subr.bf16.mxu0 %v7373
  %7437 = vmatpush1.bf16.msra.mxu0 %v7372
  %7438 = vmatprep.subr.bf16.mxu0 %v7375
  %7439 = vmatpush1.bf16.msra.mxu0 %v7374
  %7440 = vmatprep.subr.bf16.mxu0 %v7377
  %7441 = vmatpush1.bf16.msra.mxu0 %v7376
  %7442 = vmatprep.subr.bf16.mxu0 %v7379
  %7443 = vmatpush1.bf16.msra.mxu0 %v7378
  %7444 = vmatprep.subr.bf16.mxu0 %v7381
  %7445 = vmatpush1.bf16.msra.mxu0 %v7380
  %7446 = vmatprep.subr.bf16.mxu0 %v7383
  %7447 = vmatpush1.bf16.msra.mxu0 %v7382
  %7448 = vmatprep.subr.bf16.mxu0 %v7385
  %7449 = vmatpush1.bf16.msra.mxu0 %v7384
  %7450 = vmatprep.subr.bf16.mxu0 %v7387
  %7451 = vmatpush1.bf16.msra.mxu0 %v7386
  %7452 = vmatprep.subr.bf16.mxu0 %v7389
  %7453 = vmatpush1.bf16.msra.mxu0 %v7388
  %7454 = vmatprep.subr.bf16.mxu0 %v7391
  %7455 = vmatpush1.bf16.msra.mxu0 %v7390
  %7456 = vmatprep.subr.bf16.mxu0 %v7393
  %7457 = vmatpush1.bf16.msra.mxu0 %v7392
  %7458 = vmatprep.subr.bf16.mxu0 %v7395
  %7459 = vmatpush1.bf16.msra.mxu0 %v7394
  %7460 = vmatprep.subr.bf16.mxu0 %v7397
  %7461 = vmatpush1.bf16.msra.mxu0 %v7396
  %7462 = vmatprep.subr.bf16.mxu0 %v7399
  %7463 = vmatpush1.bf16.msra.mxu0 %v7398
  %7464 = vmatprep.subr.bf16.mxu0 %v7401
  %7465 = vmatpush1.bf16.msra.mxu0 %v7400
  %7466 = vmatprep.subr.bf16.mxu0 %v7403
  %7467 = vmatpush1.bf16.msra.mxu0 %v7402
  %7468 = vmatprep.mubr.bf16.mxu0 %v7218
  %7469 = vmatmul.mubr.bf16.gmra.mrb[0].mxu0 %v7217
  %v7470 = vpop.f32.mrb[0].mxu0
  %v7471 = vadd.f32 0.0, %v7470
  %v7472 = vpop.f32.mrb[0].mxu0
  %v7473 = vadd.f32 0.0, %v7472
  %v7474 = vpop.f32.mrb[0].mxu0
  %v7475 = vadd.f32 0.0, %v7474
  %v7476 = vpop.f32.mrb[0].mxu0
  %v7477 = vadd.f32 0.0, %v7476
  %7478 = vmatprep.mubr.bf16.mxu0 %v7220
  %7479 = vmatmul.mubr.bf16.gmra.mrb[0].mxu0 %v7219
  %v7480 = vpop.f32.mrb[0].mxu0
  %v7481 = vadd.f32 0.0, %v7480
  %v7482 = vpop.f32.mrb[0].mxu0
  %v7483 = vadd.f32 0.0, %v7482
  %v7484 = vpop.f32.mrb[0].mxu0
  %v7485 = vadd.f32 0.0, %v7484
  %v7486 = vpop.f32.mrb[0].mxu0
  %v7487 = vadd.f32 0.0, %v7486
  %7488 = vmatprep.mubr.bf16.mxu0 %v7222
  %7489 = vmatmul.mubr.bf16.gmra.mrb[0].mxu0 %v7221
  %v7490 = vpop.f32.mrb[0].mxu0
  %v7491 = vadd.f32 0.0, %v7490
  %v7492 = vpop.f32.mrb[0].mxu0
  %v7493 = vadd.f32 0.0, %v7492
  %v7494 = vpop.f32.mrb[0].mxu0
  %v7495 = vadd.f32 0.0, %v7494
  %v7496 = vpop.f32.mrb[0].mxu0
  %v7497 = vadd.f32 0.0, %v7496
  %7498 = vmatprep.mubr.bf16.mxu0 %v7224
  %7499 = vmatmul.mubr.bf16.gmra.mrb[0].mxu0 %v7223
  %v7500 = vpop.f32.mrb[0].mxu0
  %v7501 = vadd.f32 0.0, %v7500
  %v7502 = vpop.f32.mrb[0].mxu0
  %v7503 = vadd.f32 0.0, %v7502
  %v7504 = vpop.f32.mrb[0].mxu0
  %v7505 = vadd.f32 0.0, %v7504
  %v7506 = vpop.f32.mrb[0].mxu0
  %v7507 = vadd.f32 0.0, %v7506
  %7508 = vmatprep.mubr.bf16.mxu0 %v7226
  %7509 = vmatmul.mubr.bf16.gmra.mrb[0].mxu0 %v7225
  %v7510 = vpop.f32.mrb[0].mxu0
  %v7511 = vadd.f32 0.0, %v7510
  %v7512 = vpop.f32.mrb[0].mxu0
  %v7513 = vadd.f32 0.0, %v7512
  %v7514 = vpop.f32.mrb[0].mxu0
  %v7515 = vadd.f32 0.0, %v7514
  %v7516 = vpop.f32.mrb[0].mxu0
  %v7517 = vadd.f32 0.0, %v7516
  %7518 = vmatprep.mubr.bf16.mxu0 %v7228
  %7519 = vmatmul.mubr.bf16.gmra.mrb[0].mxu0 %v7227
  %v7520 = vpop.f32.mrb[0].mxu0
  %v7521 = vadd.f32 0.0, %v7520
  %v7522 = vpop.f32.mrb[0].mxu0
  %v7523 = vadd.f32 0.0, %v7522
  %v7524 = vpop.f32.mrb[0].mxu0
  %v7525 = vadd.f32 0.0, %v7524
  %v7526 = vpop.f32.mrb[0].mxu0
  %v7527 = vadd.f32 0.0, %v7526
  %7528 = vmatprep.mubr.bf16.mxu0 %v7230
  %7529 = vmatmul.mubr.bf16.gmra.mrb[0].mxu0 %v7229
  %v7530 = vpop.f32.mrb[0].mxu0
  %v7531 = vadd.f32 0.0, %v7530
  %v7532 = vpop.f32.mrb[0].mxu0
  %v7533 = vadd.f32 0.0, %v7532
  %v7534 = vpop.f32.mrb[0].mxu0
  %v7535 = vadd.f32 0.0, %v7534
  %v7536 = vpop.f32.mrb[0].mxu0
  %v7537 = vadd.f32 0.0, %v7536
  %7538 = vmatprep.mubr.bf16.mxu0 %v7232
  %7539 = vmatmul.mubr.bf16.gmra.mrb[0].mxu0 %v7231
  %v7540 = vpop.f32.mrb[0].mxu0
  %v7541 = vadd.f32 0.0, %v7540
  %v7542 = vpop.f32.mrb[0].mxu0
  %v7543 = vadd.f32 0.0, %v7542
  %v7544 = vpop.f32.mrb[0].mxu0
  %v7545 = vadd.f32 0.0, %v7544
  %v7546 = vpop.f32.mrb[0].mxu0
  %v7547 = vadd.f32 0.0, %v7546
  %7548 = vmatprep.mubr.bf16.mxu0 %v7234
  %7549 = vmatmul.mubr.bf16.gmra.mrb[0].mxu0 %v7233
  %v7550 = vpop.f32.mrb[0].mxu0
  %v7551 = vadd.f32 0.0, %v7550
  %v7552 = vpop.f32.mrb[0].mxu0
  %v7553 = vadd.f32 0.0, %v7552
  %v7554 = vpop.f32.mrb[0].mxu0
  %v7555 = vadd.f32 0.0, %v7554
  %v7556 = vpop.f32.mrb[0].mxu0
  %v7557 = vadd.f32 0.0, %v7556
  %7558 = vmatprep.mubr.bf16.mxu0 %v7236
  %7559 = vmatmul.mubr.bf16.gmra.mrb[0].mxu0 %v7235
  %v7560 = vpop.f32.mrb[0].mxu0
  %v7561 = vadd.f32 0.0, %v7560
  %v7562 = vpop.f32.mrb[0].mxu0
  %v7563 = vadd.f32 0.0, %v7562
  %v7564 = vpop.f32.mrb[0].mxu0
  %v7565 = vadd.f32 0.0, %v7564
  %v7566 = vpop.f32.mrb[0].mxu0
  %v7567 = vadd.f32 0.0, %v7566
  %7568 = vmatprep.mubr.bf16.mxu0 %v7238
  %7569 = vmatmul.mubr.bf16.gmra.mrb[0].mxu0 %v7237
  %v7570 = vpop.f32.mrb[0].mxu0
  %v7571 = vadd.f32 0.0, %v7570
  %v7572 = vpop.f32.mrb[0].mxu0
  %v7573 = vadd.f32 0.0, %v7572
  %v7574 = vpop.f32.mrb[0].mxu0
  %v7575 = vadd.f32 0.0, %v7574
  %v7576 = vpop.f32.mrb[0].mxu0
  %v7577 = vadd.f32 0.0, %v7576
  %7578 = vmatprep.mubr.bf16.mxu0 %v7240
  %7579 = vmatmul.mubr.bf16.gmra.mrb[0].mxu0 %v7239
  %v7580 = vpop.f32.mrb[0].mxu0
  %v7581 = vadd.f32 0.0, %v7580
  %v7582 = vpop.f32.mrb[0].mxu0
  %v7583 = vadd.f32 0.0, %v7582
  %v7584 = vpop.f32.mrb[0].mxu0
  %v7585 = vadd.f32 0.0, %v7584
  %v7586 = vpop.f32.mrb[0].mxu0
  %v7587 = vadd.f32 0.0, %v7586
  %7588 = vmatprep.mubr.bf16.mxu0 %v7242
  %7589 = vmatmul.mubr.bf16.gmra.mrb[0].mxu0 %v7241
  %v7590 = vpop.f32.mrb[0].mxu0
  %v7591 = vadd.f32 0.0, %v7590
  %v7592 = vpop.f32.mrb[0].mxu0
  %v7593 = vadd.f32 0.0, %v7592
  %v7594 = vpop.f32.mrb[0].mxu0
  %v7595 = vadd.f32 0.0, %v7594
  %v7596 = vpop.f32.mrb[0].mxu0
  %v7597 = vadd.f32 0.0, %v7596
  %7598 = vdwg.mxu0
  %v7599 = vadd.f32 %v7037, %v7471
  %v7600 = vadd.f32 %v7039, %v7473
  %v7601 = vadd.f32 %v7041, %v7475
  %v7602 = vadd.f32 %v7043, %v7477
  %v7603 = vadd.f32 %v7047, %v7481
  %v7604 = vadd.f32 %v7049, %v7483
  %v7605 = vadd.f32 %v7051, %v7485
  %v7606 = vadd.f32 %v7053, %v7487
  %v7607 = vadd.f32 %v7057, %v7491
  %v7608 = vadd.f32 %v7059, %v7493
  %v7609 = vadd.f32 %v7061, %v7495
  %v7610 = vadd.f32 %v7063, %v7497
  %v7611 = vadd.f32 %v7067, %v7501
  %v7612 = vadd.f32 %v7069, %v7503
  %v7613 = vadd.f32 %v7071, %v7505
  %v7614 = vadd.f32 %v7073, %v7507
  %v7615 = vadd.f32 %v7077, %v7511
  %v7616 = vadd.f32 %v7079, %v7513
  %v7617 = vadd.f32 %v7081, %v7515
  %v7618 = vadd.f32 %v7083, %v7517
  %v7619 = vadd.f32 %v7087, %v7521
  %v7620 = vadd.f32 %v7089, %v7523
  %v7621 = vadd.f32 %v7091, %v7525
  %v7622 = vadd.f32 %v7093, %v7527
  %v7623 = vadd.f32 %v7097, %v7531
  %v7624 = vadd.f32 %v7099, %v7533
  %v7625 = vadd.f32 %v7101, %v7535
  %v7626 = vadd.f32 %v7103, %v7537
  %v7627 = vadd.f32 %v7107, %v7541
  %v7628 = vadd.f32 %v7109, %v7543
  %v7629 = vadd.f32 %v7111, %v7545
  %v7630 = vadd.f32 %v7113, %v7547
  %v7631 = vadd.f32 %v7117, %v7551
  %v7632 = vadd.f32 %v7119, %v7553
  %v7633 = vadd.f32 %v7121, %v7555
  %v7634 = vadd.f32 %v7123, %v7557
  %v7635 = vadd.f32 %v7127, %v7561
  %v7636 = vadd.f32 %v7129, %v7563
  %v7637 = vadd.f32 %v7131, %v7565
  %v7638 = vadd.f32 %v7133, %v7567
  %v7639 = vadd.f32 %v7137, %v7571
  %v7640 = vadd.f32 %v7139, %v7573
  %v7641 = vadd.f32 %v7141, %v7575
  %v7642 = vadd.f32 %v7143, %v7577
  %v7643 = vadd.f32 %v7147, %v7581
  %v7644 = vadd.f32 %v7149, %v7583
  %v7645 = vadd.f32 %v7151, %v7585
  %v7646 = vadd.f32 %v7153, %v7587
  %v7647 = vadd.f32 %v7157, %v7591
  %v7648 = vadd.f32 %v7159, %v7593
  %v7649 = vadd.f32 %v7161, %v7595
  %v7650 = vadd.f32 %v7163, %v7597
  %v7651 = vld [vmem:[#allocation3 + $0x20] sm:$0xfe]
  %v7652 = vld [vmem:[#allocation3 + $0x28] sm:$0xfe]
  %v7653 = vld [vmem:[#allocation3 + $0x30] sm:$0xff]
  %v7654 = vld [vmem:[#allocation3 + $0x38] sm:$0xff]
  %v7655 = vld [vmem:[#allocation3 + $0x40] sm:$0xff]
  %v7656 = vld [vmem:[#allocation3 + $0x48] sm:$0xff]
  %v7657 = vld [vmem:[#allocation3 + $0x50] sm:$0xff]
  %v7658 = vld [vmem:[#allocation3 + $0x58] sm:$0xff]
  %v7659 = vld [vmem:[#allocation3 + $0x60] sm:$0xff]
  %v7660 = vld [vmem:[#allocation3 + $0x68] sm:$0xff]
  %v7661 = vld [vmem:[#allocation3 + $0x70] sm:$0xff]
  %v7662 = vld [vmem:[#allocation3 + $0x78] sm:$0xff]
  %v7663 = vld [vmem:[#allocation3 + $0x80] sm:$0xff]
  %v7664 = vld [vmem:[#allocation3 + $0x88] sm:$0xff]
  %v7665 = vld [vmem:[#allocation3 + $0x90] sm:$0xff]
  %v7666 = vld [vmem:[#allocation3 + $0x98] sm:$0xff]
  %v7667 = vld [vmem:[#allocation3 + $0xa0] sm:$0xff]
  %v7668 = vld [vmem:[#allocation3 + $0xa8] sm:$0xff]
  %v7669 = vld [vmem:[#allocation3 + $0xb0] sm:$0xff]
  %v7670 = vld [vmem:[#allocation3 + $0xb8] sm:$0xff]
  %v7671 = vld [vmem:[#allocation3 + $0xc0] sm:$0xff]
  %v7672 = vld [vmem:[#allocation3 + $0xc8] sm:$0xff]
  %v7673 = vld [vmem:[#allocation3 + $0xd0] sm:$0xff]
  %v7674 = vld [vmem:[#allocation3 + $0xd8] sm:$0xff]
  %v7675 = vld [vmem:[#allocation3 + $0xe0] sm:$0xff]
  %v7676 = vld [vmem:[#allocation3 + $0xe8] sm:$0xff]
  %v7677 = vld [vmem:[#allocation3 + $0xf0] sm:$0xff]
  %v7678 = vld [vmem:[#allocation3 + $0xf8] sm:$0xff]
  %v7679 = vld [vmem:[#allocation3 + $0x100] sm:$0xff]
  %v7680 = vld [vmem:[#allocation3 + $0x108] sm:$0xff]
  %v7681 = vld [vmem:[#allocation3 + $0x110] sm:$0xff]
  %v7682 = vld [vmem:[#allocation3 + $0x118] sm:$0xff]
  %v7683 = vld [vmem:[#allocation3 + $0x120] sm:$0xff]
  %v7684 = vld [vmem:[#allocation3 + $0x128] sm:$0xff]
  %v7685 = vld [vmem:[#allocation3 + $0x130] sm:$0xff]
  %v7686 = vld [vmem:[#allocation3 + $0x138] sm:$0xff]
  %v7687 = vld [vmem:[#allocation3 + $0x140] sm:$0xff]
  %v7688 = vld [vmem:[#allocation3 + $0x148] sm:$0xff]
  %v7689 = vld [vmem:[#allocation3 + $0x150] sm:$0xff]
  %v7690 = vld [vmem:[#allocation3 + $0x158] sm:$0xff]
  %v7691 = vld [vmem:[#allocation3 + $0x160] sm:$0xff]
  %v7692 = vld [vmem:[#allocation3 + $0x168] sm:$0xff]
  %v7693 = vld [vmem:[#allocation3 + $0x170] sm:$0xff]
  %v7694 = vld [vmem:[#allocation3 + $0x178] sm:$0xff]
  %v7695 = vld [vmem:[#allocation3 + $0x180] sm:$0xff]
  %v7696 = vld [vmem:[#allocation3 + $0x188] sm:$0xff]
  %v7697 = vld [vmem:[#allocation3 + $0x190] sm:$0xff]
  %v7698 = vld [vmem:[#allocation3 + $0x198] sm:$0xff]
  %v7699 = vld [vmem:[#allocation3 + $0x1a0] sm:$0xff]
  %v7700 = vld [vmem:[#allocation3 + $0x1a8] sm:$0xff]
  %v7701 = vld [vmem:[#allocation3 + $0x1b0] sm:$0xff]
  %v7702 = vld [vmem:[#allocation3 + $0x1b8] sm:$0xff]
  %v7703 = vld [vmem:[#allocation3 + $0x1c0] sm:$0x1]
  %v7704 = vld [vmem:[#allocation3 + $0x1c8] sm:$0x1]
  %v7705 = vpack.c.bf16 %v7653, %v7651
  %v7706 = vpack.c.bf16 %v7654, %v7652
  %v7707 = vpack.c.bf16 %v7657, %v7655
  %v7708 = vpack.c.bf16 %v7658, %v7656
  %v7709 = vpack.c.bf16 %v7661, %v7659
  %v7710 = vpack.c.bf16 %v7662, %v7660
  %v7711 = vpack.c.bf16 %v7665, %v7663
  %v7712 = vpack.c.bf16 %v7666, %v7664
  %v7713 = vpack.c.bf16 %v7669, %v7667
  %v7714 = vpack.c.bf16 %v7670, %v7668
  %v7715 = vpack.c.bf16 %v7673, %v7671
  %v7716 = vpack.c.bf16 %v7674, %v7672
  %v7717 = vpack.c.bf16 %v7677, %v7675
  %v7718 = vpack.c.bf16 %v7678, %v7676
  %v7719 = vpack.c.bf16 %v7681, %v7679
  %v7720 = vpack.c.bf16 %v7682, %v7680
  %v7721 = vpack.c.bf16 %v7685, %v7683
  %v7722 = vpack.c.bf16 %v7686, %v7684
  %v7723 = vpack.c.bf16 %v7689, %v7687
  %v7724 = vpack.c.bf16 %v7690, %v7688
  %v7725 = vpack.c.bf16 %v7693, %v7691
  %v7726 = vpack.c.bf16 %v7694, %v7692
  %v7727 = vpack.c.bf16 %v7697, %v7695
  %v7728 = vpack.c.bf16 %v7698, %v7696
  %v7729 = vpack.c.bf16 %v7701, %v7699
  %v7730 = vpack.c.bf16 %v7702, %v7700
  %v7731 = vpack.c.bf16 %v7703, %v7703
  %v7732 = vpack.c.bf16 %v7704, %v7704
  %s7733 = scalar_lea.vmem %s5, 768
  %v7734 = vld [vmem:[%s7733] sm:$0xff]
  %v7735 = vld [vmem:[%s7733 + $0x8] sm:$0xff]
  %v7736 = vld [vmem:[%s7733 + $0x10] sm:$0xff]
  %v7737 = vld [vmem:[%s7733 + $0x18] sm:$0xff]
  %v7738 = vld [vmem:[%s7733 + $0x20] sm:$0xff]
  %v7739 = vld [vmem:[%s7733 + $0x28] sm:$0xff]
  %v7740 = vld [vmem:[%s7733 + $0x30] sm:$0xff]
  %v7741 = vld [vmem:[%s7733 + $0x38] sm:$0xff]
  %v7742 = vld [vmem:[%s7733 + $0x40] sm:$0xff]
  %v7743 = vld [vmem:[%s7733 + $0x48] sm:$0xff]
  %v7744 = vld [vmem:[%s7733 + $0x50] sm:$0xff]
  %v7745 = vld [vmem:[%s7733 + $0x58] sm:$0xff]
  %v7746 = vld [vmem:[%s7733 + $0x60] sm:$0xff]
  %v7747 = vld [vmem:[%s7733 + $0x68] sm:$0xff]
  %v7748 = vld [vmem:[%s7733 + $0x70] sm:$0xff]
  %v7749 = vld [vmem:[%s7733 + $0x78] sm:$0xff]
  %v7750 = vld [vmem:[%s7733 + $0x80] sm:$0xff]
  %v7751 = vld [vmem:[%s7733 + $0x88] sm:$0xff]
  %v7752 = vld [vmem:[%s7733 + $0x90] sm:$0xff]
  %v7753 = vld [vmem:[%s7733 + $0x98] sm:$0xff]
  %v7754 = vld [vmem:[%s7733 + $0xa0] sm:$0xff]
  %v7755 = vld [vmem:[%s7733 + $0xa8] sm:$0xff]
  %v7756 = vld [vmem:[%s7733 + $0xb0] sm:$0xff]
  %v7757 = vld [vmem:[%s7733 + $0xb8] sm:$0xff]
  %v7758 = vld [vmem:[%s7733 + $0xc0] sm:$0xff]
  %v7759 = vld [vmem:[%s7733 + $0xc8] sm:$0xff]
  %v7760 = vld [vmem:[%s7733 + $0xd0] sm:$0xff]
  %v7761 = vld [vmem:[%s7733 + $0xd8] sm:$0xff]
  %v7762 = vld [vmem:[%s7733 + $0xe0] sm:$0xff]
  %v7763 = vld [vmem:[%s7733 + $0xe8] sm:$0xff]
  %v7764 = vld [vmem:[%s7733 + $0xf0] sm:$0xff]
  %v7765 = vld [vmem:[%s7733 + $0xf8] sm:$0xff]
  %v7767 = vshrl.u32 %v7705, 16
  %v7769 = vshll.u32 %v7705, 16
  %v7771 = vrot.slane %v7769, 1
  %v7772 = vor.u32 %v7767, %v7771
  %v7774 = vshll.u32 %v7707, 16
  %v7776 = vrot.slane %v7774, 1
  %v7777 = vsel %vm1207, %v7772, %v7776
  %v7779 = vshrl.u32 %v7706, 16
  %v7781 = vshll.u32 %v7706, 16
  %v7783 = vrot.slane %v7781, 1
  %v7784 = vor.u32 %v7779, %v7783
  %v7786 = vshll.u32 %v7708, 16
  %v7788 = vrot.slane %v7786, 1
  %v7789 = vsel %vm1207, %v7784, %v7788
  %v7790 = vshrl.u32 %v7707, 16
  %v7792 = vor.u32 %v7790, %v7776
  %v7794 = vshll.u32 %v7709, 16
  %v7796 = vrot.slane %v7794, 1
  %v7797 = vsel %vm1207, %v7792, %v7796
  %v7798 = vshrl.u32 %v7708, 16
  %v7800 = vor.u32 %v7798, %v7788
  %v7802 = vshll.u32 %v7710, 16
  %v7804 = vrot.slane %v7802, 1
  %v7805 = vsel %vm1207, %v7800, %v7804
  %v7806 = vshrl.u32 %v7709, 16
  %v7808 = vor.u32 %v7806, %v7796
  %v7810 = vshll.u32 %v7711, 16
  %v7812 = vrot.slane %v7810, 1
  %v7813 = vsel %vm1207, %v7808, %v7812
  %v7814 = vshrl.u32 %v7710, 16
  %v7816 = vor.u32 %v7814, %v7804
  %v7818 = vshll.u32 %v7712, 16
  %v7820 = vrot.slane %v7818, 1
  %v7821 = vsel %vm1207, %v7816, %v7820
  %v7822 = vshrl.u32 %v7711, 16
  %v7824 = vor.u32 %v7822, %v7812
  %v7826 = vshll.u32 %v7713, 16
  %v7828 = vrot.slane %v7826, 1
  %v7829 = vsel %vm1207, %v7824, %v7828
  %v7830 = vshrl.u32 %v7712, 16
  %v7832 = vor.u32 %v7830, %v7820
  %v7834 = vshll.u32 %v7714, 16
  %v7836 = vrot.slane %v7834, 1
  %v7837 = vsel %vm1207, %v7832, %v7836
  %v7838 = vshrl.u32 %v7713, 16
  %v7840 = vor.u32 %v7838, %v7828
  %v7842 = vshll.u32 %v7715, 16
  %v7844 = vrot.slane %v7842, 1
  %v7845 = vsel %vm1207, %v7840, %v7844
  %v7846 = vshrl.u32 %v7714, 16
  %v7848 = vor.u32 %v7846, %v7836
  %v7850 = vshll.u32 %v7716, 16
  %v7852 = vrot.slane %v7850, 1
  %v7853 = vsel %vm1207, %v7848, %v7852
  %v7854 = vshrl.u32 %v7715, 16
  %v7856 = vor.u32 %v7854, %v7844
  %v7858 = vshll.u32 %v7717, 16
  %v7860 = vrot.slane %v7858, 1
  %v7861 = vsel %vm1207, %v7856, %v7860
  %v7862 = vshrl.u32 %v7716, 16
  %v7864 = vor.u32 %v7862, %v7852
  %v7866 = vshll.u32 %v7718, 16
  %v7868 = vrot.slane %v7866, 1
  %v7869 = vsel %vm1207, %v7864, %v7868
  %v7870 = vshrl.u32 %v7717, 16
  %v7872 = vor.u32 %v7870, %v7860
  %v7874 = vshll.u32 %v7719, 16
  %v7876 = vrot.slane %v7874, 1
  %v7877 = vsel %vm1207, %v7872, %v7876
  %v7878 = vshrl.u32 %v7718, 16
  %v7880 = vor.u32 %v7878, %v7868
  %v7882 = vshll.u32 %v7720, 16
  %v7884 = vrot.slane %v7882, 1
  %v7885 = vsel %vm1207, %v7880, %v7884
  %v7886 = vshrl.u32 %v7719, 16
  %v7888 = vor.u32 %v7886, %v7876
  %v7890 = vshll.u32 %v7721, 16
  %v7892 = vrot.slane %v7890, 1
  %v7893 = vsel %vm1207, %v7888, %v7892
  %v7894 = vshrl.u32 %v7720, 16
  %v7896 = vor.u32 %v7894, %v7884
  %v7898 = vshll.u32 %v7722, 16
  %v7900 = vrot.slane %v7898, 1
  %v7901 = vsel %vm1207, %v7896, %v7900
  %v7902 = vshrl.u32 %v7721, 16
  %v7904 = vor.u32 %v7902, %v7892
  %v7906 = vshll.u32 %v7723, 16
  %v7908 = vrot.slane %v7906, 1
  %v7909 = vsel %vm1207, %v7904, %v7908
  %v7910 = vshrl.u32 %v7722, 16
  %v7912 = vor.u32 %v7910, %v7900
  %v7914 = vshll.u32 %v7724, 16
  %v7916 = vrot.slane %v7914, 1
  %v7917 = vsel %vm1207, %v7912, %v7916
  %v7918 = vshrl.u32 %v7723, 16
  %v7920 = vor.u32 %v7918, %v7908
  %v7922 = vshll.u32 %v7725, 16
  %v7924 = vrot.slane %v7922, 1
  %v7925 = vsel %vm1207, %v7920, %v7924
  %v7926 = vshrl.u32 %v7724, 16
  %v7928 = vor.u32 %v7926, %v7916
  %v7930 = vshll.u32 %v7726, 16
  %v7932 = vrot.slane %v7930, 1
  %v7933 = vsel %vm1207, %v7928, %v7932
  %v7934 = vshrl.u32 %v7725, 16
  %v7936 = vor.u32 %v7934, %v7924
  %v7938 = vshll.u32 %v7727, 16
  %v7940 = vrot.slane %v7938, 1
  %v7941 = vsel %vm1207, %v7936, %v7940
  %v7942 = vshrl.u32 %v7726, 16
  %v7944 = vor.u32 %v7942, %v7932
  %v7946 = vshll.u32 %v7728, 16
  %v7948 = vrot.slane %v7946, 1
  %v7949 = vsel %vm1207, %v7944, %v7948
  %v7950 = vshrl.u32 %v7727, 16
  %v7952 = vor.u32 %v7950, %v7940
  %v7954 = vshll.u32 %v7729, 16
  %v7956 = vrot.slane %v7954, 1
  %v7957 = vsel %vm1207, %v7952, %v7956
  %v7958 = vshrl.u32 %v7728, 16
  %v7960 = vor.u32 %v7958, %v7948
  %v7962 = vshll.u32 %v7730, 16
  %v7964 = vrot.slane %v7962, 1
  %v7965 = vsel %vm1207, %v7960, %v7964
  %v7966 = vshrl.u32 %v7729, 16
  %v7968 = vor.u32 %v7966, %v7956
  %v7970 = vshll.u32 %v7731, 16
  %v7972 = vrot.slane %v7970, 1
  %v7973 = vsel %vm1207, %v7968, %v7972
  %v7974 = vshrl.u32 %v7730, 16
  %v7976 = vor.u32 %v7974, %v7964
  %v7978 = vshll.u32 %v7732, 16
  %v7980 = vrot.slane %v7978, 1
  %v7981 = vsel %vm1207, %v7976, %v7980
  %v8040 = vunpack.c.l.b16 %v7734
  %v8041 = vunpack.c.h.b16 %v7734
  %v8042 = vunpack.c.l.b16 %v7735
  %v8043 = vunpack.c.h.b16 %v7735
  %v8044 = vunpack.c.l.b16 %v7736
  %v8045 = vunpack.c.h.b16 %v7736
  %v8046 = vunpack.c.l.b16 %v7737
  %v8047 = vunpack.c.h.b16 %v7737
  %v8048 = vunpack.c.l.b16 %v7738
  %v8049 = vunpack.c.h.b16 %v7738
  %v8050 = vunpack.c.l.b16 %v7739
  %v8051 = vunpack.c.h.b16 %v7739
  %v8052 = vunpack.c.l.b16 %v7740
  %v8053 = vunpack.c.h.b16 %v7740
  %v8054 = vunpack.c.l.b16 %v7741
  %v8055 = vunpack.c.h.b16 %v7741
  %v8056 = vunpack.c.l.b16 %v7742
  %v8057 = vunpack.c.h.b16 %v7742
  %v8058 = vunpack.c.l.b16 %v7743
  %v8059 = vunpack.c.h.b16 %v7743
  %v8060 = vunpack.c.l.b16 %v7744
  %v8061 = vunpack.c.h.b16 %v7744
  %v8062 = vunpack.c.l.b16 %v7745
  %v8063 = vunpack.c.h.b16 %v7745
  %v8064 = vunpack.c.l.b16 %v7746
  %v8065 = vunpack.c.h.b16 %v7746
  %v8066 = vunpack.c.l.b16 %v7747
  %v8067 = vunpack.c.h.b16 %v7747
  %v8068 = vunpack.c.l.b16 %v7748
  %v8069 = vunpack.c.h.b16 %v7748
  %v8070 = vunpack.c.l.b16 %v7749
  %v8071 = vunpack.c.h.b16 %v7749
  %v8072 = vunpack.c.l.b16 %v7750
  %v8073 = vunpack.c.h.b16 %v7750
  %v8074 = vunpack.c.l.b16 %v7751
  %v8075 = vunpack.c.h.b16 %v7751
  %v8076 = vunpack.c.l.b16 %v7752
  %v8077 = vunpack.c.h.b16 %v7752
  %v8078 = vunpack.c.l.b16 %v7753
  %v8079 = vunpack.c.h.b16 %v7753
  %v8080 = vunpack.c.l.b16 %v7754
  %v8081 = vunpack.c.h.b16 %v7754
  %v8082 = vunpack.c.l.b16 %v7755
  %v8083 = vunpack.c.h.b16 %v7755
  %v8084 = vunpack.c.l.b16 %v7756
  %v8085 = vunpack.c.h.b16 %v7756
  %v8086 = vunpack.c.l.b16 %v7757
  %v8087 = vunpack.c.h.b16 %v7757
  %v8088 = vunpack.c.l.b16 %v7758
  %v8089 = vunpack.c.h.b16 %v7758
  %v8090 = vunpack.c.l.b16 %v7759
  %v8091 = vunpack.c.h.b16 %v7759
  %v8092 = vunpack.c.l.b16 %v7760
  %v8093 = vunpack.c.h.b16 %v7760
  %v8094 = vunpack.c.l.b16 %v7761
  %v8095 = vunpack.c.h.b16 %v7761
  %v8096 = vunpack.c.l.b16 %v7762
  %v8097 = vunpack.c.h.b16 %v7762
  %v8098 = vunpack.c.l.b16 %v7763
  %v8099 = vunpack.c.h.b16 %v7763
  %v8100 = vunpack.c.l.b16 %v7764
  %v8101 = vunpack.c.h.b16 %v7764
  %v8102 = vunpack.c.l.b16 %v7765
  %v8103 = vunpack.c.h.b16 %v7765
  %v8104 = vpack.c.b16 %v8042, %v8040
  %v8105 = vpack.c.b16 %v8043, %v8041
  %v8106 = vpack.c.b16 %v8046, %v8044
  %v8107 = vpack.c.b16 %v8047, %v8045
  %v8108 = vpack.c.b16 %v8050, %v8048
  %v8109 = vpack.c.b16 %v8051, %v8049
  %v8110 = vpack.c.b16 %v8054, %v8052
  %v8111 = vpack.c.b16 %v8055, %v8053
  %v8112 = vpack.c.b16 %v8058, %v8056
  %v8113 = vpack.c.b16 %v8059, %v8057
  %v8114 = vpack.c.b16 %v8062, %v8060
  %v8115 = vpack.c.b16 %v8063, %v8061
  %v8116 = vpack.c.b16 %v8066, %v8064
  %v8117 = vpack.c.b16 %v8067, %v8065
  %v8118 = vpack.c.b16 %v8070, %v8068
  %v8119 = vpack.c.b16 %v8071, %v8069
  %v8120 = vpack.c.b16 %v8074, %v8072
  %v8121 = vpack.c.b16 %v8075, %v8073
  %v8122 = vpack.c.b16 %v8078, %v8076
  %v8123 = vpack.c.b16 %v8079, %v8077
  %v8124 = vpack.c.b16 %v8082, %v8080
  %v8125 = vpack.c.b16 %v8083, %v8081
  %v8126 = vpack.c.b16 %v8086, %v8084
  %v8127 = vpack.c.b16 %v8087, %v8085
  %v8128 = vpack.c.b16 %v8090, %v8088
  %v8129 = vpack.c.b16 %v8091, %v8089
  %v8130 = vpack.c.b16 %v8094, %v8092
  %v8131 = vpack.c.b16 %v8095, %v8093
  %v8132 = vpack.c.b16 %v8098, %v8096
  %v8133 = vpack.c.b16 %v8099, %v8097
  %v8134 = vpack.c.b16 %v8102, %v8100
  %v8135 = vpack.c.b16 %v8103, %v8101
  %8168 = vmatprep.subr.bf16.mxu0 %v8105
  %8169 = vmatpush1.bf16.msra.mxu0 %v8104
  %8170 = vmatprep.subr.bf16.mxu0 %v8107
  %8171 = vmatpush1.bf16.msra.mxu0 %v8106
  %8172 = vmatprep.subr.bf16.mxu0 %v8109
  %8173 = vmatpush1.bf16.msra.mxu0 %v8108
  %8174 = vmatprep.subr.bf16.mxu0 %v8111
  %8175 = vmatpush1.bf16.msra.mxu0 %v8110
  %8176 = vmatprep.subr.bf16.mxu0 %v8113
  %8177 = vmatpush1.bf16.msra.mxu0 %v8112
  %8178 = vmatprep.subr.bf16.mxu0 %v8115
  %8179 = vmatpush1.bf16.msra.mxu0 %v8114
  %8180 = vmatprep.subr.bf16.mxu0 %v8117
  %8181 = vmatpush1.bf16.msra.mxu0 %v8116
  %8182 = vmatprep.subr.bf16.mxu0 %v8119
  %8183 = vmatpush1.bf16.msra.mxu0 %v8118
  %8184 = vmatprep.subr.bf16.mxu0 %v8121
  %8185 = vmatpush1.bf16.msra.mxu0 %v8120
  %8186 = vmatprep.subr.bf16.mxu0 %v8123
  %8187 = vmatpush1.bf16.msra.mxu0 %v8122
  %8188 = vmatprep.subr.bf16.mxu0 %v8125
  %8189 = vmatpush1.bf16.msra.mxu0 %v8124
  %8190 = vmatprep.subr.bf16.mxu0 %v8127
  %8191 = vmatpush1.bf16.msra.mxu0 %v8126
  %8192 = vmatprep.subr.bf16.mxu0 %v8129
  %8193 = vmatpush1.bf16.msra.mxu0 %v8128
  %8194 = vmatprep.subr.bf16.mxu0 %v8131
  %8195 = vmatpush1.bf16.msra.mxu0 %v8130
  %8196 = vmatprep.subr.bf16.mxu0 %v8133
  %8197 = vmatpush1.bf16.msra.mxu0 %v8132
  %8198 = vmatprep.subr.bf16.mxu0 %v8135
  %8199 = vmatpush1.bf16.msra.mxu0 %v8134
  %8200 = vmatprep.mubr.bf16.mxu0 %v7789
  %8201 = vmatmul.mubr.bf16.gmra.mrb[0].mxu0 %v7777
  %v8202 = vpop.f32.mrb[0].mxu0
  %v8203 = vadd.f32 0.0, %v8202
  %v8204 = vpop.f32.mrb[0].mxu0
  %v8205 = vadd.f32 0.0, %v8204
  %v8206 = vpop.f32.mrb[0].mxu0
  %v8207 = vadd.f32 0.0, %v8206
  %v8208 = vpop.f32.mrb[0].mxu0
  %v8209 = vadd.f32 0.0, %v8208
  %8210 = vmatprep.mubr.bf16.mxu0 %v7805
  %8211 = vmatmul.mubr.bf16.gmra.mrb[0].mxu0 %v7797
  %v8212 = vpop.f32.mrb[0].mxu0
  %v8213 = vadd.f32 0.0, %v8212
  %v8214 = vpop.f32.mrb[0].mxu0
  %v8215 = vadd.f32 0.0, %v8214
  %v8216 = vpop.f32.mrb[0].mxu0
  %v8217 = vadd.f32 0.0, %v8216
  %v8218 = vpop.f32.mrb[0].mxu0
  %v8219 = vadd.f32 0.0, %v8218
  %8220 = vmatprep.mubr.bf16.mxu0 %v7821
  %8221 = vmatmul.mubr.bf16.gmra.mrb[0].mxu0 %v7813
  %v8222 = vpop.f32.mrb[0].mxu0
  %v8223 = vadd.f32 0.0, %v8222
  %v8224 = vpop.f32.mrb[0].mxu0
  %v8225 = vadd.f32 0.0, %v8224
  %v8226 = vpop.f32.mrb[0].mxu0
  %v8227 = vadd.f32 0.0, %v8226
  %v8228 = vpop.f32.mrb[0].mxu0
  %v8229 = vadd.f32 0.0, %v8228
  %8230 = vmatprep.mubr.bf16.mxu0 %v7837
  %8231 = vmatmul.mubr.bf16.gmra.mrb[0].mxu0 %v7829
  %v8232 = vpop.f32.mrb[0].mxu0
  %v8233 = vadd.f32 0.0, %v8232
  %v8234 = vpop.f32.mrb[0].mxu0
  %v8235 = vadd.f32 0.0, %v8234
  %v8236 = vpop.f32.mrb[0].mxu0
  %v8237 = vadd.f32 0.0, %v8236
  %v8238 = vpop.f32.mrb[0].mxu0
  %v8239 = vadd.f32 0.0, %v8238
  %8240 = vmatprep.mubr.bf16.mxu0 %v7853
  %8241 = vmatmul.mubr.bf16.gmra.mrb[0].mxu0 %v7845
  %v8242 = vpop.f32.mrb[0].mxu0
  %v8243 = vadd.f32 0.0, %v8242
  %v8244 = vpop.f32.mrb[0].mxu0
  %v8245 = vadd.f32 0.0, %v8244
  %v8246 = vpop.f32.mrb[0].mxu0
  %v8247 = vadd.f32 0.0, %v8246
  %v8248 = vpop.f32.mrb[0].mxu0
  %v8249 = vadd.f32 0.0, %v8248
  %8250 = vmatprep.mubr.bf16.mxu0 %v7869
  %8251 = vmatmul.mubr.bf16.gmra.mrb[0].mxu0 %v7861
  %v8252 = vpop.f32.mrb[0].mxu0
  %v8253 = vadd.f32 0.0, %v8252
  %v8254 = vpop.f32.mrb[0].mxu0
  %v8255 = vadd.f32 0.0, %v8254
  %v8256 = vpop.f32.mrb[0].mxu0
  %v8257 = vadd.f32 0.0, %v8256
  %v8258 = vpop.f32.mrb[0].mxu0
  %v8259 = vadd.f32 0.0, %v8258
  %8260 = vmatprep.mubr.bf16.mxu0 %v7885
  %8261 = vmatmul.mubr.bf16.gmra.mrb[0].mxu0 %v7877
  %v8262 = vpop.f32.mrb[0].mxu0
  %v8263 = vadd.f32 0.0, %v8262
  %v8264 = vpop.f32.mrb[0].mxu0
  %v8265 = vadd.f32 0.0, %v8264
  %v8266 = vpop.f32.mrb[0].mxu0
  %v8267 = vadd.f32 0.0, %v8266
  %v8268 = vpop.f32.mrb[0].mxu0
  %v8269 = vadd.f32 0.0, %v8268
  %8270 = vmatprep.mubr.bf16.mxu0 %v7901
  %8271 = vmatmul.mubr.bf16.gmra.mrb[0].mxu0 %v7893
  %v8272 = vpop.f32.mrb[0].mxu0
  %v8273 = vadd.f32 0.0, %v8272
  %v8274 = vpop.f32.mrb[0].mxu0
  %v8275 = vadd.f32 0.0, %v8274
  %v8276 = vpop.f32.mrb[0].mxu0
  %v8277 = vadd.f32 0.0, %v8276
  %v8278 = vpop.f32.mrb[0].mxu0
  %v8279 = vadd.f32 0.0, %v8278
  %8280 = vmatprep.mubr.bf16.mxu0 %v7917
  %8281 = vmatmul.mubr.bf16.gmra.mrb[0].mxu0 %v7909
  %v8282 = vpop.f32.mrb[0].mxu0
  %v8283 = vadd.f32 0.0, %v8282
  %v8284 = vpop.f32.mrb[0].mxu0
  %v8285 = vadd.f32 0.0, %v8284
  %v8286 = vpop.f32.mrb[0].mxu0
  %v8287 = vadd.f32 0.0, %v8286
  %v8288 = vpop.f32.mrb[0].mxu0
  %v8289 = vadd.f32 0.0, %v8288
  %8290 = vmatprep.mubr.bf16.mxu0 %v7933
  %8291 = vmatmul.mubr.bf16.gmra.mrb[0].mxu0 %v7925
  %v8292 = vpop.f32.mrb[0].mxu0
  %v8293 = vadd.f32 0.0, %v8292
  %v8294 = vpop.f32.mrb[0].mxu0
  %v8295 = vadd.f32 0.0, %v8294
  %v8296 = vpop.f32.mrb[0].mxu0
  %v8297 = vadd.f32 0.0, %v8296
  %v8298 = vpop.f32.mrb[0].mxu0
  %v8299 = vadd.f32 0.0, %v8298
  %8300 = vmatprep.mubr.bf16.mxu0 %v7949
  %8301 = vmatmul.mubr.bf16.gmra.mrb[0].mxu0 %v7941
  %v8302 = vpop.f32.mrb[0].mxu0
  %v8303 = vadd.f32 0.0, %v8302
  %v8304 = vpop.f32.mrb[0].mxu0
  %v8305 = vadd.f32 0.0, %v8304
  %v8306 = vpop.f32.mrb[0].mxu0
  %v8307 = vadd.f32 0.0, %v8306
  %v8308 = vpop.f32.mrb[0].mxu0
  %v8309 = vadd.f32 0.0, %v8308
  %8310 = vmatprep.mubr.bf16.mxu0 %v7965
  %8311 = vmatmul.mubr.bf16.gmra.mrb[0].mxu0 %v7957
  %v8312 = vpop.f32.mrb[0].mxu0
  %v8313 = vadd.f32 0.0, %v8312
  %v8314 = vpop.f32.mrb[0].mxu0
  %v8315 = vadd.f32 0.0, %v8314
  %v8316 = vpop.f32.mrb[0].mxu0
  %v8317 = vadd.f32 0.0, %v8316
  %v8318 = vpop.f32.mrb[0].mxu0
  %v8319 = vadd.f32 0.0, %v8318
  %8320 = vmatprep.mubr.bf16.mxu0 %v7981
  %8321 = vmatmul.mubr.bf16.gmra.mrb[0].mxu0 %v7973
  %v8322 = vpop.f32.mrb[0].mxu0
  %v8323 = vadd.f32 0.0, %v8322
  %v8324 = vpop.f32.mrb[0].mxu0
  %v8325 = vadd.f32 0.0, %v8324
  %v8326 = vpop.f32.mrb[0].mxu0
  %v8327 = vadd.f32 0.0, %v8326
  %v8328 = vpop.f32.mrb[0].mxu0
  %v8329 = vadd.f32 0.0, %v8328
  %8330 = vdwg.mxu0
  %v8331 = vadd.f32 %v7599, %v8203
  %v8332 = vadd.f32 %v7600, %v8205
  %v8333 = vadd.f32 %v7601, %v8207
  %v8334 = vadd.f32 %v7602, %v8209
  %v8335 = vadd.f32 %v7603, %v8213
  %v8336 = vadd.f32 %v7604, %v8215
  %v8337 = vadd.f32 %v7605, %v8217
  %v8338 = vadd.f32 %v7606, %v8219
  %v8339 = vadd.f32 %v7607, %v8223
  %v8340 = vadd.f32 %v7608, %v8225
  %v8341 = vadd.f32 %v7609, %v8227
  %v8342 = vadd.f32 %v7610, %v8229
  %v8343 = vadd.f32 %v7611, %v8233
  %v8344 = vadd.f32 %v7612, %v8235
  %v8345 = vadd.f32 %v7613, %v8237
  %v8346 = vadd.f32 %v7614, %v8239
  %v8347 = vadd.f32 %v7615, %v8243
  %v8348 = vadd.f32 %v7616, %v8245
  %v8349 = vadd.f32 %v7617, %v8247
  %v8350 = vadd.f32 %v7618, %v8249
  %v8351 = vadd.f32 %v7619, %v8253
  %v8352 = vadd.f32 %v7620, %v8255
  %v8353 = vadd.f32 %v7621, %v8257
  %v8354 = vadd.f32 %v7622, %v8259
  %v8355 = vadd.f32 %v7623, %v8263
  %v8356 = vadd.f32 %v7624, %v8265
  %v8357 = vadd.f32 %v7625, %v8267
  %v8358 = vadd.f32 %v7626, %v8269
  %v8359 = vadd.f32 %v7627, %v8273
  %v8360 = vadd.f32 %v7628, %v8275
  %v8361 = vadd.f32 %v7629, %v8277
  %v8362 = vadd.f32 %v7630, %v8279
  %v8363 = vadd.f32 %v7631, %v8283
  %v8364 = vadd.f32 %v7632, %v8285
  %v8365 = vadd.f32 %v7633, %v8287
  %v8366 = vadd.f32 %v7634, %v8289
  %v8367 = vadd.f32 %v7635, %v8293
  %v8368 = vadd.f32 %v7636, %v8295
  %v8369 = vadd.f32 %v7637, %v8297
  %v8370 = vadd.f32 %v7638, %v8299
  %v8371 = vadd.f32 %v7639, %v8303
  %v8372 = vadd.f32 %v7640, %v8305
  %v8373 = vadd.f32 %v7641, %v8307
  %v8374 = vadd.f32 %v7642, %v8309
  %v8375 = vadd.f32 %v7643, %v8313
  %v8376 = vadd.f32 %v7644, %v8315
  %v8377 = vadd.f32 %v7645, %v8317
  %v8378 = vadd.f32 %v7646, %v8319
  %v8379 = vadd.f32 %v7647, %v8323
  %v8380 = vadd.f32 %v7648, %v8325
  %v8381 = vadd.f32 %v7649, %v8327
  %v8382 = vadd.f32 %v7650, %v8329
  %v8383 = vld [vmem:[%s6] sm:$0x3]
  %v8385 = vlaneseq
  %v8386 = vshrl.u32 %v8385, 7
  %v8387 = vsub.s32 0, %v8386
  %v8388 = vrot.slane %v8383, %v8387
  %v8389 = vlaneseq
  %v8390 = vshrl.u32 %v8389, 7
  %v8391 = vsub.s32 1, %v8390
  %v8392 = vrot.slane %v8383, %v8391
  %v8395 = vadd.f32 %v8331, %v8388
  %v8396 = vadd.f32 %v8332, %v8392
  %v8397 = vadd.f32 %v8333, %v8388
  %v8398 = vadd.f32 %v8334, %v8392
  %v8399 = vadd.f32 %v8335, %v8388
  %v8400 = vadd.f32 %v8336, %v8392
  %v8401 = vadd.f32 %v8337, %v8388
  %v8402 = vadd.f32 %v8338, %v8392
  %v8403 = vadd.f32 %v8339, %v8388
  %v8404 = vadd.f32 %v8340, %v8392
  %v8405 = vadd.f32 %v8341, %v8388
  %v8406 = vadd.f32 %v8342, %v8392
  %v8407 = vadd.f32 %v8343, %v8388
  %v8408 = vadd.f32 %v8344, %v8392
  %v8409 = vadd.f32 %v8345, %v8388
  %v8410 = vadd.f32 %v8346, %v8392
  %v8411 = vadd.f32 %v8347, %v8388
  %v8412 = vadd.f32 %v8348, %v8392
  %v8413 = vadd.f32 %v8349, %v8388
  %v8414 = vadd.f32 %v8350, %v8392
  %v8415 = vadd.f32 %v8351, %v8388
  %v8416 = vadd.f32 %v8352, %v8392
  %v8417 = vadd.f32 %v8353, %v8388
  %v8418 = vadd.f32 %v8354, %v8392
  %v8419 = vadd.f32 %v8355, %v8388
  %v8420 = vadd.f32 %v8356, %v8392
  %v8421 = vadd.f32 %v8357, %v8388
  %v8422 = vadd.f32 %v8358, %v8392
  %v8423 = vadd.f32 %v8359, %v8388
  %v8424 = vadd.f32 %v8360, %v8392
  %v8425 = vadd.f32 %v8361, %v8388
  %v8426 = vadd.f32 %v8362, %v8392
  %v8427 = vadd.f32 %v8363, %v8388
  %v8428 = vadd.f32 %v8364, %v8392
  %v8429 = vadd.f32 %v8365, %v8388
  %v8430 = vadd.f32 %v8366, %v8392
  %v8431 = vadd.f32 %v8367, %v8388
  %v8432 = vadd.f32 %v8368, %v8392
  %v8433 = vadd.f32 %v8369, %v8388
  %v8434 = vadd.f32 %v8370, %v8392
  %v8435 = vadd.f32 %v8371, %v8388
  %v8436 = vadd.f32 %v8372, %v8392
  %v8437 = vadd.f32 %v8373, %v8388
  %v8438 = vadd.f32 %v8374, %v8392
  %v8439 = vadd.f32 %v8375, %v8388
  %v8440 = vadd.f32 %v8376, %v8392
  %v8441 = vadd.f32 %v8377, %v8388
  %v8442 = vadd.f32 %v8378, %v8392
  %v8443 = vadd.f32 %v8379, %v8388
  %v8444 = vadd.f32 %v8380, %v8392
  %v8445 = vadd.f32 %v8381, %v8388
  %v8446 = vadd.f32 %v8382, %v8392
  %v8447 = vmax.f32 %v8395, 0.0
  %v8448 = vmax.f32 %v8396, 0.0
  %v8449 = vmax.f32 %v8397, 0.0
  %v8450 = vmax.f32 %v8398, 0.0
  %v8451 = vmax.f32 %v8399, 0.0
  %v8452 = vmax.f32 %v8400, 0.0
  %v8453 = vmax.f32 %v8401, 0.0
  %v8454 = vmax.f32 %v8402, 0.0
  %v8455 = vmax.f32 %v8403, 0.0
  %v8456 = vmax.f32 %v8404, 0.0
  %v8457 = vmax.f32 %v8405, 0.0
  %v8458 = vmax.f32 %v8406, 0.0
  %v8459 = vmax.f32 %v8407, 0.0
  %v8460 = vmax.f32 %v8408, 0.0
  %v8461 = vmax.f32 %v8409, 0.0
  %v8462 = vmax.f32 %v8410, 0.0
  %v8463 = vmax.f32 %v8411, 0.0
  %v8464 = vmax.f32 %v8412, 0.0
  %v8465 = vmax.f32 %v8413, 0.0
  %v8466 = vmax.f32 %v8414, 0.0
  %v8467 = vmax.f32 %v8415, 0.0
  %v8468 = vmax.f32 %v8416, 0.0
  %v8469 = vmax.f32 %v8417, 0.0
  %v8470 = vmax.f32 %v8418, 0.0
  %v8471 = vmax.f32 %v8419, 0.0
  %v8472 = vmax.f32 %v8420, 0.0
  %v8473 = vmax.f32 %v8421, 0.0
  %v8474 = vmax.f32 %v8422, 0.0
  %v8475 = vmax.f32 %v8423, 0.0
  %v8476 = vmax.f32 %v8424, 0.0
  %v8477 = vmax.f32 %v8425, 0.0
  %v8478 = vmax.f32 %v8426, 0.0
  %v8479 = vmax.f32 %v8427, 0.0
  %v8480 = vmax.f32 %v8428, 0.0
  %v8481 = vmax.f32 %v8429, 0.0
  %v8482 = vmax.f32 %v8430, 0.0
  %v8483 = vmax.f32 %v8431, 0.0
  %v8484 = vmax.f32 %v8432, 0.0
  %v8485 = vmax.f32 %v8433, 0.0
  %v8486 = vmax.f32 %v8434, 0.0
  %v8487 = vmax.f32 %v8435, 0.0
  %v8488 = vmax.f32 %v8436, 0.0
  %v8489 = vmax.f32 %v8437, 0.0
  %v8490 = vmax.f32 %v8438, 0.0
  %v8491 = vmax.f32 %v8439, 0.0
  %v8492 = vmax.f32 %v8440, 0.0
  %v8493 = vmax.f32 %v8441, 0.0
  %v8494 = vmax.f32 %v8442, 0.0
  %v8495 = vmax.f32 %v8443, 0.0
  %v8496 = vmax.f32 %v8444, 0.0
  %v8497 = vmax.f32 %v8445, 0.0
  %v8498 = vmax.f32 %v8446, 0.0
  %v8499 = vlaneseq
  %v8500 = vshrl.u32 %v8499, 7
  %v8501 = vadd.s32 %v8500, 8
  %v8502 = vadd.s32 %v8500, 16
  %v8503 = vadd.s32 %v8500, 24
  %v8504 = vadd.s32 %v8500, 32
  %v8505 = vadd.s32 %v8500, 40
  %v8506 = vadd.s32 %v8500, 48
  %v8507 = vadd.s32 %v8500, 56
  %v8508 = vadd.s32 %v8500, 64
  %v8509 = vadd.s32 %v8500, 72
  %v8510 = vadd.s32 %v8500, 80
  %v8511 = vadd.s32 %v8500, 88
  %v8512 = vadd.s32 %v8500, 96
  %v8513 = vadd.s32 %v8500, 104
  %v8514 = vadd.s32 %v8500, 112
  %v8515 = vadd.s32 %v8500, 120
  %v8516 = vadd.s32 %v8500, 128
  %v8517 = vadd.s32 %v8500, 136
  %v8518 = vadd.s32 %v8500, 144
  %v8519 = vadd.s32 %v8500, 152
  %v8520 = vadd.s32 %v8500, 160
  %v8521 = vadd.s32 %v8500, 168
  %v8522 = vadd.s32 %v8500, 176
  %v8523 = vadd.s32 %v8500, 184
  %v8524 = vadd.s32 %v8500, 192
  %v8525 = vadd.s32 %v8500, 200
  %v8526 = vand.u32 %v8500, 15
  %v8527 = vand.u32 %v8501, 15
  %v8528 = vand.u32 %v8502, 15
  %v8529 = vand.u32 %v8503, 15
  %v8530 = vand.u32 %v8504, 15
  %v8531 = vand.u32 %v8505, 15
  %v8532 = vand.u32 %v8506, 15
  %v8533 = vand.u32 %v8507, 15
  %v8534 = vand.u32 %v8508, 15
  %v8535 = vand.u32 %v8509, 15
  %v8536 = vand.u32 %v8510, 15
  %v8537 = vand.u32 %v8511, 15
  %v8538 = vand.u32 %v8512, 15
  %v8539 = vand.u32 %v8513, 15
  %v8540 = vand.u32 %v8514, 15
  %v8541 = vand.u32 %v8515, 15
  %v8542 = vand.u32 %v8516, 15
  %v8543 = vand.u32 %v8517, 15
  %v8544 = vand.u32 %v8518, 15
  %v8545 = vand.u32 %v8519, 15
  %v8546 = vand.u32 %v8520, 15
  %v8547 = vand.u32 %v8521, 15
  %v8548 = vand.u32 %v8522, 15
  %v8549 = vand.u32 %v8523, 15
  %v8550 = vand.u32 %v8524, 15
  %v8551 = vand.u32 %v8525, 15
  %vm8552 = vcmp.lt.s32.totalorder %v8526, 13
  %vm8553 = vcmp.lt.s32.totalorder %v8527, 13
  %vm8554 = vcmp.lt.s32.totalorder %v8528, 13
  %vm8555 = vcmp.lt.s32.totalorder %v8529, 13
  %vm8556 = vcmp.lt.s32.totalorder %v8530, 13
  %vm8557 = vcmp.lt.s32.totalorder %v8531, 13
  %vm8558 = vcmp.lt.s32.totalorder %v8532, 13
  %vm8559 = vcmp.lt.s32.totalorder %v8533, 13
  %vm8560 = vcmp.lt.s32.totalorder %v8534, 13
  %vm8561 = vcmp.lt.s32.totalorder %v8535, 13
  %vm8562 = vcmp.lt.s32.totalorder %v8536, 13
  %vm8563 = vcmp.lt.s32.totalorder %v8537, 13
  %vm8564 = vcmp.lt.s32.totalorder %v8538, 13
  %vm8565 = vcmp.lt.s32.totalorder %v8539, 13
  %vm8566 = vcmp.lt.s32.totalorder %v8540, 13
  %vm8567 = vcmp.lt.s32.totalorder %v8541, 13
  %vm8568 = vcmp.lt.s32.totalorder %v8542, 13
  %vm8569 = vcmp.lt.s32.totalorder %v8543, 13
  %vm8570 = vcmp.lt.s32.totalorder %v8544, 13
  %vm8571 = vcmp.lt.s32.totalorder %v8545, 13
  %vm8572 = vcmp.lt.s32.totalorder %v8546, 13
  %vm8573 = vcmp.lt.s32.totalorder %v8547, 13
  %vm8574 = vcmp.lt.s32.totalorder %v8548, 13
  %vm8575 = vcmp.lt.s32.totalorder %v8549, 13
  %vm8576 = vcmp.lt.s32.totalorder %v8550, 13
  %vm8577 = vcmp.lt.s32.totalorder %v8551, 13
  %v8578 = vsel %vm8552, %v8447, 0.0
  %v8579 = vsel %vm8552, %v8448, 0.0
  %v8580 = vsel %vm8553, %v8449, 0.0
  %v8581 = vsel %vm8553, %v8450, 0.0
  %v8582 = vsel %vm8554, %v8451, 0.0
  %v8583 = vsel %vm8554, %v8452, 0.0
  %v8584 = vsel %vm8555, %v8453, 0.0
  %v8585 = vsel %vm8555, %v8454, 0.0
  %v8586 = vsel %vm8556, %v8455, 0.0
  %v8587 = vsel %vm8556, %v8456, 0.0
  %v8588 = vsel %vm8557, %v8457, 0.0
  %v8589 = vsel %vm8557, %v8458, 0.0
  %v8590 = vsel %vm8558, %v8459, 0.0
  %v8591 = vsel %vm8558, %v8460, 0.0
  %v8592 = vsel %vm8559, %v8461, 0.0
  %v8593 = vsel %vm8559, %v8462, 0.0
  %v8594 = vsel %vm8560, %v8463, 0.0
  %v8595 = vsel %vm8560, %v8464, 0.0
  %v8596 = vsel %vm8561, %v8465, 0.0
  %v8597 = vsel %vm8561, %v8466, 0.0
  %v8598 = vsel %vm8562, %v8467, 0.0
  %v8599 = vsel %vm8562, %v8468, 0.0
  %v8600 = vsel %vm8563, %v8469, 0.0
  %v8601 = vsel %vm8563, %v8470, 0.0
  %v8602 = vsel %vm8564, %v8471, 0.0
  %v8603 = vsel %vm8564, %v8472, 0.0
  %v8604 = vsel %vm8565, %v8473, 0.0
  %v8605 = vsel %vm8565, %v8474, 0.0
  %v8606 = vsel %vm8566, %v8475, 0.0
  %v8607 = vsel %vm8566, %v8476, 0.0
  %v8608 = vsel %vm8567, %v8477, 0.0
  %v8609 = vsel %vm8567, %v8478, 0.0
  %v8610 = vsel %vm8568, %v8479, 0.0
  %v8611 = vsel %vm8568, %v8480, 0.0
  %v8612 = vsel %vm8569, %v8481, 0.0
  %v8613 = vsel %vm8569, %v8482, 0.0
  %v8614 = vsel %vm8570, %v8483, 0.0
  %v8615 = vsel %vm8570, %v8484, 0.0
  %v8616 = vsel %vm8571, %v8485, 0.0
  %v8617 = vsel %vm8571, %v8486, 0.0
  %v8618 = vsel %vm8572, %v8487, 0.0
  %v8619 = vsel %vm8572, %v8488, 0.0
  %v8620 = vsel %vm8573, %v8489, 0.0
  %v8621 = vsel %vm8573, %v8490, 0.0
  %v8622 = vsel %vm8574, %v8491, 0.0
  %v8623 = vsel %vm8574, %v8492, 0.0
  %v8624 = vsel %vm8575, %v8493, 0.0
  %v8625 = vsel %vm8575, %v8494, 0.0
  %v8626 = vsel %vm8576, %v8495, 0.0
  %v8627 = vsel %vm8576, %v8496, 0.0
  %v8628 = vsel %vm8577, %v8497, 0.0
  %v8629 = vsel %vm8577, %v8498, 0.0
  %v8630 = vadd.f32 %v8578, %v8580
  %v8631 = vadd.f32 %v8630, %v8582
  %v8632 = vadd.f32 %v8631, %v8584
  %v8633 = vadd.f32 %v8632, %v8586
  %v8634 = vadd.f32 %v8633, %v8588
  %v8635 = vadd.f32 %v8634, %v8590
  %v8636 = vadd.f32 %v8635, %v8592
  %v8637 = vadd.f32 %v8636, %v8594
  %v8638 = vadd.f32 %v8637, %v8596
  %v8639 = vadd.f32 %v8638, %v8598
  %v8640 = vadd.f32 %v8639, %v8600
  %v8641 = vadd.f32 %v8640, %v8602
  %v8642 = vadd.f32 %v8641, %v8604
  %v8643 = vadd.f32 %v8642, %v8606
  %v8644 = vadd.f32 %v8643, %v8608
  %v8645 = vadd.f32 %v8644, %v8610
  %v8646 = vadd.f32 %v8645, %v8612
  %v8647 = vadd.f32 %v8646, %v8614
  %v8648 = vadd.f32 %v8647, %v8616
  %v8649 = vadd.f32 %v8648, %v8618
  %v8650 = vadd.f32 %v8649, %v8620
  %v8651 = vadd.f32 %v8650, %v8622
  %v8652 = vadd.f32 %v8651, %v8624
  %v8653 = vadd.f32 %v8652, %v8626
  %v8654 = vadd.f32 %v8653, %v8628
  %v8655 = vrot.slane %v8654, 4
  %v8656 = vadd.f32 %v8654, %v8655
  %v8657 = vrot.slane %v8656, 2
  %v8658 = vadd.f32 %v8656, %v8657
  %v8659 = vrot.slane %v8658, 1
  %v8660 = vadd.f32 %v8658, %v8659
  %v8661 = vadd.f32 %v8579, %v8581
  %v8662 = vadd.f32 %v8661, %v8583
  %v8663 = vadd.f32 %v8662, %v8585
  %v8664 = vadd.f32 %v8663, %v8587
  %v8665 = vadd.f32 %v8664, %v8589
  %v8666 = vadd.f32 %v8665, %v8591
  %v8667 = vadd.f32 %v8666, %v8593
  %v8668 = vadd.f32 %v8667, %v8595
  %v8669 = vadd.f32 %v8668, %v8597
  %v8670 = vadd.f32 %v8669, %v8599
  %v8671 = vadd.f32 %v8670, %v8601
  %v8672 = vadd.f32 %v8671, %v8603
  %v8673 = vadd.f32 %v8672, %v8605
  %v8674 = vadd.f32 %v8673, %v8607
  %v8675 = vadd.f32 %v8674, %v8609
  %v8676 = vadd.f32 %v8675, %v8611
  %v8677 = vadd.f32 %v8676, %v8613
  %v8678 = vadd.f32 %v8677, %v8615
  %v8679 = vadd.f32 %v8678, %v8617
  %v8680 = vadd.f32 %v8679, %v8619
  %v8681 = vadd.f32 %v8680, %v8621
  %v8682 = vadd.f32 %v8681, %v8623
  %v8683 = vadd.f32 %v8682, %v8625
  %v8684 = vadd.f32 %v8683, %v8627
  %v8685 = vadd.f32 %v8684, %v8629
  %v8686 = vrot.slane %v8685, 4
  %v8687 = vadd.f32 %v8685, %v8686
  %v8688 = vrot.slane %v8687, 2
  %v8689 = vadd.f32 %v8687, %v8688
  %v8690 = vrot.slane %v8689, 1
  %v8691 = vadd.f32 %v8689, %v8690
  %v8692 = vmul.f32 %v8660, 0.00591716
  %v8693 = vmul.f32 %v8691, 0.00591716
  %v8696 = vcombine.low %v8692, %v8693
  %v8698 = vunpack.c.l.s4 1966171168
  %v8699 = vunpack.c.0.s8 %v8698
  %v8700 = vlaneseq
  %v8701 = vshrl.u32 %v8700, 7
  %v8702 = vsub.s32 %v8699, %v8701
  %v8703 = vrot.slane %v8696, %v8702
  %v8705 = vunpack.c.l.s4 1966171168
  %v8706 = vunpack.c.0.s8 %v8705
  %v8707 = vlaneseq
  %v8708 = vshrl.u32 %v8707, 7
  %v8709 = vsub.s32 %v8706, %v8708
  %v8710 = vrot.slane %v8703, %v8709
  %v8712 = vlaneseq
  %vm8713 = vcmp.ge.s32.totalorder %v8712, 0
  %vm8714 = vcmp.lt.s32.totalorder %v8712, 256
  %vm8715 = vmand %vm8713, %vm8714
  %8716 = vst.msk [vmem:[#allocation4] ss:$8 sm:$0x3] %vm8715, %v8710
  %8717 = vst.msk [vmem:[#allocation4] ss:$8 sm:$0x0] %vm8715, %v8710
  %v8718 = vld [vmem:[#allocation3 + $0x1c0] sm:$0xff]
  %v8719 = vld [vmem:[#allocation3 + $0x1c8] sm:$0xff]
  %v8720 = vld [vmem:[#allocation3 + $0x1d0] sm:$0xff]
  %v8721 = vld [vmem:[#allocation3 + $0x1d8] sm:$0xff]
  %v8722 = vld [vmem:[#allocation3 + $0x1e0] sm:$0xff]
  %v8723 = vld [vmem:[#allocation3 + $0x1e8] sm:$0xff]
  %v8724 = vld [vmem:[#allocation3 + $0x1f0] sm:$0xff]
  %v8725 = vld [vmem:[#allocation3 + $0x1f8] sm:$0xff]
  %v8726 = vld [vmem:[#allocation3 + $0x200] sm:$0xff]
  %v8727 = vld [vmem:[#allocation3 + $0x208] sm:$0xff]
  %v8728 = vld [vmem:[#allocation3 + $0x210] sm:$0xff]
  %v8729 = vld [vmem:[#allocation3 + $0x218] sm:$0xff]
  %v8730 = vld [vmem:[#allocation3 + $0x220] sm:$0xff]
  %v8731 = vld [vmem:[#allocation3 + $0x228] sm:$0xff]
  %v8732 = vld [vmem:[#allocation3 + $0x230] sm:$0xff]
  %v8733 = vld [vmem:[#allocation3 + $0x238] sm:$0xff]
  %v8734 = vld [vmem:[#allocation3 + $0x240] sm:$0xff]
  %v8735 = vld [vmem:[#allocation3 + $0x248] sm:$0xff]
  %v8736 = vld [vmem:[#allocation3 + $0x250] sm:$0xff]
  %v8737 = vld [vmem:[#allocation3 + $0x258] sm:$0xff]
  %v8738 = vld [vmem:[#allocation3 + $0x260] sm:$0xff]
  %v8739 = vld [vmem:[#allocation3 + $0x268] sm:$0xff]
  %v8740 = vld [vmem:[#allocation3 + $0x270] sm:$0xff]
  %v8741 = vld [vmem:[#allocation3 + $0x278] sm:$0xff]
  %v8742 = vld [vmem:[#allocation3 + $0x280] sm:$0xff]
  %v8743 = vld [vmem:[#allocation3 + $0x288] sm:$0xff]
  %v8744 = vld [vmem:[#allocation3 + $0x290] sm:$0xff]
  %v8745 = vld [vmem:[#allocation3 + $0x298] sm:$0xff]
  %v8746 = vld [vmem:[#allocation3 + $0x2a0] sm:$0xff]
  %v8747 = vld [vmem:[#allocation3 + $0x2a8] sm:$0xff]
  %v8748 = vld [vmem:[#allocation3 + $0x2b0] sm:$0xff]
  %v8749 = vld [vmem:[#allocation3 + $0x2b8] sm:$0xff]
  %v8750 = vld [vmem:[#allocation3 + $0x2c0] sm:$0xff]
  %v8751 = vld [vmem:[#allocation3 + $0x2c8] sm:$0xff]
  %v8752 = vld [vmem:[#allocation3 + $0x2d0] sm:$0xff]
  %v8753 = vld [vmem:[#allocation3 + $0x2d8] sm:$0xff]
  %v8754 = vld [vmem:[#allocation3 + $0x2e0] sm:$0xff]
  %v8755 = vld [vmem:[#allocation3 + $0x2e8] sm:$0xff]
  %v8756 = vld [vmem:[#allocation3 + $0x2f0] sm:$0xff]
  %v8757 = vld [vmem:[#allocation3 + $0x2f8] sm:$0xff]
  %v8758 = vld [vmem:[#allocation3 + $0x300] sm:$0xff]
  %v8759 = vld [vmem:[#allocation3 + $0x308] sm:$0xff]
  %v8760 = vld [vmem:[#allocation3 + $0x310] sm:$0xff]
  %v8761 = vld [vmem:[#allocation3 + $0x318] sm:$0xff]
  %v8762 = vld [vmem:[#allocation3 + $0x320] sm:$0xff]
  %v8763 = vld [vmem:[#allocation3 + $0x328] sm:$0xff]
  %v8764 = vld [vmem:[#allocation3 + $0x330] sm:$0xff]
  %v8765 = vld [vmem:[#allocation3 + $0x338] sm:$0xff]
  %v8766 = vld [vmem:[#allocation3 + $0x340] sm:$0xff]
  %v8767 = vld [vmem:[#allocation3 + $0x348] sm:$0xff]
  %v8768 = vld [vmem:[#allocation3 + $0x350] sm:$0xff]
  %v8769 = vld [vmem:[#allocation3 + $0x358] sm:$0xff]
  %v8770 = vpack.c.bf16 %v8720, %v8718
  %v8771 = vpack.c.bf16 %v8721, %v8719
  %v8772 = vpack.c.bf16 %v8724, %v8722
  %v8773 = vpack.c.bf16 %v8725, %v8723
  %v8774 = vpack.c.bf16 %v8728, %v8726
  %v8775 = vpack.c.bf16 %v8729, %v8727
  %v8776 = vpack.c.bf16 %v8732, %v8730
  %v8777 = vpack.c.bf16 %v8733, %v8731
  %v8778 = vpack.c.bf16 %v8736, %v8734
  %v8779 = vpack.c.bf16 %v8737, %v8735
  %v8780 = vpack.c.bf16 %v8740, %v8738
  %v8781 = vpack.c.bf16 %v8741, %v8739
  %v8782 = vpack.c.bf16 %v8744, %v8742
  %v8783 = vpack.c.bf16 %v8745, %v8743
  %v8784 = vpack.c.bf16 %v8748, %v8746
  %v8785 = vpack.c.bf16 %v8749, %v8747
  %v8786 = vpack.c.bf16 %v8752, %v8750
  %v8787 = vpack.c.bf16 %v8753, %v8751
  %v8788 = vpack.c.bf16 %v8756, %v8754
  %v8789 = vpack.c.bf16 %v8757, %v8755
  %v8790 = vpack.c.bf16 %v8760, %v8758
  %v8791 = vpack.c.bf16 %v8761, %v8759
  %v8792 = vpack.c.bf16 %v8764, %v8762
  %v8793 = vpack.c.bf16 %v8765, %v8763
  %v8794 = vpack.c.bf16 %v8768, %v8766
  %v8795 = vpack.c.bf16 %v8769, %v8767
  %v8796 = vld [vmem:[%s5] sm:$0xff]
  %v8797 = vld [vmem:[%s5 + $0x8] sm:$0xff]
  %v8798 = vld [vmem:[%s5 + $0x10] sm:$0xff]
  %v8799 = vld [vmem:[%s5 + $0x18] sm:$0xff]
  %v8800 = vld [vmem:[%s5 + $0x20] sm:$0xff]
  %v8801 = vld [vmem:[%s5 + $0x28] sm:$0xff]
  %v8802 = vld [vmem:[%s5 + $0x30] sm:$0xff]
  %v8803 = vld [vmem:[%s5 + $0x38] sm:$0xff]
  %v8804 = vld [vmem:[%s5 + $0x40] sm:$0xff]
  %v8805 = vld [vmem:[%s5 + $0x48] sm:$0xff]
  %v8806 = vld [vmem:[%s5 + $0x50] sm:$0xff]
  %v8807 = vld [vmem:[%s5 + $0x58] sm:$0xff]
  %v8808 = vld [vmem:[%s5 + $0x60] sm:$0xff]
  %v8809 = vld [vmem:[%s5 + $0x68] sm:$0xff]
  %v8810 = vld [vmem:[%s5 + $0x70] sm:$0xff]
  %v8811 = vld [vmem:[%s5 + $0x78] sm:$0xff]
  %v8812 = vld [vmem:[%s5 + $0x80] sm:$0xff]
  %v8813 = vld [vmem:[%s5 + $0x88] sm:$0xff]
  %v8814 = vld [vmem:[%s5 + $0x90] sm:$0xff]
  %v8815 = vld [vmem:[%s5 + $0x98] sm:$0xff]
  %v8816 = vld [vmem:[%s5 + $0xa0] sm:$0xff]
  %v8817 = vld [vmem:[%s5 + $0xa8] sm:$0xff]
  %v8818 = vld [vmem:[%s5 + $0xb0] sm:$0xff]
  %v8819 = vld [vmem:[%s5 + $0xb8] sm:$0xff]
  %v8820 = vld [vmem:[%s5 + $0xc0] sm:$0xff]
  %v8821 = vld [vmem:[%s5 + $0xc8] sm:$0xff]
  %v8822 = vld [vmem:[%s5 + $0xd0] sm:$0xff]
  %v8823 = vld [vmem:[%s5 + $0xd8] sm:$0xff]
  %v8824 = vld [vmem:[%s5 + $0xe0] sm:$0xff]
  %v8825 = vld [vmem:[%s5 + $0xe8] sm:$0xff]
  %v8826 = vld [vmem:[%s5 + $0xf0] sm:$0xff]
  %v8827 = vld [vmem:[%s5 + $0xf8] sm:$0xff]
  %v8828 = vld [vmem:[#allocation3 + $0x1c0] sm:$0xfe]
  %v8829 = vld [vmem:[#allocation3 + $0x1c8] sm:$0xfe]
  %v8830 = vld [vmem:[#allocation3 + $0x360] sm:$0x1]
  %v8831 = vld [vmem:[#allocation3 + $0x368] sm:$0x1]
  %v8832 = vpack.c.bf16 %v8720, %v8828
  %v8833 = vpack.c.bf16 %v8721, %v8829
  %v8834 = vpack.c.bf16 %v8830, %v8830
  %v8835 = vpack.c.bf16 %v8831, %v8831
  %v8836 = vld [vmem:[%s6244] sm:$0xff]
  %v8837 = vld [vmem:[%s6244 + $0x8] sm:$0xff]
  %v8838 = vld [vmem:[%s6244 + $0x10] sm:$0xff]
  %v8839 = vld [vmem:[%s6244 + $0x18] sm:$0xff]
  %v8840 = vld [vmem:[%s6244 + $0x20] sm:$0xff]
  %v8841 = vld [vmem:[%s6244 + $0x28] sm:$0xff]
  %v8842 = vld [vmem:[%s6244 + $0x30] sm:$0xff]
  %v8843 = vld [vmem:[%s6244 + $0x38] sm:$0xff]
  %v8844 = vld [vmem:[%s6244 + $0x40] sm:$0xff]
  %v8845 = vld [vmem:[%s6244 + $0x48] sm:$0xff]
  %v8846 = vld [vmem:[%s6244 + $0x50] sm:$0xff]
  %v8847 = vld [vmem:[%s6244 + $0x58] sm:$0xff]
  %v8848 = vld [vmem:[%s6244 + $0x60] sm:$0xff]
  %v8849 = vld [vmem:[%s6244 + $0x68] sm:$0xff]
  %v8850 = vld [vmem:[%s6244 + $0x70] sm:$0xff]
  %v8851 = vld [vmem:[%s6244 + $0x78] sm:$0xff]
  %v8852 = vld [vmem:[%s6244 + $0x80] sm:$0xff]
  %v8853 = vld [vmem:[%s6244 + $0x88] sm:$0xff]
  %v8854 = vld [vmem:[%s6244 + $0x90] sm:$0xff]
  %v8855 = vld [vmem:[%s6244 + $0x98] sm:$0xff]
  %v8856 = vld [vmem:[%s6244 + $0xa0] sm:$0xff]
  %v8857 = vld [vmem:[%s6244 + $0xa8] sm:$0xff]
  %v8858 = vld [vmem:[%s6244 + $0xb0] sm:$0xff]
  %v8859 = vld [vmem:[%s6244 + $0xb8] sm:$0xff]
  %v8860 = vld [vmem:[%s6244 + $0xc0] sm:$0xff]
  %v8861 = vld [vmem:[%s6244 + $0xc8] sm:$0xff]
  %v8862 = vld [vmem:[%s6244 + $0xd0] sm:$0xff]
  %v8863 = vld [vmem:[%s6244 + $0xd8] sm:$0xff]
  %v8864 = vld [vmem:[%s6244 + $0xe0] sm:$0xff]
  %v8865 = vld [vmem:[%s6244 + $0xe8] sm:$0xff]
  %v8866 = vld [vmem:[%s6244 + $0xf0] sm:$0xff]
  %v8867 = vld [vmem:[%s6244 + $0xf8] sm:$0xff]
  %v8869 = vshrl.u32 %v8832, 16
  %v8871 = vshll.u32 %v8832, 16
  %v8873 = vrot.slane %v8871, 1
  %v8874 = vor.u32 %v8869, %v8873
  %v8876 = vshll.u32 %v8772, 16
  %v8878 = vrot.slane %v8876, 1
  %v8879 = vsel %vm1207, %v8874, %v8878
  %v8881 = vshrl.u32 %v8833, 16
  %v8883 = vshll.u32 %v8833, 16
  %v8885 = vrot.slane %v8883, 1
  %v8886 = vor.u32 %v8881, %v8885
  %v8888 = vshll.u32 %v8773, 16
  %v8890 = vrot.slane %v8888, 1
  %v8891 = vsel %vm1207, %v8886, %v8890
  %v8892 = vshrl.u32 %v8772, 16
  %v8894 = vor.u32 %v8892, %v8878
  %v8896 = vshll.u32 %v8774, 16
  %v8898 = vrot.slane %v8896, 1
  %v8899 = vsel %vm1207, %v8894, %v8898
  %v8900 = vshrl.u32 %v8773, 16
  %v8902 = vor.u32 %v8900, %v8890
  %v8904 = vshll.u32 %v8775, 16
  %v8906 = vrot.slane %v8904, 1
  %v8907 = vsel %vm1207, %v8902, %v8906
  %v8908 = vshrl.u32 %v8774, 16
  %v8910 = vor.u32 %v8908, %v8898
  %v8912 = vshll.u32 %v8776, 16
  %v8914 = vrot.slane %v8912, 1
  %v8915 = vsel %vm1207, %v8910, %v8914
  %v8916 = vshrl.u32 %v8775, 16
  %v8918 = vor.u32 %v8916, %v8906
  %v8920 = vshll.u32 %v8777, 16
  %v8922 = vrot.slane %v8920, 1
  %v8923 = vsel %vm1207, %v8918, %v8922
  %v8924 = vshrl.u32 %v8776, 16
  %v8926 = vor.u32 %v8924, %v8914
  %v8928 = vshll.u32 %v8778, 16
  %v8930 = vrot.slane %v8928, 1
  %v8931 = vsel %vm1207, %v8926, %v8930
  %v8932 = vshrl.u32 %v8777, 16
  %v8934 = vor.u32 %v8932, %v8922
  %v8936 = vshll.u32 %v8779, 16
  %v8938 = vrot.slane %v8936, 1
  %v8939 = vsel %vm1207, %v8934, %v8938
  %v8940 = vshrl.u32 %v8778, 16
  %v8942 = vor.u32 %v8940, %v8930
  %v8944 = vshll.u32 %v8780, 16
  %v8946 = vrot.slane %v8944, 1
  %v8947 = vsel %vm1207, %v8942, %v8946
  %v8948 = vshrl.u32 %v8779, 16
  %v8950 = vor.u32 %v8948, %v8938
  %v8952 = vshll.u32 %v8781, 16
  %v8954 = vrot.slane %v8952, 1
  %v8955 = vsel %vm1207, %v8950, %v8954
  %v8956 = vshrl.u32 %v8780, 16
  %v8958 = vor.u32 %v8956, %v8946
  %v8960 = vshll.u32 %v8782, 16
  %v8962 = vrot.slane %v8960, 1
  %v8963 = vsel %vm1207, %v8958, %v8962
  %v8964 = vshrl.u32 %v8781, 16
  %v8966 = vor.u32 %v8964, %v8954
  %v8968 = vshll.u32 %v8783, 16
  %v8970 = vrot.slane %v8968, 1
  %v8971 = vsel %vm1207, %v8966, %v8970
  %v8972 = vshrl.u32 %v8782, 16
  %v8974 = vor.u32 %v8972, %v8962
  %v8976 = vshll.u32 %v8784, 16
  %v8978 = vrot.slane %v8976, 1
  %v8979 = vsel %vm1207, %v8974, %v8978
  %v8980 = vshrl.u32 %v8783, 16
  %v8982 = vor.u32 %v8980, %v8970
  %v8984 = vshll.u32 %v8785, 16
  %v8986 = vrot.slane %v8984, 1
  %v8987 = vsel %vm1207, %v8982, %v8986
  %v8988 = vshrl.u32 %v8784, 16
  %v8990 = vor.u32 %v8988, %v8978
  %v8992 = vshll.u32 %v8786, 16
  %v8994 = vrot.slane %v8992, 1
  %v8995 = vsel %vm1207, %v8990, %v8994
  %v8996 = vshrl.u32 %v8785, 16
  %v8998 = vor.u32 %v8996, %v8986
  %v9000 = vshll.u32 %v8787, 16
  %v9002 = vrot.slane %v9000, 1
  %v9003 = vsel %vm1207, %v8998, %v9002
  %v9004 = vshrl.u32 %v8786, 16
  %v9006 = vor.u32 %v9004, %v8994
  %v9008 = vshll.u32 %v8788, 16
  %v9010 = vrot.slane %v9008, 1
  %v9011 = vsel %vm1207, %v9006, %v9010
  %v9012 = vshrl.u32 %v8787, 16
  %v9014 = vor.u32 %v9012, %v9002
  %v9016 = vshll.u32 %v8789, 16
  %v9018 = vrot.slane %v9016, 1
  %v9019 = vsel %vm1207, %v9014, %v9018
  %v9020 = vshrl.u32 %v8788, 16
  %v9022 = vor.u32 %v9020, %v9010
  %v9024 = vshll.u32 %v8790, 16
  %v9026 = vrot.slane %v9024, 1
  %v9027 = vsel %vm1207, %v9022, %v9026
  %v9028 = vshrl.u32 %v8789, 16
  %v9030 = vor.u32 %v9028, %v9018
  %v9032 = vshll.u32 %v8791, 16
  %v9034 = vrot.slane %v9032, 1
  %v9035 = vsel %vm1207, %v9030, %v9034
  %v9036 = vshrl.u32 %v8790, 16
  %v9038 = vor.u32 %v9036, %v9026
  %v9040 = vshll.u32 %v8792, 16
  %v9042 = vrot.slane %v9040, 1
  %v9043 = vsel %vm1207, %v9038, %v9042
  %v9044 = vshrl.u32 %v8791, 16
  %v9046 = vor.u32 %v9044, %v9034
  %v9048 = vshll.u32 %v8793, 16
  %v9050 = vrot.slane %v9048, 1
  %v9051 = vsel %vm1207, %v9046, %v9050
  %v9052 = vshrl.u32 %v8792, 16
  %v9054 = vor.u32 %v9052, %v9042
  %v9056 = vshll.u32 %v8794, 16
  %v9058 = vrot.slane %v9056, 1
  %v9059 = vsel %vm1207, %v9054, %v9058
  %v9060 = vshrl.u32 %v8793, 16
  %v9062 = vor.u32 %v9060, %v9050
  %v9064 = vshll.u32 %v8795, 16
  %v9066 = vrot.slane %v9064, 1
  %v9067 = vsel %vm1207, %v9062, %v9066
  %v9068 = vshrl.u32 %v8794, 16
  %v9070 = vor.u32 %v9068, %v9058
  %v9072 = vshll.u32 %v8834, 16
  %v9074 = vrot.slane %v9072, 1
  %v9075 = vsel %vm1207, %v9070, %v9074
  %v9076 = vshrl.u32 %v8795, 16
  %v9078 = vor.u32 %v9076, %v9066
  %v9080 = vshll.u32 %v8835, 16
  %v9082 = vrot.slane %v9080, 1
  %v9083 = vsel %vm1207, %v9078, %v9082
  %v9142 = vunpack.c.l.b16 %v8836
  %v9143 = vunpack.c.h.b16 %v8836
  %v9144 = vunpack.c.l.b16 %v8837
  %v9145 = vunpack.c.h.b16 %v8837
  %v9146 = vunpack.c.l.b16 %v8838
  %v9147 = vunpack.c.h.b16 %v8838
  %v9148 = vunpack.c.l.b16 %v8839
  %v9149 = vunpack.c.h.b16 %v8839
  %v9150 = vunpack.c.l.b16 %v8840
  %v9151 = vunpack.c.h.b16 %v8840
  %v9152 = vunpack.c.l.b16 %v8841
  %v9153 = vunpack.c.h.b16 %v8841
  %v9154 = vunpack.c.l.b16 %v8842
  %v9155 = vunpack.c.h.b16 %v8842
  %v9156 = vunpack.c.l.b16 %v8843
  %v9157 = vunpack.c.h.b16 %v8843
  %v9158 = vunpack.c.l.b16 %v8844
  %v9159 = vunpack.c.h.b16 %v8844
  %v9160 = vunpack.c.l.b16 %v8845
  %v9161 = vunpack.c.h.b16 %v8845
  %v9162 = vunpack.c.l.b16 %v8846
  %v9163 = vunpack.c.h.b16 %v8846
  %v9164 = vunpack.c.l.b16 %v8847
  %v9165 = vunpack.c.h.b16 %v8847
  %v9166 = vunpack.c.l.b16 %v8848
  %v9167 = vunpack.c.h.b16 %v8848
  %v9168 = vunpack.c.l.b16 %v8849
  %v9169 = vunpack.c.h.b16 %v8849
  %v9170 = vunpack.c.l.b16 %v8850
  %v9171 = vunpack.c.h.b16 %v8850
  %v9172 = vunpack.c.l.b16 %v8851
  %v9173 = vunpack.c.h.b16 %v8851
  %v9174 = vunpack.c.l.b16 %v8852
  %v9175 = vunpack.c.h.b16 %v8852
  %v9176 = vunpack.c.l.b16 %v8853
  %v9177 = vunpack.c.h.b16 %v8853
  %v9178 = vunpack.c.l.b16 %v8854
  %v9179 = vunpack.c.h.b16 %v8854
  %v9180 = vunpack.c.l.b16 %v8855
  %v9181 = vunpack.c.h.b16 %v8855
  %v9182 = vunpack.c.l.b16 %v8856
  %v9183 = vunpack.c.h.b16 %v8856
  %v9184 = vunpack.c.l.b16 %v8857
  %v9185 = vunpack.c.h.b16 %v8857
  %v9186 = vunpack.c.l.b16 %v8858
  %v9187 = vunpack.c.h.b16 %v8858
  %v9188 = vunpack.c.l.b16 %v8859
  %v9189 = vunpack.c.h.b16 %v8859
  %v9190 = vunpack.c.l.b16 %v8860
  %v9191 = vunpack.c.h.b16 %v8860
  %v9192 = vunpack.c.l.b16 %v8861
  %v9193 = vunpack.c.h.b16 %v8861
  %v9194 = vunpack.c.l.b16 %v8862
  %v9195 = vunpack.c.h.b16 %v8862
  %v9196 = vunpack.c.l.b16 %v8863
  %v9197 = vunpack.c.h.b16 %v8863
  %v9198 = vunpack.c.l.b16 %v8864
  %v9199 = vunpack.c.h.b16 %v8864
  %v9200 = vunpack.c.l.b16 %v8865
  %v9201 = vunpack.c.h.b16 %v8865
  %v9202 = vunpack.c.l.b16 %v8866
  %v9203 = vunpack.c.h.b16 %v8866
  %v9204 = vunpack.c.l.b16 %v8867
  %v9205 = vunpack.c.h.b16 %v8867
  %v9206 = vpack.c.b16 %v9144, %v9142
  %v9207 = vpack.c.b16 %v9145, %v9143
  %v9208 = vpack.c.b16 %v9148, %v9146
  %v9209 = vpack.c.b16 %v9149, %v9147
  %v9210 = vpack.c.b16 %v9152, %v9150
  %v9211 = vpack.c.b16 %v9153, %v9151
  %v9212 = vpack.c.b16 %v9156, %v9154
  %v9213 = vpack.c.b16 %v9157, %v9155
  %v9214 = vpack.c.b16 %v9160, %v9158
  %v9215 = vpack.c.b16 %v9161, %v9159
  %v9216 = vpack.c.b16 %v9164, %v9162
  %v9217 = vpack.c.b16 %v9165, %v9163
  %v9218 = vpack.c.b16 %v9168, %v9166
  %v9219 = vpack.c.b16 %v9169, %v9167
  %v9220 = vpack.c.b16 %v9172, %v9170
  %v9221 = vpack.c.b16 %v9173, %v9171
  %v9222 = vpack.c.b16 %v9176, %v9174
  %v9223 = vpack.c.b16 %v9177, %v9175
  %v9224 = vpack.c.b16 %v9180, %v9178
  %v9225 = vpack.c.b16 %v9181, %v9179
  %v9226 = vpack.c.b16 %v9184, %v9182
  %v9227 = vpack.c.b16 %v9185, %v9183
  %v9228 = vpack.c.b16 %v9188, %v9186
  %v9229 = vpack.c.b16 %v9189, %v9187
  %v9230 = vpack.c.b16 %v9192, %v9190
  %v9231 = vpack.c.b16 %v9193, %v9191
  %v9232 = vpack.c.b16 %v9196, %v9194
  %v9233 = vpack.c.b16 %v9197, %v9195
  %v9234 = vpack.c.b16 %v9200, %v9198
  %v9235 = vpack.c.b16 %v9201, %v9199
  %v9236 = vpack.c.b16 %v9204, %v9202
  %v9237 = vpack.c.b16 %v9205, %v9203
  %9270 = vmatprep.subr.bf16.mxu0 %v9207
  %9271 = vmatpush1.bf16.msra.mxu0 %v9206
  %9272 = vmatprep.subr.bf16.mxu0 %v9209
  %9273 = vmatpush1.bf16.msra.mxu0 %v9208
  %9274 = vmatprep.subr.bf16.mxu0 %v9211
  %9275 = vmatpush1.bf16.msra.mxu0 %v9210
  %9276 = vmatprep.subr.bf16.mxu0 %v9213
  %9277 = vmatpush1.bf16.msra.mxu0 %v9212
  %9278 = vmatprep.subr.bf16.mxu0 %v9215
  %9279 = vmatpush1.bf16.msra.mxu0 %v9214
  %9280 = vmatprep.subr.bf16.mxu0 %v9217
  %9281 = vmatpush1.bf16.msra.mxu0 %v9216
  %9282 = vmatprep.subr.bf16.mxu0 %v9219
  %9283 = vmatpush1.bf16.msra.mxu0 %v9218
  %9284 = vmatprep.subr.bf16.mxu0 %v9221
  %9285 = vmatpush1.bf16.msra.mxu0 %v9220
  %9286 = vmatprep.subr.bf16.mxu0 %v9223
  %9287 = vmatpush1.bf16.msra.mxu0 %v9222
  %9288 = vmatprep.subr.bf16.mxu0 %v9225
  %9289 = vmatpush1.bf16.msra.mxu0 %v9224
  %9290 = vmatprep.subr.bf16.mxu0 %v9227
  %9291 = vmatpush1.bf16.msra.mxu0 %v9226
  %9292 = vmatprep.subr.bf16.mxu0 %v9229
  %9293 = vmatpush1.bf16.msra.mxu0 %v9228
  %9294 = vmatprep.subr.bf16.mxu0 %v9231
  %9295 = vmatpush1.bf16.msra.mxu0 %v9230
  %9296 = vmatprep.subr.bf16.mxu0 %v9233
  %9297 = vmatpush1.bf16.msra.mxu0 %v9232
  %9298 = vmatprep.subr.bf16.mxu0 %v9235
  %9299 = vmatpush1.bf16.msra.mxu0 %v9234
  %9300 = vmatprep.subr.bf16.mxu0 %v9237
  %9301 = vmatpush1.bf16.msra.mxu0 %v9236
  %9302 = vmatprep.mubr.bf16.mxu0 %v8891
  %9303 = vmatmul.mubr.bf16.gmra.mrb[0].mxu0 %v8879
  %v9304 = vpop.f32.mrb[0].mxu0
  %v9305 = vadd.f32 0.0, %v9304
  %v9306 = vpop.f32.mrb[0].mxu0
  %v9307 = vadd.f32 0.0, %v9306
  %v9308 = vpop.f32.mrb[0].mxu0
  %v9309 = vadd.f32 0.0, %v9308
  %v9310 = vpop.f32.mrb[0].mxu0
  %v9311 = vadd.f32 0.0, %v9310
  %9312 = vmatprep.mubr.bf16.mxu0 %v8907
  %9313 = vmatmul.mubr.bf16.gmra.mrb[0].mxu0 %v8899
  %v9314 = vpop.f32.mrb[0].mxu0
  %v9315 = vadd.f32 0.0, %v9314
  %v9316 = vpop.f32.mrb[0].mxu0
  %v9317 = vadd.f32 0.0, %v9316
  %v9318 = vpop.f32.mrb[0].mxu0
  %v9319 = vadd.f32 0.0, %v9318
  %v9320 = vpop.f32.mrb[0].mxu0
  %v9321 = vadd.f32 0.0, %v9320
  %9322 = vmatprep.mubr.bf16.mxu0 %v8923
  %9323 = vmatmul.mubr.bf16.gmra.mrb[0].mxu0 %v8915
  %v9324 = vpop.f32.mrb[0].mxu0
  %v9325 = vadd.f32 0.0, %v9324
  %v9326 = vpop.f32.mrb[0].mxu0
  %v9327 = vadd.f32 0.0, %v9326
  %v9328 = vpop.f32.mrb[0].mxu0
  %v9329 = vadd.f32 0.0, %v9328
  %v9330 = vpop.f32.mrb[0].mxu0
  %v9331 = vadd.f32 0.0, %v9330
  %9332 = vmatprep.mubr.bf16.mxu0 %v8939
  %9333 = vmatmul.mubr.bf16.gmra.mrb[0].mxu0 %v8931
  %v9334 = vpop.f32.mrb[0].mxu0
  %v9335 = vadd.f32 0.0, %v9334
  %v9336 = vpop.f32.mrb[0].mxu0
  %v9337 = vadd.f32 0.0, %v9336
  %v9338 = vpop.f32.mrb[0].mxu0
  %v9339 = vadd.f32 0.0, %v9338
  %v9340 = vpop.f32.mrb[0].mxu0
  %v9341 = vadd.f32 0.0, %v9340
  %9342 = vmatprep.mubr.bf16.mxu0 %v8955
  %9343 = vmatmul.mubr.bf16.gmra.mrb[0].mxu0 %v8947
  %v9344 = vpop.f32.mrb[0].mxu0
  %v9345 = vadd.f32 0.0, %v9344
  %v9346 = vpop.f32.mrb[0].mxu0
  %v9347 = vadd.f32 0.0, %v9346
  %v9348 = vpop.f32.mrb[0].mxu0
  %v9349 = vadd.f32 0.0, %v9348
  %v9350 = vpop.f32.mrb[0].mxu0
  %v9351 = vadd.f32 0.0, %v9350
  %9352 = vmatprep.mubr.bf16.mxu0 %v8971
  %9353 = vmatmul.mubr.bf16.gmra.mrb[0].mxu0 %v8963
  %v9354 = vpop.f32.mrb[0].mxu0
  %v9355 = vadd.f32 0.0, %v9354
  %v9356 = vpop.f32.mrb[0].mxu0
  %v9357 = vadd.f32 0.0, %v9356
  %v9358 = vpop.f32.mrb[0].mxu0
  %v9359 = vadd.f32 0.0, %v9358
  %v9360 = vpop.f32.mrb[0].mxu0
  %v9361 = vadd.f32 0.0, %v9360
  %9362 = vmatprep.mubr.bf16.mxu0 %v8987
  %9363 = vmatmul.mubr.bf16.gmra.mrb[0].mxu0 %v8979
  %v9364 = vpop.f32.mrb[0].mxu0
  %v9365 = vadd.f32 0.0, %v9364
  %v9366 = vpop.f32.mrb[0].mxu0
  %v9367 = vadd.f32 0.0, %v9366
  %v9368 = vpop.f32.mrb[0].mxu0
  %v9369 = vadd.f32 0.0, %v9368
  %v9370 = vpop.f32.mrb[0].mxu0
  %v9371 = vadd.f32 0.0, %v9370
  %9372 = vmatprep.mubr.bf16.mxu0 %v9003
  %9373 = vmatmul.mubr.bf16.gmra.mrb[0].mxu0 %v8995
  %v9374 = vpop.f32.mrb[0].mxu0
  %v9375 = vadd.f32 0.0, %v9374
  %v9376 = vpop.f32.mrb[0].mxu0
  %v9377 = vadd.f32 0.0, %v9376
  %v9378 = vpop.f32.mrb[0].mxu0
  %v9379 = vadd.f32 0.0, %v9378
  %v9380 = vpop.f32.mrb[0].mxu0
  %v9381 = vadd.f32 0.0, %v9380
  %9382 = vmatprep.mubr.bf16.mxu0 %v9019
  %9383 = vmatmul.mubr.bf16.gmra.mrb[0].mxu0 %v9011
  %v9384 = vpop.f32.mrb[0].mxu0
  %v9385 = vadd.f32 0.0, %v9384
  %v9386 = vpop.f32.mrb[0].mxu0
  %v9387 = vadd.f32 0.0, %v9386
  %v9388 = vpop.f32.mrb[0].mxu0
  %v9389 = vadd.f32 0.0, %v9388
  %v9390 = vpop.f32.mrb[0].mxu0
  %v9391 = vadd.f32 0.0, %v9390
  %9392 = vmatprep.mubr.bf16.mxu0 %v9035
  %9393 = vmatmul.mubr.bf16.gmra.mrb[0].mxu0 %v9027
  %v9394 = vpop.f32.mrb[0].mxu0
  %v9395 = vadd.f32 0.0, %v9394
  %v9396 = vpop.f32.mrb[0].mxu0
  %v9397 = vadd.f32 0.0, %v9396
  %v9398 = vpop.f32.mrb[0].mxu0
  %v9399 = vadd.f32 0.0, %v9398
  %v9400 = vpop.f32.mrb[0].mxu0
  %v9401 = vadd.f32 0.0, %v9400
  %9402 = vmatprep.mubr.bf16.mxu0 %v9051
  %9403 = vmatmul.mubr.bf16.gmra.mrb[0].mxu0 %v9043
  %v9404 = vpop.f32.mrb[0].mxu0
  %v9405 = vadd.f32 0.0, %v9404
  %v9406 = vpop.f32.mrb[0].mxu0
  %v9407 = vadd.f32 0.0, %v9406
  %v9408 = vpop.f32.mrb[0].mxu0
  %v9409 = vadd.f32 0.0, %v9408
  %v9410 = vpop.f32.mrb[0].mxu0
  %v9411 = vadd.f32 0.0, %v9410
  %9412 = vmatprep.mubr.bf16.mxu0 %v9067
  %9413 = vmatmul.mubr.bf16.gmra.mrb[0].mxu0 %v9059
  %v9414 = vpop.f32.mrb[0].mxu0
  %v9415 = vadd.f32 0.0, %v9414
  %v9416 = vpop.f32.mrb[0].mxu0
  %v9417 = vadd.f32 0.0, %v9416
  %v9418 = vpop.f32.mrb[0].mxu0
  %v9419 = vadd.f32 0.0, %v9418
  %v9420 = vpop.f32.mrb[0].mxu0
  %v9421 = vadd.f32 0.0, %v9420
  %9422 = vmatprep.mubr.bf16.mxu0 %v9083
  %9423 = vmatmul.mubr.bf16.gmra.mrb[0].mxu0 %v9075
  %v9424 = vpop.f32.mrb[0].mxu0
  %v9425 = vadd.f32 0.0, %v9424
  %v9426 = vpop.f32.mrb[0].mxu0
  %v9427 = vadd.f32 0.0, %v9426
  %v9428 = vpop.f32.mrb[0].mxu0
  %v9429 = vadd.f32 0.0, %v9428
  %v9430 = vpop.f32.mrb[0].mxu0
  %v9431 = vadd.f32 0.0, %v9430
  %9432 = vdwg.mxu0
  %v9465 = vunpack.c.l.b16 %v8796
  %v9466 = vunpack.c.h.b16 %v8796
  %v9467 = vunpack.c.l.b16 %v8797
  %v9468 = vunpack.c.h.b16 %v8797
  %v9469 = vunpack.c.l.b16 %v8798
  %v9470 = vunpack.c.h.b16 %v8798
  %v9471 = vunpack.c.l.b16 %v8799
  %v9472 = vunpack.c.h.b16 %v8799
  %v9473 = vunpack.c.l.b16 %v8800
  %v9474 = vunpack.c.h.b16 %v8800
  %v9475 = vunpack.c.l.b16 %v8801
  %v9476 = vunpack.c.h.b16 %v8801
  %v9477 = vunpack.c.l.b16 %v8802
  %v9478 = vunpack.c.h.b16 %v8802
  %v9479 = vunpack.c.l.b16 %v8803
  %v9480 = vunpack.c.h.b16 %v8803
  %v9481 = vunpack.c.l.b16 %v8804
  %v9482 = vunpack.c.h.b16 %v8804
  %v9483 = vunpack.c.l.b16 %v8805
  %v9484 = vunpack.c.h.b16 %v8805
  %v9485 = vunpack.c.l.b16 %v8806
  %v9486 = vunpack.c.h.b16 %v8806
  %v9487 = vunpack.c.l.b16 %v8807
  %v9488 = vunpack.c.h.b16 %v8807
  %v9489 = vunpack.c.l.b16 %v8808
  %v9490 = vunpack.c.h.b16 %v8808
  %v9491 = vunpack.c.l.b16 %v8809
  %v9492 = vunpack.c.h.b16 %v8809
  %v9493 = vunpack.c.l.b16 %v8810
  %v9494 = vunpack.c.h.b16 %v8810
  %v9495 = vunpack.c.l.b16 %v8811
  %v9496 = vunpack.c.h.b16 %v8811
  %v9497 = vunpack.c.l.b16 %v8812
  %v9498 = vunpack.c.h.b16 %v8812
  %v9499 = vunpack.c.l.b16 %v8813
  %v9500 = vunpack.c.h.b16 %v8813
  %v9501 = vunpack.c.l.b16 %v8814
  %v9502 = vunpack.c.h.b16 %v8814
  %v9503 = vunpack.c.l.b16 %v8815
  %v9504 = vunpack.c.h.b16 %v8815
  %v9505 = vunpack.c.l.b16 %v8816
  %v9506 = vunpack.c.h.b16 %v8816
  %v9507 = vunpack.c.l.b16 %v8817
  %v9508 = vunpack.c.h.b16 %v8817
  %v9509 = vunpack.c.l.b16 %v8818
  %v9510 = vunpack.c.h.b16 %v8818
  %v9511 = vunpack.c.l.b16 %v8819
  %v9512 = vunpack.c.h.b16 %v8819
  %v9513 = vunpack.c.l.b16 %v8820
  %v9514 = vunpack.c.h.b16 %v8820
  %v9515 = vunpack.c.l.b16 %v8821
  %v9516 = vunpack.c.h.b16 %v8821
  %v9517 = vunpack.c.l.b16 %v8822
  %v9518 = vunpack.c.h.b16 %v8822
  %v9519 = vunpack.c.l.b16 %v8823
  %v9520 = vunpack.c.h.b16 %v8823
  %v9521 = vunpack.c.l.b16 %v8824
  %v9522 = vunpack.c.h.b16 %v8824
  %v9523 = vunpack.c.l.b16 %v8825
  %v9524 = vunpack.c.h.b16 %v8825
  %v9525 = vunpack.c.l.b16 %v8826
  %v9526 = vunpack.c.h.b16 %v8826
  %v9527 = vunpack.c.l.b16 %v8827
  %v9528 = vunpack.c.h.b16 %v8827
  %v9529 = vpack.c.b16 %v9467, %v9465
  %v9530 = vpack.c.b16 %v9468, %v9466
  %v9531 = vpack.c.b16 %v9471, %v9469
  %v9532 = vpack.c.b16 %v9472, %v9470
  %v9533 = vpack.c.b16 %v9475, %v9473
  %v9534 = vpack.c.b16 %v9476, %v9474
  %v9535 = vpack.c.b16 %v9479, %v9477
  %v9536 = vpack.c.b16 %v9480, %v9478
  %v9537 = vpack.c.b16 %v9483, %v9481
  %v9538 = vpack.c.b16 %v9484, %v9482
  %v9539 = vpack.c.b16 %v9487, %v9485
  %v9540 = vpack.c.b16 %v9488, %v9486
  %v9541 = vpack.c.b16 %v9491, %v9489
  %v9542 = vpack.c.b16 %v9492, %v9490
  %v9543 = vpack.c.b16 %v9495, %v9493
  %v9544 = vpack.c.b16 %v9496, %v9494
  %v9545 = vpack.c.b16 %v9499, %v9497
  %v9546 = vpack.c.b16 %v9500, %v9498
  %v9547 = vpack.c.b16 %v9503, %v9501
  %v9548 = vpack.c.b16 %v9504, %v9502
  %v9549 = vpack.c.b16 %v9507, %v9505
  %v9550 = vpack.c.b16 %v9508, %v9506
  %v9551 = vpack.c.b16 %v9511, %v9509
  %v9552 = vpack.c.b16 %v9512, %v9510
  %v9553 = vpack.c.b16 %v9515, %v9513
  %v9554 = vpack.c.b16 %v9516, %v9514
  %v9555 = vpack.c.b16 %v9519, %v9517
  %v9556 = vpack.c.b16 %v9520, %v9518
  %v9557 = vpack.c.b16 %v9523, %v9521
  %v9558 = vpack.c.b16 %v9524, %v9522
  %v9559 = vpack.c.b16 %v9527, %v9525
  %v9560 = vpack.c.b16 %v9528, %v9526
  %9593 = vmatprep.subr.bf16.mxu0 %v9530
  %9594 = vmatpush1.bf16.msra.mxu0 %v9529
  %9595 = vmatprep.subr.bf16.mxu0 %v9532
  %9596 = vmatpush1.bf16.msra.mxu0 %v9531
  %9597 = vmatprep.subr.bf16.mxu0 %v9534
  %9598 = vmatpush1.bf16.msra.mxu0 %v9533
  %9599 = vmatprep.subr.bf16.mxu0 %v9536
  %9600 = vmatpush1.bf16.msra.mxu0 %v9535
  %9601 = vmatprep.subr.bf16.mxu0 %v9538
  %9602 = vmatpush1.bf16.msra.mxu0 %v9537
  %9603 = vmatprep.subr.bf16.mxu0 %v9540
  %9604 = vmatpush1.bf16.msra.mxu0 %v9539
  %9605 = vmatprep.subr.bf16.mxu0 %v9542
  %9606 = vmatpush1.bf16.msra.mxu0 %v9541
  %9607 = vmatprep.subr.bf16.mxu0 %v9544
  %9608 = vmatpush1.bf16.msra.mxu0 %v9543
  %9609 = vmatprep.subr.bf16.mxu0 %v9546
  %9610 = vmatpush1.bf16.msra.mxu0 %v9545
  %9611 = vmatprep.subr.bf16.mxu0 %v9548
  %9612 = vmatpush1.bf16.msra.mxu0 %v9547
  %9613 = vmatprep.subr.bf16.mxu0 %v9550
  %9614 = vmatpush1.bf16.msra.mxu0 %v9549
  %9615 = vmatprep.subr.bf16.mxu0 %v9552
  %9616 = vmatpush1.bf16.msra.mxu0 %v9551
  %9617 = vmatprep.subr.bf16.mxu0 %v9554
  %9618 = vmatpush1.bf16.msra.mxu0 %v9553
  %9619 = vmatprep.subr.bf16.mxu0 %v9556
  %9620 = vmatpush1.bf16.msra.mxu0 %v9555
  %9621 = vmatprep.subr.bf16.mxu0 %v9558
  %9622 = vmatpush1.bf16.msra.mxu0 %v9557
  %9623 = vmatprep.subr.bf16.mxu0 %v9560
  %9624 = vmatpush1.bf16.msra.mxu0 %v9559
  %9625 = vmatprep.mubr.bf16.mxu0 %v8771
  %9626 = vmatmul.mubr.bf16.gmra.mrb[0].mxu0 %v8770
  %v9627 = vpop.f32.mrb[0].mxu0
  %v9628 = vadd.f32 %v9305, %v9627
  %v9629 = vpop.f32.mrb[0].mxu0
  %v9630 = vadd.f32 %v9307, %v9629
  %v9631 = vpop.f32.mrb[0].mxu0
  %v9632 = vadd.f32 %v9309, %v9631
  %v9633 = vpop.f32.mrb[0].mxu0
  %v9634 = vadd.f32 %v9311, %v9633
  %9635 = vmatprep.mubr.bf16.mxu0 %v8773
  %9636 = vmatmul.mubr.bf16.gmra.mrb[0].mxu0 %v8772
  %v9637 = vpop.f32.mrb[0].mxu0
  %v9638 = vadd.f32 %v9315, %v9637
  %v9639 = vpop.f32.mrb[0].mxu0
  %v9640 = vadd.f32 %v9317, %v9639
  %v9641 = vpop.f32.mrb[0].mxu0
  %v9642 = vadd.f32 %v9319, %v9641
  %v9643 = vpop.f32.mrb[0].mxu0
  %v9644 = vadd.f32 %v9321, %v9643
  %9645 = vmatprep.mubr.bf16.mxu0 %v8775
  %9646 = vmatmul.mubr.bf16.gmra.mrb[0].mxu0 %v8774
  %v9647 = vpop.f32.mrb[0].mxu0
  %v9648 = vadd.f32 %v9325, %v9647
  %v9649 = vpop.f32.mrb[0].mxu0
  %v9650 = vadd.f32 %v9327, %v9649
  %v9651 = vpop.f32.mrb[0].mxu0
  %v9652 = vadd.f32 %v9329, %v9651
  %v9653 = vpop.f32.mrb[0].mxu0
  %v9654 = vadd.f32 %v9331, %v9653
  %9655 = vmatprep.mubr.bf16.mxu0 %v8777
  %9656 = vmatmul.mubr.bf16.gmra.mrb[0].mxu0 %v8776
  %v9657 = vpop.f32.mrb[0].mxu0
  %v9658 = vadd.f32 %v9335, %v9657
  %v9659 = vpop.f32.mrb[0].mxu0
  %v9660 = vadd.f32 %v9337, %v9659
  %v9661 = vpop.f32.mrb[0].mxu0
  %v9662 = vadd.f32 %v9339, %v9661
  %v9663 = vpop.f32.mrb[0].mxu0
  %v9664 = vadd.f32 %v9341, %v9663
  %9665 = vmatprep.mubr.bf16.mxu0 %v8779
  %9666 = vmatmul.mubr.bf16.gmra.mrb[0].mxu0 %v8778
  %v9667 = vpop.f32.mrb[0].mxu0
  %v9668 = vadd.f32 %v9345, %v9667
  %v9669 = vpop.f32.mrb[0].mxu0
  %v9670 = vadd.f32 %v9347, %v9669
  %v9671 = vpop.f32.mrb[0].mxu0
  %v9672 = vadd.f32 %v9349, %v9671
  %v9673 = vpop.f32.mrb[0].mxu0
  %v9674 = vadd.f32 %v9351, %v9673
  %9675 = vmatprep.mubr.bf16.mxu0 %v8781
  %9676 = vmatmul.mubr.bf16.gmra.mrb[0].mxu0 %v8780
  %v9677 = vpop.f32.mrb[0].mxu0
  %v9678 = vadd.f32 %v9355, %v9677
  %v9679 = vpop.f32.mrb[0].mxu0
  %v9680 = vadd.f32 %v9357, %v9679
  %v9681 = vpop.f32.mrb[0].mxu0
  %v9682 = vadd.f32 %v9359, %v9681
  %v9683 = vpop.f32.mrb[0].mxu0
  %v9684 = vadd.f32 %v9361, %v9683
  %9685 = vmatprep.mubr.bf16.mxu0 %v8783
  %9686 = vmatmul.mubr.bf16.gmra.mrb[0].mxu0 %v8782
  %v9687 = vpop.f32.mrb[0].mxu0
  %v9688 = vadd.f32 %v9365, %v9687
  %v9689 = vpop.f32.mrb[0].mxu0
  %v9690 = vadd.f32 %v9367, %v9689
  %v9691 = vpop.f32.mrb[0].mxu0
  %v9692 = vadd.f32 %v9369, %v9691
  %v9693 = vpop.f32.mrb[0].mxu0
  %v9694 = vadd.f32 %v9371, %v9693
  %9695 = vmatprep.mubr.bf16.mxu0 %v8785
  %9696 = vmatmul.mubr.bf16.gmra.mrb[0].mxu0 %v8784
  %v9697 = vpop.f32.mrb[0].mxu0
  %v9698 = vadd.f32 %v9375, %v9697
  %v9699 = vpop.f32.mrb[0].mxu0
  %v9700 = vadd.f32 %v9377, %v9699
  %v9701 = vpop.f32.mrb[0].mxu0
  %v9702 = vadd.f32 %v9379, %v9701
  %v9703 = vpop.f32.mrb[0].mxu0
  %v9704 = vadd.f32 %v9381, %v9703
  %9705 = vmatprep.mubr.bf16.mxu0 %v8787
  %9706 = vmatmul.mubr.bf16.gmra.mrb[0].mxu0 %v8786
  %v9707 = vpop.f32.mrb[0].mxu0
  %v9708 = vadd.f32 %v9385, %v9707
  %v9709 = vpop.f32.mrb[0].mxu0
  %v9710 = vadd.f32 %v9387, %v9709
  %v9711 = vpop.f32.mrb[0].mxu0
  %v9712 = vadd.f32 %v9389, %v9711
  %v9713 = vpop.f32.mrb[0].mxu0
  %v9714 = vadd.f32 %v9391, %v9713
  %9715 = vmatprep.mubr.bf16.mxu0 %v8789
  %9716 = vmatmul.mubr.bf16.gmra.mrb[0].mxu0 %v8788
  %v9717 = vpop.f32.mrb[0].mxu0
  %v9718 = vadd.f32 %v9395, %v9717
  %v9719 = vpop.f32.mrb[0].mxu0
  %v9720 = vadd.f32 %v9397, %v9719
  %v9721 = vpop.f32.mrb[0].mxu0
  %v9722 = vadd.f32 %v9399, %v9721
  %v9723 = vpop.f32.mrb[0].mxu0
  %v9724 = vadd.f32 %v9401, %v9723
  %9725 = vmatprep.mubr.bf16.mxu0 %v8791
  %9726 = vmatmul.mubr.bf16.gmra.mrb[0].mxu0 %v8790
  %v9727 = vpop.f32.mrb[0].mxu0
  %v9728 = vadd.f32 %v9405, %v9727
  %v9729 = vpop.f32.mrb[0].mxu0
  %v9730 = vadd.f32 %v9407, %v9729
  %v9731 = vpop.f32.mrb[0].mxu0
  %v9732 = vadd.f32 %v9409, %v9731
  %v9733 = vpop.f32.mrb[0].mxu0
  %v9734 = vadd.f32 %v9411, %v9733
  %9735 = vmatprep.mubr.bf16.mxu0 %v8793
  %9736 = vmatmul.mubr.bf16.gmra.mrb[0].mxu0 %v8792
  %v9737 = vpop.f32.mrb[0].mxu0
  %v9738 = vadd.f32 %v9415, %v9737
  %v9739 = vpop.f32.mrb[0].mxu0
  %v9740 = vadd.f32 %v9417, %v9739
  %v9741 = vpop.f32.mrb[0].mxu0
  %v9742 = vadd.f32 %v9419, %v9741
  %v9743 = vpop.f32.mrb[0].mxu0
  %v9744 = vadd.f32 %v9421, %v9743
  %9745 = vmatprep.mubr.bf16.mxu0 %v8795
  %9746 = vmatmul.mubr.bf16.gmra.mrb[0].mxu0 %v8794
  %v9747 = vpop.f32.mrb[0].mxu0
  %v9748 = vadd.f32 %v9425, %v9747
  %v9749 = vpop.f32.mrb[0].mxu0
  %v9750 = vadd.f32 %v9427, %v9749
  %v9751 = vpop.f32.mrb[0].mxu0
  %v9752 = vadd.f32 %v9429, %v9751
  %v9753 = vpop.f32.mrb[0].mxu0
  %v9754 = vadd.f32 %v9431, %v9753
  %9755 = vdwg.mxu0
  %v9756 = vld [vmem:[#allocation3 + $0x1e0] sm:$0xff]
  %v9757 = vld [vmem:[#allocation3 + $0x1e8] sm:$0xff]
  %v9758 = vld [vmem:[#allocation3 + $0x1f0] sm:$0xff]
  %v9759 = vld [vmem:[#allocation3 + $0x1f8] sm:$0xff]
  %v9760 = vld [vmem:[#allocation3 + $0x200] sm:$0xff]
  %v9761 = vld [vmem:[#allocation3 + $0x208] sm:$0xff]
  %v9762 = vld [vmem:[#allocation3 + $0x210] sm:$0xff]
  %v9763 = vld [vmem:[#allocation3 + $0x218] sm:$0xff]
  %v9764 = vld [vmem:[#allocation3 + $0x220] sm:$0xff]
  %v9765 = vld [vmem:[#allocation3 + $0x228] sm:$0xff]
  %v9766 = vld [vmem:[#allocation3 + $0x230] sm:$0xff]
  %v9767 = vld [vmem:[#allocation3 + $0x238] sm:$0xff]
  %v9768 = vld [vmem:[#allocation3 + $0x240] sm:$0xff]
  %v9769 = vld [vmem:[#allocation3 + $0x248] sm:$0xff]
  %v9770 = vld [vmem:[#allocation3 + $0x250] sm:$0xff]
  %v9771 = vld [vmem:[#allocation3 + $0x258] sm:$0xff]
  %v9772 = vld [vmem:[#allocation3 + $0x260] sm:$0xff]
  %v9773 = vld [vmem:[#allocation3 + $0x268] sm:$0xff]
  %v9774 = vld [vmem:[#allocation3 + $0x270] sm:$0xff]
  %v9775 = vld [vmem:[#allocation3 + $0x278] sm:$0xff]
  %v9776 = vld [vmem:[#allocation3 + $0x280] sm:$0xff]
  %v9777 = vld [vmem:[#allocation3 + $0x288] sm:$0xff]
  %v9778 = vld [vmem:[#allocation3 + $0x290] sm:$0xff]
  %v9779 = vld [vmem:[#allocation3 + $0x298] sm:$0xff]
  %v9780 = vld [vmem:[#allocation3 + $0x2a0] sm:$0xff]
  %v9781 = vld [vmem:[#allocation3 + $0x2a8] sm:$0xff]
  %v9782 = vld [vmem:[#allocation3 + $0x2b0] sm:$0xff]
  %v9783 = vld [vmem:[#allocation3 + $0x2b8] sm:$0xff]
  %v9784 = vld [vmem:[#allocation3 + $0x2c0] sm:$0xff]
  %v9785 = vld [vmem:[#allocation3 + $0x2c8] sm:$0xff]
  %v9786 = vld [vmem:[#allocation3 + $0x2d0] sm:$0xff]
  %v9787 = vld [vmem:[#allocation3 + $0x2d8] sm:$0xff]
  %v9788 = vld [vmem:[#allocation3 + $0x2e0] sm:$0xff]
  %v9789 = vld [vmem:[#allocation3 + $0x2e8] sm:$0xff]
  %v9790 = vld [vmem:[#allocation3 + $0x2f0] sm:$0xff]
  %v9791 = vld [vmem:[#allocation3 + $0x2f8] sm:$0xff]
  %v9792 = vld [vmem:[#allocation3 + $0x300] sm:$0xff]
  %v9793 = vld [vmem:[#allocation3 + $0x308] sm:$0xff]
  %v9794 = vld [vmem:[#allocation3 + $0x310] sm:$0xff]
  %v9795 = vld [vmem:[#allocation3 + $0x318] sm:$0xff]
  %v9796 = vld [vmem:[#allocation3 + $0x320] sm:$0xff]
  %v9797 = vld [vmem:[#allocation3 + $0x328] sm:$0xff]
  %v9798 = vld [vmem:[#allocation3 + $0x330] sm:$0xff]
  %v9799 = vld [vmem:[#allocation3 + $0x338] sm:$0xff]
  %v9800 = vld [vmem:[#allocation3 + $0x340] sm:$0xff]
  %v9801 = vld [vmem:[#allocation3 + $0x348] sm:$0xff]
  %v9802 = vld [vmem:[#allocation3 + $0x350] sm:$0xff]
  %v9803 = vld [vmem:[#allocation3 + $0x358] sm:$0xff]
  %v9804 = vld [vmem:[#allocation3 + $0x360] sm:$0xff]
  %v9805 = vld [vmem:[#allocation3 + $0x368] sm:$0xff]
  %v9806 = vld [vmem:[#allocation3 + $0x370] sm:$0xff]
  %v9807 = vld [vmem:[#allocation3 + $0x378] sm:$0xff]
  %v9808 = vpack.c.bf16 %v9758, %v9756
  %v9809 = vpack.c.bf16 %v9759, %v9757
  %v9810 = vpack.c.bf16 %v9762, %v9760
  %v9811 = vpack.c.bf16 %v9763, %v9761
  %v9812 = vpack.c.bf16 %v9766, %v9764
  %v9813 = vpack.c.bf16 %v9767, %v9765
  %v9814 = vpack.c.bf16 %v9770, %v9768
  %v9815 = vpack.c.bf16 %v9771, %v9769
  %v9816 = vpack.c.bf16 %v9774, %v9772
  %v9817 = vpack.c.bf16 %v9775, %v9773
  %v9818 = vpack.c.bf16 %v9778, %v9776
  %v9819 = vpack.c.bf16 %v9779, %v9777
  %v9820 = vpack.c.bf16 %v9782, %v9780
  %v9821 = vpack.c.bf16 %v9783, %v9781
  %v9822 = vpack.c.bf16 %v9786, %v9784
  %v9823 = vpack.c.bf16 %v9787, %v9785
  %v9824 = vpack.c.bf16 %v9790, %v9788
  %v9825 = vpack.c.bf16 %v9791, %v9789
  %v9826 = vpack.c.bf16 %v9794, %v9792
  %v9827 = vpack.c.bf16 %v9795, %v9793
  %v9828 = vpack.c.bf16 %v9798, %v9796
  %v9829 = vpack.c.bf16 %v9799, %v9797
  %v9830 = vpack.c.bf16 %v9802, %v9800
  %v9831 = vpack.c.bf16 %v9803, %v9801
  %v9832 = vpack.c.bf16 %v9806, %v9804
  %v9833 = vpack.c.bf16 %v9807, %v9805
  %v9834 = vld [vmem:[%s7243] sm:$0xff]
  %v9835 = vld [vmem:[%s7243 + $0x8] sm:$0xff]
  %v9836 = vld [vmem:[%s7243 + $0x10] sm:$0xff]
  %v9837 = vld [vmem:[%s7243 + $0x18] sm:$0xff]
  %v9838 = vld [vmem:[%s7243 + $0x20] sm:$0xff]
  %v9839 = vld [vmem:[%s7243 + $0x28] sm:$0xff]
  %v9840 = vld [vmem:[%s7243 + $0x30] sm:$0xff]
  %v9841 = vld [vmem:[%s7243 + $0x38] sm:$0xff]
  %v9842 = vld [vmem:[%s7243 + $0x40] sm:$0xff]
  %v9843 = vld [vmem:[%s7243 + $0x48] sm:$0xff]
  %v9844 = vld [vmem:[%s7243 + $0x50] sm:$0xff]
  %v9845 = vld [vmem:[%s7243 + $0x58] sm:$0xff]
  %v9846 = vld [vmem:[%s7243 + $0x60] sm:$0xff]
  %v9847 = vld [vmem:[%s7243 + $0x68] sm:$0xff]
  %v9848 = vld [vmem:[%s7243 + $0x70] sm:$0xff]
  %v9849 = vld [vmem:[%s7243 + $0x78] sm:$0xff]
  %v9850 = vld [vmem:[%s7243 + $0x80] sm:$0xff]
  %v9851 = vld [vmem:[%s7243 + $0x88] sm:$0xff]
  %v9852 = vld [vmem:[%s7243 + $0x90] sm:$0xff]
  %v9853 = vld [vmem:[%s7243 + $0x98] sm:$0xff]
  %v9854 = vld [vmem:[%s7243 + $0xa0] sm:$0xff]
  %v9855 = vld [vmem:[%s7243 + $0xa8] sm:$0xff]
  %v9856 = vld [vmem:[%s7243 + $0xb0] sm:$0xff]
  %v9857 = vld [vmem:[%s7243 + $0xb8] sm:$0xff]
  %v9858 = vld [vmem:[%s7243 + $0xc0] sm:$0xff]
  %v9859 = vld [vmem:[%s7243 + $0xc8] sm:$0xff]
  %v9860 = vld [vmem:[%s7243 + $0xd0] sm:$0xff]
  %v9861 = vld [vmem:[%s7243 + $0xd8] sm:$0xff]
  %v9862 = vld [vmem:[%s7243 + $0xe0] sm:$0xff]
  %v9863 = vld [vmem:[%s7243 + $0xe8] sm:$0xff]
  %v9864 = vld [vmem:[%s7243 + $0xf0] sm:$0xff]
  %v9865 = vld [vmem:[%s7243 + $0xf8] sm:$0xff]
  %v9898 = vunpack.c.l.b16 %v9834
  %v9899 = vunpack.c.h.b16 %v9834
  %v9900 = vunpack.c.l.b16 %v9835
  %v9901 = vunpack.c.h.b16 %v9835
  %v9902 = vunpack.c.l.b16 %v9836
  %v9903 = vunpack.c.h.b16 %v9836
  %v9904 = vunpack.c.l.b16 %v9837
  %v9905 = vunpack.c.h.b16 %v9837
  %v9906 = vunpack.c.l.b16 %v9838
  %v9907 = vunpack.c.h.b16 %v9838
  %v9908 = vunpack.c.l.b16 %v9839
  %v9909 = vunpack.c.h.b16 %v9839
  %v9910 = vunpack.c.l.b16 %v9840
  %v9911 = vunpack.c.h.b16 %v9840
  %v9912 = vunpack.c.l.b16 %v9841
  %v9913 = vunpack.c.h.b16 %v9841
  %v9914 = vunpack.c.l.b16 %v9842
  %v9915 = vunpack.c.h.b16 %v9842
  %v9916 = vunpack.c.l.b16 %v9843
  %v9917 = vunpack.c.h.b16 %v9843
  %v9918 = vunpack.c.l.b16 %v9844
  %v9919 = vunpack.c.h.b16 %v9844
  %v9920 = vunpack.c.l.b16 %v9845
  %v9921 = vunpack.c.h.b16 %v9845
  %v9922 = vunpack.c.l.b16 %v9846
  %v9923 = vunpack.c.h.b16 %v9846
  %v9924 = vunpack.c.l.b16 %v9847
  %v9925 = vunpack.c.h.b16 %v9847
  %v9926 = vunpack.c.l.b16 %v9848
  %v9927 = vunpack.c.h.b16 %v9848
  %v9928 = vunpack.c.l.b16 %v9849
  %v9929 = vunpack.c.h.b16 %v9849
  %v9930 = vunpack.c.l.b16 %v9850
  %v9931 = vunpack.c.h.b16 %v9850
  %v9932 = vunpack.c.l.b16 %v9851
  %v9933 = vunpack.c.h.b16 %v9851
  %v9934 = vunpack.c.l.b16 %v9852
  %v9935 = vunpack.c.h.b16 %v9852
  %v9936 = vunpack.c.l.b16 %v9853
  %v9937 = vunpack.c.h.b16 %v9853
  %v9938 = vunpack.c.l.b16 %v9854
  %v9939 = vunpack.c.h.b16 %v9854
  %v9940 = vunpack.c.l.b16 %v9855
  %v9941 = vunpack.c.h.b16 %v9855
  %v9942 = vunpack.c.l.b16 %v9856
  %v9943 = vunpack.c.h.b16 %v9856
  %v9944 = vunpack.c.l.b16 %v9857
  %v9945 = vunpack.c.h.b16 %v9857
  %v9946 = vunpack.c.l.b16 %v9858
  %v9947 = vunpack.c.h.b16 %v9858
  %v9948 = vunpack.c.l.b16 %v9859
  %v9949 = vunpack.c.h.b16 %v9859
  %v9950 = vunpack.c.l.b16 %v9860
  %v9951 = vunpack.c.h.b16 %v9860
  %v9952 = vunpack.c.l.b16 %v9861
  %v9953 = vunpack.c.h.b16 %v9861
  %v9954 = vunpack.c.l.b16 %v9862
  %v9955 = vunpack.c.h.b16 %v9862
  %v9956 = vunpack.c.l.b16 %v9863
  %v9957 = vunpack.c.h.b16 %v9863
  %v9958 = vunpack.c.l.b16 %v9864
  %v9959 = vunpack.c.h.b16 %v9864
  %v9960 = vunpack.c.l.b16 %v9865
  %v9961 = vunpack.c.h.b16 %v9865
  %v9962 = vpack.c.b16 %v9900, %v9898
  %v9963 = vpack.c.b16 %v9901, %v9899
  %v9964 = vpack.c.b16 %v9904, %v9902
  %v9965 = vpack.c.b16 %v9905, %v9903
  %v9966 = vpack.c.b16 %v9908, %v9906
  %v9967 = vpack.c.b16 %v9909, %v9907
  %v9968 = vpack.c.b16 %v9912, %v9910
  %v9969 = vpack.c.b16 %v9913, %v9911
  %v9970 = vpack.c.b16 %v9916, %v9914
  %v9971 = vpack.c.b16 %v9917, %v9915
  %v9972 = vpack.c.b16 %v9920, %v9918
  %v9973 = vpack.c.b16 %v9921, %v9919
  %v9974 = vpack.c.b16 %v9924, %v9922
  %v9975 = vpack.c.b16 %v9925, %v9923
  %v9976 = vpack.c.b16 %v9928, %v9926
  %v9977 = vpack.c.b16 %v9929, %v9927
  %v9978 = vpack.c.b16 %v9932, %v9930
  %v9979 = vpack.c.b16 %v9933, %v9931
  %v9980 = vpack.c.b16 %v9936, %v9934
  %v9981 = vpack.c.b16 %v9937, %v9935
  %v9982 = vpack.c.b16 %v9940, %v9938
  %v9983 = vpack.c.b16 %v9941, %v9939
  %v9984 = vpack.c.b16 %v9944, %v9942
  %v9985 = vpack.c.b16 %v9945, %v9943
  %v9986 = vpack.c.b16 %v9948, %v9946
  %v9987 = vpack.c.b16 %v9949, %v9947
  %v9988 = vpack.c.b16 %v9952, %v9950
  %v9989 = vpack.c.b16 %v9953, %v9951
  %v9990 = vpack.c.b16 %v9956, %v9954
  %v9991 = vpack.c.b16 %v9957, %v9955
  %v9992 = vpack.c.b16 %v9960, %v9958
  %v9993 = vpack.c.b16 %v9961, %v9959
  %10026 = vmatprep.subr.bf16.mxu0 %v9963
  %10027 = vmatpush1.bf16.msra.mxu0 %v9962
  %10028 = vmatprep.subr.bf16.mxu0 %v9965
  %10029 = vmatpush1.bf16.msra.mxu0 %v9964
  %10030 = vmatprep.subr.bf16.mxu0 %v9967
  %10031 = vmatpush1.bf16.msra.mxu0 %v9966
  %10032 = vmatprep.subr.bf16.mxu0 %v9969
  %10033 = vmatpush1.bf16.msra.mxu0 %v9968
  %10034 = vmatprep.subr.bf16.mxu0 %v9971
  %10035 = vmatpush1.bf16.msra.mxu0 %v9970
  %10036 = vmatprep.subr.bf16.mxu0 %v9973
  %10037 = vmatpush1.bf16.msra.mxu0 %v9972
  %10038 = vmatprep.subr.bf16.mxu0 %v9975
  %10039 = vmatpush1.bf16.msra.mxu0 %v9974
  %10040 = vmatprep.subr.bf16.mxu0 %v9977
  %10041 = vmatpush1.bf16.msra.mxu0 %v9976
  %10042 = vmatprep.subr.bf16.mxu0 %v9979
  %10043 = vmatpush1.bf16.msra.mxu0 %v9978
  %10044 = vmatprep.subr.bf16.mxu0 %v9981
  %10045 = vmatpush1.bf16.msra.mxu0 %v9980
  %10046 = vmatprep.subr.bf16.mxu0 %v9983
  %10047 = vmatpush1.bf16.msra.mxu0 %v9982
  %10048 = vmatprep.subr.bf16.mxu0 %v9985
  %10049 = vmatpush1.bf16.msra.mxu0 %v9984
  %10050 = vmatprep.subr.bf16.mxu0 %v9987
  %10051 = vmatpush1.bf16.msra.mxu0 %v9986
  %10052 = vmatprep.subr.bf16.mxu0 %v9989
  %10053 = vmatpush1.bf16.msra.mxu0 %v9988
  %10054 = vmatprep.subr.bf16.mxu0 %v9991
  %10055 = vmatpush1.bf16.msra.mxu0 %v9990
  %10056 = vmatprep.subr.bf16.mxu0 %v9993
  %10057 = vmatpush1.bf16.msra.mxu0 %v9992
  %10058 = vmatprep.mubr.bf16.mxu0 %v9809
  %10059 = vmatmul.mubr.bf16.gmra.mrb[0].mxu0 %v9808
  %v10060 = vpop.f32.mrb[0].mxu0
  %v10061 = vadd.f32 0.0, %v10060
  %v10062 = vpop.f32.mrb[0].mxu0
  %v10063 = vadd.f32 0.0, %v10062
  %v10064 = vpop.f32.mrb[0].mxu0
  %v10065 = vadd.f32 0.0, %v10064
  %v10066 = vpop.f32.mrb[0].mxu0
  %v10067 = vadd.f32 0.0, %v10066
  %10068 = vmatprep.mubr.bf16.mxu0 %v9811
  %10069 = vmatmul.mubr.bf16.gmra.mrb[0].mxu0 %v9810
  %v10070 = vpop.f32.mrb[0].mxu0
  %v10071 = vadd.f32 0.0, %v10070
  %v10072 = vpop.f32.mrb[0].mxu0
  %v10073 = vadd.f32 0.0, %v10072
  %v10074 = vpop.f32.mrb[0].mxu0
  %v10075 = vadd.f32 0.0, %v10074
  %v10076 = vpop.f32.mrb[0].mxu0
  %v10077 = vadd.f32 0.0, %v10076
  %10078 = vmatprep.mubr.bf16.mxu0 %v9813
  %10079 = vmatmul.mubr.bf16.gmra.mrb[0].mxu0 %v9812
  %v10080 = vpop.f32.mrb[0].mxu0
  %v10081 = vadd.f32 0.0, %v10080
  %v10082 = vpop.f32.mrb[0].mxu0
  %v10083 = vadd.f32 0.0, %v10082
  %v10084 = vpop.f32.mrb[0].mxu0
  %v10085 = vadd.f32 0.0, %v10084
  %v10086 = vpop.f32.mrb[0].mxu0
  %v10087 = vadd.f32 0.0, %v10086
  %10088 = vmatprep.mubr.bf16.mxu0 %v9815
  %10089 = vmatmul.mubr.bf16.gmra.mrb[0].mxu0 %v9814
  %v10090 = vpop.f32.mrb[0].mxu0
  %v10091 = vadd.f32 0.0, %v10090
  %v10092 = vpop.f32.mrb[0].mxu0
  %v10093 = vadd.f32 0.0, %v10092
  %v10094 = vpop.f32.mrb[0].mxu0
  %v10095 = vadd.f32 0.0, %v10094
  %v10096 = vpop.f32.mrb[0].mxu0
  %v10097 = vadd.f32 0.0, %v10096
  %10098 = vmatprep.mubr.bf16.mxu0 %v9817
  %10099 = vmatmul.mubr.bf16.gmra.mrb[0].mxu0 %v9816
  %v10100 = vpop.f32.mrb[0].mxu0
  %v10101 = vadd.f32 0.0, %v10100
  %v10102 = vpop.f32.mrb[0].mxu0
  %v10103 = vadd.f32 0.0, %v10102
  %v10104 = vpop.f32.mrb[0].mxu0
  %v10105 = vadd.f32 0.0, %v10104
  %v10106 = vpop.f32.mrb[0].mxu0
  %v10107 = vadd.f32 0.0, %v10106
  %10108 = vmatprep.mubr.bf16.mxu0 %v9819
  %10109 = vmatmul.mubr.bf16.gmra.mrb[0].mxu0 %v9818
  %v10110 = vpop.f32.mrb[0].mxu0
  %v10111 = vadd.f32 0.0, %v10110
  %v10112 = vpop.f32.mrb[0].mxu0
  %v10113 = vadd.f32 0.0, %v10112
  %v10114 = vpop.f32.mrb[0].mxu0
  %v10115 = vadd.f32 0.0, %v10114
  %v10116 = vpop.f32.mrb[0].mxu0
  %v10117 = vadd.f32 0.0, %v10116
  %10118 = vmatprep.mubr.bf16.mxu0 %v9821
  %10119 = vmatmul.mubr.bf16.gmra.mrb[0].mxu0 %v9820
  %v10120 = vpop.f32.mrb[0].mxu0
  %v10121 = vadd.f32 0.0, %v10120
  %v10122 = vpop.f32.mrb[0].mxu0
  %v10123 = vadd.f32 0.0, %v10122
  %v10124 = vpop.f32.mrb[0].mxu0
  %v10125 = vadd.f32 0.0, %v10124
  %v10126 = vpop.f32.mrb[0].mxu0
  %v10127 = vadd.f32 0.0, %v10126
  %10128 = vmatprep.mubr.bf16.mxu0 %v9823
  %10129 = vmatmul.mubr.bf16.gmra.mrb[0].mxu0 %v9822
  %v10130 = vpop.f32.mrb[0].mxu0
  %v10131 = vadd.f32 0.0, %v10130
  %v10132 = vpop.f32.mrb[0].mxu0
  %v10133 = vadd.f32 0.0, %v10132
  %v10134 = vpop.f32.mrb[0].mxu0
  %v10135 = vadd.f32 0.0, %v10134
  %v10136 = vpop.f32.mrb[0].mxu0
  %v10137 = vadd.f32 0.0, %v10136
  %10138 = vmatprep.mubr.bf16.mxu0 %v9825
  %10139 = vmatmul.mubr.bf16.gmra.mrb[0].mxu0 %v9824
  %v10140 = vpop.f32.mrb[0].mxu0
  %v10141 = vadd.f32 0.0, %v10140
  %v10142 = vpop.f32.mrb[0].mxu0
  %v10143 = vadd.f32 0.0, %v10142
  %v10144 = vpop.f32.mrb[0].mxu0
  %v10145 = vadd.f32 0.0, %v10144
  %v10146 = vpop.f32.mrb[0].mxu0
  %v10147 = vadd.f32 0.0, %v10146
  %10148 = vmatprep.mubr.bf16.mxu0 %v9827
  %10149 = vmatmul.mubr.bf16.gmra.mrb[0].mxu0 %v9826
  %v10150 = vpop.f32.mrb[0].mxu0
  %v10151 = vadd.f32 0.0, %v10150
  %v10152 = vpop.f32.mrb[0].mxu0
  %v10153 = vadd.f32 0.0, %v10152
  %v10154 = vpop.f32.mrb[0].mxu0
  %v10155 = vadd.f32 0.0, %v10154
  %v10156 = vpop.f32.mrb[0].mxu0
  %v10157 = vadd.f32 0.0, %v10156
  %10158 = vmatprep.mubr.bf16.mxu0 %v9829
  %10159 = vmatmul.mubr.bf16.gmra.mrb[0].mxu0 %v9828
  %v10160 = vpop.f32.mrb[0].mxu0
  %v10161 = vadd.f32 0.0, %v10160
  %v10162 = vpop.f32.mrb[0].mxu0
  %v10163 = vadd.f32 0.0, %v10162
  %v10164 = vpop.f32.mrb[0].mxu0
  %v10165 = vadd.f32 0.0, %v10164
  %v10166 = vpop.f32.mrb[0].mxu0
  %v10167 = vadd.f32 0.0, %v10166
  %10168 = vmatprep.mubr.bf16.mxu0 %v9831
  %10169 = vmatmul.mubr.bf16.gmra.mrb[0].mxu0 %v9830
  %v10170 = vpop.f32.mrb[0].mxu0
  %v10171 = vadd.f32 0.0, %v10170
  %v10172 = vpop.f32.mrb[0].mxu0
  %v10173 = vadd.f32 0.0, %v10172
  %v10174 = vpop.f32.mrb[0].mxu0
  %v10175 = vadd.f32 0.0, %v10174
  %v10176 = vpop.f32.mrb[0].mxu0
  %v10177 = vadd.f32 0.0, %v10176
  %10178 = vmatprep.mubr.bf16.mxu0 %v9833
  %10179 = vmatmul.mubr.bf16.gmra.mrb[0].mxu0 %v9832
  %v10180 = vpop.f32.mrb[0].mxu0
  %v10181 = vadd.f32 0.0, %v10180
  %v10182 = vpop.f32.mrb[0].mxu0
  %v10183 = vadd.f32 0.0, %v10182
  %v10184 = vpop.f32.mrb[0].mxu0
  %v10185 = vadd.f32 0.0, %v10184
  %v10186 = vpop.f32.mrb[0].mxu0
  %v10187 = vadd.f32 0.0, %v10186
  %10188 = vdwg.mxu0
  %v10189 = vadd.f32 %v9628, %v10061
  %v10190 = vadd.f32 %v9630, %v10063
  %v10191 = vadd.f32 %v9632, %v10065
  %v10192 = vadd.f32 %v9634, %v10067
  %v10193 = vadd.f32 %v9638, %v10071
  %v10194 = vadd.f32 %v9640, %v10073
  %v10195 = vadd.f32 %v9642, %v10075
  %v10196 = vadd.f32 %v9644, %v10077
  %v10197 = vadd.f32 %v9648, %v10081
  %v10198 = vadd.f32 %v9650, %v10083
  %v10199 = vadd.f32 %v9652, %v10085
  %v10200 = vadd.f32 %v9654, %v10087
  %v10201 = vadd.f32 %v9658, %v10091
  %v10202 = vadd.f32 %v9660, %v10093
  %v10203 = vadd.f32 %v9662, %v10095
  %v10204 = vadd.f32 %v9664, %v10097
  %v10205 = vadd.f32 %v9668, %v10101
  %v10206 = vadd.f32 %v9670, %v10103
  %v10207 = vadd.f32 %v9672, %v10105
  %v10208 = vadd.f32 %v9674, %v10107
  %v10209 = vadd.f32 %v9678, %v10111
  %v10210 = vadd.f32 %v9680, %v10113
  %v10211 = vadd.f32 %v9682, %v10115
  %v10212 = vadd.f32 %v9684, %v10117
  %v10213 = vadd.f32 %v9688, %v10121
  %v10214 = vadd.f32 %v9690, %v10123
  %v10215 = vadd.f32 %v9692, %v10125
  %v10216 = vadd.f32 %v9694, %v10127
  %v10217 = vadd.f32 %v9698, %v10131
  %v10218 = vadd.f32 %v9700, %v10133
  %v10219 = vadd.f32 %v9702, %v10135
  %v10220 = vadd.f32 %v9704, %v10137
  %v10221 = vadd.f32 %v9708, %v10141
  %v10222 = vadd.f32 %v9710, %v10143
  %v10223 = vadd.f32 %v9712, %v10145
  %v10224 = vadd.f32 %v9714, %v10147
  %v10225 = vadd.f32 %v9718, %v10151
  %v10226 = vadd.f32 %v9720, %v10153
  %v10227 = vadd.f32 %v9722, %v10155
  %v10228 = vadd.f32 %v9724, %v10157
  %v10229 = vadd.f32 %v9728, %v10161
  %v10230 = vadd.f32 %v9730, %v10163
  %v10231 = vadd.f32 %v9732, %v10165
  %v10232 = vadd.f32 %v9734, %v10167
  %v10233 = vadd.f32 %v9738, %v10171
  %v10234 = vadd.f32 %v9740, %v10173
  %v10235 = vadd.f32 %v9742, %v10175
  %v10236 = vadd.f32 %v9744, %v10177
  %v10237 = vadd.f32 %v9748, %v10181
  %v10238 = vadd.f32 %v9750, %v10183
  %v10239 = vadd.f32 %v9752, %v10185
  %v10240 = vadd.f32 %v9754, %v10187
  %v10241 = vld [vmem:[#allocation3 + $0x1e0] sm:$0xfe]
  %v10242 = vld [vmem:[#allocation3 + $0x1e8] sm:$0xfe]
  %v10243 = vld [vmem:[#allocation3 + $0x1f0] sm:$0xff]
  %v10244 = vld [vmem:[#allocation3 + $0x1f8] sm:$0xff]
  %v10245 = vld [vmem:[#allocation3 + $0x200] sm:$0xff]
  %v10246 = vld [vmem:[#allocation3 + $0x208] sm:$0xff]
  %v10247 = vld [vmem:[#allocation3 + $0x210] sm:$0xff]
  %v10248 = vld [vmem:[#allocation3 + $0x218] sm:$0xff]
  %v10249 = vld [vmem:[#allocation3 + $0x220] sm:$0xff]
  %v10250 = vld [vmem:[#allocation3 + $0x228] sm:$0xff]
  %v10251 = vld [vmem:[#allocation3 + $0x230] sm:$0xff]
  %v10252 = vld [vmem:[#allocation3 + $0x238] sm:$0xff]
  %v10253 = vld [vmem:[#allocation3 + $0x240] sm:$0xff]
  %v10254 = vld [vmem:[#allocation3 + $0x248] sm:$0xff]
  %v10255 = vld [vmem:[#allocation3 + $0x250] sm:$0xff]
  %v10256 = vld [vmem:[#allocation3 + $0x258] sm:$0xff]
  %v10257 = vld [vmem:[#allocation3 + $0x260] sm:$0xff]
  %v10258 = vld [vmem:[#allocation3 + $0x268] sm:$0xff]
  %v10259 = vld [vmem:[#allocation3 + $0x270] sm:$0xff]
  %v10260 = vld [vmem:[#allocation3 + $0x278] sm:$0xff]
  %v10261 = vld [vmem:[#allocation3 + $0x280] sm:$0xff]
  %v10262 = vld [vmem:[#allocation3 + $0x288] sm:$0xff]
  %v10263 = vld [vmem:[#allocation3 + $0x290] sm:$0xff]
  %v10264 = vld [vmem:[#allocation3 + $0x298] sm:$0xff]
  %v10265 = vld [vmem:[#allocation3 + $0x2a0] sm:$0xff]
  %v10266 = vld [vmem:[#allocation3 + $0x2a8] sm:$0xff]
  %v10267 = vld [vmem:[#allocation3 + $0x2b0] sm:$0xff]
  %v10268 = vld [vmem:[#allocation3 + $0x2b8] sm:$0xff]
  %v10269 = vld [vmem:[#allocation3 + $0x2c0] sm:$0xff]
  %v10270 = vld [vmem:[#allocation3 + $0x2c8] sm:$0xff]
  %v10271 = vld [vmem:[#allocation3 + $0x2d0] sm:$0xff]
  %v10272 = vld [vmem:[#allocation3 + $0x2d8] sm:$0xff]
  %v10273 = vld [vmem:[#allocation3 + $0x2e0] sm:$0xff]
  %v10274 = vld [vmem:[#allocation3 + $0x2e8] sm:$0xff]
  %v10275 = vld [vmem:[#allocation3 + $0x2f0] sm:$0xff]
  %v10276 = vld [vmem:[#allocation3 + $0x2f8] sm:$0xff]
  %v10277 = vld [vmem:[#allocation3 + $0x300] sm:$0xff]
  %v10278 = vld [vmem:[#allocation3 + $0x308] sm:$0xff]
  %v10279 = vld [vmem:[#allocation3 + $0x310] sm:$0xff]
  %v10280 = vld [vmem:[#allocation3 + $0x318] sm:$0xff]
  %v10281 = vld [vmem:[#allocation3 + $0x320] sm:$0xff]
  %v10282 = vld [vmem:[#allocation3 + $0x328] sm:$0xff]
  %v10283 = vld [vmem:[#allocation3 + $0x330] sm:$0xff]
  %v10284 = vld [vmem:[#allocation3 + $0x338] sm:$0xff]
  %v10285 = vld [vmem:[#allocation3 + $0x340] sm:$0xff]
  %v10286 = vld [vmem:[#allocation3 + $0x348] sm:$0xff]
  %v10287 = vld [vmem:[#allocation3 + $0x350] sm:$0xff]
  %v10288 = vld [vmem:[#allocation3 + $0x358] sm:$0xff]
  %v10289 = vld [vmem:[#allocation3 + $0x360] sm:$0xff]
  %v10290 = vld [vmem:[#allocation3 + $0x368] sm:$0xff]
  %v10291 = vld [vmem:[#allocation3 + $0x370] sm:$0xff]
  %v10292 = vld [vmem:[#allocation3 + $0x378] sm:$0xff]
  %v10293 = vld [vmem:[#allocation3 + $0x380] sm:$0x1]
  %v10294 = vld [vmem:[#allocation3 + $0x388] sm:$0x1]
  %v10295 = vpack.c.bf16 %v10243, %v10241
  %v10296 = vpack.c.bf16 %v10244, %v10242
  %v10297 = vpack.c.bf16 %v10247, %v10245
  %v10298 = vpack.c.bf16 %v10248, %v10246
  %v10299 = vpack.c.bf16 %v10251, %v10249
  %v10300 = vpack.c.bf16 %v10252, %v10250
  %v10301 = vpack.c.bf16 %v10255, %v10253
  %v10302 = vpack.c.bf16 %v10256, %v10254
  %v10303 = vpack.c.bf16 %v10259, %v10257
  %v10304 = vpack.c.bf16 %v10260, %v10258
  %v10305 = vpack.c.bf16 %v10263, %v10261
  %v10306 = vpack.c.bf16 %v10264, %v10262
  %v10307 = vpack.c.bf16 %v10267, %v10265
  %v10308 = vpack.c.bf16 %v10268, %v10266
  %v10309 = vpack.c.bf16 %v10271, %v10269
  %v10310 = vpack.c.bf16 %v10272, %v10270
  %v10311 = vpack.c.bf16 %v10275, %v10273
  %v10312 = vpack.c.bf16 %v10276, %v10274
  %v10313 = vpack.c.bf16 %v10279, %v10277
  %v10314 = vpack.c.bf16 %v10280, %v10278
  %v10315 = vpack.c.bf16 %v10283, %v10281
  %v10316 = vpack.c.bf16 %v10284, %v10282
  %v10317 = vpack.c.bf16 %v10287, %v10285
  %v10318 = vpack.c.bf16 %v10288, %v10286
  %v10319 = vpack.c.bf16 %v10291, %v10289
  %v10320 = vpack.c.bf16 %v10292, %v10290
  %v10321 = vpack.c.bf16 %v10293, %v10293
  %v10322 = vpack.c.bf16 %v10294, %v10294
  %v10323 = vld [vmem:[%s7733] sm:$0xff]
  %v10324 = vld [vmem:[%s7733 + $0x8] sm:$0xff]
  %v10325 = vld [vmem:[%s7733 + $0x10] sm:$0xff]
  %v10326 = vld [vmem:[%s7733 + $0x18] sm:$0xff]
  %v10327 = vld [vmem:[%s7733 + $0x20] sm:$0xff]
  %v10328 = vld [vmem:[%s7733 + $0x28] sm:$0xff]
  %v10329 = vld [vmem:[%s7733 + $0x30] sm:$0xff]
  %v10330 = vld [vmem:[%s7733 + $0x38] sm:$0xff]
  %v10331 = vld [vmem:[%s7733 + $0x40] sm:$0xff]
  %v10332 = vld [vmem:[%s7733 + $0x48] sm:$0xff]
  %v10333 = vld [vmem:[%s7733 + $0x50] sm:$0xff]
  %v10334 = vld [vmem:[%s7733 + $0x58] sm:$0xff]
  %v10335 = vld [vmem:[%s7733 + $0x60] sm:$0xff]
  %v10336 = vld [vmem:[%s7733 + $0x68] sm:$0xff]
  %v10337 = vld [vmem:[%s7733 + $0x70] sm:$0xff]
  %v10338 = vld [vmem:[%s7733 + $0x78] sm:$0xff]
  %v10339 = vld [vmem:[%s7733 + $0x80] sm:$0xff]
  %v10340 = vld [vmem:[%s7733 + $0x88] sm:$0xff]
  %v10341 = vld [vmem:[%s7733 + $0x90] sm:$0xff]
  %v10342 = vld [vmem:[%s7733 + $0x98] sm:$0xff]
  %v10343 = vld [vmem:[%s7733 + $0xa0] sm:$0xff]
  %v10344 = vld [vmem:[%s7733 + $0xa8] sm:$0xff]
  %v10345 = vld [vmem:[%s7733 + $0xb0] sm:$0xff]
  %v10346 = vld [vmem:[%s7733 + $0xb8] sm:$0xff]
  %v10347 = vld [vmem:[%s7733 + $0xc0] sm:$0xff]
  %v10348 = vld [vmem:[%s7733 + $0xc8] sm:$0xff]
  %v10349 = vld [vmem:[%s7733 + $0xd0] sm:$0xff]
  %v10350 = vld [vmem:[%s7733 + $0xd8] sm:$0xff]
  %v10351 = vld [vmem:[%s7733 + $0xe0] sm:$0xff]
  %v10352 = vld [vmem:[%s7733 + $0xe8] sm:$0xff]
  %v10353 = vld [vmem:[%s7733 + $0xf0] sm:$0xff]
  %v10354 = vld [vmem:[%s7733 + $0xf8] sm:$0xff]
  %v10356 = vshrl.u32 %v10295, 16
  %v10358 = vshll.u32 %v10295, 16
  %v10360 = vrot.slane %v10358, 1
  %v10361 = vor.u32 %v10356, %v10360
  %v10363 = vshll.u32 %v10297, 16
  %v10365 = vrot.slane %v10363, 1
  %v10366 = vsel %vm1207, %v10361, %v10365
  %v10368 = vshrl.u32 %v10296, 16
  %v10370 = vshll.u32 %v10296, 16
  %v10372 = vrot.slane %v10370, 1
  %v10373 = vor.u32 %v10368, %v10372
  %v10375 = vshll.u32 %v10298, 16
  %v10377 = vrot.slane %v10375, 1
  %v10378 = vsel %vm1207, %v10373, %v10377
  %v10379 = vshrl.u32 %v10297, 16
  %v10381 = vor.u32 %v10379, %v10365
  %v10383 = vshll.u32 %v10299, 16
  %v10385 = vrot.slane %v10383, 1
  %v10386 = vsel %vm1207, %v10381, %v10385
  %v10387 = vshrl.u32 %v10298, 16
  %v10389 = vor.u32 %v10387, %v10377
  %v10391 = vshll.u32 %v10300, 16
  %v10393 = vrot.slane %v10391, 1
  %v10394 = vsel %vm1207, %v10389, %v10393
  %v10395 = vshrl.u32 %v10299, 16
  %v10397 = vor.u32 %v10395, %v10385
  %v10399 = vshll.u32 %v10301, 16
  %v10401 = vrot.slane %v10399, 1
  %v10402 = vsel %vm1207, %v10397, %v10401
  %v10403 = vshrl.u32 %v10300, 16
  %v10405 = vor.u32 %v10403, %v10393
  %v10407 = vshll.u32 %v10302, 16
  %v10409 = vrot.slane %v10407, 1
  %v10410 = vsel %vm1207, %v10405, %v10409
  %v10411 = vshrl.u32 %v10301, 16
  %v10413 = vor.u32 %v10411, %v10401
  %v10415 = vshll.u32 %v10303, 16
  %v10417 = vrot.slane %v10415, 1
  %v10418 = vsel %vm1207, %v10413, %v10417
  %v10419 = vshrl.u32 %v10302, 16
  %v10421 = vor.u32 %v10419, %v10409
  %v10423 = vshll.u32 %v10304, 16
  %v10425 = vrot.slane %v10423, 1
  %v10426 = vsel %vm1207, %v10421, %v10425
  %v10427 = vshrl.u32 %v10303, 16
  %v10429 = vor.u32 %v10427, %v10417
  %v10431 = vshll.u32 %v10305, 16
  %v10433 = vrot.slane %v10431, 1
  %v10434 = vsel %vm1207, %v10429, %v10433
  %v10435 = vshrl.u32 %v10304, 16
  %v10437 = vor.u32 %v10435, %v10425
  %v10439 = vshll.u32 %v10306, 16
  %v10441 = vrot.slane %v10439, 1
  %v10442 = vsel %vm1207, %v10437, %v10441
  %v10443 = vshrl.u32 %v10305, 16
  %v10445 = vor.u32 %v10443, %v10433
  %v10447 = vshll.u32 %v10307, 16
  %v10449 = vrot.slane %v10447, 1
  %v10450 = vsel %vm1207, %v10445, %v10449
  %v10451 = vshrl.u32 %v10306, 16
  %v10453 = vor.u32 %v10451, %v10441
  %v10455 = vshll.u32 %v10308, 16
  %v10457 = vrot.slane %v10455, 1
  %v10458 = vsel %vm1207, %v10453, %v10457
  %v10459 = vshrl.u32 %v10307, 16
  %v10461 = vor.u32 %v10459, %v10449
  %v10463 = vshll.u32 %v10309, 16
  %v10465 = vrot.slane %v10463, 1
  %v10466 = vsel %vm1207, %v10461, %v10465
  %v10467 = vshrl.u32 %v10308, 16
  %v10469 = vor.u32 %v10467, %v10457
  %v10471 = vshll.u32 %v10310, 16
  %v10473 = vrot.slane %v10471, 1
  %v10474 = vsel %vm1207, %v10469, %v10473
  %v10475 = vshrl.u32 %v10309, 16
  %v10477 = vor.u32 %v10475, %v10465
  %v10479 = vshll.u32 %v10311, 16
  %v10481 = vrot.slane %v10479, 1
  %v10482 = vsel %vm1207, %v10477, %v10481
  %v10483 = vshrl.u32 %v10310, 16
  %v10485 = vor.u32 %v10483, %v10473
  %v10487 = vshll.u32 %v10312, 16
  %v10489 = vrot.slane %v10487, 1
  %v10490 = vsel %vm1207, %v10485, %v10489
  %v10491 = vshrl.u32 %v10311, 16
  %v10493 = vor.u32 %v10491, %v10481
  %v10495 = vshll.u32 %v10313, 16
  %v10497 = vrot.slane %v10495, 1
  %v10498 = vsel %vm1207, %v10493, %v10497
  %v10499 = vshrl.u32 %v10312, 16
  %v10501 = vor.u32 %v10499, %v10489
  %v10503 = vshll.u32 %v10314, 16
  %v10505 = vrot.slane %v10503, 1
  %v10506 = vsel %vm1207, %v10501, %v10505
  %v10507 = vshrl.u32 %v10313, 16
  %v10509 = vor.u32 %v10507, %v10497
  %v10511 = vshll.u32 %v10315, 16
  %v10513 = vrot.slane %v10511, 1
  %v10514 = vsel %vm1207, %v10509, %v10513
  %v10515 = vshrl.u32 %v10314, 16
  %v10517 = vor.u32 %v10515, %v10505
  %v10519 = vshll.u32 %v10316, 16
  %v10521 = vrot.slane %v10519, 1
  %v10522 = vsel %vm1207, %v10517, %v10521
  %v10523 = vshrl.u32 %v10315, 16
  %v10525 = vor.u32 %v10523, %v10513
  %v10527 = vshll.u32 %v10317, 16
  %v10529 = vrot.slane %v10527, 1
  %v10530 = vsel %vm1207, %v10525, %v10529
  %v10531 = vshrl.u32 %v10316, 16
  %v10533 = vor.u32 %v10531, %v10521
  %v10535 = vshll.u32 %v10318, 16
  %v10537 = vrot.slane %v10535, 1
  %v10538 = vsel %vm1207, %v10533, %v10537
  %v10539 = vshrl.u32 %v10317, 16
  %v10541 = vor.u32 %v10539, %v10529
  %v10543 = vshll.u32 %v10319, 16
  %v10545 = vrot.slane %v10543, 1
  %v10546 = vsel %vm1207, %v10541, %v10545
  %v10547 = vshrl.u32 %v10318, 16
  %v10549 = vor.u32 %v10547, %v10537
  %v10551 = vshll.u32 %v10320, 16
  %v10553 = vrot.slane %v10551, 1
  %v10554 = vsel %vm1207, %v10549, %v10553
  %v10555 = vshrl.u32 %v10319, 16
  %v10557 = vor.u32 %v10555, %v10545
  %v10559 = vshll.u32 %v10321, 16
  %v10561 = vrot.slane %v10559, 1
  %v10562 = vsel %vm1207, %v10557, %v10561
  %v10563 = vshrl.u32 %v10320, 16
  %v10565 = vor.u32 %v10563, %v10553
  %v10567 = vshll.u32 %v10322, 16
  %v10569 = vrot.slane %v10567, 1
  %v10570 = vsel %vm1207, %v10565, %v10569
  %v10629 = vunpack.c.l.b16 %v10323
  %v10630 = vunpack.c.h.b16 %v10323
  %v10631 = vunpack.c.l.b16 %v10324
  %v10632 = vunpack.c.h.b16 %v10324
  %v10633 = vunpack.c.l.b16 %v10325
  %v10634 = vunpack.c.h.b16 %v10325
  %v10635 = vunpack.c.l.b16 %v10326
  %v10636 = vunpack.c.h.b16 %v10326
  %v10637 = vunpack.c.l.b16 %v10327
  %v10638 = vunpack.c.h.b16 %v10327
  %v10639 = vunpack.c.l.b16 %v10328
  %v10640 = vunpack.c.h.b16 %v10328
  %v10641 = vunpack.c.l.b16 %v10329
  %v10642 = vunpack.c.h.b16 %v10329
  %v10643 = vunpack.c.l.b16 %v10330
  %v10644 = vunpack.c.h.b16 %v10330
  %v10645 = vunpack.c.l.b16 %v10331
  %v10646 = vunpack.c.h.b16 %v10331
  %v10647 = vunpack.c.l.b16 %v10332
  %v10648 = vunpack.c.h.b16 %v10332
  %v10649 = vunpack.c.l.b16 %v10333
  %v10650 = vunpack.c.h.b16 %v10333
  %v10651 = vunpack.c.l.b16 %v10334
  %v10652 = vunpack.c.h.b16 %v10334
  %v10653 = vunpack.c.l.b16 %v10335
  %v10654 = vunpack.c.h.b16 %v10335
  %v10655 = vunpack.c.l.b16 %v10336
  %v10656 = vunpack.c.h.b16 %v10336
  %v10657 = vunpack.c.l.b16 %v10337
  %v10658 = vunpack.c.h.b16 %v10337
  %v10659 = vunpack.c.l.b16 %v10338
  %v10660 = vunpack.c.h.b16 %v10338
  %v10661 = vunpack.c.l.b16 %v10339
  %v10662 = vunpack.c.h.b16 %v10339
  %v10663 = vunpack.c.l.b16 %v10340
  %v10664 = vunpack.c.h.b16 %v10340
  %v10665 = vunpack.c.l.b16 %v10341
  %v10666 = vunpack.c.h.b16 %v10341
  %v10667 = vunpack.c.l.b16 %v10342
  %v10668 = vunpack.c.h.b16 %v10342
  %v10669 = vunpack.c.l.b16 %v10343
  %v10670 = vunpack.c.h.b16 %v10343
  %v10671 = vunpack.c.l.b16 %v10344
  %v10672 = vunpack.c.h.b16 %v10344
  %v10673 = vunpack.c.l.b16 %v10345
  %v10674 = vunpack.c.h.b16 %v10345
  %v10675 = vunpack.c.l.b16 %v10346
  %v10676 = vunpack.c.h.b16 %v10346
  %v10677 = vunpack.c.l.b16 %v10347
  %v10678 = vunpack.c.h.b16 %v10347
  %v10679 = vunpack.c.l.b16 %v10348
  %v10680 = vunpack.c.h.b16 %v10348
  %v10681 = vunpack.c.l.b16 %v10349
  %v10682 = vunpack.c.h.b16 %v10349
  %v10683 = vunpack.c.l.b16 %v10350
  %v10684 = vunpack.c.h.b16 %v10350
  %v10685 = vunpack.c.l.b16 %v10351
  %v10686 = vunpack.c.h.b16 %v10351
  %v10687 = vunpack.c.l.b16 %v10352
  %v10688 = vunpack.c.h.b16 %v10352
  %v10689 = vunpack.c.l.b16 %v10353
  %v10690 = vunpack.c.h.b16 %v10353
  %v10691 = vunpack.c.l.b16 %v10354
  %v10692 = vunpack.c.h.b16 %v10354
  %v10693 = vpack.c.b16 %v10631, %v10629
  %v10694 = vpack.c.b16 %v10632, %v10630
  %v10695 = vpack.c.b16 %v10635, %v10633
  %v10696 = vpack.c.b16 %v10636, %v10634
  %v10697 = vpack.c.b16 %v10639, %v10637
  %v10698 = vpack.c.b16 %v10640, %v10638
  %v10699 = vpack.c.b16 %v10643, %v10641
  %v10700 = vpack.c.b16 %v10644, %v10642
  %v10701 = vpack.c.b16 %v10647, %v10645
  %v10702 = vpack.c.b16 %v10648, %v10646
  %v10703 = vpack.c.b16 %v10651, %v10649
  %v10704 = vpack.c.b16 %v10652, %v10650
  %v10705 = vpack.c.b16 %v10655, %v10653
  %v10706 = vpack.c.b16 %v10656, %v10654
  %v10707 = vpack.c.b16 %v10659, %v10657
  %v10708 = vpack.c.b16 %v10660, %v10658
  %v10709 = vpack.c.b16 %v10663, %v10661
  %v10710 = vpack.c.b16 %v10664, %v10662
  %v10711 = vpack.c.b16 %v10667, %v10665
  %v10712 = vpack.c.b16 %v10668, %v10666
  %v10713 = vpack.c.b16 %v10671, %v10669
  %v10714 = vpack.c.b16 %v10672, %v10670
  %v10715 = vpack.c.b16 %v10675, %v10673
  %v10716 = vpack.c.b16 %v10676, %v10674
  %v10717 = vpack.c.b16 %v10679, %v10677
  %v10718 = vpack.c.b16 %v10680, %v10678
  %v10719 = vpack.c.b16 %v10683, %v10681
  %v10720 = vpack.c.b16 %v10684, %v10682
  %v10721 = vpack.c.b16 %v10687, %v10685
  %v10722 = vpack.c.b16 %v10688, %v10686
  %v10723 = vpack.c.b16 %v10691, %v10689
  %v10724 = vpack.c.b16 %v10692, %v10690
  %10757 = vmatprep.subr.bf16.mxu0 %v10694
  %10758 = vmatpush1.bf16.msra.mxu0 %v10693
  %10759 = vmatprep.subr.bf16.mxu0 %v10696
  %10760 = vmatpush1.bf16.msra.mxu0 %v10695
  %10761 = vmatprep.subr.bf16.mxu0 %v10698
  %10762 = vmatpush1.bf16.msra.mxu0 %v10697
  %10763 = vmatprep.subr.bf16.mxu0 %v10700
  %10764 = vmatpush1.bf16.msra.mxu0 %v10699
  %10765 = vmatprep.subr.bf16.mxu0 %v10702
  %10766 = vmatpush1.bf16.msra.mxu0 %v10701
  %10767 = vmatprep.subr.bf16.mxu0 %v10704
  %10768 = vmatpush1.bf16.msra.mxu0 %v10703
  %10769 = vmatprep.subr.bf16.mxu0 %v10706
  %10770 = vmatpush1.bf16.msra.mxu0 %v10705
  %10771 = vmatprep.subr.bf16.mxu0 %v10708
  %10772 = vmatpush1.bf16.msra.mxu0 %v10707
  %10773 = vmatprep.subr.bf16.mxu0 %v10710
  %10774 = vmatpush1.bf16.msra.mxu0 %v10709
  %10775 = vmatprep.subr.bf16.mxu0 %v10712
  %10776 = vmatpush1.bf16.msra.mxu0 %v10711
  %10777 = vmatprep.subr.bf16.mxu0 %v10714
  %10778 = vmatpush1.bf16.msra.mxu0 %v10713
  %10779 = vmatprep.subr.bf16.mxu0 %v10716
  %10780 = vmatpush1.bf16.msra.mxu0 %v10715
  %10781 = vmatprep.subr.bf16.mxu0 %v10718
  %10782 = vmatpush1.bf16.msra.mxu0 %v10717
  %10783 = vmatprep.subr.bf16.mxu0 %v10720
  %10784 = vmatpush1.bf16.msra.mxu0 %v10719
  %10785 = vmatprep.subr.bf16.mxu0 %v10722
  %10786 = vmatpush1.bf16.msra.mxu0 %v10721
  %10787 = vmatprep.subr.bf16.mxu0 %v10724
  %10788 = vmatpush1.bf16.msra.mxu0 %v10723
  %10789 = vmatprep.mubr.bf16.mxu0 %v10378
  %10790 = vmatmul.mubr.bf16.gmra.mrb[0].mxu0 %v10366
  %v10791 = vpop.f32.mrb[0].mxu0
  %v10792 = vadd.f32 0.0, %v10791
  %v10793 = vpop.f32.mrb[0].mxu0
  %v10794 = vadd.f32 0.0, %v10793
  %v10795 = vpop.f32.mrb[0].mxu0
  %v10796 = vadd.f32 0.0, %v10795
  %v10797 = vpop.f32.mrb[0].mxu0
  %v10798 = vadd.f32 0.0, %v10797
  %10799 = vmatprep.mubr.bf16.mxu0 %v10394
  %10800 = vmatmul.mubr.bf16.gmra.mrb[0].mxu0 %v10386
  %v10801 = vpop.f32.mrb[0].mxu0
  %v10802 = vadd.f32 0.0, %v10801
  %v10803 = vpop.f32.mrb[0].mxu0
  %v10804 = vadd.f32 0.0, %v10803
  %v10805 = vpop.f32.mrb[0].mxu0
  %v10806 = vadd.f32 0.0, %v10805
  %v10807 = vpop.f32.mrb[0].mxu0
  %v10808 = vadd.f32 0.0, %v10807
  %10809 = vmatprep.mubr.bf16.mxu0 %v10410
  %10810 = vmatmul.mubr.bf16.gmra.mrb[0].mxu0 %v10402
  %v10811 = vpop.f32.mrb[0].mxu0
  %v10812 = vadd.f32 0.0, %v10811
  %v10813 = vpop.f32.mrb[0].mxu0
  %v10814 = vadd.f32 0.0, %v10813
  %v10815 = vpop.f32.mrb[0].mxu0
  %v10816 = vadd.f32 0.0, %v10815
  %v10817 = vpop.f32.mrb[0].mxu0
  %v10818 = vadd.f32 0.0, %v10817
  %10819 = vmatprep.mubr.bf16.mxu0 %v10426
  %10820 = vmatmul.mubr.bf16.gmra.mrb[0].mxu0 %v10418
  %v10821 = vpop.f32.mrb[0].mxu0
  %v10822 = vadd.f32 0.0, %v10821
  %v10823 = vpop.f32.mrb[0].mxu0
  %v10824 = vadd.f32 0.0, %v10823
  %v10825 = vpop.f32.mrb[0].mxu0
  %v10826 = vadd.f32 0.0, %v10825
  %v10827 = vpop.f32.mrb[0].mxu0
  %v10828 = vadd.f32 0.0, %v10827
  %10829 = vmatprep.mubr.bf16.mxu0 %v10442
  %10830 = vmatmul.mubr.bf16.gmra.mrb[0].mxu0 %v10434
  %v10831 = vpop.f32.mrb[0].mxu0
  %v10832 = vadd.f32 0.0, %v10831
  %v10833 = vpop.f32.mrb[0].mxu0
  %v10834 = vadd.f32 0.0, %v10833
  %v10835 = vpop.f32.mrb[0].mxu0
  %v10836 = vadd.f32 0.0, %v10835
  %v10837 = vpop.f32.mrb[0].mxu0
  %v10838 = vadd.f32 0.0, %v10837
  %10839 = vmatprep.mubr.bf16.mxu0 %v10458
  %10840 = vmatmul.mubr.bf16.gmra.mrb[0].mxu0 %v10450
  %v10841 = vpop.f32.mrb[0].mxu0
  %v10842 = vadd.f32 0.0, %v10841
  %v10843 = vpop.f32.mrb[0].mxu0
  %v10844 = vadd.f32 0.0, %v10843
  %v10845 = vpop.f32.mrb[0].mxu0
  %v10846 = vadd.f32 0.0, %v10845
  %v10847 = vpop.f32.mrb[0].mxu0
  %v10848 = vadd.f32 0.0, %v10847
  %10849 = vmatprep.mubr.bf16.mxu0 %v10474
  %10850 = vmatmul.mubr.bf16.gmra.mrb[0].mxu0 %v10466
  %v10851 = vpop.f32.mrb[0].mxu0
  %v10852 = vadd.f32 0.0, %v10851
  %v10853 = vpop.f32.mrb[0].mxu0
  %v10854 = vadd.f32 0.0, %v10853
  %v10855 = vpop.f32.mrb[0].mxu0
  %v10856 = vadd.f32 0.0, %v10855
  %v10857 = vpop.f32.mrb[0].mxu0
  %v10858 = vadd.f32 0.0, %v10857
  %10859 = vmatprep.mubr.bf16.mxu0 %v10490
  %10860 = vmatmul.mubr.bf16.gmra.mrb[0].mxu0 %v10482
  %v10861 = vpop.f32.mrb[0].mxu0
  %v10862 = vadd.f32 0.0, %v10861
  %v10863 = vpop.f32.mrb[0].mxu0
  %v10864 = vadd.f32 0.0, %v10863
  %v10865 = vpop.f32.mrb[0].mxu0
  %v10866 = vadd.f32 0.0, %v10865
  %v10867 = vpop.f32.mrb[0].mxu0
  %v10868 = vadd.f32 0.0, %v10867
  %10869 = vmatprep.mubr.bf16.mxu0 %v10506
  %10870 = vmatmul.mubr.bf16.gmra.mrb[0].mxu0 %v10498
  %v10871 = vpop.f32.mrb[0].mxu0
  %v10872 = vadd.f32 0.0, %v10871
  %v10873 = vpop.f32.mrb[0].mxu0
  %v10874 = vadd.f32 0.0, %v10873
  %v10875 = vpop.f32.mrb[0].mxu0
  %v10876 = vadd.f32 0.0, %v10875
  %v10877 = vpop.f32.mrb[0].mxu0
  %v10878 = vadd.f32 0.0, %v10877
  %10879 = vmatprep.mubr.bf16.mxu0 %v10522
  %10880 = vmatmul.mubr.bf16.gmra.mrb[0].mxu0 %v10514
  %v10881 = vpop.f32.mrb[0].mxu0
  %v10882 = vadd.f32 0.0, %v10881
  %v10883 = vpop.f32.mrb[0].mxu0
  %v10884 = vadd.f32 0.0, %v10883
  %v10885 = vpop.f32.mrb[0].mxu0
  %v10886 = vadd.f32 0.0, %v10885
  %v10887 = vpop.f32.mrb[0].mxu0
  %v10888 = vadd.f32 0.0, %v10887
  %10889 = vmatprep.mubr.bf16.mxu0 %v10538
  %10890 = vmatmul.mubr.bf16.gmra.mrb[0].mxu0 %v10530
  %v10891 = vpop.f32.mrb[0].mxu0
  %v10892 = vadd.f32 0.0, %v10891
  %v10893 = vpop.f32.mrb[0].mxu0
  %v10894 = vadd.f32 0.0, %v10893
  %v10895 = vpop.f32.mrb[0].mxu0
  %v10896 = vadd.f32 0.0, %v10895
  %v10897 = vpop.f32.mrb[0].mxu0
  %v10898 = vadd.f32 0.0, %v10897
  %10899 = vmatprep.mubr.bf16.mxu0 %v10554
  %10900 = vmatmul.mubr.bf16.gmra.mrb[0].mxu0 %v10546
  %v10901 = vpop.f32.mrb[0].mxu0
  %v10902 = vadd.f32 0.0, %v10901
  %v10903 = vpop.f32.mrb[0].mxu0
  %v10904 = vadd.f32 0.0, %v10903
  %v10905 = vpop.f32.mrb[0].mxu0
  %v10906 = vadd.f32 0.0, %v10905
  %v10907 = vpop.f32.mrb[0].mxu0
  %v10908 = vadd.f32 0.0, %v10907
  %10909 = vmatprep.mubr.bf16.mxu0 %v10570
  %10910 = vmatmul.mubr.bf16.gmra.mrb[0].mxu0 %v10562
  %v10911 = vpop.f32.mrb[0].mxu0
  %v10912 = vadd.f32 0.0, %v10911
  %v10913 = vpop.f32.mrb[0].mxu0
  %v10914 = vadd.f32 0.0, %v10913
  %v10915 = vpop.f32.mrb[0].mxu0
  %v10916 = vadd.f32 0.0, %v10915
  %v10917 = vpop.f32.mrb[0].mxu0
  %v10918 = vadd.f32 0.0, %v10917
  %10919 = vdwg.mxu0
  %v10920 = vadd.f32 %v10189, %v10792
  %v10921 = vadd.f32 %v10190, %v10794
  %v10922 = vadd.f32 %v10191, %v10796
  %v10923 = vadd.f32 %v10192, %v10798
  %v10924 = vadd.f32 %v10193, %v10802
  %v10925 = vadd.f32 %v10194, %v10804
  %v10926 = vadd.f32 %v10195, %v10806
  %v10927 = vadd.f32 %v10196, %v10808
  %v10928 = vadd.f32 %v10197, %v10812
  %v10929 = vadd.f32 %v10198, %v10814
  %v10930 = vadd.f32 %v10199, %v10816
  %v10931 = vadd.f32 %v10200, %v10818
  %v10932 = vadd.f32 %v10201, %v10822
  %v10933 = vadd.f32 %v10202, %v10824
  %v10934 = vadd.f32 %v10203, %v10826
  %v10935 = vadd.f32 %v10204, %v10828
  %v10936 = vadd.f32 %v10205, %v10832
  %v10937 = vadd.f32 %v10206, %v10834
  %v10938 = vadd.f32 %v10207, %v10836
  %v10939 = vadd.f32 %v10208, %v10838
  %v10940 = vadd.f32 %v10209, %v10842
  %v10941 = vadd.f32 %v10210, %v10844
  %v10942 = vadd.f32 %v10211, %v10846
  %v10943 = vadd.f32 %v10212, %v10848
  %v10944 = vadd.f32 %v10213, %v10852
  %v10945 = vadd.f32 %v10214, %v10854
  %v10946 = vadd.f32 %v10215, %v10856
  %v10947 = vadd.f32 %v10216, %v10858
  %v10948 = vadd.f32 %v10217, %v10862
  %v10949 = vadd.f32 %v10218, %v10864
  %v10950 = vadd.f32 %v10219, %v10866
  %v10951 = vadd.f32 %v10220, %v10868
  %v10952 = vadd.f32 %v10221, %v10872
  %v10953 = vadd.f32 %v10222, %v10874
  %v10954 = vadd.f32 %v10223, %v10876
  %v10955 = vadd.f32 %v10224, %v10878
  %v10956 = vadd.f32 %v10225, %v10882
  %v10957 = vadd.f32 %v10226, %v10884
  %v10958 = vadd.f32 %v10227, %v10886
  %v10959 = vadd.f32 %v10228, %v10888
  %v10960 = vadd.f32 %v10229, %v10892
  %v10961 = vadd.f32 %v10230, %v10894
  %v10962 = vadd.f32 %v10231, %v10896
  %v10963 = vadd.f32 %v10232, %v10898
  %v10964 = vadd.f32 %v10233, %v10902
  %v10965 = vadd.f32 %v10234, %v10904
  %v10966 = vadd.f32 %v10235, %v10906
  %v10967 = vadd.f32 %v10236, %v10908
  %v10968 = vadd.f32 %v10237, %v10912
  %v10969 = vadd.f32 %v10238, %v10914
  %v10970 = vadd.f32 %v10239, %v10916
  %v10971 = vadd.f32 %v10240, %v10918
  %v10972 = vld [vmem:[%s6] sm:$0x3]
  %v10974 = vlaneseq
  %v10975 = vshrl.u32 %v10974, 7
  %v10976 = vsub.s32 0, %v10975
  %v10977 = vrot.slane %v10972, %v10976
  %v10978 = vlaneseq
  %v10979 = vshrl.u32 %v10978, 7
  %v10980 = vsub.s32 1, %v10979
  %v10981 = vrot.slane %v10972, %v10980
  %v10984 = vadd.f32 %v10920, %v10977
  %v10985 = vadd.f32 %v10921, %v10981
  %v10986 = vadd.f32 %v10922, %v10977
  %v10987 = vadd.f32 %v10923, %v10981
  %v10988 = vadd.f32 %v10924, %v10977
  %v10989 = vadd.f32 %v10925, %v10981
  %v10990 = vadd.f32 %v10926, %v10977
  %v10991 = vadd.f32 %v10927, %v10981
  %v10992 = vadd.f32 %v10928, %v10977
  %v10993 = vadd.f32 %v10929, %v10981
  %v10994 = vadd.f32 %v10930, %v10977
  %v10995 = vadd.f32 %v10931, %v10981
  %v10996 = vadd.f32 %v10932, %v10977
  %v10997 = vadd.f32 %v10933, %v10981
  %v10998 = vadd.f32 %v10934, %v10977
  %v10999 = vadd.f32 %v10935, %v10981
  %v11000 = vadd.f32 %v10936, %v10977
  %v11001 = vadd.f32 %v10937, %v10981
  %v11002 = vadd.f32 %v10938, %v10977
  %v11003 = vadd.f32 %v10939, %v10981
  %v11004 = vadd.f32 %v10940, %v10977
  %v11005 = vadd.f32 %v10941, %v10981
  %v11006 = vadd.f32 %v10942, %v10977
  %v11007 = vadd.f32 %v10943, %v10981
  %v11008 = vadd.f32 %v10944, %v10977
  %v11009 = vadd.f32 %v10945, %v10981
  %v11010 = vadd.f32 %v10946, %v10977
  %v11011 = vadd.f32 %v10947, %v10981
  %v11012 = vadd.f32 %v10948, %v10977
  %v11013 = vadd.f32 %v10949, %v10981
  %v11014 = vadd.f32 %v10950, %v10977
  %v11015 = vadd.f32 %v10951, %v10981
  %v11016 = vadd.f32 %v10952, %v10977
  %v11017 = vadd.f32 %v10953, %v10981
  %v11018 = vadd.f32 %v10954, %v10977
  %v11019 = vadd.f32 %v10955, %v10981
  %v11020 = vadd.f32 %v10956, %v10977
  %v11021 = vadd.f32 %v10957, %v10981
  %v11022 = vadd.f32 %v10958, %v10977
  %v11023 = vadd.f32 %v10959, %v10981
  %v11024 = vadd.f32 %v10960, %v10977
  %v11025 = vadd.f32 %v10961, %v10981
  %v11026 = vadd.f32 %v10962, %v10977
  %v11027 = vadd.f32 %v10963, %v10981
  %v11028 = vadd.f32 %v10964, %v10977
  %v11029 = vadd.f32 %v10965, %v10981
  %v11030 = vadd.f32 %v10966, %v10977
  %v11031 = vadd.f32 %v10967, %v10981
  %v11032 = vadd.f32 %v10968, %v10977
  %v11033 = vadd.f32 %v10969, %v10981
  %v11034 = vadd.f32 %v10970, %v10977
  %v11035 = vadd.f32 %v10971, %v10981
  %v11036 = vmax.f32 %v10984, 0.0
  %v11037 = vmax.f32 %v10985, 0.0
  %v11038 = vmax.f32 %v10986, 0.0
  %v11039 = vmax.f32 %v10987, 0.0
  %v11040 = vmax.f32 %v10988, 0.0
  %v11041 = vmax.f32 %v10989, 0.0
  %v11042 = vmax.f32 %v10990, 0.0
  %v11043 = vmax.f32 %v10991, 0.0
  %v11044 = vmax.f32 %v10992, 0.0
  %v11045 = vmax.f32 %v10993, 0.0
  %v11046 = vmax.f32 %v10994, 0.0
  %v11047 = vmax.f32 %v10995, 0.0
  %v11048 = vmax.f32 %v10996, 0.0
  %v11049 = vmax.f32 %v10997, 0.0
  %v11050 = vmax.f32 %v10998, 0.0
  %v11051 = vmax.f32 %v10999, 0.0
  %v11052 = vmax.f32 %v11000, 0.0
  %v11053 = vmax.f32 %v11001, 0.0
  %v11054 = vmax.f32 %v11002, 0.0
  %v11055 = vmax.f32 %v11003, 0.0
  %v11056 = vmax.f32 %v11004, 0.0
  %v11057 = vmax.f32 %v11005, 0.0
  %v11058 = vmax.f32 %v11006, 0.0
  %v11059 = vmax.f32 %v11007, 0.0
  %v11060 = vmax.f32 %v11008, 0.0
  %v11061 = vmax.f32 %v11009, 0.0
  %v11062 = vmax.f32 %v11010, 0.0
  %v11063 = vmax.f32 %v11011, 0.0
  %v11064 = vmax.f32 %v11012, 0.0
  %v11065 = vmax.f32 %v11013, 0.0
  %v11066 = vmax.f32 %v11014, 0.0
  %v11067 = vmax.f32 %v11015, 0.0
  %v11068 = vmax.f32 %v11016, 0.0
  %v11069 = vmax.f32 %v11017, 0.0
  %v11070 = vmax.f32 %v11018, 0.0
  %v11071 = vmax.f32 %v11019, 0.0
  %v11072 = vmax.f32 %v11020, 0.0
  %v11073 = vmax.f32 %v11021, 0.0
  %v11074 = vmax.f32 %v11022, 0.0
  %v11075 = vmax.f32 %v11023, 0.0
  %v11076 = vmax.f32 %v11024, 0.0
  %v11077 = vmax.f32 %v11025, 0.0
  %v11078 = vmax.f32 %v11026, 0.0
  %v11079 = vmax.f32 %v11027, 0.0
  %v11080 = vmax.f32 %v11028, 0.0
  %v11081 = vmax.f32 %v11029, 0.0
  %v11082 = vmax.f32 %v11030, 0.0
  %v11083 = vmax.f32 %v11031, 0.0
  %v11084 = vmax.f32 %v11032, 0.0
  %v11085 = vmax.f32 %v11033, 0.0
  %v11086 = vmax.f32 %v11034, 0.0
  %v11087 = vmax.f32 %v11035, 0.0
  %v11088 = vsel %vm8552, %v11036, 0.0
  %v11089 = vsel %vm8552, %v11037, 0.0
  %v11090 = vsel %vm8553, %v11038, 0.0
  %v11091 = vsel %vm8553, %v11039, 0.0
  %v11092 = vsel %vm8554, %v11040, 0.0
  %v11093 = vsel %vm8554, %v11041, 0.0
  %v11094 = vsel %vm8555, %v11042, 0.0
  %v11095 = vsel %vm8555, %v11043, 0.0
  %v11096 = vsel %vm8556, %v11044, 0.0
  %v11097 = vsel %vm8556, %v11045, 0.0
  %v11098 = vsel %vm8557, %v11046, 0.0
  %v11099 = vsel %vm8557, %v11047, 0.0
  %v11100 = vsel %vm8558, %v11048, 0.0
  %v11101 = vsel %vm8558, %v11049, 0.0
  %v11102 = vsel %vm8559, %v11050, 0.0
  %v11103 = vsel %vm8559, %v11051, 0.0
  %v11104 = vsel %vm8560, %v11052, 0.0
  %v11105 = vsel %vm8560, %v11053, 0.0
  %v11106 = vsel %vm8561, %v11054, 0.0
  %v11107 = vsel %vm8561, %v11055, 0.0
  %v11108 = vsel %vm8562, %v11056, 0.0
  %v11109 = vsel %vm8562, %v11057, 0.0
  %v11110 = vsel %vm8563, %v11058, 0.0
  %v11111 = vsel %vm8563, %v11059, 0.0
  %v11112 = vsel %vm8564, %v11060, 0.0
  %v11113 = vsel %vm8564, %v11061, 0.0
  %v11114 = vsel %vm8565, %v11062, 0.0
  %v11115 = vsel %vm8565, %v11063, 0.0
  %v11116 = vsel %vm8566, %v11064, 0.0
  %v11117 = vsel %vm8566, %v11065, 0.0
  %v11118 = vsel %vm8567, %v11066, 0.0
  %v11119 = vsel %vm8567, %v11067, 0.0
  %v11120 = vsel %vm8568, %v11068, 0.0
  %v11121 = vsel %vm8568, %v11069, 0.0
  %v11122 = vsel %vm8569, %v11070, 0.0
  %v11123 = vsel %vm8569, %v11071, 0.0
  %v11124 = vsel %vm8570, %v11072, 0.0
  %v11125 = vsel %vm8570, %v11073, 0.0
  %v11126 = vsel %vm8571, %v11074, 0.0
  %v11127 = vsel %vm8571, %v11075, 0.0
  %v11128 = vsel %vm8572, %v11076, 0.0
  %v11129 = vsel %vm8572, %v11077, 0.0
  %v11130 = vsel %vm8573, %v11078, 0.0
  %v11131 = vsel %vm8573, %v11079, 0.0
  %v11132 = vsel %vm8574, %v11080, 0.0
  %v11133 = vsel %vm8574, %v11081, 0.0
  %v11134 = vsel %vm8575, %v11082, 0.0
  %v11135 = vsel %vm8575, %v11083, 0.0
  %v11136 = vsel %vm8576, %v11084, 0.0
  %v11137 = vsel %vm8576, %v11085, 0.0
  %v11138 = vsel %vm8577, %v11086, 0.0
  %v11139 = vsel %vm8577, %v11087, 0.0
  %v11140 = vadd.f32 %v11088, %v11090
  %v11141 = vadd.f32 %v11140, %v11092
  %v11142 = vadd.f32 %v11141, %v11094
  %v11143 = vadd.f32 %v11142, %v11096
  %v11144 = vadd.f32 %v11143, %v11098
  %v11145 = vadd.f32 %v11144, %v11100
  %v11146 = vadd.f32 %v11145, %v11102
  %v11147 = vadd.f32 %v11146, %v11104
  %v11148 = vadd.f32 %v11147, %v11106
  %v11149 = vadd.f32 %v11148, %v11108
  %v11150 = vadd.f32 %v11149, %v11110
  %v11151 = vadd.f32 %v11150, %v11112
  %v11152 = vadd.f32 %v11151, %v11114
  %v11153 = vadd.f32 %v11152, %v11116
  %v11154 = vadd.f32 %v11153, %v11118
  %v11155 = vadd.f32 %v11154, %v11120
  %v11156 = vadd.f32 %v11155, %v11122
  %v11157 = vadd.f32 %v11156, %v11124
  %v11158 = vadd.f32 %v11157, %v11126
  %v11159 = vadd.f32 %v11158, %v11128
  %v11160 = vadd.f32 %v11159, %v11130
  %v11161 = vadd.f32 %v11160, %v11132
  %v11162 = vadd.f32 %v11161, %v11134
  %v11163 = vadd.f32 %v11162, %v11136
  %v11164 = vadd.f32 %v11163, %v11138
  %v11165 = vrot.slane %v11164, 4
  %v11166 = vadd.f32 %v11164, %v11165
  %v11167 = vrot.slane %v11166, 2
  %v11168 = vadd.f32 %v11166, %v11167
  %v11169 = vrot.slane %v11168, 1
  %v11170 = vadd.f32 %v11168, %v11169
  %v11171 = vadd.f32 %v11089, %v11091
  %v11172 = vadd.f32 %v11171, %v11093
  %v11173 = vadd.f32 %v11172, %v11095
  %v11174 = vadd.f32 %v11173, %v11097
  %v11175 = vadd.f32 %v11174, %v11099
  %v11176 = vadd.f32 %v11175, %v11101
  %v11177 = vadd.f32 %v11176, %v11103
  %v11178 = vadd.f32 %v11177, %v11105
  %v11179 = vadd.f32 %v11178, %v11107
  %v11180 = vadd.f32 %v11179, %v11109
  %v11181 = vadd.f32 %v11180, %v11111
  %v11182 = vadd.f32 %v11181, %v11113
  %v11183 = vadd.f32 %v11182, %v11115
  %v11184 = vadd.f32 %v11183, %v11117
  %v11185 = vadd.f32 %v11184, %v11119
  %v11186 = vadd.f32 %v11185, %v11121
  %v11187 = vadd.f32 %v11186, %v11123
  %v11188 = vadd.f32 %v11187, %v11125
  %v11189 = vadd.f32 %v11188, %v11127
  %v11190 = vadd.f32 %v11189, %v11129
  %v11191 = vadd.f32 %v11190, %v11131
  %v11192 = vadd.f32 %v11191, %v11133
  %v11193 = vadd.f32 %v11192, %v11135
  %v11194 = vadd.f32 %v11193, %v11137
  %v11195 = vadd.f32 %v11194, %v11139
  %v11196 = vrot.slane %v11195, 4
  %v11197 = vadd.f32 %v11195, %v11196
  %v11198 = vrot.slane %v11197, 2
  %v11199 = vadd.f32 %v11197, %v11198
  %v11200 = vrot.slane %v11199, 1
  %v11201 = vadd.f32 %v11199, %v11200
  %v11202 = vmul.f32 %v11170, 0.00591716
  %v11203 = vmul.f32 %v11201, 0.00591716
  %v11206 = vcombine.low %v11202, %v11203
  %v11208 = vunpack.c.l.s4 1966171168
  %v11209 = vunpack.c.0.s8 %v11208
  %v11210 = vlaneseq
  %v11211 = vshrl.u32 %v11210, 7
  %v11212 = vsub.s32 %v11209, %v11211
  %v11213 = vrot.slane %v11206, %v11212
  %v11215 = vunpack.c.l.s4 1966171168
  %v11216 = vunpack.c.0.s8 %v11215
  %v11217 = vlaneseq
  %v11218 = vshrl.u32 %v11217, 7
  %v11219 = vsub.s32 %v11216, %v11218
  %v11220 = vrot.slane %v11213, %v11219
  %s11222 = scalar_lea.vmem [#allocation4], 1
  %11223 = vst.msk [vmem:[%s11222] ss:$8 sm:$0x3] %vm8715, %v11220
  %11224 = vst.msk [vmem:[%s11222] ss:$8 sm:$0x0] %vm8715, %v11220
  %v11225 = vld [vmem:[#allocation4] sm:$0xff]
  %v11226 = vld [vmem:[#allocation4 + $0x8] sm:$0xff]
  %v11227 = vpack.c.bf16 %v11225, %v11225
  %v11228 = vpack.c.bf16 %v11226, %v11226
  %v11229 = vld [vmem:[%s7] sm:$0xff]
  %v11230 = vld [vmem:[%s7 + $0x8] sm:$0xff]
  %v11231 = vld [vmem:[%s7 + $0x10] sm:$0xff]
  %v11232 = vld [vmem:[%s7 + $0x18] sm:$0xff]
  %v11233 = vld [vmem:[%s7 + $0x20] sm:$0xff]
  %v11234 = vld [vmem:[%s7 + $0x28] sm:$0xff]
  %v11235 = vld [vmem:[%s7 + $0x30] sm:$0xff]
  %v11236 = vld [vmem:[%s7 + $0x38] sm:$0xff]
  %v11237 = vld [vmem:[%s7 + $0x40] sm:$0xff]
  %v11238 = vld [vmem:[%s7 + $0x48] sm:$0xff]
  %v11239 = vld [vmem:[%s7 + $0x50] sm:$0xff]
  %v11240 = vld [vmem:[%s7 + $0x58] sm:$0xff]
  %v11241 = vld [vmem:[%s7 + $0x60] sm:$0xff]
  %v11242 = vld [vmem:[%s7 + $0x68] sm:$0xff]
  %v11243 = vld [vmem:[%s7 + $0x70] sm:$0xff]
  %v11244 = vld [vmem:[%s7 + $0x78] sm:$0xff]
  %v11245 = vld [vmem:[%s7 + $0x80] sm:$0xff]
  %v11246 = vld [vmem:[%s7 + $0x88] sm:$0xff]
  %v11247 = vld [vmem:[%s7 + $0x90] sm:$0xff]
  %v11248 = vld [vmem:[%s7 + $0x98] sm:$0xff]
  %v11249 = vld [vmem:[%s7 + $0xa0] sm:$0xff]
  %v11250 = vld [vmem:[%s7 + $0xa8] sm:$0xff]
  %v11251 = vld [vmem:[%s7 + $0xb0] sm:$0xff]
  %v11252 = vld [vmem:[%s7 + $0xb8] sm:$0xff]
  %v11253 = vld [vmem:[%s7 + $0xc0] sm:$0xff]
  %v11254 = vld [vmem:[%s7 + $0xc8] sm:$0xff]
  %v11255 = vld [vmem:[%s7 + $0xd0] sm:$0xff]
  %v11256 = vld [vmem:[%s7 + $0xd8] sm:$0xff]
  %v11257 = vld [vmem:[%s7 + $0xe0] sm:$0xff]
  %v11258 = vld [vmem:[%s7 + $0xe8] sm:$0xff]
  %v11259 = vld [vmem:[%s7 + $0xf0] sm:$0xff]
  %v11260 = vld [vmem:[%s7 + $0xf8] sm:$0xff]
  %v11261 = vld [vmem:[%s8] sm:$0x3]
  %v11263 = vlaneseq
  %v11264 = vshrl.u32 %v11263, 7
  %v11265 = vsub.s32 0, %v11264
  %v11266 = vrot.slane %v11261, %v11265
  %v11267 = vlaneseq
  %v11268 = vshrl.u32 %v11267, 7
  %v11269 = vsub.s32 1, %v11268
  %v11270 = vrot.slane %v11261, %v11269
  %v11305 = vunpack.c.l.b16 %v11229
  %v11306 = vunpack.c.h.b16 %v11229
  %v11307 = vunpack.c.l.b16 %v11230
  %v11308 = vunpack.c.h.b16 %v11230
  %v11309 = vunpack.c.l.b16 %v11231
  %v11310 = vunpack.c.h.b16 %v11231
  %v11311 = vunpack.c.l.b16 %v11232
  %v11312 = vunpack.c.h.b16 %v11232
  %v11313 = vunpack.c.l.b16 %v11233
  %v11314 = vunpack.c.h.b16 %v11233
  %v11315 = vunpack.c.l.b16 %v11234
  %v11316 = vunpack.c.h.b16 %v11234
  %v11317 = vunpack.c.l.b16 %v11235
  %v11318 = vunpack.c.h.b16 %v11235
  %v11319 = vunpack.c.l.b16 %v11236
  %v11320 = vunpack.c.h.b16 %v11236
  %v11321 = vunpack.c.l.b16 %v11237
  %v11322 = vunpack.c.h.b16 %v11237
  %v11323 = vunpack.c.l.b16 %v11238
  %v11324 = vunpack.c.h.b16 %v11238
  %v11325 = vunpack.c.l.b16 %v11239
  %v11326 = vunpack.c.h.b16 %v11239
  %v11327 = vunpack.c.l.b16 %v11240
  %v11328 = vunpack.c.h.b16 %v11240
  %v11329 = vunpack.c.l.b16 %v11241
  %v11330 = vunpack.c.h.b16 %v11241
  %v11331 = vunpack.c.l.b16 %v11242
  %v11332 = vunpack.c.h.b16 %v11242
  %v11333 = vunpack.c.l.b16 %v11243
  %v11334 = vunpack.c.h.b16 %v11243
  %v11335 = vunpack.c.l.b16 %v11244
  %v11336 = vunpack.c.h.b16 %v11244
  %v11337 = vunpack.c.l.b16 %v11245
  %v11338 = vunpack.c.h.b16 %v11245
  %v11339 = vunpack.c.l.b16 %v11246
  %v11340 = vunpack.c.h.b16 %v11246
  %v11341 = vunpack.c.l.b16 %v11247
  %v11342 = vunpack.c.h.b16 %v11247
  %v11343 = vunpack.c.l.b16 %v11248
  %v11344 = vunpack.c.h.b16 %v11248
  %v11345 = vunpack.c.l.b16 %v11249
  %v11346 = vunpack.c.h.b16 %v11249
  %v11347 = vunpack.c.l.b16 %v11250
  %v11348 = vunpack.c.h.b16 %v11250
  %v11349 = vunpack.c.l.b16 %v11251
  %v11350 = vunpack.c.h.b16 %v11251
  %v11351 = vunpack.c.l.b16 %v11252
  %v11352 = vunpack.c.h.b16 %v11252
  %v11353 = vunpack.c.l.b16 %v11253
  %v11354 = vunpack.c.h.b16 %v11253
  %v11355 = vunpack.c.l.b16 %v11254
  %v11356 = vunpack.c.h.b16 %v11254
  %v11357 = vunpack.c.l.b16 %v11255
  %v11358 = vunpack.c.h.b16 %v11255
  %v11359 = vunpack.c.l.b16 %v11256
  %v11360 = vunpack.c.h.b16 %v11256
  %v11361 = vunpack.c.l.b16 %v11257
  %v11362 = vunpack.c.h.b16 %v11257
  %v11363 = vunpack.c.l.b16 %v11258
  %v11364 = vunpack.c.h.b16 %v11258
  %v11365 = vunpack.c.l.b16 %v11259
  %v11366 = vunpack.c.h.b16 %v11259
  %v11367 = vunpack.c.l.b16 %v11260
  %v11368 = vunpack.c.h.b16 %v11260
  %v11369 = vpack.c.b16 %v11307, %v11305
  %v11370 = vpack.c.b16 %v11308, %v11306
  %v11371 = vpack.c.b16 %v11311, %v11309
  %v11372 = vpack.c.b16 %v11312, %v11310
  %v11373 = vpack.c.b16 %v11315, %v11313
  %v11374 = vpack.c.b16 %v11316, %v11314
  %v11375 = vpack.c.b16 %v11319, %v11317
  %v11376 = vpack.c.b16 %v11320, %v11318
  %v11377 = vpack.c.b16 %v11323, %v11321
  %v11378 = vpack.c.b16 %v11324, %v11322
  %v11379 = vpack.c.b16 %v11327, %v11325
  %v11380 = vpack.c.b16 %v11328, %v11326
  %v11381 = vpack.c.b16 %v11331, %v11329
  %v11382 = vpack.c.b16 %v11332, %v11330
  %v11383 = vpack.c.b16 %v11335, %v11333
  %v11384 = vpack.c.b16 %v11336, %v11334
  %v11385 = vpack.c.b16 %v11339, %v11337
  %v11386 = vpack.c.b16 %v11340, %v11338
  %v11387 = vpack.c.b16 %v11343, %v11341
  %v11388 = vpack.c.b16 %v11344, %v11342
  %v11389 = vpack.c.b16 %v11347, %v11345
  %v11390 = vpack.c.b16 %v11348, %v11346
  %v11391 = vpack.c.b16 %v11351, %v11349
  %v11392 = vpack.c.b16 %v11352, %v11350
  %v11393 = vpack.c.b16 %v11355, %v11353
  %v11394 = vpack.c.b16 %v11356, %v11354
  %v11395 = vpack.c.b16 %v11359, %v11357
  %v11396 = vpack.c.b16 %v11360, %v11358
  %v11397 = vpack.c.b16 %v11363, %v11361
  %v11398 = vpack.c.b16 %v11364, %v11362
  %v11399 = vpack.c.b16 %v11367, %v11365
  %v11400 = vpack.c.b16 %v11368, %v11366
  %11433 = vmatprep.subr.bf16.mxu0 %v11370
  %11434 = vmatpush1.bf16.msra.mxu0 %v11369
  %11435 = vmatprep.subr.bf16.mxu0 %v11372
  %11436 = vmatpush1.bf16.msra.mxu0 %v11371
  %11437 = vmatprep.subr.bf16.mxu0 %v11374
  %11438 = vmatpush1.bf16.msra.mxu0 %v11373
  %11439 = vmatprep.subr.bf16.mxu0 %v11376
  %11440 = vmatpush1.bf16.msra.mxu0 %v11375
  %11441 = vmatprep.subr.bf16.mxu0 %v11378
  %11442 = vmatpush1.bf16.msra.mxu0 %v11377
  %11443 = vmatprep.subr.bf16.mxu0 %v11380
  %11444 = vmatpush1.bf16.msra.mxu0 %v11379
  %11445 = vmatprep.subr.bf16.mxu0 %v11382
  %11446 = vmatpush1.bf16.msra.mxu0 %v11381
  %11447 = vmatprep.subr.bf16.mxu0 %v11384
  %11448 = vmatpush1.bf16.msra.mxu0 %v11383
  %11449 = vmatprep.subr.bf16.mxu0 %v11386
  %11450 = vmatpush1.bf16.msra.mxu0 %v11385
  %11451 = vmatprep.subr.bf16.mxu0 %v11388
  %11452 = vmatpush1.bf16.msra.mxu0 %v11387
  %11453 = vmatprep.subr.bf16.mxu0 %v11390
  %11454 = vmatpush1.bf16.msra.mxu0 %v11389
  %11455 = vmatprep.subr.bf16.mxu0 %v11392
  %11456 = vmatpush1.bf16.msra.mxu0 %v11391
  %11457 = vmatprep.subr.bf16.mxu0 %v11394
  %11458 = vmatpush1.bf16.msra.mxu0 %v11393
  %11459 = vmatprep.subr.bf16.mxu0 %v11396
  %11460 = vmatpush1.bf16.msra.mxu0 %v11395
  %11461 = vmatprep.subr.bf16.mxu0 %v11398
  %11462 = vmatpush1.bf16.msra.mxu0 %v11397
  %11463 = vmatprep.subr.bf16.mxu0 %v11400
  %11464 = vmatpush1.bf16.msra.mxu0 %v11399
  %11465 = vmatprep.mubr.bf16.mxu0 %v11228
  %11466 = vmatmul.mubr.bf16.gmra.mrb[0].mxu0 %v11227
  %v11467 = vpop.f32.mrb[0].mxu0
  %v11468 = vadd.f32 %v11266, %v11467
  %v11469 = vpop.f32.mrb[0].mxu0
  %v11470 = vadd.f32 %v11270, %v11469
  %v11471 = vpop.f32.mrb[0].mxu0
  %v11472 = vpop.f32.mrb[0].mxu0
  %11473 = vdwg.mxu0
  %v11474 = vmax.f32 %v11468, 0.0
  %v11475 = vmax.f32 %v11470, 0.0
  %v11476 = vpack.c.bf16 %v11474, %v11474
  %v11477 = vpack.c.bf16 %v11475, %v11475
  %v11478 = vld [vmem:[%s9] sm:$0xf]
  %v11479 = vld [vmem:[%s9 + $0x4] sm:$0xf]
  %v11480 = vld [vmem:[%s9 + $0x8] sm:$0xf]
  %v11481 = vld [vmem:[%s9 + $0xc] sm:$0xf]
  %v11482 = vld [vmem:[%s9 + $0x10] sm:$0xf]
  %v11483 = vld [vmem:[%s9 + $0x14] sm:$0xf]
  %v11484 = vld [vmem:[%s9 + $0x18] sm:$0xf]
  %v11485 = vld [vmem:[%s9 + $0x1c] sm:$0xf]
  %v11486 = vld [vmem:[%s9 + $0x20] sm:$0xf]
  %v11487 = vld [vmem:[%s9 + $0x24] sm:$0xf]
  %v11488 = vld [vmem:[%s9 + $0x28] sm:$0xf]
  %v11489 = vld [vmem:[%s9 + $0x2c] sm:$0xf]
  %v11490 = vld [vmem:[%s9 + $0x30] sm:$0xf]
  %v11491 = vld [vmem:[%s9 + $0x34] sm:$0xf]
  %v11492 = vld [vmem:[%s9 + $0x38] sm:$0xf]
  %v11493 = vld [vmem:[%s9 + $0x3c] sm:$0xf]
  %v11494 = vld [vmem:[%s9 + $0x40] sm:$0xf]
  %v11495 = vld [vmem:[%s9 + $0x44] sm:$0xf]
  %v11496 = vld [vmem:[%s9 + $0x48] sm:$0xf]
  %v11497 = vld [vmem:[%s9 + $0x4c] sm:$0xf]
  %v11498 = vld [vmem:[%s9 + $0x50] sm:$0xf]
  %v11499 = vld [vmem:[%s9 + $0x54] sm:$0xf]
  %v11500 = vld [vmem:[%s9 + $0x58] sm:$0xf]
  %v11501 = vld [vmem:[%s9 + $0x5c] sm:$0xf]
  %v11502 = vld [vmem:[%s9 + $0x60] sm:$0xf]
  %v11503 = vld [vmem:[%s9 + $0x64] sm:$0xf]
  %v11504 = vld [vmem:[%s9 + $0x68] sm:$0xf]
  %v11505 = vld [vmem:[%s9 + $0x6c] sm:$0xf]
  %v11506 = vld [vmem:[%s9 + $0x70] sm:$0xf]
  %v11507 = vld [vmem:[%s9 + $0x74] sm:$0xf]
  %v11508 = vld [vmem:[%s9 + $0x78] sm:$0xf]
  %v11509 = vld [vmem:[%s9 + $0x7c] sm:$0xf]
  %v11510 = vld [vmem:[%s10] sm:$0x1]
  %v11512 = vlaneseq
  %v11513 = vshrl.u32 %v11512, 7
  %v11514 = vsub.s32 0, %v11513
  %v11515 = vrot.slane %v11510, %v11514
  %v11549 = vunpack.c.l.b16 %v11478
  %v11550 = vunpack.c.l.b16 %v11479
  %v11551 = vunpack.c.l.b16 %v11480
  %v11552 = vunpack.c.l.b16 %v11481
  %v11553 = vunpack.c.l.b16 %v11482
  %v11554 = vunpack.c.l.b16 %v11483
  %v11555 = vunpack.c.l.b16 %v11484
  %v11556 = vunpack.c.l.b16 %v11485
  %v11557 = vunpack.c.l.b16 %v11486
  %v11558 = vunpack.c.l.b16 %v11487
  %v11559 = vunpack.c.l.b16 %v11488
  %v11560 = vunpack.c.l.b16 %v11489
  %v11561 = vunpack.c.l.b16 %v11490
  %v11562 = vunpack.c.l.b16 %v11491
  %v11563 = vunpack.c.l.b16 %v11492
  %v11564 = vunpack.c.l.b16 %v11493
  %v11565 = vunpack.c.l.b16 %v11494
  %v11566 = vunpack.c.l.b16 %v11495
  %v11567 = vunpack.c.l.b16 %v11496
  %v11568 = vunpack.c.l.b16 %v11497
  %v11569 = vunpack.c.l.b16 %v11498
  %v11570 = vunpack.c.l.b16 %v11499
  %v11571 = vunpack.c.l.b16 %v11500
  %v11572 = vunpack.c.l.b16 %v11501
  %v11573 = vunpack.c.l.b16 %v11502
  %v11574 = vunpack.c.l.b16 %v11503
  %v11575 = vunpack.c.l.b16 %v11504
  %v11576 = vunpack.c.l.b16 %v11505
  %v11577 = vunpack.c.l.b16 %v11506
  %v11578 = vunpack.c.l.b16 %v11507
  %v11579 = vunpack.c.l.b16 %v11508
  %v11580 = vunpack.c.l.b16 %v11509
  %v11581 = vpack.c.b16 %v11550, %v11549
  %v11582 = vpack.c.b16 %v11552, %v11551
  %v11583 = vpack.c.b16 %v11554, %v11553
  %v11584 = vpack.c.b16 %v11556, %v11555
  %v11585 = vpack.c.b16 %v11558, %v11557
  %v11586 = vpack.c.b16 %v11560, %v11559
  %v11587 = vpack.c.b16 %v11562, %v11561
  %v11588 = vpack.c.b16 %v11564, %v11563
  %v11589 = vpack.c.b16 %v11566, %v11565
  %v11590 = vpack.c.b16 %v11568, %v11567
  %v11591 = vpack.c.b16 %v11570, %v11569
  %v11592 = vpack.c.b16 %v11572, %v11571
  %v11593 = vpack.c.b16 %v11574, %v11573
  %v11594 = vpack.c.b16 %v11576, %v11575
  %v11595 = vpack.c.b16 %v11578, %v11577
  %v11596 = vpack.c.b16 %v11580, %v11579
  %11613 = vmatprep.subr.bf16.mxu0 0
  %11614 = vmatpush1.bf16.msra.mxu0 %v11581
  %11615 = vmatprep.subr.bf16.mxu0 0
  %11616 = vmatpush1.bf16.msra.mxu0 %v11582
  %11617 = vmatprep.subr.bf16.mxu0 0
  %11618 = vmatpush1.bf16.msra.mxu0 %v11583
  %11619 = vmatprep.subr.bf16.mxu0 0
  %11620 = vmatpush1.bf16.msra.mxu0 %v11584
  %11621 = vmatprep.subr.bf16.mxu0 0
  %11622 = vmatpush1.bf16.msra.mxu0 %v11585
  %11623 = vmatprep.subr.bf16.mxu0 0
  %11624 = vmatpush1.bf16.msra.mxu0 %v11586
  %11625 = vmatprep.subr.bf16.mxu0 0
  %11626 = vmatpush1.bf16.msra.mxu0 %v11587
  %11627 = vmatprep.subr.bf16.mxu0 0
  %11628 = vmatpush1.bf16.msra.mxu0 %v11588
  %11629 = vmatprep.subr.bf16.mxu0 0
  %11630 = vmatpush1.bf16.msra.mxu0 %v11589
  %11631 = vmatprep.subr.bf16.mxu0 0
  %11632 = vmatpush1.bf16.msra.mxu0 %v11590
  %11633 = vmatprep.subr.bf16.mxu0 0
  %11634 = vmatpush1.bf16.msra.mxu0 %v11591
  %11635 = vmatprep.subr.bf16.mxu0 0
  %11636 = vmatpush1.bf16.msra.mxu0 %v11592
  %11637 = vmatprep.subr.bf16.mxu0 0
  %11638 = vmatpush1.bf16.msra.mxu0 %v11593
  %11639 = vmatprep.subr.bf16.mxu0 0
  %11640 = vmatpush1.bf16.msra.mxu0 %v11594
  %11641 = vmatprep.subr.bf16.mxu0 0
  %11642 = vmatpush1.bf16.msra.mxu0 %v11595
  %11643 = vmatprep.subr.bf16.mxu0 0
  %11644 = vmatpush1.bf16.msra.mxu0 %v11596
  %11645 = vmatprep.mubr.bf16.mxu0 %v11477
  %11646 = vmatmul.mubr.bf16.gmra.mrb[0].mxu0 %v11476
  %v11647 = vpop.f32.mrb[0].mxu0
  %v11648 = vadd.f32 %v11515, %v11647
  %v11649 = vpop.f32.mrb[0].mxu0
  %v11650 = vpop.f32.mrb[0].mxu0
  %v11651 = vpop.f32.mrb[0].mxu0
  %11652 = vdwg.mxu0
  %v11653 = vlaneseq
  %v11654 = vand.u32 %v11653, 127
  %vm11655 = vcmp.lt.s32.totalorder %v11654, 32
  %v11656 = vmax.f32 %v11648, 0.0
  %v11657 = vsel %vm11655, %v11656, %v11648
  %v11658 = vpack.c.bf16 %v11657, %v11657
  %v11659 = vld [vmem:[%s11] sm:$0xf]
  %v11660 = vld [vmem:[%s11 + $0x4] sm:$0xf]
  %v11661 = vld [vmem:[%s11 + $0x8] sm:$0xf]
  %v11662 = vld [vmem:[%s11 + $0xc] sm:$0xf]
  %v11663 = vld [vmem:[%s11 + $0x10] sm:$0xf]
  %v11664 = vld [vmem:[%s11 + $0x14] sm:$0xf]
  %v11665 = vld [vmem:[%s11 + $0x18] sm:$0xf]
  %v11666 = vld [vmem:[%s11 + $0x1c] sm:$0xf]
  %v11667 = vld [vmem:[%s11 + $0x20] sm:$0xf]
  %v11668 = vld [vmem:[%s11 + $0x24] sm:$0xf]
  %v11669 = vld [vmem:[%s11 + $0x28] sm:$0xf]
  %v11670 = vld [vmem:[%s11 + $0x2c] sm:$0xf]
  %v11671 = vld [vmem:[%s11 + $0x30] sm:$0xf]
  %v11672 = vld [vmem:[%s11 + $0x34] sm:$0xf]
  %v11673 = vld [vmem:[%s11 + $0x38] sm:$0xf]
  %v11674 = vld [vmem:[%s11 + $0x3c] sm:$0xf]
  %v11675 = vld [vmem:[%s12] sm:$0x1]
  %v11677 = vlaneseq
  %v11678 = vshrl.u32 %v11677, 7
  %v11679 = vsub.s32 0, %v11678
  %v11680 = vrot.slane %v11675, %v11679
  %v11698 = vunpack.c.l.b16 %v11659
  %v11699 = vunpack.c.l.b16 %v11660
  %v11700 = vunpack.c.l.b16 %v11661
  %v11701 = vunpack.c.l.b16 %v11662
  %v11702 = vunpack.c.l.b16 %v11663
  %v11703 = vunpack.c.l.b16 %v11664
  %v11704 = vunpack.c.l.b16 %v11665
  %v11705 = vunpack.c.l.b16 %v11666
  %v11706 = vunpack.c.l.b16 %v11667
  %v11707 = vunpack.c.l.b16 %v11668
  %v11708 = vunpack.c.l.b16 %v11669
  %v11709 = vunpack.c.l.b16 %v11670
  %v11710 = vunpack.c.l.b16 %v11671
  %v11711 = vunpack.c.l.b16 %v11672
  %v11712 = vunpack.c.l.b16 %v11673
  %v11713 = vunpack.c.l.b16 %v11674
  %v11714 = vpack.c.b16 %v11699, %v11698
  %v11715 = vpack.c.b16 %v11701, %v11700
  %v11716 = vpack.c.b16 %v11703, %v11702
  %v11717 = vpack.c.b16 %v11705, %v11704
  %v11718 = vpack.c.b16 %v11707, %v11706
  %v11719 = vpack.c.b16 %v11709, %v11708
  %v11720 = vpack.c.b16 %v11711, %v11710
  %v11721 = vpack.c.b16 %v11713, %v11712
  %11730 = vmatprep.subr.bf16.mxu0 0
  %11731 = vmatpush1.bf16.msra.mxu0 %v11714
  %11732 = vmatprep.subr.bf16.mxu0 0
  %11733 = vmatpush1.bf16.msra.mxu0 %v11715
  %11734 = vmatprep.subr.bf16.mxu0 0
  %11735 = vmatpush1.bf16.msra.mxu0 %v11716
  %11736 = vmatprep.subr.bf16.mxu0 0
  %11737 = vmatpush1.bf16.msra.mxu0 %v11717
  %11738 = vmatprep.subr.bf16.mxu0 0
  %11739 = vmatpush1.bf16.msra.mxu0 %v11718
  %11740 = vmatprep.subr.bf16.mxu0 0
  %11741 = vmatpush1.bf16.msra.mxu0 %v11719
  %11742 = vmatprep.subr.bf16.mxu0 0
  %11743 = vmatpush1.bf16.msra.mxu0 %v11720
  %11744 = vmatprep.subr.bf16.mxu0 0
  %11745 = vmatpush1.bf16.msra.mxu0 %v11721
  %11746 = vmatprep.subr.bf16.mxu0 0
  %11747 = vmatpush1.bf16.msra.mxu0 0
  %11748 = vmatprep.subr.bf16.mxu0 0
  %11749 = vmatpush1.bf16.msra.mxu0 0
  %11750 = vmatprep.subr.bf16.mxu0 0
  %11751 = vmatpush1.bf16.msra.mxu0 0
  %11752 = vmatprep.subr.bf16.mxu0 0
  %11753 = vmatpush1.bf16.msra.mxu0 0
  %11754 = vmatprep.subr.bf16.mxu0 0
  %11755 = vmatpush1.bf16.msra.mxu0 0
  %11756 = vmatprep.subr.bf16.mxu0 0
  %11757 = vmatpush1.bf16.msra.mxu0 0
  %11758 = vmatprep.subr.bf16.mxu0 0
  %11759 = vmatpush1.bf16.msra.mxu0 0
  %11760 = vmatprep.subr.bf16.mxu0 0
  %11761 = vmatpush1.bf16.msra.mxu0 0
  %11762 = vmatprep.mubr.bf16.mxu0 0
  %11763 = vmatmul.mubr.bf16.gmra.mrb[0].mxu0 %v11658
  %v11764 = vpop.f32.mrb[0].mxu0
  %v11765 = vadd.f32 %v11680, %v11764
  %v11766 = vpop.f32.mrb[0].mxu0
  %v11767 = vpop.f32.mrb[0].mxu0
  %v11768 = vpop.f32.mrb[0].mxu0
  %11769 = vdwg.mxu0
  %11770 = vst [vmem:[%s13] sm:$0xff] %v11765
  // Predicated region
  $region54: #{convd3qn_forward.1} parent=0 // pred_check
    _
  $region55: #{convd3qn_forward.1} parent=0 // pred_check_branch
    %11772 = sbr.rel (0) target = $region57
  $region56: #{convd3qn_forward.1} parent=0 // pred_region
    _
  $region57: #{convd3qn_forward.1} parent=0 // pred_fallthru
    _
  // Predicated region
  $region58: #{convd3qn_forward.1} parent=0 // pred_check
    _
  $region59: #{convd3qn_forward.1} parent=0 // pred_check_branch
    %11774 = sbr.rel (0) target = $region61
  $region60: #{convd3qn_forward.1} parent=0 // pred_region
    _
  $region61: #{convd3qn_forward.1} parent=0 // pred_fallthru
    _

</llo_original>
